<compile_context>
chip_gen: v5e
topology: v5e:2x2
jax: 0.10.0
libtpu: 0.0.40
codegen_flags: <defaults>
</compile_context>

<pallas_src>
import jax
import jax.numpy as jnp
from jax.experimental import pallas as pl
from jax.experimental.pallas import tpu as pltpu

NCLASSES = 43
LEAKY_SLOPE = 0.01          # F.leaky_relu default negative_slope
BN_EPS = 1e-5
TILE_M = 256                # M-tile for the gridded matmul kernels
NEG_BIG = -1e30             # bias of padded logit lanes -> exp() == 0 in f32


def _round_up(x, m):
    return (x + m - 1) // m * m


def _m_tiling(m):
    """Pick an M tile (multiple of 16 for bf16 sublanes) and padded M."""
    tile = TILE_M if m >= TILE_M else _round_up(m, 16)
    return tile, _round_up(m, tile)


# ---------------------------------------------------------------------------
# Pallas kernels
# ---------------------------------------------------------------------------
def _conv_fused_kernel(p_ref, w_ref, b_ref, scale_ref, shift_ref, o_ref):
    """out = bn_affine( leaky_relu( patches @ W + b ) ) for one M-tile."""
    acc = jnp.dot(p_ref[...], w_ref[...], preferred_element_type=jnp.float32)
    acc = acc + b_ref[...]                                # conv bias (1, N) f32
    acc = jnp.where(acc >= 0.0, acc, LEAKY_SLOPE * acc)   # leaky_relu (f32)
    acc = acc * scale_ref[...] + shift_ref[...]           # batchnorm  (f32)
    o_ref[...] = acc.astype(o_ref.dtype)


def _head_kernel(x_ref, w1_ref, b1_ref, w2_ref, b2_ref, o_ref):
    """log_softmax( fc2( relu( fc1(x) ) ) ) on one M-tile of rows."""
    h = jnp.dot(x_ref[...], w1_ref[...], preferred_element_type=jnp.float32)
    h = jnp.maximum(h + b1_ref[...], 0.0)                 # relu(fc1), f32
    # TODO(synk): F.dropout / Dropout2d folded to identity (inference mode).
    logits = jnp.dot(h.astype(w2_ref.dtype), w2_ref[...],
                     preferred_element_type=jnp.float32)
    logits = logits + b2_ref[...]        # padded lanes get -1e30 -> exp == 0
    m = jnp.max(logits, axis=-1, keepdims=True)
    lse = jnp.log(jnp.sum(jnp.exp(logits - m), axis=-1, keepdims=True)) + m
    o_ref[...] = logits - lse                              # log_softmax(dim=1)


# ---------------------------------------------------------------------------
# Layer wrappers
# ---------------------------------------------------------------------------
def _extract_patches_nhwc(x, kh, kw, stride, pad):
    """x: (B, H, W, C) -> (B*OH*OW, KH*KW*C); per-patch order is (kh, kw, c).
    (Patch construction stays XLA-side; weight layout is prepped to match.)"""
    if pad:
        x = jnp.pad(x, ((0, 0), (pad, pad), (pad, pad), (0, 0)))
    b, h, w, c = x.shape
    oh = (h - kh) // stride + 1
    ow = (w - kw) // stride + 1
    cols = []
    for i in range(kh):
        for j in range(kw):
            cols.append(x[:, i:i + stride * (oh - 1) + 1:stride,
                          j:j + stride * (ow - 1) + 1:stride, :])
    p = jnp.concatenate(cols, axis=-1)        # (B, OH, OW, KH*KW*C)
    return p.reshape(b * oh * ow, kh * kw * c), oh, ow


def conv_bn_layer(x, layer, *, kh, kw, stride, pad):
    """Fused conv -> leaky_relu -> batchnorm (inference). NHWC in, NHWC out."""
    batch = x.shape[0]
    w_mat = layer["w"]                        # (K, N) bf16, prepped + padded
    k_dim, n = w_mat.shape
    patches, oh, ow = _extract_patches_nhwc(x, kh, kw, stride, pad)
    if patches.shape[1] != k_dim:             # conv1: K = 75 -> 128
        patches = jnp.pad(patches, ((0, 0), (0, k_dim - patches.shape[1])))
    m = patches.shape[0]
    tile_m, m_pad = _m_tiling(m)
    if m_pad != m:
        patches = jnp.pad(patches, ((0, m_pad - m), (0, 0)))

    out = pl.pallas_call(
        _conv_fused_kernel,
        out_shape=jax.ShapeDtypeStruct((m_pad, n), jnp.bfloat16),
        grid_spec=pltpu.PrefetchScalarGridSpec(
            num_scalar_prefetch=0,
            grid=(m_pad // tile_m,),
            in_specs=[
                pl.BlockSpec((tile_m, k_dim), lambda i: (i, 0)),   # patch rows
                pl.BlockSpec((k_dim, n), lambda i: (0, 0)),        # weights
                pl.BlockSpec((1, n), lambda i: (0, 0)),            # bias
                pl.BlockSpec((1, n), lambda i: (0, 0)),            # bn scale
                pl.BlockSpec((1, n), lambda i: (0, 0)),            # bn shift
            ],
            out_specs=pl.BlockSpec((tile_m, n), lambda i: (i, 0)),
        ),
        compiler_params=pltpu.CompilerParams(
            dimension_semantics=("parallel",)),
    )(patches, w_mat, layer["b"], layer["scale"], layer["shift"])

    return out[:m].reshape(batch, oh, ow, n)


def classifier_head(x_flat, head):
    """fc1 -> relu -> fc2 -> log_softmax on (B, 4096) bf16 rows."""
    batch = x_flat.shape[0]
    w1, b1, w2, b2 = head["w1"], head["b1"], head["w2"], head["b2"]
    k1, hdim = w1.shape
    n_pad = w2.shape[1]                       # 128 (43 real + padding)
    tile_b, b_pad = _m_tiling(batch)
    if b_pad != batch:
        x_flat = jnp.pad(x_flat, ((0, b_pad - batch), (0, 0)))

    out = pl.pallas_call(
        _head_kernel,
        out_shape=jax.ShapeDtypeStruct((b_pad, n_pad), jnp.float32),
        grid_spec=pltpu.PrefetchScalarGridSpec(
            num_scalar_prefetch=0,
            grid=(b_pad // tile_b,),
            in_specs=[
                pl.BlockSpec((tile_b, k1), lambda i: (i, 0)),
                pl.BlockSpec((k1, hdim), lambda i: (0, 0)),
                pl.BlockSpec((1, hdim), lambda i: (0, 0)),
                pl.BlockSpec((hdim, n_pad), lambda i: (0, 0)),
                pl.BlockSpec((1, n_pad), lambda i: (0, 0)),
            ],
            out_specs=pl.BlockSpec((tile_b, n_pad), lambda i: (i, 0)),
        ),
        compiler_params=pltpu.CompilerParams(
            dimension_semantics=("parallel",)),
    )(x_flat, w1, b1, w2, b2)

    return out[:batch, :NCLASSES]


# ---------------------------------------------------------------------------
# Parameters: raw (PyTorch layout) + one-time prep (outside jit)
# ---------------------------------------------------------------------------
def init_params(key):
    ks = jax.random.split(key, 16)
    p = {}
    p["conv1_w"] = 0.05 * jax.random.normal(ks[0], (96, 3, 5, 5), jnp.float32)
    p["conv1_b"] = 0.05 * jax.random.normal(ks[1], (96,), jnp.float32)
    p["conv2_w"] = 0.05 * jax.random.normal(ks[2], (148, 96, 3, 3), jnp.float32)
    p["conv2_b"] = 0.05 * jax.random.normal(ks[3], (148,), jnp.float32)
    p["conv3_w"] = 0.05 * jax.random.normal(ks[4], (256, 148, 3, 3), jnp.float32)
    p["conv3_b"] = 0.05 * jax.random.normal(ks[5], (256,), jnp.float32)
    for name, n, kb in (("bn1", 96, 6), ("bn2", 148, 8), ("bn3", 256, 10)):
        sub = jax.random.split(ks[kb], 4)
        p[name + "_g"] = 1.0 + 0.1 * jax.random.normal(sub[0], (n,), jnp.float32)
        p[name + "_b"] = 0.1 * jax.random.normal(sub[1], (n,), jnp.float32)
        p[name + "_m"] = 0.1 * jax.random.normal(sub[2], (n,), jnp.float32)
        p[name + "_v"] = 0.5 + jnp.abs(jax.random.normal(sub[3], (n,), jnp.float32))
    p["fc1_w"] = 0.02 * jax.random.normal(ks[12], (256, 4096), jnp.float32)
    p["fc1_b"] = 0.02 * jax.random.normal(ks[13], (256,), jnp.float32)
    p["fc2_w"] = 0.05 * jax.random.normal(ks[14], (NCLASSES, 256), jnp.float32)
    p["fc2_b"] = 0.05 * jax.random.normal(ks[15], (NCLASSES,), jnp.float32)
    return p


def _prep_conv(w, b, gamma, beta, mean, var, *, cin_pad, cout_pad, k_pad):
    """(Cout,Cin,KH,KW) -> (K, Cout_pad) bf16 matmul weights in im2col
    (kh, kw, cin) order, plus zero-padded f32 bias / BN scale / BN shift."""
    cout, cin, kh, kw = w.shape
    wt = jnp.transpose(w, (2, 3, 1, 0))                      # (KH, KW, Cin, Cout)
    wt = jnp.pad(wt, ((0, 0), (0, 0), (0, cin_pad - cin), (0, cout_pad - cout)))
    w_mat = wt.reshape(kh * kw * cin_pad, cout_pad)
    if k_pad != w_mat.shape[0]:
        w_mat = jnp.pad(w_mat, ((0, k_pad - w_mat.shape[0]), (0, 0)))
    scale = gamma / jnp.sqrt(var + BN_EPS)
    shift = beta - mean * scale
    padc = (0, cout_pad - cout)
    return {
        "w": w_mat.astype(jnp.bfloat16),
        "b": jnp.pad(b, padc).reshape(1, cout_pad).astype(jnp.float32),
        "scale": jnp.pad(scale, padc).reshape(1, cout_pad).astype(jnp.float32),
        "shift": jnp.pad(shift, padc).reshape(1, cout_pad).astype(jnp.float32),
    }


def prepare_params(p):
    """One-time (outside jit) layout prep.  Padded out-channels carry
    scale=shift=bias=0, so they are exact zeros; next-layer weights are
    zero-padded in Cin accordingly -> numerics are unchanged."""
    prep = {
        "conv1": _prep_conv(p["conv1_w"], p["conv1_b"], p["bn1_g"], p["bn1_b"],
                            p["bn1_m"], p["bn1_v"],
                            cin_pad=3, cout_pad=128, k_pad=128),
        "conv2": _prep_conv(p["conv2_w"], p["conv2_b"], p["bn2_g"], p["bn2_b"],
                            p["bn2_m"], p["bn2_v"],
                            cin_pad=128, cout_pad=256, k_pad=9 * 128),
        "conv3": _prep_conv(p["conv3_w"], p["conv3_b"], p["bn3_g"], p["bn3_b"],
                            p["bn3_m"], p["bn3_v"],
                            cin_pad=256, cout_pad=256, k_pad=9 * 256),
    }
    # fc1: permute the 4096 inputs from PyTorch's NCHW flatten order (c,h,w)
    # to our NHWC flatten order (h,w,c); store as (in, out).
    fc1 = p["fc1_w"].reshape(256, 256, 4, 4)                 # (out, c, h, w)
    fc1 = jnp.transpose(fc1, (2, 3, 1, 0)).reshape(4096, 256)
    # fc2: store as (in, out); pad logits 43 -> 128 with zero weights and a
    # -1e30 bias so padded lanes vanish under log_softmax.
    fc2 = jnp.pad(p["fc2_w"].T, ((0, 0), (0, 128 - NCLASSES)))
    b2 = jnp.concatenate(
        [p["fc2_b"], jnp.full((128 - NCLASSES,), NEG_BIG, jnp.float32)])
    prep["head"] = {
        "w1": fc1.astype(jnp.bfloat16),
        "b1": p["fc1_b"].reshape(1, 256).astype(jnp.float32),
        "w2": fc2.astype(jnp.bfloat16),
        "b2": b2.reshape(1, 128).astype(jnp.float32),
    }
    return prep


def net_forward(x, prep):
    """x: (B, 3, 32, 32) NCHW float32 -> (B, 43) log-probabilities."""
    x = jnp.transpose(x, (0, 2, 3, 1)).astype(jnp.bfloat16)   # NHWC bf16, once
    x = conv_bn_layer(x, prep["conv1"], kh=5, kw=5, stride=2, pad=0)  # (B,14,14,128)
    x = conv_bn_layer(x, prep["conv2"], kh=3, kw=3, stride=2, pad=1)  # (B, 7, 7,256)
    x = conv_bn_layer(x, prep["conv3"], kh=3, kw=3, stride=2, pad=1)  # (B, 4, 4,256)
    x = x.reshape(x.shape[0], 4096)           # NHWC flatten (fc1 pre-permuted)
    return classifier_head(x, prep["head"])


if __name__ == "__main__":
    key = jax.random.PRNGKey(0)
    k_params, k_x = jax.random.split(key)
    params = init_params(k_params)
    prep = prepare_params(params)             # one-time weight layout prep
    x = jax.random.normal(k_x, (2, 3, 32, 32), jnp.float32)

    out = jax.jit(net_forward)(x, prep)
    out = jax.block_until_ready(out)

    assert out.shape == (2, NCLASSES), out.shape
    # log_softmax rows must (log-)sum to ~1.
    row_sums = jnp.sum(jnp.exp(out), axis=1)
    assert bool(jnp.all(jnp.abs(row_sums - 1.0) < 1e-3)), row_sums
    print("KERNEL_OK")
</pallas_src>

<mosaic_0001>
module attributes {stable_mosaic.version = 11 : i64} {
  func.func @_conv_fused_kernel(%arg0: i32, %arg1: memref<256x128xbf16, #tpu.memory_space<vmem>>, %arg2: memref<128x128xbf16, #tpu.memory_space<vmem>>, %arg3: memref<1x128xf32, #tpu.memory_space<vmem>>, %arg4: memref<1x128xf32, #tpu.memory_space<vmem>>, %arg5: memref<1x128xf32, #tpu.memory_space<vmem>>, %arg6: memref<256x128xbf16, #tpu.memory_space<vmem>>) attributes {dimension_semantics = [#tpu.dimension_semantics<parallel>], iteration_bounds = array<i64: 2>, scalar_prefetch = 0 : i64, scratch_operands = 0 : i64, tpu.core_type = #tpu.core_type<tc>, window_params = [{transform_indices = @transform_0, window_bounds = array<i64: 256, 128>}, {pipeline_mode = #tpu.pipeline_mode<synchronous>, transform_indices = @transform_1, window_bounds = array<i64: 128, 128>}, {pipeline_mode = #tpu.pipeline_mode<synchronous>, transform_indices = @transform_2, window_bounds = array<i64: 1, 128>}, {pipeline_mode = #tpu.pipeline_mode<synchronous>, transform_indices = @transform_3, window_bounds = array<i64: 1, 128>}, {pipeline_mode = #tpu.pipeline_mode<synchronous>, transform_indices = @transform_4, window_bounds = array<i64: 1, 128>}, {transform_indices = @transform_5, window_bounds = array<i64: 256, 128>}]} {
    %c0 = arith.constant 0 : index
    %c0_0 = arith.constant 0 : index
    %0 = vector.load %arg1[%c0, %c0_0] : memref<256x128xbf16, #tpu.memory_space<vmem>>, vector<256x128xbf16>
    %c0_1 = arith.constant 0 : index
    %c0_2 = arith.constant 0 : index
    %1 = vector.load %arg2[%c0_1, %c0_2] : memref<128x128xbf16, #tpu.memory_space<vmem>>, vector<128x128xbf16>
    %cst = arith.constant dense<0.000000e+00> : vector<256x128xf32>
    %2 = tpu.matmul %0, %1, %cst {dimension_numbers = #tpu.dot_dimension_numbers<[1], [0], [0], [1], [0, 0, 1, 1], [], []>} : vector<256x128xbf16>, vector<128x128xbf16>, vector<256x128xf32> -> vector<256x128xf32>
    %c0_3 = arith.constant 0 : index
    %c0_4 = arith.constant 0 : index
    %3 = vector.load %arg3[%c0_3, %c0_4] : memref<1x128xf32, #tpu.memory_space<vmem>>, vector<1x128xf32>
    %4 = vector.broadcast %3 : vector<1x128xf32> to vector<256x128xf32>
    %5 = arith.addf %2, %4 : vector<256x128xf32>
    %cst_5 = arith.constant 0.000000e+00 : f32
    %6 = vector.broadcast %cst_5 : f32 to vector<256x128xf32>
    %7 = arith.cmpf oge, %5, %6 : vector<256x128xf32>
    %cst_6 = arith.constant 0.00999999977 : f32
    %8 = vector.broadcast %cst_6 : f32 to vector<256x128xf32>
    %9 = arith.mulf %8, %5 : vector<256x128xf32>
    %10 = arith.select %7, %5, %9 : vector<256x128xi1>, vector<256x128xf32>
    %c0_7 = arith.constant 0 : index
    %c0_8 = arith.constant 0 : index
    %11 = vector.load %arg4[%c0_7, %c0_8] : memref<1x128xf32, #tpu.memory_space<vmem>>, vector<1x128xf32>
    %12 = vector.broadcast %11 : vector<1x128xf32> to vector<256x128xf32>
    %13 = arith.mulf %10, %12 : vector<256x128xf32>
    %c0_9 = arith.constant 0 : index
    %c0_10 = arith.constant 0 : index
    %14 = vector.load %arg5[%c0_9, %c0_10] : memref<1x128xf32, #tpu.memory_space<vmem>>, vector<1x128xf32>
    %15 = vector.broadcast %14 : vector<1x128xf32> to vector<256x128xf32>
    %16 = arith.addf %13, %15 : vector<256x128xf32>
    %17 = arith.truncf %16 : vector<256x128xf32> to vector<256x128xbf16>
    %c0_11 = arith.constant 0 : index
    %c0_12 = arith.constant 0 : index
    %18 = vector.load %arg6[%c0_11, %c0_12] : memref<256x128xbf16, #tpu.memory_space<vmem>>, vector<256x128xbf16>
    tpu.vector_store %arg6[%c0_11, %c0_12], %17 {strides = array<i32>} : memref<256x128xbf16, #tpu.memory_space<vmem>>, vector<256x128xbf16>,
    return
  }
  func.func @transform_0(%arg0: i32) -> (i32, i32) {
    %c0_i32 = arith.constant 0 : i32
    %c0_i32_0 = arith.constant 0 : i32
    return %arg0, %c0_i32 : i32, i32
  }
  func.func @transform_1(%arg0: i32) -> (i32, i32) {
    %c0_i32 = arith.constant 0 : i32
    %c0_i32_0 = arith.constant 0 : i32
    %c0_i32_1 = arith.constant 0 : i32
    return %c0_i32, %c0_i32_0 : i32, i32
  }
  func.func @transform_2(%arg0: i32) -> (i32, i32) {
    %c0_i32 = arith.constant 0 : i32
    %c0_i32_0 = arith.constant 0 : i32
    %c0_i32_1 = arith.constant 0 : i32
    return %c0_i32, %c0_i32_0 : i32, i32
  }
  func.func @transform_3(%arg0: i32) -> (i32, i32) {
    %c0_i32 = arith.constant 0 : i32
    %c0_i32_0 = arith.constant 0 : i32
    %c0_i32_1 = arith.constant 0 : i32
    return %c0_i32, %c0_i32_0 : i32, i32
  }
  func.func @transform_4(%arg0: i32) -> (i32, i32) {
    %c0_i32 = arith.constant 0 : i32
    %c0_i32_0 = arith.constant 0 : i32
    %c0_i32_1 = arith.constant 0 : i32
    return %c0_i32, %c0_i32_0 : i32, i32
  }
  func.func @transform_5(%arg0: i32) -> (i32, i32) {
    %c0_i32 = arith.constant 0 : i32
    %c0_i32_0 = arith.constant 0 : i32
    return %arg0, %c0_i32 : i32, i32
  }
}

module attributes {stable_mosaic.version = 11 : i64} {
  func.func @_conv_fused_kernel(%arg0: i32, %arg1: memref<112x1152xbf16, #tpu.memory_space<vmem>>, %arg2: memref<1152x256xbf16, #tpu.memory_space<vmem>>, %arg3: memref<1x256xf32, #tpu.memory_space<vmem>>, %arg4: memref<1x256xf32, #tpu.memory_space<vmem>>, %arg5: memref<1x256xf32, #tpu.memory_space<vmem>>, %arg6: memref<112x256xbf16, #tpu.memory_space<vmem>>) attributes {dimension_semantics = [#tpu.dimension_semantics<parallel>], iteration_bounds = array<i64: 1>, scalar_prefetch = 0 : i64, scratch_operands = 0 : i64, tpu.core_type = #tpu.core_type<tc>, window_params = [{transform_indices = @transform_0, window_bounds = array<i64: 112, 1152>}, {pipeline_mode = #tpu.pipeline_mode<synchronous>, transform_indices = @transform_1, window_bounds = array<i64: 1152, 256>}, {pipeline_mode = #tpu.pipeline_mode<synchronous>, transform_indices = @transform_2, window_bounds = array<i64: 1, 256>}, {pipeline_mode = #tpu.pipeline_mode<synchronous>, transform_indices = @transform_3, window_bounds = array<i64: 1, 256>}, {pipeline_mode = #tpu.pipeline_mode<synchronous>, transform_indices = @transform_4, window_bounds = array<i64: 1, 256>}, {transform_indices = @transform_5, window_bounds = array<i64: 112, 256>}]} {
    %c0 = arith.constant 0 : index
    %c0_0 = arith.constant 0 : index
    %0 = vector.load %arg1[%c0, %c0_0] : memref<112x1152xbf16, #tpu.memory_space<vmem>>, vector<112x1152xbf16>
    %c0_1 = arith.constant 0 : index
    %c0_2 = arith.constant 0 : index
    %1 = vector.load %arg2[%c0_1, %c0_2] : memref<1152x256xbf16, #tpu.memory_space<vmem>>, vector<1152x256xbf16>
    %cst = arith.constant dense<0.000000e+00> : vector<112x256xf32>
    %2 = tpu.matmul %0, %1, %cst {dimension_numbers = #tpu.dot_dimension_numbers<[1], [0], [0], [1], [0, 0, 1, 1], [], []>} : vector<112x1152xbf16>, vector<1152x256xbf16>, vector<112x256xf32> -> vector<112x256xf32>
    %c0_3 = arith.constant 0 : index
    %c0_4 = arith.constant 0 : index
    %3 = vector.load %arg3[%c0_3, %c0_4] : memref<1x256xf32, #tpu.memory_space<vmem>>, vector<1x256xf32>
    %4 = vector.broadcast %3 : vector<1x256xf32> to vector<112x256xf32>
    %5 = arith.addf %2, %4 : vector<112x256xf32>
    %cst_5 = arith.constant 0.000000e+00 : f32
    %6 = vector.broadcast %cst_5 : f32 to vector<112x256xf32>
    %7 = arith.cmpf oge, %5, %6 : vector<112x256xf32>
    %cst_6 = arith.constant 0.00999999977 : f32
    %8 = vector.broadcast %cst_6 : f32 to vector<112x256xf32>
    %9 = arith.mulf %8, %5 : vector<112x256xf32>
    %10 = arith.select %7, %5, %9 : vector<112x256xi1>, vector<112x256xf32>
    %c0_7 = arith.constant 0 : index
    %c0_8 = arith.constant 0 : index
    %11 = vector.load %arg4[%c0_7, %c0_8] : memref<1x256xf32, #tpu.memory_space<vmem>>, vector<1x256xf32>
    %12 = vector.broadcast %11 : vector<1x256xf32> to vector<112x256xf32>
    %13 = arith.mulf %10, %12 : vector<112x256xf32>
    %c0_9 = arith.constant 0 : index
    %c0_10 = arith.constant 0 : index
    %14 = vector.load %arg5[%c0_9, %c0_10] : memref<1x256xf32, #tpu.memory_space<vmem>>, vector<1x256xf32>
    %15 = vector.broadcast %14 : vector<1x256xf32> to vector<112x256xf32>
    %16 = arith.addf %13, %15 : vector<112x256xf32>
    %17 = arith.truncf %16 : vector<112x256xf32> to vector<112x256xbf16>
    %c0_11 = arith.constant 0 : index
    %c0_12 = arith.constant 0 : index
    %18 = vector.load %arg6[%c0_11, %c0_12] : memref<112x256xbf16, #tpu.memory_space<vmem>>, vector<112x256xbf16>
    tpu.vector_store %arg6[%c0_11, %c0_12], %17 {strides = array<i32>} : memref<112x256xbf16, #tpu.memory_space<vmem>>, vector<112x256xbf16>,
    return
  }
  func.func @transform_0(%arg0: i32) -> (i32, i32) {
    %c0_i32 = arith.constant 0 : i32
    %c0_i32_0 = arith.constant 0 : i32
    return %arg0, %c0_i32 : i32, i32
  }
  func.func @transform_1(%arg0: i32) -> (i32, i32) {
    %c0_i32 = arith.constant 0 : i32
    %c0_i32_0 = arith.constant 0 : i32
    %c0_i32_1 = arith.constant 0 : i32
    return %c0_i32, %c0_i32_0 : i32, i32
  }
  func.func @transform_2(%arg0: i32) -> (i32, i32) {
    %c0_i32 = arith.constant 0 : i32
    %c0_i32_0 = arith.constant 0 : i32
    %c0_i32_1 = arith.constant 0 : i32
    return %c0_i32, %c0_i32_0 : i32, i32
  }
  func.func @transform_3(%arg0: i32) -> (i32, i32) {
    %c0_i32 = arith.constant 0 : i32
    %c0_i32_0 = arith.constant 0 : i32
    %c0_i32_1 = arith.constant 0 : i32
    return %c0_i32, %c0_i32_0 : i32, i32
  }
  func.func @transform_4(%arg0: i32) -> (i32, i32) {
    %c0_i32 = arith.constant 0 : i32
    %c0_i32_0 = arith.constant 0 : i32
    %c0_i32_1 = arith.constant 0 : i32
    return %c0_i32, %c0_i32_0 : i32, i32
  }
  func.func @transform_5(%arg0: i32) -> (i32, i32) {
    %c0_i32 = arith.constant 0 : i32
    %c0_i32_0 = arith.constant 0 : i32
    return %arg0, %c0_i32 : i32, i32
  }
}

module attributes {stable_mosaic.version = 11 : i64} {
  func.func @_head_kernel(%arg0: i32, %arg1: memref<16x4096xbf16, #tpu.memory_space<vmem>>, %arg2: memref<4096x256xbf16, #tpu.memory_space<vmem>>, %arg3: memref<1x256xf32, #tpu.memory_space<vmem>>, %arg4: memref<256x128xbf16, #tpu.memory_space<vmem>>, %arg5: memref<1x128xf32, #tpu.memory_space<vmem>>, %arg6: memref<16x128xf32, #tpu.memory_space<vmem>>) attributes {dimension_semantics = [#tpu.dimension_semantics<parallel>], iteration_bounds = array<i64: 1>, scalar_prefetch = 0 : i64, scratch_operands = 0 : i64, tpu.core_type = #tpu.core_type<tc>, window_params = [{transform_indices = @transform_0, window_bounds = array<i64: 16, 4096>}, {pipeline_mode = #tpu.pipeline_mode<synchronous>, transform_indices = @transform_1, window_bounds = array<i64: 4096, 256>}, {pipeline_mode = #tpu.pipeline_mode<synchronous>, transform_indices = @transform_2, window_bounds = array<i64: 1, 256>}, {pipeline_mode = #tpu.pipeline_mode<synchronous>, transform_indices = @transform_3, window_bounds = array<i64: 256, 128>}, {pipeline_mode = #tpu.pipeline_mode<synchronous>, transform_indices = @transform_4, window_bounds = array<i64: 1, 128>}, {transform_indices = @transform_5, window_bounds = array<i64: 16, 128>}]} {
    %c0 = arith.constant 0 : index
    %c0_0 = arith.constant 0 : index
    %0 = vector.load %arg1[%c0, %c0_0] : memref<16x4096xbf16, #tpu.memory_space<vmem>>, vector<16x4096xbf16>
    %c0_1 = arith.constant 0 : index
    %c0_2 = arith.constant 0 : index
    %1 = vector.load %arg2[%c0_1, %c0_2] : memref<4096x256xbf16, #tpu.memory_space<vmem>>, vector<4096x256xbf16>
    %cst = arith.constant dense<0.000000e+00> : vector<16x256xf32>
    %2 = tpu.matmul %0, %1, %cst {dimension_numbers = #tpu.dot_dimension_numbers<[1], [0], [0], [1], [0, 0, 1, 1], [], []>} : vector<16x4096xbf16>, vector<4096x256xbf16>, vector<16x256xf32> -> vector<16x256xf32>
    %c0_3 = arith.constant 0 : index
    %c0_4 = arith.constant 0 : index
    %3 = vector.load %arg3[%c0_3, %c0_4] : memref<1x256xf32, #tpu.memory_space<vmem>>, vector<1x256xf32>
    %4 = vector.broadcast %3 : vector<1x256xf32> to vector<16x256xf32>
    %5 = arith.addf %2, %4 : vector<16x256xf32>
    %cst_5 = arith.constant 0.000000e+00 : f32
    %6 = vector.broadcast %cst_5 : f32 to vector<16x256xf32>
    %7 = arith.maximumf %5, %6 : vector<16x256xf32>
    %8 = arith.truncf %7 : vector<16x256xf32> to vector<16x256xbf16>
    %c0_6 = arith.constant 0 : index
    %c0_7 = arith.constant 0 : index
    %9 = vector.load %arg4[%c0_6, %c0_7] : memref<256x128xbf16, #tpu.memory_space<vmem>>, vector<256x128xbf16>
    %cst_8 = arith.constant dense<0.000000e+00> : vector<16x128xf32>
    %10 = tpu.matmul %8, %9, %cst_8 {dimension_numbers = #tpu.dot_dimension_numbers<[1], [0], [0], [1], [0, 0, 1, 1], [], []>} : vector<16x256xbf16>, vector<256x128xbf16>, vector<16x128xf32> -> vector<16x128xf32>
    %c0_9 = arith.constant 0 : index
    %c0_10 = arith.constant 0 : index
    %11 = vector.load %arg5[%c0_9, %c0_10] : memref<1x128xf32, #tpu.memory_space<vmem>>, vector<1x128xf32>
    %12 = vector.broadcast %11 : vector<1x128xf32> to vector<16x128xf32>
    %13 = arith.addf %10, %12 : vector<16x128xf32>
    %cst_11 = arith.constant dense<0xFF800000> : vector<16xf32>
    %14 = vector.multi_reduction <maximumf>, %13, %cst_11 [1] : vector<16x128xf32> to vector<16xf32>
    %15 = vector.shape_cast %14 : vector<16xf32> to vector<16x1xf32>
    %16 = vector.broadcast %15 : vector<16x1xf32> to vector<16x128xf32>
    %17 = arith.subf %13, %16 : vector<16x128xf32>
    %18 = math.exp %17 : vector<16x128xf32>
    %cst_12 = arith.constant dense<0.000000e+00> : vector<16xf32>
    %19 = vector.multi_reduction <add>, %18, %cst_12 [1] : vector<16x128xf32> to vector<16xf32>
    %20 = vector.shape_cast %19 : vector<16xf32> to vector<16x1xf32>
    %21 = math.log %20 : vector<16x1xf32>
    %22 = arith.addf %21, %15 : vector<16x1xf32>
    %23 = vector.broadcast %22 : vector<16x1xf32> to vector<16x128xf32>
    %24 = arith.subf %13, %23 : vector<16x128xf32>
    %c0_13 = arith.constant 0 : index
    %c0_14 = arith.constant 0 : index
    %25 = vector.load %arg6[%c0_13, %c0_14] : memref<16x128xf32, #tpu.memory_space<vmem>>, vector<16x128xf32>
    tpu.vector_store %arg6[%c0_13, %c0_14], %24 {strides = array<i32>} : memref<16x128xf32, #tpu.memory_space<vmem>>, vector<16x128xf32>,
    return
  }
  func.func @transform_0(%arg0: i32) -> (i32, i32) {
    %c0_i32 = arith.constant 0 : i32
    %c0_i32_0 = arith.constant 0 : i32
    return %arg0, %c0_i32 : i32, i32
  }
  func.func @transform_1(%arg0: i32) -> (i32, i32) {
    %c0_i32 = arith.constant 0 : i32
    %c0_i32_0 = arith.constant 0 : i32
    %c0_i32_1 = arith.constant 0 : i32
    return %c0_i32, %c0_i32_0 : i32, i32
  }
  func.func @transform_2(%arg0: i32) -> (i32, i32) {
    %c0_i32 = arith.constant 0 : i32
    %c0_i32_0 = arith.constant 0 : i32
    %c0_i32_1 = arith.constant 0 : i32
    return %c0_i32, %c0_i32_0 : i32, i32
  }
  func.func @transform_3(%arg0: i32) -> (i32, i32) {
    %c0_i32 = arith.constant 0 : i32
    %c0_i32_0 = arith.constant 0 : i32
    %c0_i32_1 = arith.constant 0 : i32
    return %c0_i32, %c0_i32_0 : i32, i32
  }
  func.func @transform_4(%arg0: i32) -> (i32, i32) {
    %c0_i32 = arith.constant 0 : i32
    %c0_i32_0 = arith.constant 0 : i32
    %c0_i32_1 = arith.constant 0 : i32
    return %c0_i32, %c0_i32_0 : i32, i32
  }
  func.func @transform_5(%arg0: i32) -> (i32, i32) {
    %c0_i32 = arith.constant 0 : i32
    %c0_i32_0 = arith.constant 0 : i32
    return %arg0, %c0_i32 : i32, i32
  }
}

module attributes {stable_mosaic.version = 11 : i64} {
  func.func @_conv_fused_kernel(%arg0: i32, %arg1: memref<32x2304xbf16, #tpu.memory_space<vmem>>, %arg2: memref<2304x256xbf16, #tpu.memory_space<vmem>>, %arg3: memref<1x256xf32, #tpu.memory_space<vmem>>, %arg4: memref<1x256xf32, #tpu.memory_space<vmem>>, %arg5: memref<1x256xf32, #tpu.memory_space<vmem>>, %arg6: memref<32x256xbf16, #tpu.memory_space<vmem>>) attributes {dimension_semantics = [#tpu.dimension_semantics<parallel>], iteration_bounds = array<i64: 1>, scalar_prefetch = 0 : i64, scratch_operands = 0 : i64, tpu.core_type = #tpu.core_type<tc>, window_params = [{transform_indices = @transform_0, window_bounds = array<i64: 32, 2304>}, {pipeline_mode = #tpu.pipeline_mode<synchronous>, transform_indices = @transform_1, window_bounds = array<i64: 2304, 256>}, {pipeline_mode = #tpu.pipeline_mode<synchronous>, transform_indices = @transform_2, window_bounds = array<i64: 1, 256>}, {pipeline_mode = #tpu.pipeline_mode<synchronous>, transform_indices = @transform_3, window_bounds = array<i64: 1, 256>}, {pipeline_mode = #tpu.pipeline_mode<synchronous>, transform_indices = @transform_4, window_bounds = array<i64: 1, 256>}, {transform_indices = @transform_5, window_bounds = array<i64: 32, 256>}]} {
    %c0 = arith.constant 0 : index
    %c0_0 = arith.constant 0 : index
    %0 = vector.load %arg1[%c0, %c0_0] : memref<32x2304xbf16, #tpu.memory_space<vmem>>, vector<32x2304xbf16>
    %c0_1 = arith.constant 0 : index
    %c0_2 = arith.constant 0 : index
    %1 = vector.load %arg2[%c0_1, %c0_2] : memref<2304x256xbf16, #tpu.memory_space<vmem>>, vector<2304x256xbf16>
    %cst = arith.constant dense<0.000000e+00> : vector<32x256xf32>
    %2 = tpu.matmul %0, %1, %cst {dimension_numbers = #tpu.dot_dimension_numbers<[1], [0], [0], [1], [0, 0, 1, 1], [], []>} : vector<32x2304xbf16>, vector<2304x256xbf16>, vector<32x256xf32> -> vector<32x256xf32>
    %c0_3 = arith.constant 0 : index
    %c0_4 = arith.constant 0 : index
    %3 = vector.load %arg3[%c0_3, %c0_4] : memref<1x256xf32, #tpu.memory_space<vmem>>, vector<1x256xf32>
    %4 = vector.broadcast %3 : vector<1x256xf32> to vector<32x256xf32>
    %5 = arith.addf %2, %4 : vector<32x256xf32>
    %cst_5 = arith.constant 0.000000e+00 : f32
    %6 = vector.broadcast %cst_5 : f32 to vector<32x256xf32>
    %7 = arith.cmpf oge, %5, %6 : vector<32x256xf32>
    %cst_6 = arith.constant 0.00999999977 : f32
    %8 = vector.broadcast %cst_6 : f32 to vector<32x256xf32>
    %9 = arith.mulf %8, %5 : vector<32x256xf32>
    %10 = arith.select %7, %5, %9 : vector<32x256xi1>, vector<32x256xf32>
    %c0_7 = arith.constant 0 : index
    %c0_8 = arith.constant 0 : index
    %11 = vector.load %arg4[%c0_7, %c0_8] : memref<1x256xf32, #tpu.memory_space<vmem>>, vector<1x256xf32>
    %12 = vector.broadcast %11 : vector<1x256xf32> to vector<32x256xf32>
    %13 = arith.mulf %10, %12 : vector<32x256xf32>
    %c0_9 = arith.constant 0 : index
    %c0_10 = arith.constant 0 : index
    %14 = vector.load %arg5[%c0_9, %c0_10] : memref<1x256xf32, #tpu.memory_space<vmem>>, vector<1x256xf32>
    %15 = vector.broadcast %14 : vector<1x256xf32> to vector<32x256xf32>
    %16 = arith.addf %13, %15 : vector<32x256xf32>
    %17 = arith.truncf %16 : vector<32x256xf32> to vector<32x256xbf16>
    %c0_11 = arith.constant 0 : index
    %c0_12 = arith.constant 0 : index
    %18 = vector.load %arg6[%c0_11, %c0_12] : memref<32x256xbf16, #tpu.memory_space<vmem>>, vector<32x256xbf16>
    tpu.vector_store %arg6[%c0_11, %c0_12], %17 {strides = array<i32>} : memref<32x256xbf16, #tpu.memory_space<vmem>>, vector<32x256xbf16>,
    return
  }
  func.func @transform_0(%arg0: i32) -> (i32, i32) {
    %c0_i32 = arith.constant 0 : i32
    %c0_i32_0 = arith.constant 0 : i32
    return %arg0, %c0_i32 : i32, i32
  }
  func.func @transform_1(%arg0: i32) -> (i32, i32) {
    %c0_i32 = arith.constant 0 : i32
    %c0_i32_0 = arith.constant 0 : i32
    %c0_i32_1 = arith.constant 0 : i32
    return %c0_i32, %c0_i32_0 : i32, i32
  }
  func.func @transform_2(%arg0: i32) -> (i32, i32) {
    %c0_i32 = arith.constant 0 : i32
    %c0_i32_0 = arith.constant 0 : i32
    %c0_i32_1 = arith.constant 0 : i32
    return %c0_i32, %c0_i32_0 : i32, i32
  }
  func.func @transform_3(%arg0: i32) -> (i32, i32) {
    %c0_i32 = arith.constant 0 : i32
    %c0_i32_0 = arith.constant 0 : i32
    %c0_i32_1 = arith.constant 0 : i32
    return %c0_i32, %c0_i32_0 : i32, i32
  }
  func.func @transform_4(%arg0: i32) -> (i32, i32) {
    %c0_i32 = arith.constant 0 : i32
    %c0_i32_0 = arith.constant 0 : i32
    %c0_i32_1 = arith.constant 0 : i32
    return %c0_i32, %c0_i32_0 : i32, i32
  }
  func.func @transform_5(%arg0: i32) -> (i32, i32) {
    %c0_i32 = arith.constant 0 : i32
    %c0_i32_0 = arith.constant 0 : i32
    return %arg0, %c0_i32 : i32, i32
  }
}

</mosaic_0001>

<llo_original>
// kernel: net_forward.4
$region0: #{net_forward.4}
  #allocation0 [shape = 'u32[]', space=smem, size = 0x4, offset = 0x4, fixed_abs, tag = 'smem constant byte address 0x4 - core index']
  #allocation1 [shape = 'u32[72,128]{1,0:T(1,128)}', space=vmem, size = 0x9000, scoped, tag = 'internal scratch']
  %s0 = inlined_call_operand.vmem [shape: bf16[512,128], index: 0, kind: input, shape index: {}]
  %s1 = inlined_call_operand.vmem [shape: bf16[128,128], index: 1, kind: input, shape index: {}]
  %s2 = inlined_call_operand.vmem [shape: f32[1,128], index: 2, kind: input, shape index: {}]
  %s3 = inlined_call_operand.vmem [shape: f32[1,128], index: 3, kind: input, shape index: {}]
  %s4 = inlined_call_operand.vmem [shape: f32[1,128], index: 4, kind: input, shape index: {}]
  %s5 = inlined_call_operand.vmem [shape: bf16[512,128], index: 5, kind: output, shape index: {}]
  %s6 = sld [smem:[#allocation0]]
  $region53: #{net_forward.4} parent=0
    _
  %s8 = ssub.s32 1, %s6
  %s9 = scalar_select 0, %s8, %s6
  loop: start=0, step=1, limit=4
  $region2: #{net_forward.4} parent=0 // loop_pre_header
    _
  $region3: #{net_forward.4} parent=0 // loop_header
    %s11 = sphi 0, %s15
    %p12 = scmp.ge.s32.totalorder %s11, 4
    %s21 = sphi 0, %s23
    %s24 = sphi 0, %s21
    %s25 = sphi 0, %s24
    %s41 = sphi 0, %s25
    %s45 = sphi 0, %s45
    %s47 = sphi 0, %s45
    %s48 = sphi 0, %s47
    %s62 = sphi 0, %s48
    %s66 = sphi 0, %s66
    %s68 = sphi 0, %s66
    %s69 = sphi 0, %s68
    %s83 = sphi 0, %s69
    %s87 = sphi 0, %s87
    %s89 = sphi 0, %s87
    %s90 = sphi 0, %s89
    %s104 = sphi 0, %s90
    %s108 = sphi 0, %s108
    %s110 = sphi 0, %s108
    %s111 = sphi 0, %s110
    %s125 = sphi 0, %s111
    %s131 = sphi 0, %s133
    %s134 = sphi 0, %s131
    %s135 = sphi 0, %s134
    %s151 = sphi 0, %s135
  $region4: #{net_forward.4} parent=0 // loop_header_branch
    %14 = sbr.rel (%p12) target = $region8
  $region5: #{net_forward.4} parent=0 // loop_body
    %s16 = ssub.s32 %s11, 1
    %s17 = ssub.s32 %s11, 2
    %s18 = sadd.s32 %s11, 1
    %s19 = ssub.s32 %s11, %s18
    %p20 = scmp.eq.s32.totalorder %s19, 0
    %s22 = sadd.s32 %s21, 1
    %s23 = scalar_select %p20, %s21, %s22
    %p26 = pneg %p20
    %p27 = scmp.eq.s32.totalorder %s11, 1
    %p28 = por %p26, %p27
    %p29 = scmp.ne.s32.totalorder %s21, %s24
    %p30 = scmp.eq.s32.totalorder %s11, 0
    %p31 = por %p29, %p30
    %p32 = scmp.ne.s32.totalorder %s21, %s24
    %p33 = scmp.eq.s32.totalorder %s16, 1
    %p34 = por %p32, %p33
    %p35 = scmp.ne.s32.totalorder %s24, %s25
    %p36 = scmp.eq.s32.totalorder %s16, 0
    %p37 = por %p35, %p36
    %p38 = scmp.ne.s32.totalorder %s24, %s25
    %p39 = scmp.eq.s32.totalorder %s17, 1
    %p40 = por %p38, %p39
    %p42 = scmp.ne.s32.totalorder %s25, %s41
    %p43 = scmp.eq.s32.totalorder %s17, 0
    %p44 = por %p42, %p43
    %s46 = sadd.s32 %s45, 1
    %p49 = scmp.eq.s32.totalorder %s11, 1
    %p50 = scmp.ne.s32.totalorder %s45, %s47
    %p51 = scmp.eq.s32.totalorder %s11, 0
    %p52 = por %p50, %p51
    %p53 = scmp.ne.s32.totalorder %s45, %s47
    %p54 = scmp.eq.s32.totalorder %s16, 1
    %p55 = por %p53, %p54
    %p56 = scmp.ne.s32.totalorder %s47, %s48
    %p57 = scmp.eq.s32.totalorder %s16, 0
    %p58 = por %p56, %p57
    %p59 = scmp.ne.s32.totalorder %s47, %s48
    %p60 = scmp.eq.s32.totalorder %s17, 1
    %p61 = por %p59, %p60
    %p63 = scmp.ne.s32.totalorder %s48, %s62
    %p64 = scmp.eq.s32.totalorder %s17, 0
    %p65 = por %p63, %p64
    %s67 = sadd.s32 %s66, 1
    %p70 = scmp.eq.s32.totalorder %s11, 1
    %p71 = scmp.ne.s32.totalorder %s66, %s68
    %p72 = scmp.eq.s32.totalorder %s11, 0
    %p73 = por %p71, %p72
    %p74 = scmp.ne.s32.totalorder %s66, %s68
    %p75 = scmp.eq.s32.totalorder %s16, 1
    %p76 = por %p74, %p75
    %p77 = scmp.ne.s32.totalorder %s68, %s69
    %p78 = scmp.eq.s32.totalorder %s16, 0
    %p79 = por %p77, %p78
    %p80 = scmp.ne.s32.totalorder %s68, %s69
    %p81 = scmp.eq.s32.totalorder %s17, 1
    %p82 = por %p80, %p81
    %p84 = scmp.ne.s32.totalorder %s69, %s83
    %p85 = scmp.eq.s32.totalorder %s17, 0
    %p86 = por %p84, %p85
    %s88 = sadd.s32 %s87, 1
    %p91 = scmp.eq.s32.totalorder %s11, 1
    %p92 = scmp.ne.s32.totalorder %s87, %s89
    %p93 = scmp.eq.s32.totalorder %s11, 0
    %p94 = por %p92, %p93
    %p95 = scmp.ne.s32.totalorder %s87, %s89
    %p96 = scmp.eq.s32.totalorder %s16, 1
    %p97 = por %p95, %p96
    %p98 = scmp.ne.s32.totalorder %s89, %s90
    %p99 = scmp.eq.s32.totalorder %s16, 0
    %p100 = por %p98, %p99
    %p101 = scmp.ne.s32.totalorder %s89, %s90
    %p102 = scmp.eq.s32.totalorder %s17, 1
    %p103 = por %p101, %p102
    %p105 = scmp.ne.s32.totalorder %s90, %s104
    %p106 = scmp.eq.s32.totalorder %s17, 0
    %p107 = por %p105, %p106
    %s109 = sadd.s32 %s108, 1
    %p112 = scmp.eq.s32.totalorder %s11, 1
    %p113 = scmp.ne.s32.totalorder %s108, %s110
    %p114 = scmp.eq.s32.totalorder %s11, 0
    %p115 = por %p113, %p114
    %p116 = scmp.ne.s32.totalorder %s108, %s110
    %p117 = scmp.eq.s32.totalorder %s16, 1
    %p118 = por %p116, %p117
    %p119 = scmp.ne.s32.totalorder %s110, %s111
    %p120 = scmp.eq.s32.totalorder %s16, 0
    %p121 = por %p119, %p120
    %p122 = scmp.ne.s32.totalorder %s110, %s111
    %p123 = scmp.eq.s32.totalorder %s17, 1
    %p124 = por %p122, %p123
    %p126 = scmp.ne.s32.totalorder %s111, %s125
    %p127 = scmp.eq.s32.totalorder %s17, 0
    %p128 = por %p126, %p127
    %s129 = ssub.s32 %s11, %s18
    %p130 = scmp.eq.s32.totalorder %s129, 0
    %s132 = sadd.s32 %s131, 1
    %s133 = scalar_select %p130, %s131, %s132
    %p136 = pneg %p130
    %p137 = scmp.eq.s32.totalorder %s11, 1
    %p138 = por %p136, %p137
    %p139 = scmp.ne.s32.totalorder %s131, %s134
    %p140 = scmp.eq.s32.totalorder %s11, 0
    %p141 = por %p139, %p140
    %p142 = scmp.ne.s32.totalorder %s131, %s134
    %p143 = scmp.eq.s32.totalorder %s16, 1
    %p144 = por %p142, %p143
    %p145 = scmp.ne.s32.totalorder %s134, %s135
    %p146 = scmp.eq.s32.totalorder %s16, 0
    %p147 = por %p145, %p146
    %p148 = scmp.ne.s32.totalorder %s134, %s135
    %p149 = scmp.eq.s32.totalorder %s17, 1
    %p150 = por %p148, %p149
    %p152 = scmp.ne.s32.totalorder %s135, %s151
    %p153 = scmp.eq.s32.totalorder %s17, 0
    %p154 = por %p152, %p153
    %p155 = scmp.le.s32.totalorder 1, %s11
    %p156 = scmp.lt.s32.totalorder %s11, 3
    %p157 = pnand %p155, %p156
    %p158 = pneg %p157
    // Predicated region
    $region9: #{net_forward.4} parent=5 // pred_check
      _
    $region10: #{net_forward.4} parent=5 // pred_check_branch
      %160 = sbr.rel (%p157) target = $region12
    $region11: #{net_forward.4} parent=5 // pred_region
      %s161 = ssub.s32 %s11, 1
      // Predicated region
      $region13: #{net_forward.4} parent=11 // pred_check
        %p162 = pneg %p58
      $region14: #{net_forward.4} parent=11 // pred_check_branch
        %164 = sbr.rel (%p162) target = $region16
      $region15: #{net_forward.4} parent=11 // pred_region
        _
      $region16: #{net_forward.4} parent=11 // pred_fallthru
        _
      // Predicated region
      $region17: #{net_forward.4} parent=11 // pred_check
        %p165 = pneg %p79
      $region18: #{net_forward.4} parent=11 // pred_check_branch
        %167 = sbr.rel (%p165) target = $region20
      $region19: #{net_forward.4} parent=11 // pred_region
        _
      $region20: #{net_forward.4} parent=11 // pred_fallthru
        _
      // Predicated region
      $region21: #{net_forward.4} parent=11 // pred_check
        %p168 = pneg %p100
      $region22: #{net_forward.4} parent=11 // pred_check_branch
        %170 = sbr.rel (%p168) target = $region24
      $region23: #{net_forward.4} parent=11 // pred_region
        _
      $region24: #{net_forward.4} parent=11 // pred_fallthru
        _
      // Predicated region
      $region25: #{net_forward.4} parent=11 // pred_check
        %p171 = pneg %p121
      $region26: #{net_forward.4} parent=11 // pred_check_branch
        %173 = sbr.rel (%p171) target = $region28
      $region27: #{net_forward.4} parent=11 // pred_region
        _
      $region28: #{net_forward.4} parent=11 // pred_fallthru
        _
    $region12: #{net_forward.4} parent=5 // pred_fallthru
      _
    %p174 = scmp.lt.s32.totalorder %s11, 2
    // Predicated region
    $region29: #{net_forward.4} parent=5 // pred_check
      %p175 = pneg %p174
    $region30: #{net_forward.4} parent=5 // pred_check_branch
      %177 = sbr.rel (%p175) target = $region32
    $region31: #{net_forward.4} parent=5 // pred_region
      // Predicated region
      $region33: #{net_forward.4} parent=31 // pred_check
        %p178 = pneg %p31
      $region34: #{net_forward.4} parent=31 // pred_check_branch
        %180 = sbr.rel (%p178) target = $region36
      $region35: #{net_forward.4} parent=31 // pred_region
        %s181 = smul.u32 32, %s11
        %p182 = scmp.lt.s32.totalorder %s181, 63
        %s183 = scalar_select %p182, %s181, 63
        %s184 = smul.addr %s183, 4
        %s185 = scalar_lea.vmem %s0, %s184
        %s186 = smul.u32 32, %s11
      $region36: #{net_forward.4} parent=31 // pred_fallthru
        _
    $region32: #{net_forward.4} parent=5 // pred_fallthru
      _
    %p187 = scmp.le.s32.totalorder 1, %s11
    %p188 = scmp.lt.s32.totalorder %s11, 3
    %p189 = pnand %p187, %p188
    %p190 = pneg %p189
    // Predicated region
    $region37: #{net_forward.4} parent=5 // pred_check
      _
    $region38: #{net_forward.4} parent=5 // pred_check_branch
      %192 = sbr.rel (%p189) target = $region40
    $region39: #{net_forward.4} parent=5 // pred_region
      %s193 = ssub.s32 %s11, 1
      %s194 = smul.u32 32, %s16
      %p195 = scmp.lt.s32.totalorder %s194, 63
      %s196 = scalar_select %p195, %s194, 63
      %s197 = smul.addr %s196, 4
      %s198 = scalar_lea.vmem %s0, %s197
      %p199 = pneg %p37
      %p200 = pneg %p34
      %p201 = pneg %p58
      %p202 = pneg %p55
      %p203 = pneg %p79
      %p204 = pneg %p76
      %p205 = pneg %p100
      %p206 = pneg %p97
      %p207 = pneg %p121
      %p208 = pneg %p118
      %p209 = pneg %p147
      %p210 = pneg %p144
      %s211 = smul.u32 32, %s16
      %p212 = scmp.lt.s32.totalorder %s211, 63
      %s213 = scalar_select %p212, %s211, 63
      %s214 = smul.addr %s213, 4
      %s215 = scalar_lea.vmem %s5, %s214
      %s216 = smul.u32 32, %s16
      %p217 = scmp.lt.s32.totalorder %s216, 63
      %s218 = scalar_select %p217, %s216, 63
      %s219 = smul.addr %s218, 4
      %s220 = scalar_lea.vmem %s0, %s219
      %s221 = smul.u32 32, %s16
      %s222 = smul.u32 32, %s16
      %p223 = scmp.lt.s32.totalorder %s222, 63
      %s224 = scalar_select %p223, %s222, 63
      %s225 = smul.addr %s224, 4
      %s226 = scalar_lea.vmem %s5, %s225
      %s227 = smul.u32 32, %s16
      %v228 = vld [vmem:[%s220] sm:$0xf]
      %v229 = vld [vmem:[%s220 + $0x4] sm:$0xf]
      %v230 = vld [vmem:[%s220 + $0x8] sm:$0xf]
      %v231 = vld [vmem:[%s220 + $0xc] sm:$0xf]
      %v232 = vld [vmem:[%s220 + $0x10] sm:$0xf]
      %v233 = vld [vmem:[%s220 + $0x14] sm:$0xf]
      %v234 = vld [vmem:[%s220 + $0x18] sm:$0xf]
      %v235 = vld [vmem:[%s220 + $0x1c] sm:$0xf]
      %v236 = vld [vmem:[%s220 + $0x20] sm:$0xf]
      %v237 = vld [vmem:[%s220 + $0x24] sm:$0xf]
      %v238 = vld [vmem:[%s220 + $0x28] sm:$0xf]
      %v239 = vld [vmem:[%s220 + $0x2c] sm:$0xf]
      %v240 = vld [vmem:[%s220 + $0x30] sm:$0xf]
      %v241 = vld [vmem:[%s220 + $0x34] sm:$0xf]
      %v242 = vld [vmem:[%s220 + $0x38] sm:$0xf]
      %v243 = vld [vmem:[%s220 + $0x3c] sm:$0xf]
      %v244 = vld [vmem:[%s220 + $0x40] sm:$0xf]
      %v245 = vld [vmem:[%s220 + $0x44] sm:$0xf]
      %v246 = vld [vmem:[%s220 + $0x48] sm:$0xf]
      %v247 = vld [vmem:[%s220 + $0x4c] sm:$0xf]
      %v248 = vld [vmem:[%s220 + $0x50] sm:$0xf]
      %v249 = vld [vmem:[%s220 + $0x54] sm:$0xf]
      %v250 = vld [vmem:[%s220 + $0x58] sm:$0xf]
      %v251 = vld [vmem:[%s220 + $0x5c] sm:$0xf]
      %v252 = vld [vmem:[%s220 + $0x60] sm:$0xf]
      %v253 = vld [vmem:[%s220 + $0x64] sm:$0xf]
      %v254 = vld [vmem:[%s220 + $0x68] sm:$0xf]
      %v255 = vld [vmem:[%s220 + $0x6c] sm:$0xf]
      %v256 = vld [vmem:[%s220 + $0x70] sm:$0xf]
      %v257 = vld [vmem:[%s220 + $0x74] sm:$0xf]
      %v258 = vld [vmem:[%s220 + $0x78] sm:$0xf]
      %v259 = vld [vmem:[%s220 + $0x7c] sm:$0xf]
      %v260 = vld [vmem:[%s1] sm:$0xf]
      %v261 = vld [vmem:[%s1 + $0x4] sm:$0xf]
      %v262 = vld [vmem:[%s1 + $0x8] sm:$0xf]
      %v263 = vld [vmem:[%s1 + $0xc] sm:$0xf]
      %v264 = vld [vmem:[%s1 + $0x10] sm:$0xf]
      %v265 = vld [vmem:[%s1 + $0x14] sm:$0xf]
      %v266 = vld [vmem:[%s1 + $0x18] sm:$0xf]
      %v267 = vld [vmem:[%s1 + $0x1c] sm:$0xf]
      %v268 = vld [vmem:[%s1 + $0x20] sm:$0xf]
      %v269 = vld [vmem:[%s1 + $0x24] sm:$0xf]
      %v270 = vld [vmem:[%s1 + $0x28] sm:$0xf]
      %v271 = vld [vmem:[%s1 + $0x2c] sm:$0xf]
      %v272 = vld [vmem:[%s1 + $0x30] sm:$0xf]
      %v273 = vld [vmem:[%s1 + $0x34] sm:$0xf]
      %v274 = vld [vmem:[%s1 + $0x38] sm:$0xf]
      %v275 = vld [vmem:[%s1 + $0x3c] sm:$0xf]
      %v276 = vld [vmem:[%s2] sm:$0x1]
      %v278 = vperm.slane %v276, 0
      %v312 = vunpack.c.l.b16 %v228
      %v313 = vunpack.c.l.b16 %v229
      %v314 = vunpack.c.l.b16 %v230
      %v315 = vunpack.c.l.b16 %v231
      %v316 = vunpack.c.l.b16 %v232
      %v317 = vunpack.c.l.b16 %v233
      %v318 = vunpack.c.l.b16 %v234
      %v319 = vunpack.c.l.b16 %v235
      %v320 = vunpack.c.l.b16 %v236
      %v321 = vunpack.c.l.b16 %v237
      %v322 = vunpack.c.l.b16 %v238
      %v323 = vunpack.c.l.b16 %v239
      %v324 = vunpack.c.l.b16 %v240
      %v325 = vunpack.c.l.b16 %v241
      %v326 = vunpack.c.l.b16 %v242
      %v327 = vunpack.c.l.b16 %v243
      %v328 = vunpack.c.l.b16 %v244
      %v329 = vunpack.c.l.b16 %v245
      %v330 = vunpack.c.l.b16 %v246
      %v331 = vunpack.c.l.b16 %v247
      %v332 = vunpack.c.l.b16 %v248
      %v333 = vunpack.c.l.b16 %v249
      %v334 = vunpack.c.l.b16 %v250
      %v335 = vunpack.c.l.b16 %v251
      %v336 = vunpack.c.l.b16 %v252
      %v337 = vunpack.c.l.b16 %v253
      %v338 = vunpack.c.l.b16 %v254
      %v339 = vunpack.c.l.b16 %v255
      %v340 = vunpack.c.l.b16 %v256
      %v341 = vunpack.c.l.b16 %v257
      %v342 = vunpack.c.l.b16 %v258
      %v343 = vunpack.c.l.b16 %v259
      %v344 = vpack.c.b16 %v313, %v312
      %v345 = vpack.c.b16 %v315, %v314
      %v346 = vpack.c.b16 %v317, %v316
      %v347 = vpack.c.b16 %v319, %v318
      %v348 = vpack.c.b16 %v321, %v320
      %v349 = vpack.c.b16 %v323, %v322
      %v350 = vpack.c.b16 %v325, %v324
      %v351 = vpack.c.b16 %v327, %v326
      %v352 = vpack.c.b16 %v329, %v328
      %v353 = vpack.c.b16 %v331, %v330
      %v354 = vpack.c.b16 %v333, %v332
      %v355 = vpack.c.b16 %v335, %v334
      %v356 = vpack.c.b16 %v337, %v336
      %v357 = vpack.c.b16 %v339, %v338
      %v358 = vpack.c.b16 %v341, %v340
      %v359 = vpack.c.b16 %v343, %v342
      %v392 = vunpack.c.l.b16 %v260
      %v393 = vunpack.c.l.b16 %v261
      %v394 = vunpack.c.l.b16 %v262
      %v395 = vunpack.c.l.b16 %v263
      %v396 = vunpack.c.l.b16 %v264
      %v397 = vunpack.c.l.b16 %v265
      %v398 = vunpack.c.l.b16 %v266
      %v399 = vunpack.c.l.b16 %v267
      %v400 = vunpack.c.l.b16 %v268
      %v401 = vunpack.c.l.b16 %v269
      %v402 = vunpack.c.l.b16 %v270
      %v403 = vunpack.c.l.b16 %v271
      %v404 = vunpack.c.l.b16 %v272
      %v405 = vunpack.c.l.b16 %v273
      %v406 = vunpack.c.l.b16 %v274
      %v407 = vunpack.c.l.b16 %v275
      %v408 = vpack.c.b16 %v393, %v392
      %v409 = vpack.c.b16 %v395, %v394
      %v410 = vpack.c.b16 %v397, %v396
      %v411 = vpack.c.b16 %v399, %v398
      %v412 = vpack.c.b16 %v401, %v400
      %v413 = vpack.c.b16 %v403, %v402
      %v414 = vpack.c.b16 %v405, %v404
      %v415 = vpack.c.b16 %v407, %v406
      %424 = vmatpush.bf16.msra.mxu0 %v415
      %425 = vmatpush.bf16.msra.mxu0 %v414
      %426 = vmatpush.bf16.msra.mxu0 %v413
      %427 = vmatpush.bf16.msra.mxu0 %v412
      %428 = vmatpush.bf16.msra.mxu0 %v411
      %429 = vmatpush.bf16.msra.mxu0 %v410
      %430 = vmatpush.bf16.msra.mxu0 %v409
      %431 = vmatpush.bf16.msra.mxu0 %v408
      %432 = vmatmul.bf16.gmra.mxu0 %v344
      %v433 = vpop.f32.mrf.mxu0
      %v434 = vadd.f32 %v278, %v433
      %v435 = vpop.f32.mrf.mxu0
      %v436 = vadd.f32 %v278, %v435
      %437 = vmatmul.bf16.gmra.mxu0 %v345
      %v438 = vpop.f32.mrf.mxu0
      %v439 = vadd.f32 %v278, %v438
      %v440 = vpop.f32.mrf.mxu0
      %v441 = vadd.f32 %v278, %v440
      %442 = vmatmul.bf16.gmra.mxu0 %v346
      %v443 = vpop.f32.mrf.mxu0
      %v444 = vadd.f32 %v278, %v443
      %v445 = vpop.f32.mrf.mxu0
      %v446 = vadd.f32 %v278, %v445
      %447 = vmatmul.bf16.gmra.mxu0 %v347
      %v448 = vpop.f32.mrf.mxu0
      %v449 = vadd.f32 %v278, %v448
      %v450 = vpop.f32.mrf.mxu0
      %v451 = vadd.f32 %v278, %v450
      %452 = vmatmul.bf16.gmra.mxu0 %v348
      %v453 = vpop.f32.mrf.mxu0
      %v454 = vadd.f32 %v278, %v453
      %v455 = vpop.f32.mrf.mxu0
      %v456 = vadd.f32 %v278, %v455
      %457 = vmatmul.bf16.gmra.mxu0 %v349
      %v458 = vpop.f32.mrf.mxu0
      %v459 = vadd.f32 %v278, %v458
      %v460 = vpop.f32.mrf.mxu0
      %v461 = vadd.f32 %v278, %v460
      %462 = vmatmul.bf16.gmra.mxu0 %v350
      %v463 = vpop.f32.mrf.mxu0
      %v464 = vadd.f32 %v278, %v463
      %v465 = vpop.f32.mrf.mxu0
      %v466 = vadd.f32 %v278, %v465
      %467 = vmatmul.bf16.gmra.mxu0 %v351
      %v468 = vpop.f32.mrf.mxu0
      %v469 = vadd.f32 %v278, %v468
      %v470 = vpop.f32.mrf.mxu0
      %v471 = vadd.f32 %v278, %v470
      %472 = vmatmul.bf16.gmra.mxu0 %v352
      %v473 = vpop.f32.mrf.mxu0
      %v474 = vadd.f32 %v278, %v473
      %v475 = vpop.f32.mrf.mxu0
      %v476 = vadd.f32 %v278, %v475
      %477 = vmatmul.bf16.gmra.mxu0 %v353
      %v478 = vpop.f32.mrf.mxu0
      %v479 = vadd.f32 %v278, %v478
      %v480 = vpop.f32.mrf.mxu0
      %v481 = vadd.f32 %v278, %v480
      %482 = vmatmul.bf16.gmra.mxu0 %v354
      %v483 = vpop.f32.mrf.mxu0
      %v484 = vadd.f32 %v278, %v483
      %v485 = vpop.f32.mrf.mxu0
      %v486 = vadd.f32 %v278, %v485
      %487 = vmatmul.bf16.gmra.mxu0 %v355
      %v488 = vpop.f32.mrf.mxu0
      %v489 = vadd.f32 %v278, %v488
      %v490 = vpop.f32.mrf.mxu0
      %v491 = vadd.f32 %v278, %v490
      %492 = vmatmul.bf16.gmra.mxu0 %v356
      %v493 = vpop.f32.mrf.mxu0
      %v494 = vadd.f32 %v278, %v493
      %v495 = vpop.f32.mrf.mxu0
      %v496 = vadd.f32 %v278, %v495
      %497 = vmatmul.bf16.gmra.mxu0 %v357
      %v498 = vpop.f32.mrf.mxu0
      %v499 = vadd.f32 %v278, %v498
      %v500 = vpop.f32.mrf.mxu0
      %v501 = vadd.f32 %v278, %v500
      %502 = vmatmul.bf16.gmra.mxu0 %v358
      %v503 = vpop.f32.mrf.mxu0
      %v504 = vadd.f32 %v278, %v503
      %v505 = vpop.f32.mrf.mxu0
      %v506 = vadd.f32 %v278, %v505
      %507 = vmatmul.bf16.gmra.mxu0 %v359
      %v508 = vpop.f32.mrf.mxu0
      %v509 = vadd.f32 %v278, %v508
      %v510 = vpop.f32.mrf.mxu0
      %v511 = vadd.f32 %v278, %v510
      %512 = vdwg.mxu0
      %vm513 = vcmp.ge.f32.partialorder %v434, 0.0
      %vm514 = vcmp.ge.f32.partialorder %v436, 0.0
      %vm515 = vcmp.ge.f32.partialorder %v439, 0.0
      %vm516 = vcmp.ge.f32.partialorder %v441, 0.0
      %vm517 = vcmp.ge.f32.partialorder %v444, 0.0
      %vm518 = vcmp.ge.f32.partialorder %v446, 0.0
      %vm519 = vcmp.ge.f32.partialorder %v449, 0.0
      %vm520 = vcmp.ge.f32.partialorder %v451, 0.0
      %vm521 = vcmp.ge.f32.partialorder %v454, 0.0
      %vm522 = vcmp.ge.f32.partialorder %v456, 0.0
      %vm523 = vcmp.ge.f32.partialorder %v459, 0.0
      %vm524 = vcmp.ge.f32.partialorder %v461, 0.0
      %vm525 = vcmp.ge.f32.partialorder %v464, 0.0
      %vm526 = vcmp.ge.f32.partialorder %v466, 0.0
      %vm527 = vcmp.ge.f32.partialorder %v469, 0.0
      %vm528 = vcmp.ge.f32.partialorder %v471, 0.0
      %vm529 = vcmp.ge.f32.partialorder %v474, 0.0
      %vm530 = vcmp.ge.f32.partialorder %v476, 0.0
      %vm531 = vcmp.ge.f32.partialorder %v479, 0.0
      %vm532 = vcmp.ge.f32.partialorder %v481, 0.0
      %vm533 = vcmp.ge.f32.partialorder %v484, 0.0
      %vm534 = vcmp.ge.f32.partialorder %v486, 0.0
      %vm535 = vcmp.ge.f32.partialorder %v489, 0.0
      %vm536 = vcmp.ge.f32.partialorder %v491, 0.0
      %vm537 = vcmp.ge.f32.partialorder %v494, 0.0
      %vm538 = vcmp.ge.f32.partialorder %v496, 0.0
      %vm539 = vcmp.ge.f32.partialorder %v499, 0.0
      %vm540 = vcmp.ge.f32.partialorder %v501, 0.0
      %vm541 = vcmp.ge.f32.partialorder %v504, 0.0
      %vm542 = vcmp.ge.f32.partialorder %v506, 0.0
      %vm543 = vcmp.ge.f32.partialorder %v509, 0.0
      %vm544 = vcmp.ge.f32.partialorder %v511, 0.0
      %v545 = vmul.f32 %v434, 0.01
      %v546 = vmul.f32 %v436, 0.01
      %v547 = vmul.f32 %v439, 0.01
      %v548 = vmul.f32 %v441, 0.01
      %v549 = vmul.f32 %v444, 0.01
      %v550 = vmul.f32 %v446, 0.01
      %v551 = vmul.f32 %v449, 0.01
      %v552 = vmul.f32 %v451, 0.01
      %v553 = vmul.f32 %v454, 0.01
      %v554 = vmul.f32 %v456, 0.01
      %v555 = vmul.f32 %v459, 0.01
      %v556 = vmul.f32 %v461, 0.01
      %v557 = vmul.f32 %v464, 0.01
      %v558 = vmul.f32 %v466, 0.01
      %v559 = vmul.f32 %v469, 0.01
      %v560 = vmul.f32 %v471, 0.01
      %v561 = vmul.f32 %v474, 0.01
      %v562 = vmul.f32 %v476, 0.01
      %v563 = vmul.f32 %v479, 0.01
      %v564 = vmul.f32 %v481, 0.01
      %v565 = vmul.f32 %v484, 0.01
      %v566 = vmul.f32 %v486, 0.01
      %v567 = vmul.f32 %v489, 0.01
      %v568 = vmul.f32 %v491, 0.01
      %v569 = vmul.f32 %v494, 0.01
      %v570 = vmul.f32 %v496, 0.01
      %v571 = vmul.f32 %v499, 0.01
      %v572 = vmul.f32 %v501, 0.01
      %v573 = vmul.f32 %v504, 0.01
      %v574 = vmul.f32 %v506, 0.01
      %v575 = vmul.f32 %v509, 0.01
      %v576 = vmul.f32 %v511, 0.01
      %v577 = vsel %vm513, %v434, %v545
      %v578 = vsel %vm514, %v436, %v546
      %v579 = vsel %vm515, %v439, %v547
      %v580 = vsel %vm516, %v441, %v548
      %v581 = vsel %vm517, %v444, %v549
      %v582 = vsel %vm518, %v446, %v550
      %v583 = vsel %vm519, %v449, %v551
      %v584 = vsel %vm520, %v451, %v552
      %v585 = vsel %vm521, %v454, %v553
      %v586 = vsel %vm522, %v456, %v554
      %v587 = vsel %vm523, %v459, %v555
      %v588 = vsel %vm524, %v461, %v556
      %v589 = vsel %vm525, %v464, %v557
      %v590 = vsel %vm526, %v466, %v558
      %v591 = vsel %vm527, %v469, %v559
      %v592 = vsel %vm528, %v471, %v560
      %v593 = vsel %vm529, %v474, %v561
      %v594 = vsel %vm530, %v476, %v562
      %v595 = vsel %vm531, %v479, %v563
      %v596 = vsel %vm532, %v481, %v564
      %v597 = vsel %vm533, %v484, %v565
      %v598 = vsel %vm534, %v486, %v566
      %v599 = vsel %vm535, %v489, %v567
      %v600 = vsel %vm536, %v491, %v568
      %v601 = vsel %vm537, %v494, %v569
      %v602 = vsel %vm538, %v496, %v570
      %v603 = vsel %vm539, %v499, %v571
      %v604 = vsel %vm540, %v501, %v572
      %v605 = vsel %vm541, %v504, %v573
      %v606 = vsel %vm542, %v506, %v574
      %v607 = vsel %vm543, %v509, %v575
      %v608 = vsel %vm544, %v511, %v576
      %v609 = vld [vmem:[%s3] sm:$0x1]
      %v611 = vperm.slane %v609, 0
      %v613 = vmul.f32 %v577, %v611
      %v614 = vmul.f32 %v578, %v611
      %v615 = vmul.f32 %v579, %v611
      %v616 = vmul.f32 %v580, %v611
      %v617 = vmul.f32 %v581, %v611
      %v618 = vmul.f32 %v582, %v611
      %v619 = vmul.f32 %v583, %v611
      %v620 = vmul.f32 %v584, %v611
      %v621 = vmul.f32 %v585, %v611
      %v622 = vmul.f32 %v586, %v611
      %v623 = vmul.f32 %v587, %v611
      %v624 = vmul.f32 %v588, %v611
      %v625 = vmul.f32 %v589, %v611
      %v626 = vmul.f32 %v590, %v611
      %v627 = vmul.f32 %v591, %v611
      %v628 = vmul.f32 %v592, %v611
      %v629 = vmul.f32 %v593, %v611
      %v630 = vmul.f32 %v594, %v611
      %v631 = vmul.f32 %v595, %v611
      %v632 = vmul.f32 %v596, %v611
      %v633 = vmul.f32 %v597, %v611
      %v634 = vmul.f32 %v598, %v611
      %v635 = vmul.f32 %v599, %v611
      %v636 = vmul.f32 %v600, %v611
      %v637 = vmul.f32 %v601, %v611
      %v638 = vmul.f32 %v602, %v611
      %v639 = vmul.f32 %v603, %v611
      %v640 = vmul.f32 %v604, %v611
      %v641 = vmul.f32 %v605, %v611
      %v642 = vmul.f32 %v606, %v611
      %v643 = vmul.f32 %v607, %v611
      %v644 = vmul.f32 %v608, %v611
      %v645 = vld [vmem:[%s4] sm:$0x1]
      %v647 = vperm.slane %v645, 0
      %v649 = vadd.f32 %v613, %v647
      %v650 = vadd.f32 %v614, %v647
      %v651 = vadd.f32 %v615, %v647
      %v652 = vadd.f32 %v616, %v647
      %v653 = vadd.f32 %v617, %v647
      %v654 = vadd.f32 %v618, %v647
      %v655 = vadd.f32 %v619, %v647
      %v656 = vadd.f32 %v620, %v647
      %v657 = vadd.f32 %v621, %v647
      %v658 = vadd.f32 %v622, %v647
      %v659 = vadd.f32 %v623, %v647
      %v660 = vadd.f32 %v624, %v647
      %v661 = vadd.f32 %v625, %v647
      %v662 = vadd.f32 %v626, %v647
      %v663 = vadd.f32 %v627, %v647
      %v664 = vadd.f32 %v628, %v647
      %v665 = vadd.f32 %v629, %v647
      %v666 = vadd.f32 %v630, %v647
      %v667 = vadd.f32 %v631, %v647
      %v668 = vadd.f32 %v632, %v647
      %v669 = vadd.f32 %v633, %v647
      %v670 = vadd.f32 %v634, %v647
      %v671 = vadd.f32 %v635, %v647
      %v672 = vadd.f32 %v636, %v647
      %v673 = vadd.f32 %v637, %v647
      %v674 = vadd.f32 %v638, %v647
      %v675 = vadd.f32 %v639, %v647
      %v676 = vadd.f32 %v640, %v647
      %v677 = vadd.f32 %v641, %v647
      %v678 = vadd.f32 %v642, %v647
      %v679 = vadd.f32 %v643, %v647
      %v680 = vadd.f32 %v644, %v647
      %v681 = vpack.c.bf16 %v649, %v649
      %v682 = vpack.c.bf16 %v650, %v650
      %v683 = vpack.c.bf16 %v651, %v651
      %v684 = vpack.c.bf16 %v652, %v652
      %v685 = vpack.c.bf16 %v653, %v653
      %v686 = vpack.c.bf16 %v654, %v654
      %v687 = vpack.c.bf16 %v655, %v655
      %v688 = vpack.c.bf16 %v656, %v656
      %v689 = vpack.c.bf16 %v657, %v657
      %v690 = vpack.c.bf16 %v658, %v658
      %v691 = vpack.c.bf16 %v659, %v659
      %v692 = vpack.c.bf16 %v660, %v660
      %v693 = vpack.c.bf16 %v661, %v661
      %v694 = vpack.c.bf16 %v662, %v662
      %v695 = vpack.c.bf16 %v663, %v663
      %v696 = vpack.c.bf16 %v664, %v664
      %v697 = vpack.c.bf16 %v665, %v665
      %v698 = vpack.c.bf16 %v666, %v666
      %v699 = vpack.c.bf16 %v667, %v667
      %v700 = vpack.c.bf16 %v668, %v668
      %v701 = vpack.c.bf16 %v669, %v669
      %v702 = vpack.c.bf16 %v670, %v670
      %v703 = vpack.c.bf16 %v671, %v671
      %v704 = vpack.c.bf16 %v672, %v672
      %v705 = vpack.c.bf16 %v673, %v673
      %v706 = vpack.c.bf16 %v674, %v674
      %v707 = vpack.c.bf16 %v675, %v675
      %v708 = vpack.c.bf16 %v676, %v676
      %v709 = vpack.c.bf16 %v677, %v677
      %v710 = vpack.c.bf16 %v678, %v678
      %v711 = vpack.c.bf16 %v679, %v679
      %v712 = vpack.c.bf16 %v680, %v680
      %713 = vst [vmem:[%s226] sm:$0xf] %v681
      %714 = vst [vmem:[%s226 + $0x4] sm:$0xf] %v682
      %715 = vst [vmem:[%s226 + $0x8] sm:$0xf] %v683
      %716 = vst [vmem:[%s226 + $0xc] sm:$0xf] %v684
      %717 = vst [vmem:[%s226 + $0x10] sm:$0xf] %v685
      %718 = vst [vmem:[%s226 + $0x14] sm:$0xf] %v686
      %719 = vst [vmem:[%s226 + $0x18] sm:$0xf] %v687
      %720 = vst [vmem:[%s226 + $0x1c] sm:$0xf] %v688
      %721 = vst [vmem:[%s226 + $0x20] sm:$0xf] %v689
      %722 = vst [vmem:[%s226 + $0x24] sm:$0xf] %v690
      %723 = vst [vmem:[%s226 + $0x28] sm:$0xf] %v691
      %724 = vst [vmem:[%s226 + $0x2c] sm:$0xf] %v692
      %725 = vst [vmem:[%s226 + $0x30] sm:$0xf] %v693
      %726 = vst [vmem:[%s226 + $0x34] sm:$0xf] %v694
      %727 = vst [vmem:[%s226 + $0x38] sm:$0xf] %v695
      %728 = vst [vmem:[%s226 + $0x3c] sm:$0xf] %v696
      %729 = vst [vmem:[%s226 + $0x40] sm:$0xf] %v697
      %730 = vst [vmem:[%s226 + $0x44] sm:$0xf] %v698
      %731 = vst [vmem:[%s226 + $0x48] sm:$0xf] %v699
      %732 = vst [vmem:[%s226 + $0x4c] sm:$0xf] %v700
      %733 = vst [vmem:[%s226 + $0x50] sm:$0xf] %v701
      %734 = vst [vmem:[%s226 + $0x54] sm:$0xf] %v702
      %735 = vst [vmem:[%s226 + $0x58] sm:$0xf] %v703
      %736 = vst [vmem:[%s226 + $0x5c] sm:$0xf] %v704
      %737 = vst [vmem:[%s226 + $0x60] sm:$0xf] %v705
      %738 = vst [vmem:[%s226 + $0x64] sm:$0xf] %v706
      %739 = vst [vmem:[%s226 + $0x68] sm:$0xf] %v707
      %740 = vst [vmem:[%s226 + $0x6c] sm:$0xf] %v708
      %741 = vst [vmem:[%s226 + $0x70] sm:$0xf] %v709
      %742 = vst [vmem:[%s226 + $0x74] sm:$0xf] %v710
      %743 = vst [vmem:[%s226 + $0x78] sm:$0xf] %v711
      %744 = vst [vmem:[%s226 + $0x7c] sm:$0xf] %v712
      %s745 = smul.u32 32, %s16
      %p746 = scmp.lt.s32.totalorder %s745, 63
      %s747 = scalar_select %p746, %s745, 63
      %s748 = smul.addr %s747, 4
      %s749 = scalar_lea.vmem %s5, %s748
      // Predicated region
      $region41: #{net_forward.4} parent=39 // pred_check
        %p750 = pneg %p144
      $region42: #{net_forward.4} parent=39 // pred_check_branch
        %752 = sbr.rel (%p750) target = $region44
      $region43: #{net_forward.4} parent=39 // pred_region
        %s753 = smul.u32 32, %s16
      $region44: #{net_forward.4} parent=39 // pred_fallthru
        _
    $region40: #{net_forward.4} parent=5 // pred_fallthru
      _
    %p754 = scmp.le.s32.totalorder 2, %s11
    // Predicated region
    $region45: #{net_forward.4} parent=5 // pred_check
      %p755 = pneg %p754
    $region46: #{net_forward.4} parent=5 // pred_check_branch
      %757 = sbr.rel (%p755) target = $region48
    $region47: #{net_forward.4} parent=5 // pred_region
      %s758 = ssub.s32 %s11, 2
      // Predicated region
      $region49: #{net_forward.4} parent=47 // pred_check
        %p759 = pneg %p150
      $region50: #{net_forward.4} parent=47 // pred_check_branch
        %761 = sbr.rel (%p759) target = $region52
      $region51: #{net_forward.4} parent=47 // pred_region
        %s762 = smul.u32 32, %s17
        %p763 = scmp.lt.s32.totalorder %s762, 63
        %s764 = scalar_select %p763, %s762, 63
        %s765 = smul.addr %s764, 4
        %s766 = scalar_lea.vmem %s5, %s765
      $region52: #{net_forward.4} parent=47 // pred_fallthru
        _
    $region48: #{net_forward.4} parent=5 // pred_fallthru
      _
  $region6: #{net_forward.4} parent=0 // loop_footer
    %s15 = sadd.s32 1, %s11
  $region7: #{net_forward.4} parent=0 // loop_footer_branch
    %10 = sbr.rel target = $region3
  $region8: #{net_forward.4} parent=0 // loop_exit
    _

// kernel: net_forward.5
$region0: #{net_forward.5}
  #allocation0 [shape = 'u32[]', space=smem, size = 0x4, offset = 0x4, fixed_abs, tag = 'smem constant byte address 0x4 - core index']
  #allocation1 [shape = 'u32[72,128]{1,0:T(1,128)}', space=vmem, size = 0x9000, scoped, tag = 'internal scratch']
  %s0 = inlined_call_operand.vmem [shape: bf16[112,1152], index: 0, kind: input, shape index: {}]
  %s1 = inlined_call_operand.vmem [shape: bf16[1152,256], index: 1, kind: input, shape index: {}]
  %s2 = inlined_call_operand.vmem [shape: f32[1,256], index: 2, kind: input, shape index: {}]
  %s3 = inlined_call_operand.vmem [shape: f32[1,256], index: 3, kind: input, shape index: {}]
  %s4 = inlined_call_operand.vmem [shape: f32[1,256], index: 4, kind: input, shape index: {}]
  %s5 = inlined_call_operand.vmem [shape: bf16[112,256], index: 5, kind: output, shape index: {}]
  %s6 = sld [smem:[#allocation0]]
  $region30: #{net_forward.5} parent=0
    _
  %s8 = ssub.s32 1, %s6
  %s9 = scalar_select 0, %s8, %s6
  // Predicated region
  $region2: #{net_forward.5} parent=0 // pred_check
    _
  $region3: #{net_forward.5} parent=0 // pred_check_branch
    %11 = sbr.rel (0) target = $region5
  $region4: #{net_forward.5} parent=0 // pred_region
    _
  $region5: #{net_forward.5} parent=0 // pred_fallthru
    _
  // Predicated region
  $region6: #{net_forward.5} parent=0 // pred_check
    _
  $region7: #{net_forward.5} parent=0 // pred_check_branch
    %13 = sbr.rel (0) target = $region9
  $region8: #{net_forward.5} parent=0 // pred_region
    _
  $region9: #{net_forward.5} parent=0 // pred_fallthru
    _
  // Predicated region
  $region10: #{net_forward.5} parent=0 // pred_check
    _
  $region11: #{net_forward.5} parent=0 // pred_check_branch
    %15 = sbr.rel (0) target = $region13
  $region12: #{net_forward.5} parent=0 // pred_region
    _
  $region13: #{net_forward.5} parent=0 // pred_fallthru
    _
  // Predicated region
  $region14: #{net_forward.5} parent=0 // pred_check
    _
  $region15: #{net_forward.5} parent=0 // pred_check_branch
    %17 = sbr.rel (0) target = $region17
  $region16: #{net_forward.5} parent=0 // pred_region
    _
  $region17: #{net_forward.5} parent=0 // pred_fallthru
    _
  // Predicated region
  $region18: #{net_forward.5} parent=0 // pred_check
    _
  $region19: #{net_forward.5} parent=0 // pred_check_branch
    %19 = sbr.rel (0) target = $region21
  $region20: #{net_forward.5} parent=0 // pred_region
    _
  $region21: #{net_forward.5} parent=0 // pred_fallthru
    _
  %v20 = vld [vmem:[%s0] sm:$0xff]
  %v21 = vld [vmem:[%s0 + $0x8] sm:$0xff]
  %v22 = vld [vmem:[%s0 + $0x10] sm:$0xff]
  %v23 = vld [vmem:[%s0 + $0x18] sm:$0xff]
  %v24 = vld [vmem:[%s0 + $0x20] sm:$0xf]
  %v25 = vld [vmem:[%s0 + $0x24] sm:$0xff]
  %v26 = vld [vmem:[%s0 + $0x2c] sm:$0xff]
  %v27 = vld [vmem:[%s0 + $0x34] sm:$0xff]
  %v28 = vld [vmem:[%s0 + $0x3c] sm:$0xff]
  %v29 = vld [vmem:[%s0 + $0x44] sm:$0xf]
  %v30 = vld [vmem:[%s0 + $0x48] sm:$0xff]
  %v31 = vld [vmem:[%s0 + $0x50] sm:$0xff]
  %v32 = vld [vmem:[%s0 + $0x58] sm:$0xff]
  %v33 = vld [vmem:[%s0 + $0x60] sm:$0xff]
  %v34 = vld [vmem:[%s0 + $0x68] sm:$0xf]
  %v35 = vld [vmem:[%s0 + $0x6c] sm:$0xff]
  %v36 = vld [vmem:[%s0 + $0x74] sm:$0xff]
  %v37 = vld [vmem:[%s0 + $0x7c] sm:$0xff]
  %v38 = vld [vmem:[%s0 + $0x84] sm:$0xff]
  %v39 = vld [vmem:[%s0 + $0x8c] sm:$0xf]
  %v40 = vld [vmem:[%s0 + $0x90] sm:$0xff]
  %v41 = vld [vmem:[%s0 + $0x98] sm:$0xff]
  %v42 = vld [vmem:[%s0 + $0xa0] sm:$0xff]
  %v43 = vld [vmem:[%s0 + $0xa8] sm:$0xff]
  %v44 = vld [vmem:[%s0 + $0xb0] sm:$0xf]
  %v45 = vld [vmem:[%s0 + $0xb4] sm:$0xff]
  %v46 = vld [vmem:[%s0 + $0xbc] sm:$0xff]
  %v47 = vld [vmem:[%s0 + $0xc4] sm:$0xff]
  %v48 = vld [vmem:[%s0 + $0xcc] sm:$0xff]
  %v49 = vld [vmem:[%s0 + $0xd4] sm:$0xf]
  %v50 = vld [vmem:[%s0 + $0xd8] sm:$0xff]
  %v51 = vld [vmem:[%s0 + $0xe0] sm:$0xff]
  %v52 = vld [vmem:[%s0 + $0xe8] sm:$0xff]
  %v53 = vld [vmem:[%s0 + $0xf0] sm:$0xff]
  %v54 = vld [vmem:[%s0 + $0xf8] sm:$0xf]
  %v55 = vld [vmem:[%s0 + $0xfc] sm:$0xff]
  %v56 = vld [vmem:[%s0 + $0x104] sm:$0xff]
  %v57 = vld [vmem:[%s0 + $0x10c] sm:$0xff]
  %v58 = vld [vmem:[%s0 + $0x114] sm:$0xff]
  %v59 = vld [vmem:[%s0 + $0x11c] sm:$0xf]
  %v60 = vld [vmem:[%s0 + $0x120] sm:$0xff]
  %v61 = vld [vmem:[%s0 + $0x128] sm:$0xff]
  %v62 = vld [vmem:[%s0 + $0x130] sm:$0xff]
  %v63 = vld [vmem:[%s0 + $0x138] sm:$0xff]
  %v64 = vld [vmem:[%s0 + $0x140] sm:$0xf]
  %v65 = vld [vmem:[%s0 + $0x144] sm:$0xff]
  %v66 = vld [vmem:[%s0 + $0x14c] sm:$0xff]
  %v67 = vld [vmem:[%s0 + $0x154] sm:$0xff]
  %v68 = vld [vmem:[%s0 + $0x15c] sm:$0xff]
  %v69 = vld [vmem:[%s0 + $0x164] sm:$0xf]
  %v70 = vld [vmem:[%s0 + $0x168] sm:$0xff]
  %v71 = vld [vmem:[%s0 + $0x170] sm:$0xff]
  %v72 = vld [vmem:[%s0 + $0x178] sm:$0xff]
  %v73 = vld [vmem:[%s0 + $0x180] sm:$0xff]
  %v74 = vld [vmem:[%s0 + $0x188] sm:$0xf]
  %v75 = vld [vmem:[%s0 + $0x18c] sm:$0xff]
  %v76 = vld [vmem:[%s0 + $0x194] sm:$0xff]
  %v77 = vld [vmem:[%s0 + $0x19c] sm:$0xff]
  %v78 = vld [vmem:[%s0 + $0x1a4] sm:$0xff]
  %v79 = vld [vmem:[%s0 + $0x1ac] sm:$0xf]
  %v80 = vld [vmem:[%s0 + $0x1b0] sm:$0xff]
  %v81 = vld [vmem:[%s0 + $0x1b8] sm:$0xff]
  %v82 = vld [vmem:[%s0 + $0x1c0] sm:$0xff]
  %v83 = vld [vmem:[%s0 + $0x1c8] sm:$0xff]
  %v84 = vld [vmem:[%s0 + $0x1d0] sm:$0xf]
  %v85 = vld [vmem:[%s0 + $0x1d4] sm:$0xff]
  %v86 = vld [vmem:[%s0 + $0x1dc] sm:$0xff]
  %v87 = vld [vmem:[%s0 + $0x1e4] sm:$0xff]
  %v88 = vld [vmem:[%s0 + $0x1ec] sm:$0xff]
  %v89 = vld [vmem:[%s0 + $0x1f4] sm:$0xf]
  %v90 = vld [vmem:[%s1] sm:$0xff]
  %v91 = vld [vmem:[%s1 + $0x8] sm:$0xff]
  %v92 = vld [vmem:[%s1 + $0x10] sm:$0xff]
  %v93 = vld [vmem:[%s1 + $0x18] sm:$0xff]
  %v94 = vld [vmem:[%s1 + $0x20] sm:$0xff]
  %v95 = vld [vmem:[%s1 + $0x28] sm:$0xff]
  %v96 = vld [vmem:[%s1 + $0x30] sm:$0xff]
  %v97 = vld [vmem:[%s1 + $0x38] sm:$0xff]
  %v98 = vld [vmem:[%s1 + $0x40] sm:$0xff]
  %v99 = vld [vmem:[%s1 + $0x48] sm:$0xff]
  %v100 = vld [vmem:[%s1 + $0x50] sm:$0xff]
  %v101 = vld [vmem:[%s1 + $0x58] sm:$0xff]
  %v102 = vld [vmem:[%s1 + $0x60] sm:$0xff]
  %v103 = vld [vmem:[%s1 + $0x68] sm:$0xff]
  %v104 = vld [vmem:[%s1 + $0x70] sm:$0xff]
  %v105 = vld [vmem:[%s1 + $0x78] sm:$0xff]
  %v106 = vld [vmem:[%s1 + $0x80] sm:$0xff]
  %v107 = vld [vmem:[%s1 + $0x88] sm:$0xff]
  %v108 = vld [vmem:[%s1 + $0x90] sm:$0xff]
  %v109 = vld [vmem:[%s1 + $0x98] sm:$0xff]
  %v110 = vld [vmem:[%s1 + $0xa0] sm:$0xff]
  %v111 = vld [vmem:[%s1 + $0xa8] sm:$0xff]
  %v112 = vld [vmem:[%s1 + $0xb0] sm:$0xff]
  %v113 = vld [vmem:[%s1 + $0xb8] sm:$0xff]
  %v114 = vld [vmem:[%s1 + $0xc0] sm:$0xff]
  %v115 = vld [vmem:[%s1 + $0xc8] sm:$0xff]
  %v116 = vld [vmem:[%s1 + $0xd0] sm:$0xff]
  %v117 = vld [vmem:[%s1 + $0xd8] sm:$0xff]
  %v118 = vld [vmem:[%s1 + $0xe0] sm:$0xff]
  %v119 = vld [vmem:[%s1 + $0xe8] sm:$0xff]
  %v120 = vld [vmem:[%s1 + $0xf0] sm:$0xff]
  %v121 = vld [vmem:[%s1 + $0xf8] sm:$0xff]
  %v122 = vld [vmem:[%s1 + $0x100] sm:$0xff]
  %v123 = vld [vmem:[%s1 + $0x108] sm:$0xff]
  %v124 = vld [vmem:[%s1 + $0x110] sm:$0xff]
  %v125 = vld [vmem:[%s1 + $0x118] sm:$0xff]
  %v126 = vld [vmem:[%s1 + $0x120] sm:$0xff]
  %v127 = vld [vmem:[%s1 + $0x128] sm:$0xff]
  %v128 = vld [vmem:[%s1 + $0x130] sm:$0xff]
  %v129 = vld [vmem:[%s1 + $0x138] sm:$0xff]
  %v130 = vld [vmem:[%s1 + $0x140] sm:$0xff]
  %v131 = vld [vmem:[%s1 + $0x148] sm:$0xff]
  %v132 = vld [vmem:[%s1 + $0x150] sm:$0xff]
  %v133 = vld [vmem:[%s1 + $0x158] sm:$0xff]
  %v134 = vld [vmem:[%s1 + $0x160] sm:$0xff]
  %v135 = vld [vmem:[%s1 + $0x168] sm:$0xff]
  %v136 = vld [vmem:[%s1 + $0x170] sm:$0xff]
  %v137 = vld [vmem:[%s1 + $0x178] sm:$0xff]
  %v138 = vld [vmem:[%s1 + $0x180] sm:$0xff]
  %v139 = vld [vmem:[%s1 + $0x188] sm:$0xff]
  %v140 = vld [vmem:[%s1 + $0x190] sm:$0xff]
  %v141 = vld [vmem:[%s1 + $0x198] sm:$0xff]
  %v142 = vld [vmem:[%s1 + $0x1a0] sm:$0xff]
  %v143 = vld [vmem:[%s1 + $0x1a8] sm:$0xff]
  %v144 = vld [vmem:[%s1 + $0x1b0] sm:$0xff]
  %v145 = vld [vmem:[%s1 + $0x1b8] sm:$0xff]
  %v146 = vld [vmem:[%s1 + $0x1c0] sm:$0xff]
  %v147 = vld [vmem:[%s1 + $0x1c8] sm:$0xff]
  %v148 = vld [vmem:[%s1 + $0x1d0] sm:$0xff]
  %v149 = vld [vmem:[%s1 + $0x1d8] sm:$0xff]
  %v150 = vld [vmem:[%s1 + $0x1e0] sm:$0xff]
  %v151 = vld [vmem:[%s1 + $0x1e8] sm:$0xff]
  %v152 = vld [vmem:[%s1 + $0x1f0] sm:$0xff]
  %v153 = vld [vmem:[%s1 + $0x1f8] sm:$0xff]
  %v154 = vld [vmem:[%s1 + $0x200] sm:$0xff]
  %v155 = vld [vmem:[%s1 + $0x208] sm:$0xff]
  %v156 = vld [vmem:[%s1 + $0x210] sm:$0xff]
  %v157 = vld [vmem:[%s1 + $0x218] sm:$0xff]
  %v158 = vld [vmem:[%s1 + $0x220] sm:$0xff]
  %v159 = vld [vmem:[%s1 + $0x228] sm:$0xff]
  %v160 = vld [vmem:[%s1 + $0x230] sm:$0xff]
  %v161 = vld [vmem:[%s1 + $0x238] sm:$0xff]
  %v162 = vld [vmem:[%s1 + $0x240] sm:$0xff]
  %v163 = vld [vmem:[%s1 + $0x248] sm:$0xff]
  %v164 = vld [vmem:[%s1 + $0x250] sm:$0xff]
  %v165 = vld [vmem:[%s1 + $0x258] sm:$0xff]
  %v166 = vld [vmem:[%s1 + $0x260] sm:$0xff]
  %v167 = vld [vmem:[%s1 + $0x268] sm:$0xff]
  %v168 = vld [vmem:[%s1 + $0x270] sm:$0xff]
  %v169 = vld [vmem:[%s1 + $0x278] sm:$0xff]
  %v170 = vld [vmem:[%s1 + $0x280] sm:$0xff]
  %v171 = vld [vmem:[%s1 + $0x288] sm:$0xff]
  %v172 = vld [vmem:[%s1 + $0x290] sm:$0xff]
  %v173 = vld [vmem:[%s1 + $0x298] sm:$0xff]
  %v174 = vld [vmem:[%s1 + $0x2a0] sm:$0xff]
  %v175 = vld [vmem:[%s1 + $0x2a8] sm:$0xff]
  %v176 = vld [vmem:[%s1 + $0x2b0] sm:$0xff]
  %v177 = vld [vmem:[%s1 + $0x2b8] sm:$0xff]
  %v178 = vld [vmem:[%s1 + $0x2c0] sm:$0xff]
  %v179 = vld [vmem:[%s1 + $0x2c8] sm:$0xff]
  %v180 = vld [vmem:[%s1 + $0x2d0] sm:$0xff]
  %v181 = vld [vmem:[%s1 + $0x2d8] sm:$0xff]
  %v182 = vld [vmem:[%s1 + $0x2e0] sm:$0xff]
  %v183 = vld [vmem:[%s1 + $0x2e8] sm:$0xff]
  %v184 = vld [vmem:[%s1 + $0x2f0] sm:$0xff]
  %v185 = vld [vmem:[%s1 + $0x2f8] sm:$0xff]
  %v186 = vld [vmem:[%s1 + $0x300] sm:$0xff]
  %v187 = vld [vmem:[%s1 + $0x308] sm:$0xff]
  %v188 = vld [vmem:[%s1 + $0x310] sm:$0xff]
  %v189 = vld [vmem:[%s1 + $0x318] sm:$0xff]
  %v190 = vld [vmem:[%s1 + $0x320] sm:$0xff]
  %v191 = vld [vmem:[%s1 + $0x328] sm:$0xff]
  %v192 = vld [vmem:[%s1 + $0x330] sm:$0xff]
  %v193 = vld [vmem:[%s1 + $0x338] sm:$0xff]
  %v194 = vld [vmem:[%s1 + $0x340] sm:$0xff]
  %v195 = vld [vmem:[%s1 + $0x348] sm:$0xff]
  %v196 = vld [vmem:[%s1 + $0x350] sm:$0xff]
  %v197 = vld [vmem:[%s1 + $0x358] sm:$0xff]
  %v198 = vld [vmem:[%s1 + $0x360] sm:$0xff]
  %v199 = vld [vmem:[%s1 + $0x368] sm:$0xff]
  %v200 = vld [vmem:[%s1 + $0x370] sm:$0xff]
  %v201 = vld [vmem:[%s1 + $0x378] sm:$0xff]
  %v202 = vld [vmem:[%s1 + $0x380] sm:$0xff]
  %v203 = vld [vmem:[%s1 + $0x388] sm:$0xff]
  %v204 = vld [vmem:[%s1 + $0x390] sm:$0xff]
  %v205 = vld [vmem:[%s1 + $0x398] sm:$0xff]
  %v206 = vld [vmem:[%s1 + $0x3a0] sm:$0xff]
  %v207 = vld [vmem:[%s1 + $0x3a8] sm:$0xff]
  %v208 = vld [vmem:[%s1 + $0x3b0] sm:$0xff]
  %v209 = vld [vmem:[%s1 + $0x3b8] sm:$0xff]
  %v210 = vld [vmem:[%s1 + $0x3c0] sm:$0xff]
  %v211 = vld [vmem:[%s1 + $0x3c8] sm:$0xff]
  %v212 = vld [vmem:[%s1 + $0x3d0] sm:$0xff]
  %v213 = vld [vmem:[%s1 + $0x3d8] sm:$0xff]
  %v214 = vld [vmem:[%s1 + $0x3e0] sm:$0xff]
  %v215 = vld [vmem:[%s1 + $0x3e8] sm:$0xff]
  %v216 = vld [vmem:[%s1 + $0x3f0] sm:$0xff]
  %v217 = vld [vmem:[%s1 + $0x3f8] sm:$0xff]
  %v218 = vld [vmem:[%s1 + $0x400] sm:$0xff]
  %v219 = vld [vmem:[%s1 + $0x408] sm:$0xff]
  %v220 = vld [vmem:[%s1 + $0x410] sm:$0xff]
  %v221 = vld [vmem:[%s1 + $0x418] sm:$0xff]
  %v222 = vld [vmem:[%s1 + $0x420] sm:$0xff]
  %v223 = vld [vmem:[%s1 + $0x428] sm:$0xff]
  %v224 = vld [vmem:[%s1 + $0x430] sm:$0xff]
  %v225 = vld [vmem:[%s1 + $0x438] sm:$0xff]
  %v226 = vld [vmem:[%s1 + $0x440] sm:$0xff]
  %v227 = vld [vmem:[%s1 + $0x448] sm:$0xff]
  %v228 = vld [vmem:[%s1 + $0x450] sm:$0xff]
  %v229 = vld [vmem:[%s1 + $0x458] sm:$0xff]
  %v230 = vld [vmem:[%s1 + $0x460] sm:$0xff]
  %v231 = vld [vmem:[%s1 + $0x468] sm:$0xff]
  %v232 = vld [vmem:[%s1 + $0x470] sm:$0xff]
  %v233 = vld [vmem:[%s1 + $0x478] sm:$0xff]
  %v234 = vld [vmem:[%s2] sm:$0x3]
  %v236 = vperm.slane %v234, 0
  %v237 = vperm.slane %v234, 1
  %v310 = vunpack.c.l.b16 %v20
  %v311 = vunpack.c.h.b16 %v20
  %v312 = vunpack.c.l.b16 %v21
  %v313 = vunpack.c.h.b16 %v21
  %v314 = vunpack.c.l.b16 %v22
  %v315 = vunpack.c.h.b16 %v22
  %v316 = vunpack.c.l.b16 %v23
  %v317 = vunpack.c.h.b16 %v23
  %v318 = vunpack.c.l.b16 %v24
  %v319 = vunpack.c.l.b16 %v25
  %v320 = vunpack.c.h.b16 %v25
  %v321 = vunpack.c.l.b16 %v26
  %v322 = vunpack.c.h.b16 %v26
  %v323 = vunpack.c.l.b16 %v27
  %v324 = vunpack.c.h.b16 %v27
  %v325 = vunpack.c.l.b16 %v28
  %v326 = vunpack.c.h.b16 %v28
  %v327 = vunpack.c.l.b16 %v29
  %v328 = vunpack.c.l.b16 %v30
  %v329 = vunpack.c.h.b16 %v30
  %v330 = vunpack.c.l.b16 %v31
  %v331 = vunpack.c.h.b16 %v31
  %v332 = vunpack.c.l.b16 %v32
  %v333 = vunpack.c.h.b16 %v32
  %v334 = vunpack.c.l.b16 %v33
  %v335 = vunpack.c.h.b16 %v33
  %v336 = vunpack.c.l.b16 %v34
  %v337 = vunpack.c.l.b16 %v35
  %v338 = vunpack.c.h.b16 %v35
  %v339 = vunpack.c.l.b16 %v36
  %v340 = vunpack.c.h.b16 %v36
  %v341 = vunpack.c.l.b16 %v37
  %v342 = vunpack.c.h.b16 %v37
  %v343 = vunpack.c.l.b16 %v38
  %v344 = vunpack.c.h.b16 %v38
  %v345 = vunpack.c.l.b16 %v39
  %v346 = vunpack.c.l.b16 %v40
  %v347 = vunpack.c.h.b16 %v40
  %v348 = vunpack.c.l.b16 %v41
  %v349 = vunpack.c.h.b16 %v41
  %v350 = vunpack.c.l.b16 %v42
  %v351 = vunpack.c.h.b16 %v42
  %v352 = vunpack.c.l.b16 %v43
  %v353 = vunpack.c.h.b16 %v43
  %v354 = vunpack.c.l.b16 %v44
  %v355 = vunpack.c.l.b16 %v45
  %v356 = vunpack.c.h.b16 %v45
  %v357 = vunpack.c.l.b16 %v46
  %v358 = vunpack.c.h.b16 %v46
  %v359 = vunpack.c.l.b16 %v47
  %v360 = vunpack.c.h.b16 %v47
  %v361 = vunpack.c.l.b16 %v48
  %v362 = vunpack.c.h.b16 %v48
  %v363 = vunpack.c.l.b16 %v49
  %v364 = vunpack.c.l.b16 %v50
  %v365 = vunpack.c.h.b16 %v50
  %v366 = vunpack.c.l.b16 %v51
  %v367 = vunpack.c.h.b16 %v51
  %v368 = vunpack.c.l.b16 %v52
  %v369 = vunpack.c.h.b16 %v52
  %v370 = vunpack.c.l.b16 %v53
  %v371 = vunpack.c.h.b16 %v53
  %v372 = vunpack.c.l.b16 %v54
  %v373 = vunpack.c.l.b16 %v55
  %v374 = vunpack.c.h.b16 %v55
  %v375 = vunpack.c.l.b16 %v56
  %v376 = vunpack.c.h.b16 %v56
  %v377 = vunpack.c.l.b16 %v57
  %v378 = vunpack.c.h.b16 %v57
  %v379 = vunpack.c.l.b16 %v58
  %v380 = vunpack.c.h.b16 %v58
  %v381 = vunpack.c.l.b16 %v59
  %v382 = vunpack.c.l.b16 %v60
  %v383 = vunpack.c.h.b16 %v60
  %v384 = vunpack.c.l.b16 %v61
  %v385 = vunpack.c.h.b16 %v61
  %v386 = vunpack.c.l.b16 %v62
  %v387 = vunpack.c.h.b16 %v62
  %v388 = vunpack.c.l.b16 %v63
  %v389 = vunpack.c.h.b16 %v63
  %v390 = vunpack.c.l.b16 %v64
  %v391 = vunpack.c.l.b16 %v65
  %v392 = vunpack.c.h.b16 %v65
  %v393 = vunpack.c.l.b16 %v66
  %v394 = vunpack.c.h.b16 %v66
  %v395 = vunpack.c.l.b16 %v67
  %v396 = vunpack.c.h.b16 %v67
  %v397 = vunpack.c.l.b16 %v68
  %v398 = vunpack.c.h.b16 %v68
  %v399 = vunpack.c.l.b16 %v69
  %v400 = vunpack.c.l.b16 %v70
  %v401 = vunpack.c.h.b16 %v70
  %v402 = vunpack.c.l.b16 %v71
  %v403 = vunpack.c.h.b16 %v71
  %v404 = vunpack.c.l.b16 %v72
  %v405 = vunpack.c.h.b16 %v72
  %v406 = vunpack.c.l.b16 %v73
  %v407 = vunpack.c.h.b16 %v73
  %v408 = vunpack.c.l.b16 %v74
  %v409 = vunpack.c.l.b16 %v75
  %v410 = vunpack.c.h.b16 %v75
  %v411 = vunpack.c.l.b16 %v76
  %v412 = vunpack.c.h.b16 %v76
  %v413 = vunpack.c.l.b16 %v77
  %v414 = vunpack.c.h.b16 %v77
  %v415 = vunpack.c.l.b16 %v78
  %v416 = vunpack.c.h.b16 %v78
  %v417 = vunpack.c.l.b16 %v79
  %v418 = vunpack.c.l.b16 %v80
  %v419 = vunpack.c.h.b16 %v80
  %v420 = vunpack.c.l.b16 %v81
  %v421 = vunpack.c.h.b16 %v81
  %v422 = vunpack.c.l.b16 %v82
  %v423 = vunpack.c.h.b16 %v82
  %v424 = vunpack.c.l.b16 %v83
  %v425 = vunpack.c.h.b16 %v83
  %v426 = vunpack.c.l.b16 %v84
  %v427 = vunpack.c.l.b16 %v85
  %v428 = vunpack.c.h.b16 %v85
  %v429 = vunpack.c.l.b16 %v86
  %v430 = vunpack.c.h.b16 %v86
  %v431 = vunpack.c.l.b16 %v87
  %v432 = vunpack.c.h.b16 %v87
  %v433 = vunpack.c.l.b16 %v88
  %v434 = vunpack.c.h.b16 %v88
  %v435 = vunpack.c.l.b16 %v89
  %v436 = vpack.c.b16 %v319, %v310
  %v437 = vpack.c.b16 %v320, %v311
  %v438 = vpack.c.b16 %v321, %v312
  %v439 = vpack.c.b16 %v322, %v313
  %v440 = vpack.c.b16 %v323, %v314
  %v441 = vpack.c.b16 %v324, %v315
  %v442 = vpack.c.b16 %v325, %v316
  %v443 = vpack.c.b16 %v326, %v317
  %v444 = vpack.c.b16 %v327, %v318
  %v445 = vpack.c.b16 %v337, %v328
  %v446 = vpack.c.b16 %v338, %v329
  %v447 = vpack.c.b16 %v339, %v330
  %v448 = vpack.c.b16 %v340, %v331
  %v449 = vpack.c.b16 %v341, %v332
  %v450 = vpack.c.b16 %v342, %v333
  %v451 = vpack.c.b16 %v343, %v334
  %v452 = vpack.c.b16 %v344, %v335
  %v453 = vpack.c.b16 %v345, %v336
  %v454 = vpack.c.b16 %v355, %v346
  %v455 = vpack.c.b16 %v356, %v347
  %v456 = vpack.c.b16 %v357, %v348
  %v457 = vpack.c.b16 %v358, %v349
  %v458 = vpack.c.b16 %v359, %v350
  %v459 = vpack.c.b16 %v360, %v351
  %v460 = vpack.c.b16 %v361, %v352
  %v461 = vpack.c.b16 %v362, %v353
  %v462 = vpack.c.b16 %v363, %v354
  %v463 = vpack.c.b16 %v373, %v364
  %v464 = vpack.c.b16 %v374, %v365
  %v465 = vpack.c.b16 %v375, %v366
  %v466 = vpack.c.b16 %v376, %v367
  %v467 = vpack.c.b16 %v377, %v368
  %v468 = vpack.c.b16 %v378, %v369
  %v469 = vpack.c.b16 %v379, %v370
  %v470 = vpack.c.b16 %v380, %v371
  %v471 = vpack.c.b16 %v381, %v372
  %v472 = vpack.c.b16 %v391, %v382
  %v473 = vpack.c.b16 %v392, %v383
  %v474 = vpack.c.b16 %v393, %v384
  %v475 = vpack.c.b16 %v394, %v385
  %v476 = vpack.c.b16 %v395, %v386
  %v477 = vpack.c.b16 %v396, %v387
  %v478 = vpack.c.b16 %v397, %v388
  %v479 = vpack.c.b16 %v398, %v389
  %v480 = vpack.c.b16 %v399, %v390
  %v481 = vpack.c.b16 %v409, %v400
  %v482 = vpack.c.b16 %v410, %v401
  %v483 = vpack.c.b16 %v411, %v402
  %v484 = vpack.c.b16 %v412, %v403
  %v485 = vpack.c.b16 %v413, %v404
  %v486 = vpack.c.b16 %v414, %v405
  %v487 = vpack.c.b16 %v415, %v406
  %v488 = vpack.c.b16 %v416, %v407
  %v489 = vpack.c.b16 %v417, %v408
  %v490 = vpack.c.b16 %v427, %v418
  %v491 = vpack.c.b16 %v428, %v419
  %v492 = vpack.c.b16 %v429, %v420
  %v493 = vpack.c.b16 %v430, %v421
  %v494 = vpack.c.b16 %v431, %v422
  %v495 = vpack.c.b16 %v432, %v423
  %v496 = vpack.c.b16 %v433, %v424
  %v497 = vpack.c.b16 %v434, %v425
  %v498 = vpack.c.b16 %v435, %v426
  %v706 = vunpack.c.l.b16 %v90
  %v707 = vunpack.c.h.b16 %v90
  %v708 = vunpack.c.l.b16 %v91
  %v709 = vunpack.c.h.b16 %v91
  %v710 = vunpack.c.l.b16 %v92
  %v711 = vunpack.c.h.b16 %v92
  %v712 = vunpack.c.l.b16 %v93
  %v713 = vunpack.c.h.b16 %v93
  %v714 = vunpack.c.l.b16 %v94
  %v715 = vunpack.c.h.b16 %v94
  %v716 = vunpack.c.l.b16 %v95
  %v717 = vunpack.c.h.b16 %v95
  %v718 = vunpack.c.l.b16 %v96
  %v719 = vunpack.c.h.b16 %v96
  %v720 = vunpack.c.l.b16 %v97
  %v721 = vunpack.c.h.b16 %v97
  %v722 = vunpack.c.l.b16 %v98
  %v723 = vunpack.c.h.b16 %v98
  %v724 = vunpack.c.l.b16 %v99
  %v725 = vunpack.c.h.b16 %v99
  %v726 = vunpack.c.l.b16 %v100
  %v727 = vunpack.c.h.b16 %v100
  %v728 = vunpack.c.l.b16 %v101
  %v729 = vunpack.c.h.b16 %v101
  %v730 = vunpack.c.l.b16 %v102
  %v731 = vunpack.c.h.b16 %v102
  %v732 = vunpack.c.l.b16 %v103
  %v733 = vunpack.c.h.b16 %v103
  %v734 = vunpack.c.l.b16 %v104
  %v735 = vunpack.c.h.b16 %v104
  %v736 = vunpack.c.l.b16 %v105
  %v737 = vunpack.c.h.b16 %v105
  %v738 = vunpack.c.l.b16 %v106
  %v739 = vunpack.c.h.b16 %v106
  %v740 = vunpack.c.l.b16 %v107
  %v741 = vunpack.c.h.b16 %v107
  %v742 = vunpack.c.l.b16 %v108
  %v743 = vunpack.c.h.b16 %v108
  %v744 = vunpack.c.l.b16 %v109
  %v745 = vunpack.c.h.b16 %v109
  %v746 = vunpack.c.l.b16 %v110
  %v747 = vunpack.c.h.b16 %v110
  %v748 = vunpack.c.l.b16 %v111
  %v749 = vunpack.c.h.b16 %v111
  %v750 = vunpack.c.l.b16 %v112
  %v751 = vunpack.c.h.b16 %v112
  %v752 = vunpack.c.l.b16 %v113
  %v753 = vunpack.c.h.b16 %v113
  %v754 = vunpack.c.l.b16 %v114
  %v755 = vunpack.c.h.b16 %v114
  %v756 = vunpack.c.l.b16 %v115
  %v757 = vunpack.c.h.b16 %v115
  %v758 = vunpack.c.l.b16 %v116
  %v759 = vunpack.c.h.b16 %v116
  %v760 = vunpack.c.l.b16 %v117
  %v761 = vunpack.c.h.b16 %v117
  %v762 = vunpack.c.l.b16 %v118
  %v763 = vunpack.c.h.b16 %v118
  %v764 = vunpack.c.l.b16 %v119
  %v765 = vunpack.c.h.b16 %v119
  %v766 = vunpack.c.l.b16 %v120
  %v767 = vunpack.c.h.b16 %v120
  %v768 = vunpack.c.l.b16 %v121
  %v769 = vunpack.c.h.b16 %v121
  %v770 = vunpack.c.l.b16 %v122
  %v771 = vunpack.c.h.b16 %v122
  %v772 = vunpack.c.l.b16 %v123
  %v773 = vunpack.c.h.b16 %v123
  %v774 = vunpack.c.l.b16 %v124
  %v775 = vunpack.c.h.b16 %v124
  %v776 = vunpack.c.l.b16 %v125
  %v777 = vunpack.c.h.b16 %v125
  %v778 = vunpack.c.l.b16 %v126
  %v779 = vunpack.c.h.b16 %v126
  %v780 = vunpack.c.l.b16 %v127
  %v781 = vunpack.c.h.b16 %v127
  %v782 = vunpack.c.l.b16 %v128
  %v783 = vunpack.c.h.b16 %v128
  %v784 = vunpack.c.l.b16 %v129
  %v785 = vunpack.c.h.b16 %v129
  %v786 = vunpack.c.l.b16 %v130
  %v787 = vunpack.c.h.b16 %v130
  %v788 = vunpack.c.l.b16 %v131
  %v789 = vunpack.c.h.b16 %v131
  %v790 = vunpack.c.l.b16 %v132
  %v791 = vunpack.c.h.b16 %v132
  %v792 = vunpack.c.l.b16 %v133
  %v793 = vunpack.c.h.b16 %v133
  %v794 = vunpack.c.l.b16 %v134
  %v795 = vunpack.c.h.b16 %v134
  %v796 = vunpack.c.l.b16 %v135
  %v797 = vunpack.c.h.b16 %v135
  %v798 = vunpack.c.l.b16 %v136
  %v799 = vunpack.c.h.b16 %v136
  %v800 = vunpack.c.l.b16 %v137
  %v801 = vunpack.c.h.b16 %v137
  %v802 = vunpack.c.l.b16 %v138
  %v803 = vunpack.c.h.b16 %v138
  %v804 = vunpack.c.l.b16 %v139
  %v805 = vunpack.c.h.b16 %v139
  %v806 = vunpack.c.l.b16 %v140
  %v807 = vunpack.c.h.b16 %v140
  %v808 = vunpack.c.l.b16 %v141
  %v809 = vunpack.c.h.b16 %v141
  %v810 = vunpack.c.l.b16 %v142
  %v811 = vunpack.c.h.b16 %v142
  %v812 = vunpack.c.l.b16 %v143
  %v813 = vunpack.c.h.b16 %v143
  %v814 = vunpack.c.l.b16 %v144
  %v815 = vunpack.c.h.b16 %v144
  %v816 = vunpack.c.l.b16 %v145
  %v817 = vunpack.c.h.b16 %v145
  %v818 = vunpack.c.l.b16 %v146
  %v819 = vunpack.c.h.b16 %v146
  %v820 = vunpack.c.l.b16 %v147
  %v821 = vunpack.c.h.b16 %v147
  %v822 = vunpack.c.l.b16 %v148
  %v823 = vunpack.c.h.b16 %v148
  %v824 = vunpack.c.l.b16 %v149
  %v825 = vunpack.c.h.b16 %v149
  %v826 = vunpack.c.l.b16 %v150
  %v827 = vunpack.c.h.b16 %v150
  %v828 = vunpack.c.l.b16 %v151
  %v829 = vunpack.c.h.b16 %v151
  %v830 = vunpack.c.l.b16 %v152
  %v831 = vunpack.c.h.b16 %v152
  %v832 = vunpack.c.l.b16 %v153
  %v833 = vunpack.c.h.b16 %v153
  %v834 = vunpack.c.l.b16 %v154
  %v835 = vunpack.c.h.b16 %v154
  %v836 = vunpack.c.l.b16 %v155
  %v837 = vunpack.c.h.b16 %v155
  %v838 = vunpack.c.l.b16 %v156
  %v839 = vunpack.c.h.b16 %v156
  %v840 = vunpack.c.l.b16 %v157
  %v841 = vunpack.c.h.b16 %v157
  %v842 = vunpack.c.l.b16 %v158
  %v843 = vunpack.c.h.b16 %v158
  %v844 = vunpack.c.l.b16 %v159
  %v845 = vunpack.c.h.b16 %v159
  %v846 = vunpack.c.l.b16 %v160
  %v847 = vunpack.c.h.b16 %v160
  %v848 = vunpack.c.l.b16 %v161
  %v849 = vunpack.c.h.b16 %v161
  %v850 = vunpack.c.l.b16 %v162
  %v851 = vunpack.c.h.b16 %v162
  %v852 = vunpack.c.l.b16 %v163
  %v853 = vunpack.c.h.b16 %v163
  %v854 = vunpack.c.l.b16 %v164
  %v855 = vunpack.c.h.b16 %v164
  %v856 = vunpack.c.l.b16 %v165
  %v857 = vunpack.c.h.b16 %v165
  %v858 = vunpack.c.l.b16 %v166
  %v859 = vunpack.c.h.b16 %v166
  %v860 = vunpack.c.l.b16 %v167
  %v861 = vunpack.c.h.b16 %v167
  %v862 = vunpack.c.l.b16 %v168
  %v863 = vunpack.c.h.b16 %v168
  %v864 = vunpack.c.l.b16 %v169
  %v865 = vunpack.c.h.b16 %v169
  %v866 = vunpack.c.l.b16 %v170
  %v867 = vunpack.c.h.b16 %v170
  %v868 = vunpack.c.l.b16 %v171
  %v869 = vunpack.c.h.b16 %v171
  %v870 = vunpack.c.l.b16 %v172
  %v871 = vunpack.c.h.b16 %v172
  %v872 = vunpack.c.l.b16 %v173
  %v873 = vunpack.c.h.b16 %v173
  %v874 = vunpack.c.l.b16 %v174
  %v875 = vunpack.c.h.b16 %v174
  %v876 = vunpack.c.l.b16 %v175
  %v877 = vunpack.c.h.b16 %v175
  %v878 = vunpack.c.l.b16 %v176
  %v879 = vunpack.c.h.b16 %v176
  %v880 = vunpack.c.l.b16 %v177
  %v881 = vunpack.c.h.b16 %v177
  %v882 = vunpack.c.l.b16 %v178
  %v883 = vunpack.c.h.b16 %v178
  %v884 = vunpack.c.l.b16 %v179
  %v885 = vunpack.c.h.b16 %v179
  %v886 = vunpack.c.l.b16 %v180
  %v887 = vunpack.c.h.b16 %v180
  %v888 = vunpack.c.l.b16 %v181
  %v889 = vunpack.c.h.b16 %v181
  %v890 = vunpack.c.l.b16 %v182
  %v891 = vunpack.c.h.b16 %v182
  %v892 = vunpack.c.l.b16 %v183
  %v893 = vunpack.c.h.b16 %v183
  %v894 = vunpack.c.l.b16 %v184
  %v895 = vunpack.c.h.b16 %v184
  %v896 = vunpack.c.l.b16 %v185
  %v897 = vunpack.c.h.b16 %v185
  %v898 = vunpack.c.l.b16 %v186
  %v899 = vunpack.c.h.b16 %v186
  %v900 = vunpack.c.l.b16 %v187
  %v901 = vunpack.c.h.b16 %v187
  %v902 = vunpack.c.l.b16 %v188
  %v903 = vunpack.c.h.b16 %v188
  %v904 = vunpack.c.l.b16 %v189
  %v905 = vunpack.c.h.b16 %v189
  %v906 = vunpack.c.l.b16 %v190
  %v907 = vunpack.c.h.b16 %v190
  %v908 = vunpack.c.l.b16 %v191
  %v909 = vunpack.c.h.b16 %v191
  %v910 = vunpack.c.l.b16 %v192
  %v911 = vunpack.c.h.b16 %v192
  %v912 = vunpack.c.l.b16 %v193
  %v913 = vunpack.c.h.b16 %v193
  %v914 = vunpack.c.l.b16 %v194
  %v915 = vunpack.c.h.b16 %v194
  %v916 = vunpack.c.l.b16 %v195
  %v917 = vunpack.c.h.b16 %v195
  %v918 = vunpack.c.l.b16 %v196
  %v919 = vunpack.c.h.b16 %v196
  %v920 = vunpack.c.l.b16 %v197
  %v921 = vunpack.c.h.b16 %v197
  %v922 = vunpack.c.l.b16 %v198
  %v923 = vunpack.c.h.b16 %v198
  %v924 = vunpack.c.l.b16 %v199
  %v925 = vunpack.c.h.b16 %v199
  %v926 = vunpack.c.l.b16 %v200
  %v927 = vunpack.c.h.b16 %v200
  %v928 = vunpack.c.l.b16 %v201
  %v929 = vunpack.c.h.b16 %v201
  %v930 = vunpack.c.l.b16 %v202
  %v931 = vunpack.c.h.b16 %v202
  %v932 = vunpack.c.l.b16 %v203
  %v933 = vunpack.c.h.b16 %v203
  %v934 = vunpack.c.l.b16 %v204
  %v935 = vunpack.c.h.b16 %v204
  %v936 = vunpack.c.l.b16 %v205
  %v937 = vunpack.c.h.b16 %v205
  %v938 = vunpack.c.l.b16 %v206
  %v939 = vunpack.c.h.b16 %v206
  %v940 = vunpack.c.l.b16 %v207
  %v941 = vunpack.c.h.b16 %v207
  %v942 = vunpack.c.l.b16 %v208
  %v943 = vunpack.c.h.b16 %v208
  %v944 = vunpack.c.l.b16 %v209
  %v945 = vunpack.c.h.b16 %v209
  %v946 = vunpack.c.l.b16 %v210
  %v947 = vunpack.c.h.b16 %v210
  %v948 = vunpack.c.l.b16 %v211
  %v949 = vunpack.c.h.b16 %v211
  %v950 = vunpack.c.l.b16 %v212
  %v951 = vunpack.c.h.b16 %v212
  %v952 = vunpack.c.l.b16 %v213
  %v953 = vunpack.c.h.b16 %v213
  %v954 = vunpack.c.l.b16 %v214
  %v955 = vunpack.c.h.b16 %v214
  %v956 = vunpack.c.l.b16 %v215
  %v957 = vunpack.c.h.b16 %v215
  %v958 = vunpack.c.l.b16 %v216
  %v959 = vunpack.c.h.b16 %v216
  %v960 = vunpack.c.l.b16 %v217
  %v961 = vunpack.c.h.b16 %v217
  %v962 = vunpack.c.l.b16 %v218
  %v963 = vunpack.c.h.b16 %v218
  %v964 = vunpack.c.l.b16 %v219
  %v965 = vunpack.c.h.b16 %v219
  %v966 = vunpack.c.l.b16 %v220
  %v967 = vunpack.c.h.b16 %v220
  %v968 = vunpack.c.l.b16 %v221
  %v969 = vunpack.c.h.b16 %v221
  %v970 = vunpack.c.l.b16 %v222
  %v971 = vunpack.c.h.b16 %v222
  %v972 = vunpack.c.l.b16 %v223
  %v973 = vunpack.c.h.b16 %v223
  %v974 = vunpack.c.l.b16 %v224
  %v975 = vunpack.c.h.b16 %v224
  %v976 = vunpack.c.l.b16 %v225
  %v977 = vunpack.c.h.b16 %v225
  %v978 = vunpack.c.l.b16 %v226
  %v979 = vunpack.c.h.b16 %v226
  %v980 = vunpack.c.l.b16 %v227
  %v981 = vunpack.c.h.b16 %v227
  %v982 = vunpack.c.l.b16 %v228
  %v983 = vunpack.c.h.b16 %v228
  %v984 = vunpack.c.l.b16 %v229
  %v985 = vunpack.c.h.b16 %v229
  %v986 = vunpack.c.l.b16 %v230
  %v987 = vunpack.c.h.b16 %v230
  %v988 = vunpack.c.l.b16 %v231
  %v989 = vunpack.c.h.b16 %v231
  %v990 = vunpack.c.l.b16 %v232
  %v991 = vunpack.c.h.b16 %v232
  %v992 = vunpack.c.l.b16 %v233
  %v993 = vunpack.c.h.b16 %v233
  %v994 = vpack.c.b16 %v708, %v706
  %v995 = vpack.c.b16 %v709, %v707
  %v996 = vpack.c.b16 %v712, %v710
  %v997 = vpack.c.b16 %v713, %v711
  %v998 = vpack.c.b16 %v716, %v714
  %v999 = vpack.c.b16 %v717, %v715
  %v1000 = vpack.c.b16 %v720, %v718
  %v1001 = vpack.c.b16 %v721, %v719
  %v1002 = vpack.c.b16 %v724, %v722
  %v1003 = vpack.c.b16 %v725, %v723
  %v1004 = vpack.c.b16 %v728, %v726
  %v1005 = vpack.c.b16 %v729, %v727
  %v1006 = vpack.c.b16 %v732, %v730
  %v1007 = vpack.c.b16 %v733, %v731
  %v1008 = vpack.c.b16 %v736, %v734
  %v1009 = vpack.c.b16 %v737, %v735
  %v1010 = vpack.c.b16 %v740, %v738
  %v1011 = vpack.c.b16 %v741, %v739
  %v1012 = vpack.c.b16 %v744, %v742
  %v1013 = vpack.c.b16 %v745, %v743
  %v1014 = vpack.c.b16 %v748, %v746
  %v1015 = vpack.c.b16 %v749, %v747
  %v1016 = vpack.c.b16 %v752, %v750
  %v1017 = vpack.c.b16 %v753, %v751
  %v1018 = vpack.c.b16 %v756, %v754
  %v1019 = vpack.c.b16 %v757, %v755
  %v1020 = vpack.c.b16 %v760, %v758
  %v1021 = vpack.c.b16 %v761, %v759
  %v1022 = vpack.c.b16 %v764, %v762
  %v1023 = vpack.c.b16 %v765, %v763
  %v1024 = vpack.c.b16 %v768, %v766
  %v1025 = vpack.c.b16 %v769, %v767
  %v1026 = vpack.c.b16 %v772, %v770
  %v1027 = vpack.c.b16 %v773, %v771
  %v1028 = vpack.c.b16 %v776, %v774
  %v1029 = vpack.c.b16 %v777, %v775
  %v1030 = vpack.c.b16 %v780, %v778
  %v1031 = vpack.c.b16 %v781, %v779
  %v1032 = vpack.c.b16 %v784, %v782
  %v1033 = vpack.c.b16 %v785, %v783
  %v1034 = vpack.c.b16 %v788, %v786
  %v1035 = vpack.c.b16 %v789, %v787
  %v1036 = vpack.c.b16 %v792, %v790
  %v1037 = vpack.c.b16 %v793, %v791
  %v1038 = vpack.c.b16 %v796, %v794
  %v1039 = vpack.c.b16 %v797, %v795
  %v1040 = vpack.c.b16 %v800, %v798
  %v1041 = vpack.c.b16 %v801, %v799
  %v1042 = vpack.c.b16 %v804, %v802
  %v1043 = vpack.c.b16 %v805, %v803
  %v1044 = vpack.c.b16 %v808, %v806
  %v1045 = vpack.c.b16 %v809, %v807
  %v1046 = vpack.c.b16 %v812, %v810
  %v1047 = vpack.c.b16 %v813, %v811
  %v1048 = vpack.c.b16 %v816, %v814
  %v1049 = vpack.c.b16 %v817, %v815
  %v1050 = vpack.c.b16 %v820, %v818
  %v1051 = vpack.c.b16 %v821, %v819
  %v1052 = vpack.c.b16 %v824, %v822
  %v1053 = vpack.c.b16 %v825, %v823
  %v1054 = vpack.c.b16 %v828, %v826
  %v1055 = vpack.c.b16 %v829, %v827
  %v1056 = vpack.c.b16 %v832, %v830
  %v1057 = vpack.c.b16 %v833, %v831
  %v1058 = vpack.c.b16 %v836, %v834
  %v1059 = vpack.c.b16 %v837, %v835
  %v1060 = vpack.c.b16 %v840, %v838
  %v1061 = vpack.c.b16 %v841, %v839
  %v1062 = vpack.c.b16 %v844, %v842
  %v1063 = vpack.c.b16 %v845, %v843
  %v1064 = vpack.c.b16 %v848, %v846
  %v1065 = vpack.c.b16 %v849, %v847
  %v1066 = vpack.c.b16 %v852, %v850
  %v1067 = vpack.c.b16 %v853, %v851
  %v1068 = vpack.c.b16 %v856, %v854
  %v1069 = vpack.c.b16 %v857, %v855
  %v1070 = vpack.c.b16 %v860, %v858
  %v1071 = vpack.c.b16 %v861, %v859
  %v1072 = vpack.c.b16 %v864, %v862
  %v1073 = vpack.c.b16 %v865, %v863
  %v1074 = vpack.c.b16 %v868, %v866
  %v1075 = vpack.c.b16 %v869, %v867
  %v1076 = vpack.c.b16 %v872, %v870
  %v1077 = vpack.c.b16 %v873, %v871
  %v1078 = vpack.c.b16 %v876, %v874
  %v1079 = vpack.c.b16 %v877, %v875
  %v1080 = vpack.c.b16 %v880, %v878
  %v1081 = vpack.c.b16 %v881, %v879
  %v1082 = vpack.c.b16 %v884, %v882
  %v1083 = vpack.c.b16 %v885, %v883
  %v1084 = vpack.c.b16 %v888, %v886
  %v1085 = vpack.c.b16 %v889, %v887
  %v1086 = vpack.c.b16 %v892, %v890
  %v1087 = vpack.c.b16 %v893, %v891
  %v1088 = vpack.c.b16 %v896, %v894
  %v1089 = vpack.c.b16 %v897, %v895
  %v1090 = vpack.c.b16 %v900, %v898
  %v1091 = vpack.c.b16 %v901, %v899
  %v1092 = vpack.c.b16 %v904, %v902
  %v1093 = vpack.c.b16 %v905, %v903
  %v1094 = vpack.c.b16 %v908, %v906
  %v1095 = vpack.c.b16 %v909, %v907
  %v1096 = vpack.c.b16 %v912, %v910
  %v1097 = vpack.c.b16 %v913, %v911
  %v1098 = vpack.c.b16 %v916, %v914
  %v1099 = vpack.c.b16 %v917, %v915
  %v1100 = vpack.c.b16 %v920, %v918
  %v1101 = vpack.c.b16 %v921, %v919
  %v1102 = vpack.c.b16 %v924, %v922
  %v1103 = vpack.c.b16 %v925, %v923
  %v1104 = vpack.c.b16 %v928, %v926
  %v1105 = vpack.c.b16 %v929, %v927
  %v1106 = vpack.c.b16 %v932, %v930
  %v1107 = vpack.c.b16 %v933, %v931
  %v1108 = vpack.c.b16 %v936, %v934
  %v1109 = vpack.c.b16 %v937, %v935
  %v1110 = vpack.c.b16 %v940, %v938
  %v1111 = vpack.c.b16 %v941, %v939
  %v1112 = vpack.c.b16 %v944, %v942
  %v1113 = vpack.c.b16 %v945, %v943
  %v1114 = vpack.c.b16 %v948, %v946
  %v1115 = vpack.c.b16 %v949, %v947
  %v1116 = vpack.c.b16 %v952, %v950
  %v1117 = vpack.c.b16 %v953, %v951
  %v1118 = vpack.c.b16 %v956, %v954
  %v1119 = vpack.c.b16 %v957, %v955
  %v1120 = vpack.c.b16 %v960, %v958
  %v1121 = vpack.c.b16 %v961, %v959
  %v1122 = vpack.c.b16 %v964, %v962
  %v1123 = vpack.c.b16 %v965, %v963
  %v1124 = vpack.c.b16 %v968, %v966
  %v1125 = vpack.c.b16 %v969, %v967
  %v1126 = vpack.c.b16 %v972, %v970
  %v1127 = vpack.c.b16 %v973, %v971
  %v1128 = vpack.c.b16 %v976, %v974
  %v1129 = vpack.c.b16 %v977, %v975
  %v1130 = vpack.c.b16 %v980, %v978
  %v1131 = vpack.c.b16 %v981, %v979
  %v1132 = vpack.c.b16 %v984, %v982
  %v1133 = vpack.c.b16 %v985, %v983
  %v1134 = vpack.c.b16 %v988, %v986
  %v1135 = vpack.c.b16 %v989, %v987
  %v1136 = vpack.c.b16 %v992, %v990
  %v1137 = vpack.c.b16 %v993, %v991
  %1282 = vmatpush.bf16.msra.mxu0 %v1008
  %1283 = vmatpush.bf16.msra.mxu0 %v1006
  %1284 = vmatpush.bf16.msra.mxu0 %v1004
  %1285 = vmatpush.bf16.msra.mxu0 %v1002
  %1286 = vmatpush.bf16.msra.mxu0 %v1000
  %1287 = vmatpush.bf16.msra.mxu0 %v998
  %1288 = vmatpush.bf16.msra.mxu0 %v996
  %1289 = vmatpush.bf16.msra.mxu0 %v994
  %1290 = vmatmul.bf16.gmra.mxu0 %v436
  %v1291 = vpop.f32.mrf.mxu0
  %v1292 = vadd.f32 %v236, %v1291
  %v1293 = vpop.f32.mrf.mxu0
  %v1294 = vadd.f32 %v236, %v1293
  %1295 = vmatmul.bf16.gmra.mxu0 %v445
  %v1296 = vpop.f32.mrf.mxu0
  %v1297 = vadd.f32 %v236, %v1296
  %v1298 = vpop.f32.mrf.mxu0
  %v1299 = vadd.f32 %v236, %v1298
  %1300 = vmatmul.bf16.gmra.mxu0 %v454
  %v1301 = vpop.f32.mrf.mxu0
  %v1302 = vadd.f32 %v236, %v1301
  %v1303 = vpop.f32.mrf.mxu0
  %v1304 = vadd.f32 %v236, %v1303
  %1305 = vmatmul.bf16.gmra.mxu0 %v463
  %v1306 = vpop.f32.mrf.mxu0
  %v1307 = vadd.f32 %v236, %v1306
  %v1308 = vpop.f32.mrf.mxu0
  %v1309 = vadd.f32 %v236, %v1308
  %1310 = vmatmul.bf16.gmra.mxu0 %v472
  %v1311 = vpop.f32.mrf.mxu0
  %v1312 = vadd.f32 %v236, %v1311
  %v1313 = vpop.f32.mrf.mxu0
  %v1314 = vadd.f32 %v236, %v1313
  %1315 = vmatmul.bf16.gmra.mxu0 %v481
  %v1316 = vpop.f32.mrf.mxu0
  %v1317 = vadd.f32 %v236, %v1316
  %v1318 = vpop.f32.mrf.mxu0
  %v1319 = vadd.f32 %v236, %v1318
  %1320 = vmatmul.bf16.gmra.mxu0 %v490
  %v1321 = vpop.f32.mrf.mxu0
  %v1322 = vadd.f32 %v236, %v1321
  %v1323 = vpop.f32.mrf.mxu0
  %v1324 = vadd.f32 %v236, %v1323
  %1325 = vdwg.mxu0
  %1326 = vmatpush.bf16.msra.mxu0 %v1024
  %1327 = vmatpush.bf16.msra.mxu0 %v1022
  %1328 = vmatpush.bf16.msra.mxu0 %v1020
  %1329 = vmatpush.bf16.msra.mxu0 %v1018
  %1330 = vmatpush.bf16.msra.mxu0 %v1016
  %1331 = vmatpush.bf16.msra.mxu0 %v1014
  %1332 = vmatpush.bf16.msra.mxu0 %v1012
  %1333 = vmatpush.bf16.msra.mxu0 %v1010
  %1334 = vmatmul.bf16.gmra.mxu0 %v437
  %v1335 = vpop.f32.mrf.mxu0
  %v1336 = vadd.f32 %v1292, %v1335
  %v1337 = vpop.f32.mrf.mxu0
  %v1338 = vadd.f32 %v1294, %v1337
  %1339 = vmatmul.bf16.gmra.mxu0 %v446
  %v1340 = vpop.f32.mrf.mxu0
  %v1341 = vadd.f32 %v1297, %v1340
  %v1342 = vpop.f32.mrf.mxu0
  %v1343 = vadd.f32 %v1299, %v1342
  %1344 = vmatmul.bf16.gmra.mxu0 %v455
  %v1345 = vpop.f32.mrf.mxu0
  %v1346 = vadd.f32 %v1302, %v1345
  %v1347 = vpop.f32.mrf.mxu0
  %v1348 = vadd.f32 %v1304, %v1347
  %1349 = vmatmul.bf16.gmra.mxu0 %v464
  %v1350 = vpop.f32.mrf.mxu0
  %v1351 = vadd.f32 %v1307, %v1350
  %v1352 = vpop.f32.mrf.mxu0
  %v1353 = vadd.f32 %v1309, %v1352
  %1354 = vmatmul.bf16.gmra.mxu0 %v473
  %v1355 = vpop.f32.mrf.mxu0
  %v1356 = vadd.f32 %v1312, %v1355
  %v1357 = vpop.f32.mrf.mxu0
  %v1358 = vadd.f32 %v1314, %v1357
  %1359 = vmatmul.bf16.gmra.mxu0 %v482
  %v1360 = vpop.f32.mrf.mxu0
  %v1361 = vadd.f32 %v1317, %v1360
  %v1362 = vpop.f32.mrf.mxu0
  %v1363 = vadd.f32 %v1319, %v1362
  %1364 = vmatmul.bf16.gmra.mxu0 %v491
  %v1365 = vpop.f32.mrf.mxu0
  %v1366 = vadd.f32 %v1322, %v1365
  %v1367 = vpop.f32.mrf.mxu0
  %v1368 = vadd.f32 %v1324, %v1367
  %1369 = vdwg.mxu0
  %1370 = vmatpush.bf16.msra.mxu0 %v1040
  %1371 = vmatpush.bf16.msra.mxu0 %v1038
  %1372 = vmatpush.bf16.msra.mxu0 %v1036
  %1373 = vmatpush.bf16.msra.mxu0 %v1034
  %1374 = vmatpush.bf16.msra.mxu0 %v1032
  %1375 = vmatpush.bf16.msra.mxu0 %v1030
  %1376 = vmatpush.bf16.msra.mxu0 %v1028
  %1377 = vmatpush.bf16.msra.mxu0 %v1026
  %1378 = vmatmul.bf16.gmra.mxu0 %v438
  %v1379 = vpop.f32.mrf.mxu0
  %v1380 = vadd.f32 %v1336, %v1379
  %v1381 = vpop.f32.mrf.mxu0
  %v1382 = vadd.f32 %v1338, %v1381
  %1383 = vmatmul.bf16.gmra.mxu0 %v447
  %v1384 = vpop.f32.mrf.mxu0
  %v1385 = vadd.f32 %v1341, %v1384
  %v1386 = vpop.f32.mrf.mxu0
  %v1387 = vadd.f32 %v1343, %v1386
  %1388 = vmatmul.bf16.gmra.mxu0 %v456
  %v1389 = vpop.f32.mrf.mxu0
  %v1390 = vadd.f32 %v1346, %v1389
  %v1391 = vpop.f32.mrf.mxu0
  %v1392 = vadd.f32 %v1348, %v1391
  %1393 = vmatmul.bf16.gmra.mxu0 %v465
  %v1394 = vpop.f32.mrf.mxu0
  %v1395 = vadd.f32 %v1351, %v1394
  %v1396 = vpop.f32.mrf.mxu0
  %v1397 = vadd.f32 %v1353, %v1396
  %1398 = vmatmul.bf16.gmra.mxu0 %v474
  %v1399 = vpop.f32.mrf.mxu0
  %v1400 = vadd.f32 %v1356, %v1399
  %v1401 = vpop.f32.mrf.mxu0
  %v1402 = vadd.f32 %v1358, %v1401
  %1403 = vmatmul.bf16.gmra.mxu0 %v483
  %v1404 = vpop.f32.mrf.mxu0
  %v1405 = vadd.f32 %v1361, %v1404
  %v1406 = vpop.f32.mrf.mxu0
  %v1407 = vadd.f32 %v1363, %v1406
  %1408 = vmatmul.bf16.gmra.mxu0 %v492
  %v1409 = vpop.f32.mrf.mxu0
  %v1410 = vadd.f32 %v1366, %v1409
  %v1411 = vpop.f32.mrf.mxu0
  %v1412 = vadd.f32 %v1368, %v1411
  %1413 = vdwg.mxu0
  %1414 = vmatpush.bf16.msra.mxu0 %v1056
  %1415 = vmatpush.bf16.msra.mxu0 %v1054
  %1416 = vmatpush.bf16.msra.mxu0 %v1052
  %1417 = vmatpush.bf16.msra.mxu0 %v1050
  %1418 = vmatpush.bf16.msra.mxu0 %v1048
  %1419 = vmatpush.bf16.msra.mxu0 %v1046
  %1420 = vmatpush.bf16.msra.mxu0 %v1044
  %1421 = vmatpush.bf16.msra.mxu0 %v1042
  %1422 = vmatmul.bf16.gmra.mxu0 %v439
  %v1423 = vpop.f32.mrf.mxu0
  %v1424 = vadd.f32 %v1380, %v1423
  %v1425 = vpop.f32.mrf.mxu0
  %v1426 = vadd.f32 %v1382, %v1425
  %1427 = vmatmul.bf16.gmra.mxu0 %v448
  %v1428 = vpop.f32.mrf.mxu0
  %v1429 = vadd.f32 %v1385, %v1428
  %v1430 = vpop.f32.mrf.mxu0
  %v1431 = vadd.f32 %v1387, %v1430
  %1432 = vmatmul.bf16.gmra.mxu0 %v457
  %v1433 = vpop.f32.mrf.mxu0
  %v1434 = vadd.f32 %v1390, %v1433
  %v1435 = vpop.f32.mrf.mxu0
  %v1436 = vadd.f32 %v1392, %v1435
  %1437 = vmatmul.bf16.gmra.mxu0 %v466
  %v1438 = vpop.f32.mrf.mxu0
  %v1439 = vadd.f32 %v1395, %v1438
  %v1440 = vpop.f32.mrf.mxu0
  %v1441 = vadd.f32 %v1397, %v1440
  %1442 = vmatmul.bf16.gmra.mxu0 %v475
  %v1443 = vpop.f32.mrf.mxu0
  %v1444 = vadd.f32 %v1400, %v1443
  %v1445 = vpop.f32.mrf.mxu0
  %v1446 = vadd.f32 %v1402, %v1445
  %1447 = vmatmul.bf16.gmra.mxu0 %v484
  %v1448 = vpop.f32.mrf.mxu0
  %v1449 = vadd.f32 %v1405, %v1448
  %v1450 = vpop.f32.mrf.mxu0
  %v1451 = vadd.f32 %v1407, %v1450
  %1452 = vmatmul.bf16.gmra.mxu0 %v493
  %v1453 = vpop.f32.mrf.mxu0
  %v1454 = vadd.f32 %v1410, %v1453
  %v1455 = vpop.f32.mrf.mxu0
  %v1456 = vadd.f32 %v1412, %v1455
  %1457 = vdwg.mxu0
  %1458 = vmatpush.bf16.msra.mxu0 %v1072
  %1459 = vmatpush.bf16.msra.mxu0 %v1070
  %1460 = vmatpush.bf16.msra.mxu0 %v1068
  %1461 = vmatpush.bf16.msra.mxu0 %v1066
  %1462 = vmatpush.bf16.msra.mxu0 %v1064
  %1463 = vmatpush.bf16.msra.mxu0 %v1062
  %1464 = vmatpush.bf16.msra.mxu0 %v1060
  %1465 = vmatpush.bf16.msra.mxu0 %v1058
  %1466 = vmatmul.bf16.gmra.mxu0 %v440
  %v1467 = vpop.f32.mrf.mxu0
  %v1468 = vadd.f32 %v1424, %v1467
  %v1469 = vpop.f32.mrf.mxu0
  %v1470 = vadd.f32 %v1426, %v1469
  %1471 = vmatmul.bf16.gmra.mxu0 %v449
  %v1472 = vpop.f32.mrf.mxu0
  %v1473 = vadd.f32 %v1429, %v1472
  %v1474 = vpop.f32.mrf.mxu0
  %v1475 = vadd.f32 %v1431, %v1474
  %1476 = vmatmul.bf16.gmra.mxu0 %v458
  %v1477 = vpop.f32.mrf.mxu0
  %v1478 = vadd.f32 %v1434, %v1477
  %v1479 = vpop.f32.mrf.mxu0
  %v1480 = vadd.f32 %v1436, %v1479
  %1481 = vmatmul.bf16.gmra.mxu0 %v467
  %v1482 = vpop.f32.mrf.mxu0
  %v1483 = vadd.f32 %v1439, %v1482
  %v1484 = vpop.f32.mrf.mxu0
  %v1485 = vadd.f32 %v1441, %v1484
  %1486 = vmatmul.bf16.gmra.mxu0 %v476
  %v1487 = vpop.f32.mrf.mxu0
  %v1488 = vadd.f32 %v1444, %v1487
  %v1489 = vpop.f32.mrf.mxu0
  %v1490 = vadd.f32 %v1446, %v1489
  %1491 = vmatmul.bf16.gmra.mxu0 %v485
  %v1492 = vpop.f32.mrf.mxu0
  %v1493 = vadd.f32 %v1449, %v1492
  %v1494 = vpop.f32.mrf.mxu0
  %v1495 = vadd.f32 %v1451, %v1494
  %1496 = vmatmul.bf16.gmra.mxu0 %v494
  %v1497 = vpop.f32.mrf.mxu0
  %v1498 = vadd.f32 %v1454, %v1497
  %v1499 = vpop.f32.mrf.mxu0
  %v1500 = vadd.f32 %v1456, %v1499
  %1501 = vdwg.mxu0
  %1502 = vmatpush.bf16.msra.mxu0 %v1088
  %1503 = vmatpush.bf16.msra.mxu0 %v1086
  %1504 = vmatpush.bf16.msra.mxu0 %v1084
  %1505 = vmatpush.bf16.msra.mxu0 %v1082
  %1506 = vmatpush.bf16.msra.mxu0 %v1080
  %1507 = vmatpush.bf16.msra.mxu0 %v1078
  %1508 = vmatpush.bf16.msra.mxu0 %v1076
  %1509 = vmatpush.bf16.msra.mxu0 %v1074
  %1510 = vmatmul.bf16.gmra.mxu0 %v441
  %v1511 = vpop.f32.mrf.mxu0
  %v1512 = vadd.f32 %v1468, %v1511
  %v1513 = vpop.f32.mrf.mxu0
  %v1514 = vadd.f32 %v1470, %v1513
  %1515 = vmatmul.bf16.gmra.mxu0 %v450
  %v1516 = vpop.f32.mrf.mxu0
  %v1517 = vadd.f32 %v1473, %v1516
  %v1518 = vpop.f32.mrf.mxu0
  %v1519 = vadd.f32 %v1475, %v1518
  %1520 = vmatmul.bf16.gmra.mxu0 %v459
  %v1521 = vpop.f32.mrf.mxu0
  %v1522 = vadd.f32 %v1478, %v1521
  %v1523 = vpop.f32.mrf.mxu0
  %v1524 = vadd.f32 %v1480, %v1523
  %1525 = vmatmul.bf16.gmra.mxu0 %v468
  %v1526 = vpop.f32.mrf.mxu0
  %v1527 = vadd.f32 %v1483, %v1526
  %v1528 = vpop.f32.mrf.mxu0
  %v1529 = vadd.f32 %v1485, %v1528
  %1530 = vmatmul.bf16.gmra.mxu0 %v477
  %v1531 = vpop.f32.mrf.mxu0
  %v1532 = vadd.f32 %v1488, %v1531
  %v1533 = vpop.f32.mrf.mxu0
  %v1534 = vadd.f32 %v1490, %v1533
  %1535 = vmatmul.bf16.gmra.mxu0 %v486
  %v1536 = vpop.f32.mrf.mxu0
  %v1537 = vadd.f32 %v1493, %v1536
  %v1538 = vpop.f32.mrf.mxu0
  %v1539 = vadd.f32 %v1495, %v1538
  %1540 = vmatmul.bf16.gmra.mxu0 %v495
  %v1541 = vpop.f32.mrf.mxu0
  %v1542 = vadd.f32 %v1498, %v1541
  %v1543 = vpop.f32.mrf.mxu0
  %v1544 = vadd.f32 %v1500, %v1543
  %1545 = vdwg.mxu0
  %1546 = vmatpush.bf16.msra.mxu0 %v1104
  %1547 = vmatpush.bf16.msra.mxu0 %v1102
  %1548 = vmatpush.bf16.msra.mxu0 %v1100
  %1549 = vmatpush.bf16.msra.mxu0 %v1098
  %1550 = vmatpush.bf16.msra.mxu0 %v1096
  %1551 = vmatpush.bf16.msra.mxu0 %v1094
  %1552 = vmatpush.bf16.msra.mxu0 %v1092
  %1553 = vmatpush.bf16.msra.mxu0 %v1090
  %1554 = vmatmul.bf16.gmra.mxu0 %v442
  %v1555 = vpop.f32.mrf.mxu0
  %v1556 = vadd.f32 %v1512, %v1555
  %v1557 = vpop.f32.mrf.mxu0
  %v1558 = vadd.f32 %v1514, %v1557
  %1559 = vmatmul.bf16.gmra.mxu0 %v451
  %v1560 = vpop.f32.mrf.mxu0
  %v1561 = vadd.f32 %v1517, %v1560
  %v1562 = vpop.f32.mrf.mxu0
  %v1563 = vadd.f32 %v1519, %v1562
  %1564 = vmatmul.bf16.gmra.mxu0 %v460
  %v1565 = vpop.f32.mrf.mxu0
  %v1566 = vadd.f32 %v1522, %v1565
  %v1567 = vpop.f32.mrf.mxu0
  %v1568 = vadd.f32 %v1524, %v1567
  %1569 = vmatmul.bf16.gmra.mxu0 %v469
  %v1570 = vpop.f32.mrf.mxu0
  %v1571 = vadd.f32 %v1527, %v1570
  %v1572 = vpop.f32.mrf.mxu0
  %v1573 = vadd.f32 %v1529, %v1572
  %1574 = vmatmul.bf16.gmra.mxu0 %v478
  %v1575 = vpop.f32.mrf.mxu0
  %v1576 = vadd.f32 %v1532, %v1575
  %v1577 = vpop.f32.mrf.mxu0
  %v1578 = vadd.f32 %v1534, %v1577
  %1579 = vmatmul.bf16.gmra.mxu0 %v487
  %v1580 = vpop.f32.mrf.mxu0
  %v1581 = vadd.f32 %v1537, %v1580
  %v1582 = vpop.f32.mrf.mxu0
  %v1583 = vadd.f32 %v1539, %v1582
  %1584 = vmatmul.bf16.gmra.mxu0 %v496
  %v1585 = vpop.f32.mrf.mxu0
  %v1586 = vadd.f32 %v1542, %v1585
  %v1587 = vpop.f32.mrf.mxu0
  %v1588 = vadd.f32 %v1544, %v1587
  %1589 = vdwg.mxu0
  %1590 = vmatpush.bf16.msra.mxu0 %v1120
  %1591 = vmatpush.bf16.msra.mxu0 %v1118
  %1592 = vmatpush.bf16.msra.mxu0 %v1116
  %1593 = vmatpush.bf16.msra.mxu0 %v1114
  %1594 = vmatpush.bf16.msra.mxu0 %v1112
  %1595 = vmatpush.bf16.msra.mxu0 %v1110
  %1596 = vmatpush.bf16.msra.mxu0 %v1108
  %1597 = vmatpush.bf16.msra.mxu0 %v1106
  %1598 = vmatmul.bf16.gmra.mxu0 %v443
  %v1599 = vpop.f32.mrf.mxu0
  %v1600 = vadd.f32 %v1556, %v1599
  %v1601 = vpop.f32.mrf.mxu0
  %v1602 = vadd.f32 %v1558, %v1601
  %1603 = vmatmul.bf16.gmra.mxu0 %v452
  %v1604 = vpop.f32.mrf.mxu0
  %v1605 = vadd.f32 %v1561, %v1604
  %v1606 = vpop.f32.mrf.mxu0
  %v1607 = vadd.f32 %v1563, %v1606
  %1608 = vmatmul.bf16.gmra.mxu0 %v461
  %v1609 = vpop.f32.mrf.mxu0
  %v1610 = vadd.f32 %v1566, %v1609
  %v1611 = vpop.f32.mrf.mxu0
  %v1612 = vadd.f32 %v1568, %v1611
  %1613 = vmatmul.bf16.gmra.mxu0 %v470
  %v1614 = vpop.f32.mrf.mxu0
  %v1615 = vadd.f32 %v1571, %v1614
  %v1616 = vpop.f32.mrf.mxu0
  %v1617 = vadd.f32 %v1573, %v1616
  %1618 = vmatmul.bf16.gmra.mxu0 %v479
  %v1619 = vpop.f32.mrf.mxu0
  %v1620 = vadd.f32 %v1576, %v1619
  %v1621 = vpop.f32.mrf.mxu0
  %v1622 = vadd.f32 %v1578, %v1621
  %1623 = vmatmul.bf16.gmra.mxu0 %v488
  %v1624 = vpop.f32.mrf.mxu0
  %v1625 = vadd.f32 %v1581, %v1624
  %v1626 = vpop.f32.mrf.mxu0
  %v1627 = vadd.f32 %v1583, %v1626
  %1628 = vmatmul.bf16.gmra.mxu0 %v497
  %v1629 = vpop.f32.mrf.mxu0
  %v1630 = vadd.f32 %v1586, %v1629
  %v1631 = vpop.f32.mrf.mxu0
  %v1632 = vadd.f32 %v1588, %v1631
  %1633 = vdwg.mxu0
  %1634 = vmatpush.bf16.msra.mxu0 %v1136
  %1635 = vmatpush.bf16.msra.mxu0 %v1134
  %1636 = vmatpush.bf16.msra.mxu0 %v1132
  %1637 = vmatpush.bf16.msra.mxu0 %v1130
  %1638 = vmatpush.bf16.msra.mxu0 %v1128
  %1639 = vmatpush.bf16.msra.mxu0 %v1126
  %1640 = vmatpush.bf16.msra.mxu0 %v1124
  %1641 = vmatpush.bf16.msra.mxu0 %v1122
  %1642 = vmatmul.bf16.gmra.mxu0 %v444
  %v1643 = vpop.f32.mrf.mxu0
  %v1644 = vadd.f32 %v1600, %v1643
  %v1645 = vpop.f32.mrf.mxu0
  %v1646 = vadd.f32 %v1602, %v1645
  %1647 = vmatmul.bf16.gmra.mxu0 %v453
  %v1648 = vpop.f32.mrf.mxu0
  %v1649 = vadd.f32 %v1605, %v1648
  %v1650 = vpop.f32.mrf.mxu0
  %v1651 = vadd.f32 %v1607, %v1650
  %1652 = vmatmul.bf16.gmra.mxu0 %v462
  %v1653 = vpop.f32.mrf.mxu0
  %v1654 = vadd.f32 %v1610, %v1653
  %v1655 = vpop.f32.mrf.mxu0
  %v1656 = vadd.f32 %v1612, %v1655
  %1657 = vmatmul.bf16.gmra.mxu0 %v471
  %v1658 = vpop.f32.mrf.mxu0
  %v1659 = vadd.f32 %v1615, %v1658
  %v1660 = vpop.f32.mrf.mxu0
  %v1661 = vadd.f32 %v1617, %v1660
  %1662 = vmatmul.bf16.gmra.mxu0 %v480
  %v1663 = vpop.f32.mrf.mxu0
  %v1664 = vadd.f32 %v1620, %v1663
  %v1665 = vpop.f32.mrf.mxu0
  %v1666 = vadd.f32 %v1622, %v1665
  %1667 = vmatmul.bf16.gmra.mxu0 %v489
  %v1668 = vpop.f32.mrf.mxu0
  %v1669 = vadd.f32 %v1625, %v1668
  %v1670 = vpop.f32.mrf.mxu0
  %v1671 = vadd.f32 %v1627, %v1670
  %1672 = vmatmul.bf16.gmra.mxu0 %v498
  %v1673 = vpop.f32.mrf.mxu0
  %v1674 = vadd.f32 %v1630, %v1673
  %v1675 = vpop.f32.mrf.mxu0
  %v1676 = vadd.f32 %v1632, %v1675
  %1677 = vdwg.mxu0
  %1678 = vmatpush.bf16.msra.mxu0 %v1009
  %1679 = vmatpush.bf16.msra.mxu0 %v1007
  %1680 = vmatpush.bf16.msra.mxu0 %v1005
  %1681 = vmatpush.bf16.msra.mxu0 %v1003
  %1682 = vmatpush.bf16.msra.mxu0 %v1001
  %1683 = vmatpush.bf16.msra.mxu0 %v999
  %1684 = vmatpush.bf16.msra.mxu0 %v997
  %1685 = vmatpush.bf16.msra.mxu0 %v995
  %1686 = vmatmul.bf16.gmra.mxu0 %v436
  %v1687 = vpop.f32.mrf.mxu0
  %v1688 = vadd.f32 %v237, %v1687
  %v1689 = vpop.f32.mrf.mxu0
  %v1690 = vadd.f32 %v237, %v1689
  %1691 = vmatmul.bf16.gmra.mxu0 %v445
  %v1692 = vpop.f32.mrf.mxu0
  %v1693 = vadd.f32 %v237, %v1692
  %v1694 = vpop.f32.mrf.mxu0
  %v1695 = vadd.f32 %v237, %v1694
  %1696 = vmatmul.bf16.gmra.mxu0 %v454
  %v1697 = vpop.f32.mrf.mxu0
  %v1698 = vadd.f32 %v237, %v1697
  %v1699 = vpop.f32.mrf.mxu0
  %v1700 = vadd.f32 %v237, %v1699
  %1701 = vmatmul.bf16.gmra.mxu0 %v463
  %v1702 = vpop.f32.mrf.mxu0
  %v1703 = vadd.f32 %v237, %v1702
  %v1704 = vpop.f32.mrf.mxu0
  %v1705 = vadd.f32 %v237, %v1704
  %1706 = vmatmul.bf16.gmra.mxu0 %v472
  %v1707 = vpop.f32.mrf.mxu0
  %v1708 = vadd.f32 %v237, %v1707
  %v1709 = vpop.f32.mrf.mxu0
  %v1710 = vadd.f32 %v237, %v1709
  %1711 = vmatmul.bf16.gmra.mxu0 %v481
  %v1712 = vpop.f32.mrf.mxu0
  %v1713 = vadd.f32 %v237, %v1712
  %v1714 = vpop.f32.mrf.mxu0
  %v1715 = vadd.f32 %v237, %v1714
  %1716 = vmatmul.bf16.gmra.mxu0 %v490
  %v1717 = vpop.f32.mrf.mxu0
  %v1718 = vadd.f32 %v237, %v1717
  %v1719 = vpop.f32.mrf.mxu0
  %v1720 = vadd.f32 %v237, %v1719
  %1721 = vdwg.mxu0
  %1722 = vmatpush.bf16.msra.mxu0 %v1025
  %1723 = vmatpush.bf16.msra.mxu0 %v1023
  %1724 = vmatpush.bf16.msra.mxu0 %v1021
  %1725 = vmatpush.bf16.msra.mxu0 %v1019
  %1726 = vmatpush.bf16.msra.mxu0 %v1017
  %1727 = vmatpush.bf16.msra.mxu0 %v1015
  %1728 = vmatpush.bf16.msra.mxu0 %v1013
  %1729 = vmatpush.bf16.msra.mxu0 %v1011
  %1730 = vmatmul.bf16.gmra.mxu0 %v437
  %v1731 = vpop.f32.mrf.mxu0
  %v1732 = vadd.f32 %v1688, %v1731
  %v1733 = vpop.f32.mrf.mxu0
  %v1734 = vadd.f32 %v1690, %v1733
  %1735 = vmatmul.bf16.gmra.mxu0 %v446
  %v1736 = vpop.f32.mrf.mxu0
  %v1737 = vadd.f32 %v1693, %v1736
  %v1738 = vpop.f32.mrf.mxu0
  %v1739 = vadd.f32 %v1695, %v1738
  %1740 = vmatmul.bf16.gmra.mxu0 %v455
  %v1741 = vpop.f32.mrf.mxu0
  %v1742 = vadd.f32 %v1698, %v1741
  %v1743 = vpop.f32.mrf.mxu0
  %v1744 = vadd.f32 %v1700, %v1743
  %1745 = vmatmul.bf16.gmra.mxu0 %v464
  %v1746 = vpop.f32.mrf.mxu0
  %v1747 = vadd.f32 %v1703, %v1746
  %v1748 = vpop.f32.mrf.mxu0
  %v1749 = vadd.f32 %v1705, %v1748
  %1750 = vmatmul.bf16.gmra.mxu0 %v473
  %v1751 = vpop.f32.mrf.mxu0
  %v1752 = vadd.f32 %v1708, %v1751
  %v1753 = vpop.f32.mrf.mxu0
  %v1754 = vadd.f32 %v1710, %v1753
  %1755 = vmatmul.bf16.gmra.mxu0 %v482
  %v1756 = vpop.f32.mrf.mxu0
  %v1757 = vadd.f32 %v1713, %v1756
  %v1758 = vpop.f32.mrf.mxu0
  %v1759 = vadd.f32 %v1715, %v1758
  %1760 = vmatmul.bf16.gmra.mxu0 %v491
  %v1761 = vpop.f32.mrf.mxu0
  %v1762 = vadd.f32 %v1718, %v1761
  %v1763 = vpop.f32.mrf.mxu0
  %v1764 = vadd.f32 %v1720, %v1763
  %1765 = vdwg.mxu0
  %1766 = vmatpush.bf16.msra.mxu0 %v1041
  %1767 = vmatpush.bf16.msra.mxu0 %v1039
  %1768 = vmatpush.bf16.msra.mxu0 %v1037
  %1769 = vmatpush.bf16.msra.mxu0 %v1035
  %1770 = vmatpush.bf16.msra.mxu0 %v1033
  %1771 = vmatpush.bf16.msra.mxu0 %v1031
  %1772 = vmatpush.bf16.msra.mxu0 %v1029
  %1773 = vmatpush.bf16.msra.mxu0 %v1027
  %1774 = vmatmul.bf16.gmra.mxu0 %v438
  %v1775 = vpop.f32.mrf.mxu0
  %v1776 = vadd.f32 %v1732, %v1775
  %v1777 = vpop.f32.mrf.mxu0
  %v1778 = vadd.f32 %v1734, %v1777
  %1779 = vmatmul.bf16.gmra.mxu0 %v447
  %v1780 = vpop.f32.mrf.mxu0
  %v1781 = vadd.f32 %v1737, %v1780
  %v1782 = vpop.f32.mrf.mxu0
  %v1783 = vadd.f32 %v1739, %v1782
  %1784 = vmatmul.bf16.gmra.mxu0 %v456
  %v1785 = vpop.f32.mrf.mxu0
  %v1786 = vadd.f32 %v1742, %v1785
  %v1787 = vpop.f32.mrf.mxu0
  %v1788 = vadd.f32 %v1744, %v1787
  %1789 = vmatmul.bf16.gmra.mxu0 %v465
  %v1790 = vpop.f32.mrf.mxu0
  %v1791 = vadd.f32 %v1747, %v1790
  %v1792 = vpop.f32.mrf.mxu0
  %v1793 = vadd.f32 %v1749, %v1792
  %1794 = vmatmul.bf16.gmra.mxu0 %v474
  %v1795 = vpop.f32.mrf.mxu0
  %v1796 = vadd.f32 %v1752, %v1795
  %v1797 = vpop.f32.mrf.mxu0
  %v1798 = vadd.f32 %v1754, %v1797
  %1799 = vmatmul.bf16.gmra.mxu0 %v483
  %v1800 = vpop.f32.mrf.mxu0
  %v1801 = vadd.f32 %v1757, %v1800
  %v1802 = vpop.f32.mrf.mxu0
  %v1803 = vadd.f32 %v1759, %v1802
  %1804 = vmatmul.bf16.gmra.mxu0 %v492
  %v1805 = vpop.f32.mrf.mxu0
  %v1806 = vadd.f32 %v1762, %v1805
  %v1807 = vpop.f32.mrf.mxu0
  %v1808 = vadd.f32 %v1764, %v1807
  %1809 = vdwg.mxu0
  %1810 = vmatpush.bf16.msra.mxu0 %v1057
  %1811 = vmatpush.bf16.msra.mxu0 %v1055
  %1812 = vmatpush.bf16.msra.mxu0 %v1053
  %1813 = vmatpush.bf16.msra.mxu0 %v1051
  %1814 = vmatpush.bf16.msra.mxu0 %v1049
  %1815 = vmatpush.bf16.msra.mxu0 %v1047
  %1816 = vmatpush.bf16.msra.mxu0 %v1045
  %1817 = vmatpush.bf16.msra.mxu0 %v1043
  %1818 = vmatmul.bf16.gmra.mxu0 %v439
  %v1819 = vpop.f32.mrf.mxu0
  %v1820 = vadd.f32 %v1776, %v1819
  %v1821 = vpop.f32.mrf.mxu0
  %v1822 = vadd.f32 %v1778, %v1821
  %1823 = vmatmul.bf16.gmra.mxu0 %v448
  %v1824 = vpop.f32.mrf.mxu0
  %v1825 = vadd.f32 %v1781, %v1824
  %v1826 = vpop.f32.mrf.mxu0
  %v1827 = vadd.f32 %v1783, %v1826
  %1828 = vmatmul.bf16.gmra.mxu0 %v457
  %v1829 = vpop.f32.mrf.mxu0
  %v1830 = vadd.f32 %v1786, %v1829
  %v1831 = vpop.f32.mrf.mxu0
  %v1832 = vadd.f32 %v1788, %v1831
  %1833 = vmatmul.bf16.gmra.mxu0 %v466
  %v1834 = vpop.f32.mrf.mxu0
  %v1835 = vadd.f32 %v1791, %v1834
  %v1836 = vpop.f32.mrf.mxu0
  %v1837 = vadd.f32 %v1793, %v1836
  %1838 = vmatmul.bf16.gmra.mxu0 %v475
  %v1839 = vpop.f32.mrf.mxu0
  %v1840 = vadd.f32 %v1796, %v1839
  %v1841 = vpop.f32.mrf.mxu0
  %v1842 = vadd.f32 %v1798, %v1841
  %1843 = vmatmul.bf16.gmra.mxu0 %v484
  %v1844 = vpop.f32.mrf.mxu0
  %v1845 = vadd.f32 %v1801, %v1844
  %v1846 = vpop.f32.mrf.mxu0
  %v1847 = vadd.f32 %v1803, %v1846
  %1848 = vmatmul.bf16.gmra.mxu0 %v493
  %v1849 = vpop.f32.mrf.mxu0
  %v1850 = vadd.f32 %v1806, %v1849
  %v1851 = vpop.f32.mrf.mxu0
  %v1852 = vadd.f32 %v1808, %v1851
  %1853 = vdwg.mxu0
  %1854 = vmatpush.bf16.msra.mxu0 %v1073
  %1855 = vmatpush.bf16.msra.mxu0 %v1071
  %1856 = vmatpush.bf16.msra.mxu0 %v1069
  %1857 = vmatpush.bf16.msra.mxu0 %v1067
  %1858 = vmatpush.bf16.msra.mxu0 %v1065
  %1859 = vmatpush.bf16.msra.mxu0 %v1063
  %1860 = vmatpush.bf16.msra.mxu0 %v1061
  %1861 = vmatpush.bf16.msra.mxu0 %v1059
  %1862 = vmatmul.bf16.gmra.mxu0 %v440
  %v1863 = vpop.f32.mrf.mxu0
  %v1864 = vadd.f32 %v1820, %v1863
  %v1865 = vpop.f32.mrf.mxu0
  %v1866 = vadd.f32 %v1822, %v1865
  %1867 = vmatmul.bf16.gmra.mxu0 %v449
  %v1868 = vpop.f32.mrf.mxu0
  %v1869 = vadd.f32 %v1825, %v1868
  %v1870 = vpop.f32.mrf.mxu0
  %v1871 = vadd.f32 %v1827, %v1870
  %1872 = vmatmul.bf16.gmra.mxu0 %v458
  %v1873 = vpop.f32.mrf.mxu0
  %v1874 = vadd.f32 %v1830, %v1873
  %v1875 = vpop.f32.mrf.mxu0
  %v1876 = vadd.f32 %v1832, %v1875
  %1877 = vmatmul.bf16.gmra.mxu0 %v467
  %v1878 = vpop.f32.mrf.mxu0
  %v1879 = vadd.f32 %v1835, %v1878
  %v1880 = vpop.f32.mrf.mxu0
  %v1881 = vadd.f32 %v1837, %v1880
  %1882 = vmatmul.bf16.gmra.mxu0 %v476
  %v1883 = vpop.f32.mrf.mxu0
  %v1884 = vadd.f32 %v1840, %v1883
  %v1885 = vpop.f32.mrf.mxu0
  %v1886 = vadd.f32 %v1842, %v1885
  %1887 = vmatmul.bf16.gmra.mxu0 %v485
  %v1888 = vpop.f32.mrf.mxu0
  %v1889 = vadd.f32 %v1845, %v1888
  %v1890 = vpop.f32.mrf.mxu0
  %v1891 = vadd.f32 %v1847, %v1890
  %1892 = vmatmul.bf16.gmra.mxu0 %v494
  %v1893 = vpop.f32.mrf.mxu0
  %v1894 = vadd.f32 %v1850, %v1893
  %v1895 = vpop.f32.mrf.mxu0
  %v1896 = vadd.f32 %v1852, %v1895
  %1897 = vdwg.mxu0
  %1898 = vmatpush.bf16.msra.mxu0 %v1089
  %1899 = vmatpush.bf16.msra.mxu0 %v1087
  %1900 = vmatpush.bf16.msra.mxu0 %v1085
  %1901 = vmatpush.bf16.msra.mxu0 %v1083
  %1902 = vmatpush.bf16.msra.mxu0 %v1081
  %1903 = vmatpush.bf16.msra.mxu0 %v1079
  %1904 = vmatpush.bf16.msra.mxu0 %v1077
  %1905 = vmatpush.bf16.msra.mxu0 %v1075
  %1906 = vmatmul.bf16.gmra.mxu0 %v441
  %v1907 = vpop.f32.mrf.mxu0
  %v1908 = vadd.f32 %v1864, %v1907
  %v1909 = vpop.f32.mrf.mxu0
  %v1910 = vadd.f32 %v1866, %v1909
  %1911 = vmatmul.bf16.gmra.mxu0 %v450
  %v1912 = vpop.f32.mrf.mxu0
  %v1913 = vadd.f32 %v1869, %v1912
  %v1914 = vpop.f32.mrf.mxu0
  %v1915 = vadd.f32 %v1871, %v1914
  %1916 = vmatmul.bf16.gmra.mxu0 %v459
  %v1917 = vpop.f32.mrf.mxu0
  %v1918 = vadd.f32 %v1874, %v1917
  %v1919 = vpop.f32.mrf.mxu0
  %v1920 = vadd.f32 %v1876, %v1919
  %1921 = vmatmul.bf16.gmra.mxu0 %v468
  %v1922 = vpop.f32.mrf.mxu0
  %v1923 = vadd.f32 %v1879, %v1922
  %v1924 = vpop.f32.mrf.mxu0
  %v1925 = vadd.f32 %v1881, %v1924
  %1926 = vmatmul.bf16.gmra.mxu0 %v477
  %v1927 = vpop.f32.mrf.mxu0
  %v1928 = vadd.f32 %v1884, %v1927
  %v1929 = vpop.f32.mrf.mxu0
  %v1930 = vadd.f32 %v1886, %v1929
  %1931 = vmatmul.bf16.gmra.mxu0 %v486
  %v1932 = vpop.f32.mrf.mxu0
  %v1933 = vadd.f32 %v1889, %v1932
  %v1934 = vpop.f32.mrf.mxu0
  %v1935 = vadd.f32 %v1891, %v1934
  %1936 = vmatmul.bf16.gmra.mxu0 %v495
  %v1937 = vpop.f32.mrf.mxu0
  %v1938 = vadd.f32 %v1894, %v1937
  %v1939 = vpop.f32.mrf.mxu0
  %v1940 = vadd.f32 %v1896, %v1939
  %1941 = vdwg.mxu0
  %1942 = vmatpush.bf16.msra.mxu0 %v1105
  %1943 = vmatpush.bf16.msra.mxu0 %v1103
  %1944 = vmatpush.bf16.msra.mxu0 %v1101
  %1945 = vmatpush.bf16.msra.mxu0 %v1099
  %1946 = vmatpush.bf16.msra.mxu0 %v1097
  %1947 = vmatpush.bf16.msra.mxu0 %v1095
  %1948 = vmatpush.bf16.msra.mxu0 %v1093
  %1949 = vmatpush.bf16.msra.mxu0 %v1091
  %1950 = vmatmul.bf16.gmra.mxu0 %v442
  %v1951 = vpop.f32.mrf.mxu0
  %v1952 = vadd.f32 %v1908, %v1951
  %v1953 = vpop.f32.mrf.mxu0
  %v1954 = vadd.f32 %v1910, %v1953
  %1955 = vmatmul.bf16.gmra.mxu0 %v451
  %v1956 = vpop.f32.mrf.mxu0
  %v1957 = vadd.f32 %v1913, %v1956
  %v1958 = vpop.f32.mrf.mxu0
  %v1959 = vadd.f32 %v1915, %v1958
  %1960 = vmatmul.bf16.gmra.mxu0 %v460
  %v1961 = vpop.f32.mrf.mxu0
  %v1962 = vadd.f32 %v1918, %v1961
  %v1963 = vpop.f32.mrf.mxu0
  %v1964 = vadd.f32 %v1920, %v1963
  %1965 = vmatmul.bf16.gmra.mxu0 %v469
  %v1966 = vpop.f32.mrf.mxu0
  %v1967 = vadd.f32 %v1923, %v1966
  %v1968 = vpop.f32.mrf.mxu0
  %v1969 = vadd.f32 %v1925, %v1968
  %1970 = vmatmul.bf16.gmra.mxu0 %v478
  %v1971 = vpop.f32.mrf.mxu0
  %v1972 = vadd.f32 %v1928, %v1971
  %v1973 = vpop.f32.mrf.mxu0
  %v1974 = vadd.f32 %v1930, %v1973
  %1975 = vmatmul.bf16.gmra.mxu0 %v487
  %v1976 = vpop.f32.mrf.mxu0
  %v1977 = vadd.f32 %v1933, %v1976
  %v1978 = vpop.f32.mrf.mxu0
  %v1979 = vadd.f32 %v1935, %v1978
  %1980 = vmatmul.bf16.gmra.mxu0 %v496
  %v1981 = vpop.f32.mrf.mxu0
  %v1982 = vadd.f32 %v1938, %v1981
  %v1983 = vpop.f32.mrf.mxu0
  %v1984 = vadd.f32 %v1940, %v1983
  %1985 = vdwg.mxu0
  %1986 = vmatpush.bf16.msra.mxu0 %v1121
  %1987 = vmatpush.bf16.msra.mxu0 %v1119
  %1988 = vmatpush.bf16.msra.mxu0 %v1117
  %1989 = vmatpush.bf16.msra.mxu0 %v1115
  %1990 = vmatpush.bf16.msra.mxu0 %v1113
  %1991 = vmatpush.bf16.msra.mxu0 %v1111
  %1992 = vmatpush.bf16.msra.mxu0 %v1109
  %1993 = vmatpush.bf16.msra.mxu0 %v1107
  %1994 = vmatmul.bf16.gmra.mxu0 %v443
  %v1995 = vpop.f32.mrf.mxu0
  %v1996 = vadd.f32 %v1952, %v1995
  %v1997 = vpop.f32.mrf.mxu0
  %v1998 = vadd.f32 %v1954, %v1997
  %1999 = vmatmul.bf16.gmra.mxu0 %v452
  %v2000 = vpop.f32.mrf.mxu0
  %v2001 = vadd.f32 %v1957, %v2000
  %v2002 = vpop.f32.mrf.mxu0
  %v2003 = vadd.f32 %v1959, %v2002
  %2004 = vmatmul.bf16.gmra.mxu0 %v461
  %v2005 = vpop.f32.mrf.mxu0
  %v2006 = vadd.f32 %v1962, %v2005
  %v2007 = vpop.f32.mrf.mxu0
  %v2008 = vadd.f32 %v1964, %v2007
  %2009 = vmatmul.bf16.gmra.mxu0 %v470
  %v2010 = vpop.f32.mrf.mxu0
  %v2011 = vadd.f32 %v1967, %v2010
  %v2012 = vpop.f32.mrf.mxu0
  %v2013 = vadd.f32 %v1969, %v2012
  %2014 = vmatmul.bf16.gmra.mxu0 %v479
  %v2015 = vpop.f32.mrf.mxu0
  %v2016 = vadd.f32 %v1972, %v2015
  %v2017 = vpop.f32.mrf.mxu0
  %v2018 = vadd.f32 %v1974, %v2017
  %2019 = vmatmul.bf16.gmra.mxu0 %v488
  %v2020 = vpop.f32.mrf.mxu0
  %v2021 = vadd.f32 %v1977, %v2020
  %v2022 = vpop.f32.mrf.mxu0
  %v2023 = vadd.f32 %v1979, %v2022
  %2024 = vmatmul.bf16.gmra.mxu0 %v497
  %v2025 = vpop.f32.mrf.mxu0
  %v2026 = vadd.f32 %v1982, %v2025
  %v2027 = vpop.f32.mrf.mxu0
  %v2028 = vadd.f32 %v1984, %v2027
  %2029 = vdwg.mxu0
  %2030 = vmatpush.bf16.msra.mxu0 %v1137
  %2031 = vmatpush.bf16.msra.mxu0 %v1135
  %2032 = vmatpush.bf16.msra.mxu0 %v1133
  %2033 = vmatpush.bf16.msra.mxu0 %v1131
  %2034 = vmatpush.bf16.msra.mxu0 %v1129
  %2035 = vmatpush.bf16.msra.mxu0 %v1127
  %2036 = vmatpush.bf16.msra.mxu0 %v1125
  %2037 = vmatpush.bf16.msra.mxu0 %v1123
  %2038 = vmatmul.bf16.gmra.mxu0 %v444
  %v2039 = vpop.f32.mrf.mxu0
  %v2040 = vadd.f32 %v1996, %v2039
  %v2041 = vpop.f32.mrf.mxu0
  %v2042 = vadd.f32 %v1998, %v2041
  %2043 = vmatmul.bf16.gmra.mxu0 %v453
  %v2044 = vpop.f32.mrf.mxu0
  %v2045 = vadd.f32 %v2001, %v2044
  %v2046 = vpop.f32.mrf.mxu0
  %v2047 = vadd.f32 %v2003, %v2046
  %2048 = vmatmul.bf16.gmra.mxu0 %v462
  %v2049 = vpop.f32.mrf.mxu0
  %v2050 = vadd.f32 %v2006, %v2049
  %v2051 = vpop.f32.mrf.mxu0
  %v2052 = vadd.f32 %v2008, %v2051
  %2053 = vmatmul.bf16.gmra.mxu0 %v471
  %v2054 = vpop.f32.mrf.mxu0
  %v2055 = vadd.f32 %v2011, %v2054
  %v2056 = vpop.f32.mrf.mxu0
  %v2057 = vadd.f32 %v2013, %v2056
  %2058 = vmatmul.bf16.gmra.mxu0 %v480
  %v2059 = vpop.f32.mrf.mxu0
  %v2060 = vadd.f32 %v2016, %v2059
  %v2061 = vpop.f32.mrf.mxu0
  %v2062 = vadd.f32 %v2018, %v2061
  %2063 = vmatmul.bf16.gmra.mxu0 %v489
  %v2064 = vpop.f32.mrf.mxu0
  %v2065 = vadd.f32 %v2021, %v2064
  %v2066 = vpop.f32.mrf.mxu0
  %v2067 = vadd.f32 %v2023, %v2066
  %2068 = vmatmul.bf16.gmra.mxu0 %v498
  %v2069 = vpop.f32.mrf.mxu0
  %v2070 = vadd.f32 %v2026, %v2069
  %v2071 = vpop.f32.mrf.mxu0
  %v2072 = vadd.f32 %v2028, %v2071
  %2073 = vdwg.mxu0
  %vm2074 = vcmp.ge.f32.partialorder %v1644, 0.0
  %vm2075 = vcmp.ge.f32.partialorder %v2040, 0.0
  %vm2076 = vcmp.ge.f32.partialorder %v1646, 0.0
  %vm2077 = vcmp.ge.f32.partialorder %v2042, 0.0
  %vm2078 = vcmp.ge.f32.partialorder %v1649, 0.0
  %vm2079 = vcmp.ge.f32.partialorder %v2045, 0.0
  %vm2080 = vcmp.ge.f32.partialorder %v1651, 0.0
  %vm2081 = vcmp.ge.f32.partialorder %v2047, 0.0
  %vm2082 = vcmp.ge.f32.partialorder %v1654, 0.0
  %vm2083 = vcmp.ge.f32.partialorder %v2050, 0.0
  %vm2084 = vcmp.ge.f32.partialorder %v1656, 0.0
  %vm2085 = vcmp.ge.f32.partialorder %v2052, 0.0
  %vm2086 = vcmp.ge.f32.partialorder %v1659, 0.0
  %vm2087 = vcmp.ge.f32.partialorder %v2055, 0.0
  %vm2088 = vcmp.ge.f32.partialorder %v1661, 0.0
  %vm2089 = vcmp.ge.f32.partialorder %v2057, 0.0
  %vm2090 = vcmp.ge.f32.partialorder %v1664, 0.0
  %vm2091 = vcmp.ge.f32.partialorder %v2060, 0.0
  %vm2092 = vcmp.ge.f32.partialorder %v1666, 0.0
  %vm2093 = vcmp.ge.f32.partialorder %v2062, 0.0
  %vm2094 = vcmp.ge.f32.partialorder %v1669, 0.0
  %vm2095 = vcmp.ge.f32.partialorder %v2065, 0.0
  %vm2096 = vcmp.ge.f32.partialorder %v1671, 0.0
  %vm2097 = vcmp.ge.f32.partialorder %v2067, 0.0
  %vm2098 = vcmp.ge.f32.partialorder %v1674, 0.0
  %vm2099 = vcmp.ge.f32.partialorder %v2070, 0.0
  %vm2100 = vcmp.ge.f32.partialorder %v1676, 0.0
  %vm2101 = vcmp.ge.f32.partialorder %v2072, 0.0
  %v2102 = vmul.f32 %v1644, 0.01
  %v2103 = vmul.f32 %v2040, 0.01
  %v2104 = vmul.f32 %v1646, 0.01
  %v2105 = vmul.f32 %v2042, 0.01
  %v2106 = vmul.f32 %v1649, 0.01
  %v2107 = vmul.f32 %v2045, 0.01
  %v2108 = vmul.f32 %v1651, 0.01
  %v2109 = vmul.f32 %v2047, 0.01
  %v2110 = vmul.f32 %v1654, 0.01
  %v2111 = vmul.f32 %v2050, 0.01
  %v2112 = vmul.f32 %v1656, 0.01
  %v2113 = vmul.f32 %v2052, 0.01
  %v2114 = vmul.f32 %v1659, 0.01
  %v2115 = vmul.f32 %v2055, 0.01
  %v2116 = vmul.f32 %v1661, 0.01
  %v2117 = vmul.f32 %v2057, 0.01
  %v2118 = vmul.f32 %v1664, 0.01
  %v2119 = vmul.f32 %v2060, 0.01
  %v2120 = vmul.f32 %v1666, 0.01
  %v2121 = vmul.f32 %v2062, 0.01
  %v2122 = vmul.f32 %v1669, 0.01
  %v2123 = vmul.f32 %v2065, 0.01
  %v2124 = vmul.f32 %v1671, 0.01
  %v2125 = vmul.f32 %v2067, 0.01
  %v2126 = vmul.f32 %v1674, 0.01
  %v2127 = vmul.f32 %v2070, 0.01
  %v2128 = vmul.f32 %v1676, 0.01
  %v2129 = vmul.f32 %v2072, 0.01
  %v2130 = vsel %vm2074, %v1644, %v2102
  %v2131 = vsel %vm2075, %v2040, %v2103
  %v2132 = vsel %vm2076, %v1646, %v2104
  %v2133 = vsel %vm2077, %v2042, %v2105
  %v2134 = vsel %vm2078, %v1649, %v2106
  %v2135 = vsel %vm2079, %v2045, %v2107
  %v2136 = vsel %vm2080, %v1651, %v2108
  %v2137 = vsel %vm2081, %v2047, %v2109
  %v2138 = vsel %vm2082, %v1654, %v2110
  %v2139 = vsel %vm2083, %v2050, %v2111
  %v2140 = vsel %vm2084, %v1656, %v2112
  %v2141 = vsel %vm2085, %v2052, %v2113
  %v2142 = vsel %vm2086, %v1659, %v2114
  %v2143 = vsel %vm2087, %v2055, %v2115
  %v2144 = vsel %vm2088, %v1661, %v2116
  %v2145 = vsel %vm2089, %v2057, %v2117
  %v2146 = vsel %vm2090, %v1664, %v2118
  %v2147 = vsel %vm2091, %v2060, %v2119
  %v2148 = vsel %vm2092, %v1666, %v2120
  %v2149 = vsel %vm2093, %v2062, %v2121
  %v2150 = vsel %vm2094, %v1669, %v2122
  %v2151 = vsel %vm2095, %v2065, %v2123
  %v2152 = vsel %vm2096, %v1671, %v2124
  %v2153 = vsel %vm2097, %v2067, %v2125
  %v2154 = vsel %vm2098, %v1674, %v2126
  %v2155 = vsel %vm2099, %v2070, %v2127
  %v2156 = vsel %vm2100, %v1676, %v2128
  %v2157 = vsel %vm2101, %v2072, %v2129
  %v2158 = vld [vmem:[%s3] sm:$0x3]
  %v2160 = vperm.slane %v2158, 0
  %v2161 = vperm.slane %v2158, 1
  %v2164 = vmul.f32 %v2130, %v2160
  %v2165 = vmul.f32 %v2131, %v2161
  %v2166 = vmul.f32 %v2132, %v2160
  %v2167 = vmul.f32 %v2133, %v2161
  %v2168 = vmul.f32 %v2134, %v2160
  %v2169 = vmul.f32 %v2135, %v2161
  %v2170 = vmul.f32 %v2136, %v2160
  %v2171 = vmul.f32 %v2137, %v2161
  %v2172 = vmul.f32 %v2138, %v2160
  %v2173 = vmul.f32 %v2139, %v2161
  %v2174 = vmul.f32 %v2140, %v2160
  %v2175 = vmul.f32 %v2141, %v2161
  %v2176 = vmul.f32 %v2142, %v2160
  %v2177 = vmul.f32 %v2143, %v2161
  %v2178 = vmul.f32 %v2144, %v2160
  %v2179 = vmul.f32 %v2145, %v2161
  %v2180 = vmul.f32 %v2146, %v2160
  %v2181 = vmul.f32 %v2147, %v2161
  %v2182 = vmul.f32 %v2148, %v2160
  %v2183 = vmul.f32 %v2149, %v2161
  %v2184 = vmul.f32 %v2150, %v2160
  %v2185 = vmul.f32 %v2151, %v2161
  %v2186 = vmul.f32 %v2152, %v2160
  %v2187 = vmul.f32 %v2153, %v2161
  %v2188 = vmul.f32 %v2154, %v2160
  %v2189 = vmul.f32 %v2155, %v2161
  %v2190 = vmul.f32 %v2156, %v2160
  %v2191 = vmul.f32 %v2157, %v2161
  %v2192 = vld [vmem:[%s4] sm:$0x3]
  %v2194 = vperm.slane %v2192, 0
  %v2195 = vperm.slane %v2192, 1
  %v2198 = vadd.f32 %v2164, %v2194
  %v2199 = vadd.f32 %v2165, %v2195
  %v2200 = vadd.f32 %v2166, %v2194
  %v2201 = vadd.f32 %v2167, %v2195
  %v2202 = vadd.f32 %v2168, %v2194
  %v2203 = vadd.f32 %v2169, %v2195
  %v2204 = vadd.f32 %v2170, %v2194
  %v2205 = vadd.f32 %v2171, %v2195
  %v2206 = vadd.f32 %v2172, %v2194
  %v2207 = vadd.f32 %v2173, %v2195
  %v2208 = vadd.f32 %v2174, %v2194
  %v2209 = vadd.f32 %v2175, %v2195
  %v2210 = vadd.f32 %v2176, %v2194
  %v2211 = vadd.f32 %v2177, %v2195
  %v2212 = vadd.f32 %v2178, %v2194
  %v2213 = vadd.f32 %v2179, %v2195
  %v2214 = vadd.f32 %v2180, %v2194
  %v2215 = vadd.f32 %v2181, %v2195
  %v2216 = vadd.f32 %v2182, %v2194
  %v2217 = vadd.f32 %v2183, %v2195
  %v2218 = vadd.f32 %v2184, %v2194
  %v2219 = vadd.f32 %v2185, %v2195
  %v2220 = vadd.f32 %v2186, %v2194
  %v2221 = vadd.f32 %v2187, %v2195
  %v2222 = vadd.f32 %v2188, %v2194
  %v2223 = vadd.f32 %v2189, %v2195
  %v2224 = vadd.f32 %v2190, %v2194
  %v2225 = vadd.f32 %v2191, %v2195
  %v2226 = vpack.c.bf16 %v2199, %v2198
  %v2227 = vpack.c.bf16 %v2201, %v2200
  %v2228 = vpack.c.bf16 %v2203, %v2202
  %v2229 = vpack.c.bf16 %v2205, %v2204
  %v2230 = vpack.c.bf16 %v2207, %v2206
  %v2231 = vpack.c.bf16 %v2209, %v2208
  %v2232 = vpack.c.bf16 %v2211, %v2210
  %v2233 = vpack.c.bf16 %v2213, %v2212
  %v2234 = vpack.c.bf16 %v2215, %v2214
  %v2235 = vpack.c.bf16 %v2217, %v2216
  %v2236 = vpack.c.bf16 %v2219, %v2218
  %v2237 = vpack.c.bf16 %v2221, %v2220
  %v2238 = vpack.c.bf16 %v2223, %v2222
  %v2239 = vpack.c.bf16 %v2225, %v2224
  %2240 = vst [vmem:[%s5] sm:$0xff] %v2226
  %2241 = vst [vmem:[%s5 + $0x8] sm:$0xff] %v2227
  %2242 = vst [vmem:[%s5 + $0x10] sm:$0xff] %v2228
  %2243 = vst [vmem:[%s5 + $0x18] sm:$0xff] %v2229
  %2244 = vst [vmem:[%s5 + $0x20] sm:$0xff] %v2230
  %2245 = vst [vmem:[%s5 + $0x28] sm:$0xff] %v2231
  %2246 = vst [vmem:[%s5 + $0x30] sm:$0xff] %v2232
  %2247 = vst [vmem:[%s5 + $0x38] sm:$0xff] %v2233
  %2248 = vst [vmem:[%s5 + $0x40] sm:$0xff] %v2234
  %2249 = vst [vmem:[%s5 + $0x48] sm:$0xff] %v2235
  %2250 = vst [vmem:[%s5 + $0x50] sm:$0xff] %v2236
  %2251 = vst [vmem:[%s5 + $0x58] sm:$0xff] %v2237
  %2252 = vst [vmem:[%s5 + $0x60] sm:$0xff] %v2238
  %2253 = vst [vmem:[%s5 + $0x68] sm:$0xff] %v2239
  // Predicated region
  $region22: #{net_forward.5} parent=0 // pred_check
    _
  $region23: #{net_forward.5} parent=0 // pred_check_branch
    %2255 = sbr.rel (0) target = $region25
  $region24: #{net_forward.5} parent=0 // pred_region
    _
  $region25: #{net_forward.5} parent=0 // pred_fallthru
    _
  // Predicated region
  $region26: #{net_forward.5} parent=0 // pred_check
    _
  $region27: #{net_forward.5} parent=0 // pred_check_branch
    %2257 = sbr.rel (0) target = $region29
  $region28: #{net_forward.5} parent=0 // pred_region
    _
  $region29: #{net_forward.5} parent=0 // pred_fallthru
    _

// kernel: net_forward.6
$region0: #{net_forward.6}
  #allocation0 [shape = 'u32[]', space=smem, size = 0x4, offset = 0x4, fixed_abs, tag = 'smem constant byte address 0x4 - core index']
  #allocation1 [shape = 'u32[72,128]{1,0:T(1,128)}', space=vmem, size = 0x9000, scoped, tag = 'internal scratch']
  %s0 = inlined_call_operand.vmem [shape: bf16[32,2304], index: 0, kind: input, shape index: {}]
  %s1 = inlined_call_operand.vmem [shape: bf16[2304,256], index: 1, kind: input, shape index: {}]
  %s2 = inlined_call_operand.vmem [shape: f32[1,256], index: 2, kind: input, shape index: {}]
  %s3 = inlined_call_operand.vmem [shape: f32[1,256], index: 3, kind: input, shape index: {}]
  %s4 = inlined_call_operand.vmem [shape: f32[1,256], index: 4, kind: input, shape index: {}]
  %s5 = inlined_call_operand.vmem [shape: bf16[32,256], index: 5, kind: output, shape index: {}]
  %s6 = sld [smem:[#allocation0]]
  $region30: #{net_forward.6} parent=0
    _
  %s8 = ssub.s32 1, %s6
  %s9 = scalar_select 0, %s8, %s6
  // Predicated region
  $region2: #{net_forward.6} parent=0 // pred_check
    _
  $region3: #{net_forward.6} parent=0 // pred_check_branch
    %11 = sbr.rel (0) target = $region5
  $region4: #{net_forward.6} parent=0 // pred_region
    _
  $region5: #{net_forward.6} parent=0 // pred_fallthru
    _
  // Predicated region
  $region6: #{net_forward.6} parent=0 // pred_check
    _
  $region7: #{net_forward.6} parent=0 // pred_check_branch
    %13 = sbr.rel (0) target = $region9
  $region8: #{net_forward.6} parent=0 // pred_region
    _
  $region9: #{net_forward.6} parent=0 // pred_fallthru
    _
  // Predicated region
  $region10: #{net_forward.6} parent=0 // pred_check
    _
  $region11: #{net_forward.6} parent=0 // pred_check_branch
    %15 = sbr.rel (0) target = $region13
  $region12: #{net_forward.6} parent=0 // pred_region
    _
  $region13: #{net_forward.6} parent=0 // pred_fallthru
    _
  // Predicated region
  $region14: #{net_forward.6} parent=0 // pred_check
    _
  $region15: #{net_forward.6} parent=0 // pred_check_branch
    %17 = sbr.rel (0) target = $region17
  $region16: #{net_forward.6} parent=0 // pred_region
    _
  $region17: #{net_forward.6} parent=0 // pred_fallthru
    _
  // Predicated region
  $region18: #{net_forward.6} parent=0 // pred_check
    _
  $region19: #{net_forward.6} parent=0 // pred_check_branch
    %19 = sbr.rel (0) target = $region21
  $region20: #{net_forward.6} parent=0 // pred_region
    _
  $region21: #{net_forward.6} parent=0 // pred_fallthru
    _
  %v20 = vld [vmem:[%s0] sm:$0xff]
  %v21 = vld [vmem:[%s0 + $0x8] sm:$0xff]
  %v22 = vld [vmem:[%s0 + $0x10] sm:$0xff]
  %v23 = vld [vmem:[%s0 + $0x18] sm:$0xff]
  %v24 = vld [vmem:[%s0 + $0x20] sm:$0xff]
  %v25 = vld [vmem:[%s0 + $0x28] sm:$0xff]
  %v26 = vld [vmem:[%s0 + $0x30] sm:$0xff]
  %v27 = vld [vmem:[%s0 + $0x38] sm:$0xff]
  %v28 = vld [vmem:[%s0 + $0x40] sm:$0xff]
  %v29 = vld [vmem:[%s0 + $0x48] sm:$0xff]
  %v30 = vld [vmem:[%s0 + $0x50] sm:$0xff]
  %v31 = vld [vmem:[%s0 + $0x58] sm:$0xff]
  %v32 = vld [vmem:[%s0 + $0x60] sm:$0xff]
  %v33 = vld [vmem:[%s0 + $0x68] sm:$0xff]
  %v34 = vld [vmem:[%s0 + $0x70] sm:$0xff]
  %v35 = vld [vmem:[%s0 + $0x78] sm:$0xff]
  %v36 = vld [vmem:[%s0 + $0x80] sm:$0xff]
  %v37 = vld [vmem:[%s0 + $0x88] sm:$0xff]
  %v38 = vld [vmem:[%s0 + $0x90] sm:$0xff]
  %v39 = vld [vmem:[%s0 + $0x98] sm:$0xff]
  %v40 = vld [vmem:[%s0 + $0xa0] sm:$0xff]
  %v41 = vld [vmem:[%s0 + $0xa8] sm:$0xff]
  %v42 = vld [vmem:[%s0 + $0xb0] sm:$0xff]
  %v43 = vld [vmem:[%s0 + $0xb8] sm:$0xff]
  %v44 = vld [vmem:[%s0 + $0xc0] sm:$0xff]
  %v45 = vld [vmem:[%s0 + $0xc8] sm:$0xff]
  %v46 = vld [vmem:[%s0 + $0xd0] sm:$0xff]
  %v47 = vld [vmem:[%s0 + $0xd8] sm:$0xff]
  %v48 = vld [vmem:[%s0 + $0xe0] sm:$0xff]
  %v49 = vld [vmem:[%s0 + $0xe8] sm:$0xff]
  %v50 = vld [vmem:[%s0 + $0xf0] sm:$0xff]
  %v51 = vld [vmem:[%s0 + $0xf8] sm:$0xff]
  %v52 = vld [vmem:[%s0 + $0x100] sm:$0xff]
  %v53 = vld [vmem:[%s0 + $0x108] sm:$0xff]
  %v54 = vld [vmem:[%s0 + $0x110] sm:$0xff]
  %v55 = vld [vmem:[%s0 + $0x118] sm:$0xff]
  %v56 = vld [vmem:[%s1] sm:$0xff]
  %v57 = vld [vmem:[%s1 + $0x8] sm:$0xff]
  %v58 = vld [vmem:[%s1 + $0x10] sm:$0xff]
  %v59 = vld [vmem:[%s1 + $0x18] sm:$0xff]
  %v60 = vld [vmem:[%s1 + $0x20] sm:$0xff]
  %v61 = vld [vmem:[%s1 + $0x28] sm:$0xff]
  %v62 = vld [vmem:[%s1 + $0x30] sm:$0xff]
  %v63 = vld [vmem:[%s1 + $0x38] sm:$0xff]
  %v64 = vld [vmem:[%s1 + $0x40] sm:$0xff]
  %v65 = vld [vmem:[%s1 + $0x48] sm:$0xff]
  %v66 = vld [vmem:[%s1 + $0x50] sm:$0xff]
  %v67 = vld [vmem:[%s1 + $0x58] sm:$0xff]
  %v68 = vld [vmem:[%s1 + $0x60] sm:$0xff]
  %v69 = vld [vmem:[%s1 + $0x68] sm:$0xff]
  %v70 = vld [vmem:[%s1 + $0x70] sm:$0xff]
  %v71 = vld [vmem:[%s1 + $0x78] sm:$0xff]
  %v72 = vld [vmem:[%s1 + $0x80] sm:$0xff]
  %v73 = vld [vmem:[%s1 + $0x88] sm:$0xff]
  %v74 = vld [vmem:[%s1 + $0x90] sm:$0xff]
  %v75 = vld [vmem:[%s1 + $0x98] sm:$0xff]
  %v76 = vld [vmem:[%s1 + $0xa0] sm:$0xff]
  %v77 = vld [vmem:[%s1 + $0xa8] sm:$0xff]
  %v78 = vld [vmem:[%s1 + $0xb0] sm:$0xff]
  %v79 = vld [vmem:[%s1 + $0xb8] sm:$0xff]
  %v80 = vld [vmem:[%s1 + $0xc0] sm:$0xff]
  %v81 = vld [vmem:[%s1 + $0xc8] sm:$0xff]
  %v82 = vld [vmem:[%s1 + $0xd0] sm:$0xff]
  %v83 = vld [vmem:[%s1 + $0xd8] sm:$0xff]
  %v84 = vld [vmem:[%s1 + $0xe0] sm:$0xff]
  %v85 = vld [vmem:[%s1 + $0xe8] sm:$0xff]
  %v86 = vld [vmem:[%s1 + $0xf0] sm:$0xff]
  %v87 = vld [vmem:[%s1 + $0xf8] sm:$0xff]
  %v88 = vld [vmem:[%s1 + $0x100] sm:$0xff]
  %v89 = vld [vmem:[%s1 + $0x108] sm:$0xff]
  %v90 = vld [vmem:[%s1 + $0x110] sm:$0xff]
  %v91 = vld [vmem:[%s1 + $0x118] sm:$0xff]
  %v92 = vld [vmem:[%s1 + $0x120] sm:$0xff]
  %v93 = vld [vmem:[%s1 + $0x128] sm:$0xff]
  %v94 = vld [vmem:[%s1 + $0x130] sm:$0xff]
  %v95 = vld [vmem:[%s1 + $0x138] sm:$0xff]
  %v96 = vld [vmem:[%s1 + $0x140] sm:$0xff]
  %v97 = vld [vmem:[%s1 + $0x148] sm:$0xff]
  %v98 = vld [vmem:[%s1 + $0x150] sm:$0xff]
  %v99 = vld [vmem:[%s1 + $0x158] sm:$0xff]
  %v100 = vld [vmem:[%s1 + $0x160] sm:$0xff]
  %v101 = vld [vmem:[%s1 + $0x168] sm:$0xff]
  %v102 = vld [vmem:[%s1 + $0x170] sm:$0xff]
  %v103 = vld [vmem:[%s1 + $0x178] sm:$0xff]
  %v104 = vld [vmem:[%s1 + $0x180] sm:$0xff]
  %v105 = vld [vmem:[%s1 + $0x188] sm:$0xff]
  %v106 = vld [vmem:[%s1 + $0x190] sm:$0xff]
  %v107 = vld [vmem:[%s1 + $0x198] sm:$0xff]
  %v108 = vld [vmem:[%s1 + $0x1a0] sm:$0xff]
  %v109 = vld [vmem:[%s1 + $0x1a8] sm:$0xff]
  %v110 = vld [vmem:[%s1 + $0x1b0] sm:$0xff]
  %v111 = vld [vmem:[%s1 + $0x1b8] sm:$0xff]
  %v112 = vld [vmem:[%s1 + $0x1c0] sm:$0xff]
  %v113 = vld [vmem:[%s1 + $0x1c8] sm:$0xff]
  %v114 = vld [vmem:[%s1 + $0x1d0] sm:$0xff]
  %v115 = vld [vmem:[%s1 + $0x1d8] sm:$0xff]
  %v116 = vld [vmem:[%s1 + $0x1e0] sm:$0xff]
  %v117 = vld [vmem:[%s1 + $0x1e8] sm:$0xff]
  %v118 = vld [vmem:[%s1 + $0x1f0] sm:$0xff]
  %v119 = vld [vmem:[%s1 + $0x1f8] sm:$0xff]
  %v120 = vld [vmem:[%s1 + $0x200] sm:$0xff]
  %v121 = vld [vmem:[%s1 + $0x208] sm:$0xff]
  %v122 = vld [vmem:[%s1 + $0x210] sm:$0xff]
  %v123 = vld [vmem:[%s1 + $0x218] sm:$0xff]
  %v124 = vld [vmem:[%s1 + $0x220] sm:$0xff]
  %v125 = vld [vmem:[%s1 + $0x228] sm:$0xff]
  %v126 = vld [vmem:[%s1 + $0x230] sm:$0xff]
  %v127 = vld [vmem:[%s1 + $0x238] sm:$0xff]
  %v128 = vld [vmem:[%s1 + $0x240] sm:$0xff]
  %v129 = vld [vmem:[%s1 + $0x248] sm:$0xff]
  %v130 = vld [vmem:[%s1 + $0x250] sm:$0xff]
  %v131 = vld [vmem:[%s1 + $0x258] sm:$0xff]
  %v132 = vld [vmem:[%s1 + $0x260] sm:$0xff]
  %v133 = vld [vmem:[%s1 + $0x268] sm:$0xff]
  %v134 = vld [vmem:[%s1 + $0x270] sm:$0xff]
  %v135 = vld [vmem:[%s1 + $0x278] sm:$0xff]
  %v136 = vld [vmem:[%s1 + $0x280] sm:$0xff]
  %v137 = vld [vmem:[%s1 + $0x288] sm:$0xff]
  %v138 = vld [vmem:[%s1 + $0x290] sm:$0xff]
  %v139 = vld [vmem:[%s1 + $0x298] sm:$0xff]
  %v140 = vld [vmem:[%s1 + $0x2a0] sm:$0xff]
  %v141 = vld [vmem:[%s1 + $0x2a8] sm:$0xff]
  %v142 = vld [vmem:[%s1 + $0x2b0] sm:$0xff]
  %v143 = vld [vmem:[%s1 + $0x2b8] sm:$0xff]
  %v144 = vld [vmem:[%s1 + $0x2c0] sm:$0xff]
  %v145 = vld [vmem:[%s1 + $0x2c8] sm:$0xff]
  %v146 = vld [vmem:[%s1 + $0x2d0] sm:$0xff]
  %v147 = vld [vmem:[%s1 + $0x2d8] sm:$0xff]
  %v148 = vld [vmem:[%s1 + $0x2e0] sm:$0xff]
  %v149 = vld [vmem:[%s1 + $0x2e8] sm:$0xff]
  %v150 = vld [vmem:[%s1 + $0x2f0] sm:$0xff]
  %v151 = vld [vmem:[%s1 + $0x2f8] sm:$0xff]
  %v152 = vld [vmem:[%s1 + $0x300] sm:$0xff]
  %v153 = vld [vmem:[%s1 + $0x308] sm:$0xff]
  %v154 = vld [vmem:[%s1 + $0x310] sm:$0xff]
  %v155 = vld [vmem:[%s1 + $0x318] sm:$0xff]
  %v156 = vld [vmem:[%s1 + $0x320] sm:$0xff]
  %v157 = vld [vmem:[%s1 + $0x328] sm:$0xff]
  %v158 = vld [vmem:[%s1 + $0x330] sm:$0xff]
  %v159 = vld [vmem:[%s1 + $0x338] sm:$0xff]
  %v160 = vld [vmem:[%s1 + $0x340] sm:$0xff]
  %v161 = vld [vmem:[%s1 + $0x348] sm:$0xff]
  %v162 = vld [vmem:[%s1 + $0x350] sm:$0xff]
  %v163 = vld [vmem:[%s1 + $0x358] sm:$0xff]
  %v164 = vld [vmem:[%s1 + $0x360] sm:$0xff]
  %v165 = vld [vmem:[%s1 + $0x368] sm:$0xff]
  %v166 = vld [vmem:[%s1 + $0x370] sm:$0xff]
  %v167 = vld [vmem:[%s1 + $0x378] sm:$0xff]
  %v168 = vld [vmem:[%s1 + $0x380] sm:$0xff]
  %v169 = vld [vmem:[%s1 + $0x388] sm:$0xff]
  %v170 = vld [vmem:[%s1 + $0x390] sm:$0xff]
  %v171 = vld [vmem:[%s1 + $0x398] sm:$0xff]
  %v172 = vld [vmem:[%s1 + $0x3a0] sm:$0xff]
  %v173 = vld [vmem:[%s1 + $0x3a8] sm:$0xff]
  %v174 = vld [vmem:[%s1 + $0x3b0] sm:$0xff]
  %v175 = vld [vmem:[%s1 + $0x3b8] sm:$0xff]
  %v176 = vld [vmem:[%s1 + $0x3c0] sm:$0xff]
  %v177 = vld [vmem:[%s1 + $0x3c8] sm:$0xff]
  %v178 = vld [vmem:[%s1 + $0x3d0] sm:$0xff]
  %v179 = vld [vmem:[%s1 + $0x3d8] sm:$0xff]
  %v180 = vld [vmem:[%s1 + $0x3e0] sm:$0xff]
  %v181 = vld [vmem:[%s1 + $0x3e8] sm:$0xff]
  %v182 = vld [vmem:[%s1 + $0x3f0] sm:$0xff]
  %v183 = vld [vmem:[%s1 + $0x3f8] sm:$0xff]
  %v184 = vld [vmem:[%s1 + $0x400] sm:$0xff]
  %v185 = vld [vmem:[%s1 + $0x408] sm:$0xff]
  %v186 = vld [vmem:[%s1 + $0x410] sm:$0xff]
  %v187 = vld [vmem:[%s1 + $0x418] sm:$0xff]
  %v188 = vld [vmem:[%s1 + $0x420] sm:$0xff]
  %v189 = vld [vmem:[%s1 + $0x428] sm:$0xff]
  %v190 = vld [vmem:[%s1 + $0x430] sm:$0xff]
  %v191 = vld [vmem:[%s1 + $0x438] sm:$0xff]
  %v192 = vld [vmem:[%s1 + $0x440] sm:$0xff]
  %v193 = vld [vmem:[%s1 + $0x448] sm:$0xff]
  %v194 = vld [vmem:[%s1 + $0x450] sm:$0xff]
  %v195 = vld [vmem:[%s1 + $0x458] sm:$0xff]
  %v196 = vld [vmem:[%s1 + $0x460] sm:$0xff]
  %v197 = vld [vmem:[%s1 + $0x468] sm:$0xff]
  %v198 = vld [vmem:[%s1 + $0x470] sm:$0xff]
  %v199 = vld [vmem:[%s1 + $0x478] sm:$0xff]
  %v200 = vld [vmem:[%s1 + $0x480] sm:$0xff]
  %v201 = vld [vmem:[%s1 + $0x488] sm:$0xff]
  %v202 = vld [vmem:[%s1 + $0x490] sm:$0xff]
  %v203 = vld [vmem:[%s1 + $0x498] sm:$0xff]
  %v204 = vld [vmem:[%s1 + $0x4a0] sm:$0xff]
  %v205 = vld [vmem:[%s1 + $0x4a8] sm:$0xff]
  %v206 = vld [vmem:[%s1 + $0x4b0] sm:$0xff]
  %v207 = vld [vmem:[%s1 + $0x4b8] sm:$0xff]
  %v208 = vld [vmem:[%s1 + $0x4c0] sm:$0xff]
  %v209 = vld [vmem:[%s1 + $0x4c8] sm:$0xff]
  %v210 = vld [vmem:[%s1 + $0x4d0] sm:$0xff]
  %v211 = vld [vmem:[%s1 + $0x4d8] sm:$0xff]
  %v212 = vld [vmem:[%s1 + $0x4e0] sm:$0xff]
  %v213 = vld [vmem:[%s1 + $0x4e8] sm:$0xff]
  %v214 = vld [vmem:[%s1 + $0x4f0] sm:$0xff]
  %v215 = vld [vmem:[%s1 + $0x4f8] sm:$0xff]
  %v216 = vld [vmem:[%s1 + $0x500] sm:$0xff]
  %v217 = vld [vmem:[%s1 + $0x508] sm:$0xff]
  %v218 = vld [vmem:[%s1 + $0x510] sm:$0xff]
  %v219 = vld [vmem:[%s1 + $0x518] sm:$0xff]
  %v220 = vld [vmem:[%s1 + $0x520] sm:$0xff]
  %v221 = vld [vmem:[%s1 + $0x528] sm:$0xff]
  %v222 = vld [vmem:[%s1 + $0x530] sm:$0xff]
  %v223 = vld [vmem:[%s1 + $0x538] sm:$0xff]
  %v224 = vld [vmem:[%s1 + $0x540] sm:$0xff]
  %v225 = vld [vmem:[%s1 + $0x548] sm:$0xff]
  %v226 = vld [vmem:[%s1 + $0x550] sm:$0xff]
  %v227 = vld [vmem:[%s1 + $0x558] sm:$0xff]
  %v228 = vld [vmem:[%s1 + $0x560] sm:$0xff]
  %v229 = vld [vmem:[%s1 + $0x568] sm:$0xff]
  %v230 = vld [vmem:[%s1 + $0x570] sm:$0xff]
  %v231 = vld [vmem:[%s1 + $0x578] sm:$0xff]
  %v232 = vld [vmem:[%s1 + $0x580] sm:$0xff]
  %v233 = vld [vmem:[%s1 + $0x588] sm:$0xff]
  %v234 = vld [vmem:[%s1 + $0x590] sm:$0xff]
  %v235 = vld [vmem:[%s1 + $0x598] sm:$0xff]
  %v236 = vld [vmem:[%s1 + $0x5a0] sm:$0xff]
  %v237 = vld [vmem:[%s1 + $0x5a8] sm:$0xff]
  %v238 = vld [vmem:[%s1 + $0x5b0] sm:$0xff]
  %v239 = vld [vmem:[%s1 + $0x5b8] sm:$0xff]
  %v240 = vld [vmem:[%s1 + $0x5c0] sm:$0xff]
  %v241 = vld [vmem:[%s1 + $0x5c8] sm:$0xff]
  %v242 = vld [vmem:[%s1 + $0x5d0] sm:$0xff]
  %v243 = vld [vmem:[%s1 + $0x5d8] sm:$0xff]
  %v244 = vld [vmem:[%s1 + $0x5e0] sm:$0xff]
  %v245 = vld [vmem:[%s1 + $0x5e8] sm:$0xff]
  %v246 = vld [vmem:[%s1 + $0x5f0] sm:$0xff]
  %v247 = vld [vmem:[%s1 + $0x5f8] sm:$0xff]
  %v248 = vld [vmem:[%s1 + $0x600] sm:$0xff]
  %v249 = vld [vmem:[%s1 + $0x608] sm:$0xff]
  %v250 = vld [vmem:[%s1 + $0x610] sm:$0xff]
  %v251 = vld [vmem:[%s1 + $0x618] sm:$0xff]
  %v252 = vld [vmem:[%s1 + $0x620] sm:$0xff]
  %v253 = vld [vmem:[%s1 + $0x628] sm:$0xff]
  %v254 = vld [vmem:[%s1 + $0x630] sm:$0xff]
  %v255 = vld [vmem:[%s1 + $0x638] sm:$0xff]
  %v256 = vld [vmem:[%s1 + $0x640] sm:$0xff]
  %v257 = vld [vmem:[%s1 + $0x648] sm:$0xff]
  %v258 = vld [vmem:[%s1 + $0x650] sm:$0xff]
  %v259 = vld [vmem:[%s1 + $0x658] sm:$0xff]
  %v260 = vld [vmem:[%s1 + $0x660] sm:$0xff]
  %v261 = vld [vmem:[%s1 + $0x668] sm:$0xff]
  %v262 = vld [vmem:[%s1 + $0x670] sm:$0xff]
  %v263 = vld [vmem:[%s1 + $0x678] sm:$0xff]
  %v264 = vld [vmem:[%s1 + $0x680] sm:$0xff]
  %v265 = vld [vmem:[%s1 + $0x688] sm:$0xff]
  %v266 = vld [vmem:[%s1 + $0x690] sm:$0xff]
  %v267 = vld [vmem:[%s1 + $0x698] sm:$0xff]
  %v268 = vld [vmem:[%s1 + $0x6a0] sm:$0xff]
  %v269 = vld [vmem:[%s1 + $0x6a8] sm:$0xff]
  %v270 = vld [vmem:[%s1 + $0x6b0] sm:$0xff]
  %v271 = vld [vmem:[%s1 + $0x6b8] sm:$0xff]
  %v272 = vld [vmem:[%s1 + $0x6c0] sm:$0xff]
  %v273 = vld [vmem:[%s1 + $0x6c8] sm:$0xff]
  %v274 = vld [vmem:[%s1 + $0x6d0] sm:$0xff]
  %v275 = vld [vmem:[%s1 + $0x6d8] sm:$0xff]
  %v276 = vld [vmem:[%s1 + $0x6e0] sm:$0xff]
  %v277 = vld [vmem:[%s1 + $0x6e8] sm:$0xff]
  %v278 = vld [vmem:[%s1 + $0x6f0] sm:$0xff]
  %v279 = vld [vmem:[%s1 + $0x6f8] sm:$0xff]
  %v280 = vld [vmem:[%s1 + $0x700] sm:$0xff]
  %v281 = vld [vmem:[%s1 + $0x708] sm:$0xff]
  %v282 = vld [vmem:[%s1 + $0x710] sm:$0xff]
  %v283 = vld [vmem:[%s1 + $0x718] sm:$0xff]
  %v284 = vld [vmem:[%s1 + $0x720] sm:$0xff]
  %v285 = vld [vmem:[%s1 + $0x728] sm:$0xff]
  %v286 = vld [vmem:[%s1 + $0x730] sm:$0xff]
  %v287 = vld [vmem:[%s1 + $0x738] sm:$0xff]
  %v288 = vld [vmem:[%s1 + $0x740] sm:$0xff]
  %v289 = vld [vmem:[%s1 + $0x748] sm:$0xff]
  %v290 = vld [vmem:[%s1 + $0x750] sm:$0xff]
  %v291 = vld [vmem:[%s1 + $0x758] sm:$0xff]
  %v292 = vld [vmem:[%s1 + $0x760] sm:$0xff]
  %v293 = vld [vmem:[%s1 + $0x768] sm:$0xff]
  %v294 = vld [vmem:[%s1 + $0x770] sm:$0xff]
  %v295 = vld [vmem:[%s1 + $0x778] sm:$0xff]
  %v296 = vld [vmem:[%s1 + $0x780] sm:$0xff]
  %v297 = vld [vmem:[%s1 + $0x788] sm:$0xff]
  %v298 = vld [vmem:[%s1 + $0x790] sm:$0xff]
  %v299 = vld [vmem:[%s1 + $0x798] sm:$0xff]
  %v300 = vld [vmem:[%s1 + $0x7a0] sm:$0xff]
  %v301 = vld [vmem:[%s1 + $0x7a8] sm:$0xff]
  %v302 = vld [vmem:[%s1 + $0x7b0] sm:$0xff]
  %v303 = vld [vmem:[%s1 + $0x7b8] sm:$0xff]
  %v304 = vld [vmem:[%s1 + $0x7c0] sm:$0xff]
  %v305 = vld [vmem:[%s1 + $0x7c8] sm:$0xff]
  %v306 = vld [vmem:[%s1 + $0x7d0] sm:$0xff]
  %v307 = vld [vmem:[%s1 + $0x7d8] sm:$0xff]
  %v308 = vld [vmem:[%s1 + $0x7e0] sm:$0xff]
  %v309 = vld [vmem:[%s1 + $0x7e8] sm:$0xff]
  %v310 = vld [vmem:[%s1 + $0x7f0] sm:$0xff]
  %v311 = vld [vmem:[%s1 + $0x7f8] sm:$0xff]
  %v312 = vld [vmem:[%s1 + $0x800] sm:$0xff]
  %v313 = vld [vmem:[%s1 + $0x808] sm:$0xff]
  %v314 = vld [vmem:[%s1 + $0x810] sm:$0xff]
  %v315 = vld [vmem:[%s1 + $0x818] sm:$0xff]
  %v316 = vld [vmem:[%s1 + $0x820] sm:$0xff]
  %v317 = vld [vmem:[%s1 + $0x828] sm:$0xff]
  %v318 = vld [vmem:[%s1 + $0x830] sm:$0xff]
  %v319 = vld [vmem:[%s1 + $0x838] sm:$0xff]
  %v320 = vld [vmem:[%s1 + $0x840] sm:$0xff]
  %v321 = vld [vmem:[%s1 + $0x848] sm:$0xff]
  %v322 = vld [vmem:[%s1 + $0x850] sm:$0xff]
  %v323 = vld [vmem:[%s1 + $0x858] sm:$0xff]
  %v324 = vld [vmem:[%s1 + $0x860] sm:$0xff]
  %v325 = vld [vmem:[%s1 + $0x868] sm:$0xff]
  %v326 = vld [vmem:[%s1 + $0x870] sm:$0xff]
  %v327 = vld [vmem:[%s1 + $0x878] sm:$0xff]
  %v328 = vld [vmem:[%s1 + $0x880] sm:$0xff]
  %v329 = vld [vmem:[%s1 + $0x888] sm:$0xff]
  %v330 = vld [vmem:[%s1 + $0x890] sm:$0xff]
  %v331 = vld [vmem:[%s1 + $0x898] sm:$0xff]
  %v332 = vld [vmem:[%s1 + $0x8a0] sm:$0xff]
  %v333 = vld [vmem:[%s1 + $0x8a8] sm:$0xff]
  %v334 = vld [vmem:[%s1 + $0x8b0] sm:$0xff]
  %v335 = vld [vmem:[%s1 + $0x8b8] sm:$0xff]
  %v336 = vld [vmem:[%s1 + $0x8c0] sm:$0xff]
  %v337 = vld [vmem:[%s1 + $0x8c8] sm:$0xff]
  %v338 = vld [vmem:[%s1 + $0x8d0] sm:$0xff]
  %v339 = vld [vmem:[%s1 + $0x8d8] sm:$0xff]
  %v340 = vld [vmem:[%s1 + $0x8e0] sm:$0xff]
  %v341 = vld [vmem:[%s1 + $0x8e8] sm:$0xff]
  %v342 = vld [vmem:[%s1 + $0x8f0] sm:$0xff]
  %v343 = vld [vmem:[%s1 + $0x8f8] sm:$0xff]
  %v344 = vld [vmem:[%s2] sm:$0x3]
  %v346 = vperm.slane %v344, 0
  %v347 = vperm.slane %v344, 1
  %v386 = vunpack.c.l.b16 %v20
  %v387 = vunpack.c.h.b16 %v20
  %v388 = vunpack.c.l.b16 %v21
  %v389 = vunpack.c.h.b16 %v21
  %v390 = vunpack.c.l.b16 %v22
  %v391 = vunpack.c.h.b16 %v22
  %v392 = vunpack.c.l.b16 %v23
  %v393 = vunpack.c.h.b16 %v23
  %v394 = vunpack.c.l.b16 %v24
  %v395 = vunpack.c.h.b16 %v24
  %v396 = vunpack.c.l.b16 %v25
  %v397 = vunpack.c.h.b16 %v25
  %v398 = vunpack.c.l.b16 %v26
  %v399 = vunpack.c.h.b16 %v26
  %v400 = vunpack.c.l.b16 %v27
  %v401 = vunpack.c.h.b16 %v27
  %v402 = vunpack.c.l.b16 %v28
  %v403 = vunpack.c.h.b16 %v28
  %v404 = vunpack.c.l.b16 %v29
  %v405 = vunpack.c.h.b16 %v29
  %v406 = vunpack.c.l.b16 %v30
  %v407 = vunpack.c.h.b16 %v30
  %v408 = vunpack.c.l.b16 %v31
  %v409 = vunpack.c.h.b16 %v31
  %v410 = vunpack.c.l.b16 %v32
  %v411 = vunpack.c.h.b16 %v32
  %v412 = vunpack.c.l.b16 %v33
  %v413 = vunpack.c.h.b16 %v33
  %v414 = vunpack.c.l.b16 %v34
  %v415 = vunpack.c.h.b16 %v34
  %v416 = vunpack.c.l.b16 %v35
  %v417 = vunpack.c.h.b16 %v35
  %v418 = vunpack.c.l.b16 %v36
  %v419 = vunpack.c.h.b16 %v36
  %v420 = vunpack.c.l.b16 %v37
  %v421 = vunpack.c.h.b16 %v37
  %v422 = vunpack.c.l.b16 %v38
  %v423 = vunpack.c.h.b16 %v38
  %v424 = vunpack.c.l.b16 %v39
  %v425 = vunpack.c.h.b16 %v39
  %v426 = vunpack.c.l.b16 %v40
  %v427 = vunpack.c.h.b16 %v40
  %v428 = vunpack.c.l.b16 %v41
  %v429 = vunpack.c.h.b16 %v41
  %v430 = vunpack.c.l.b16 %v42
  %v431 = vunpack.c.h.b16 %v42
  %v432 = vunpack.c.l.b16 %v43
  %v433 = vunpack.c.h.b16 %v43
  %v434 = vunpack.c.l.b16 %v44
  %v435 = vunpack.c.h.b16 %v44
  %v436 = vunpack.c.l.b16 %v45
  %v437 = vunpack.c.h.b16 %v45
  %v438 = vunpack.c.l.b16 %v46
  %v439 = vunpack.c.h.b16 %v46
  %v440 = vunpack.c.l.b16 %v47
  %v441 = vunpack.c.h.b16 %v47
  %v442 = vunpack.c.l.b16 %v48
  %v443 = vunpack.c.h.b16 %v48
  %v444 = vunpack.c.l.b16 %v49
  %v445 = vunpack.c.h.b16 %v49
  %v446 = vunpack.c.l.b16 %v50
  %v447 = vunpack.c.h.b16 %v50
  %v448 = vunpack.c.l.b16 %v51
  %v449 = vunpack.c.h.b16 %v51
  %v450 = vunpack.c.l.b16 %v52
  %v451 = vunpack.c.h.b16 %v52
  %v452 = vunpack.c.l.b16 %v53
  %v453 = vunpack.c.h.b16 %v53
  %v454 = vunpack.c.l.b16 %v54
  %v455 = vunpack.c.h.b16 %v54
  %v456 = vunpack.c.l.b16 %v55
  %v457 = vunpack.c.h.b16 %v55
  %v458 = vpack.c.b16 %v404, %v386
  %v459 = vpack.c.b16 %v405, %v387
  %v460 = vpack.c.b16 %v406, %v388
  %v461 = vpack.c.b16 %v407, %v389
  %v462 = vpack.c.b16 %v408, %v390
  %v463 = vpack.c.b16 %v409, %v391
  %v464 = vpack.c.b16 %v410, %v392
  %v465 = vpack.c.b16 %v411, %v393
  %v466 = vpack.c.b16 %v412, %v394
  %v467 = vpack.c.b16 %v413, %v395
  %v468 = vpack.c.b16 %v414, %v396
  %v469 = vpack.c.b16 %v415, %v397
  %v470 = vpack.c.b16 %v416, %v398
  %v471 = vpack.c.b16 %v417, %v399
  %v472 = vpack.c.b16 %v418, %v400
  %v473 = vpack.c.b16 %v419, %v401
  %v474 = vpack.c.b16 %v420, %v402
  %v475 = vpack.c.b16 %v421, %v403
  %v476 = vpack.c.b16 %v440, %v422
  %v477 = vpack.c.b16 %v441, %v423
  %v478 = vpack.c.b16 %v442, %v424
  %v479 = vpack.c.b16 %v443, %v425
  %v480 = vpack.c.b16 %v444, %v426
  %v481 = vpack.c.b16 %v445, %v427
  %v482 = vpack.c.b16 %v446, %v428
  %v483 = vpack.c.b16 %v447, %v429
  %v484 = vpack.c.b16 %v448, %v430
  %v485 = vpack.c.b16 %v449, %v431
  %v486 = vpack.c.b16 %v450, %v432
  %v487 = vpack.c.b16 %v451, %v433
  %v488 = vpack.c.b16 %v452, %v434
  %v489 = vpack.c.b16 %v453, %v435
  %v490 = vpack.c.b16 %v454, %v436
  %v491 = vpack.c.b16 %v455, %v437
  %v492 = vpack.c.b16 %v456, %v438
  %v493 = vpack.c.b16 %v457, %v439
  %v818 = vunpack.c.l.b16 %v56
  %v819 = vunpack.c.h.b16 %v56
  %v820 = vunpack.c.l.b16 %v57
  %v821 = vunpack.c.h.b16 %v57
  %v822 = vunpack.c.l.b16 %v58
  %v823 = vunpack.c.h.b16 %v58
  %v824 = vunpack.c.l.b16 %v59
  %v825 = vunpack.c.h.b16 %v59
  %v826 = vunpack.c.l.b16 %v60
  %v827 = vunpack.c.h.b16 %v60
  %v828 = vunpack.c.l.b16 %v61
  %v829 = vunpack.c.h.b16 %v61
  %v830 = vunpack.c.l.b16 %v62
  %v831 = vunpack.c.h.b16 %v62
  %v832 = vunpack.c.l.b16 %v63
  %v833 = vunpack.c.h.b16 %v63
  %v834 = vunpack.c.l.b16 %v64
  %v835 = vunpack.c.h.b16 %v64
  %v836 = vunpack.c.l.b16 %v65
  %v837 = vunpack.c.h.b16 %v65
  %v838 = vunpack.c.l.b16 %v66
  %v839 = vunpack.c.h.b16 %v66
  %v840 = vunpack.c.l.b16 %v67
  %v841 = vunpack.c.h.b16 %v67
  %v842 = vunpack.c.l.b16 %v68
  %v843 = vunpack.c.h.b16 %v68
  %v844 = vunpack.c.l.b16 %v69
  %v845 = vunpack.c.h.b16 %v69
  %v846 = vunpack.c.l.b16 %v70
  %v847 = vunpack.c.h.b16 %v70
  %v848 = vunpack.c.l.b16 %v71
  %v849 = vunpack.c.h.b16 %v71
  %v850 = vunpack.c.l.b16 %v72
  %v851 = vunpack.c.h.b16 %v72
  %v852 = vunpack.c.l.b16 %v73
  %v853 = vunpack.c.h.b16 %v73
  %v854 = vunpack.c.l.b16 %v74
  %v855 = vunpack.c.h.b16 %v74
  %v856 = vunpack.c.l.b16 %v75
  %v857 = vunpack.c.h.b16 %v75
  %v858 = vunpack.c.l.b16 %v76
  %v859 = vunpack.c.h.b16 %v76
  %v860 = vunpack.c.l.b16 %v77
  %v861 = vunpack.c.h.b16 %v77
  %v862 = vunpack.c.l.b16 %v78
  %v863 = vunpack.c.h.b16 %v78
  %v864 = vunpack.c.l.b16 %v79
  %v865 = vunpack.c.h.b16 %v79
  %v866 = vunpack.c.l.b16 %v80
  %v867 = vunpack.c.h.b16 %v80
  %v868 = vunpack.c.l.b16 %v81
  %v869 = vunpack.c.h.b16 %v81
  %v870 = vunpack.c.l.b16 %v82
  %v871 = vunpack.c.h.b16 %v82
  %v872 = vunpack.c.l.b16 %v83
  %v873 = vunpack.c.h.b16 %v83
  %v874 = vunpack.c.l.b16 %v84
  %v875 = vunpack.c.h.b16 %v84
  %v876 = vunpack.c.l.b16 %v85
  %v877 = vunpack.c.h.b16 %v85
  %v878 = vunpack.c.l.b16 %v86
  %v879 = vunpack.c.h.b16 %v86
  %v880 = vunpack.c.l.b16 %v87
  %v881 = vunpack.c.h.b16 %v87
  %v882 = vunpack.c.l.b16 %v88
  %v883 = vunpack.c.h.b16 %v88
  %v884 = vunpack.c.l.b16 %v89
  %v885 = vunpack.c.h.b16 %v89
  %v886 = vunpack.c.l.b16 %v90
  %v887 = vunpack.c.h.b16 %v90
  %v888 = vunpack.c.l.b16 %v91
  %v889 = vunpack.c.h.b16 %v91
  %v890 = vunpack.c.l.b16 %v92
  %v891 = vunpack.c.h.b16 %v92
  %v892 = vunpack.c.l.b16 %v93
  %v893 = vunpack.c.h.b16 %v93
  %v894 = vunpack.c.l.b16 %v94
  %v895 = vunpack.c.h.b16 %v94
  %v896 = vunpack.c.l.b16 %v95
  %v897 = vunpack.c.h.b16 %v95
  %v898 = vunpack.c.l.b16 %v96
  %v899 = vunpack.c.h.b16 %v96
  %v900 = vunpack.c.l.b16 %v97
  %v901 = vunpack.c.h.b16 %v97
  %v902 = vunpack.c.l.b16 %v98
  %v903 = vunpack.c.h.b16 %v98
  %v904 = vunpack.c.l.b16 %v99
  %v905 = vunpack.c.h.b16 %v99
  %v906 = vunpack.c.l.b16 %v100
  %v907 = vunpack.c.h.b16 %v100
  %v908 = vunpack.c.l.b16 %v101
  %v909 = vunpack.c.h.b16 %v101
  %v910 = vunpack.c.l.b16 %v102
  %v911 = vunpack.c.h.b16 %v102
  %v912 = vunpack.c.l.b16 %v103
  %v913 = vunpack.c.h.b16 %v103
  %v914 = vunpack.c.l.b16 %v104
  %v915 = vunpack.c.h.b16 %v104
  %v916 = vunpack.c.l.b16 %v105
  %v917 = vunpack.c.h.b16 %v105
  %v918 = vunpack.c.l.b16 %v106
  %v919 = vunpack.c.h.b16 %v106
  %v920 = vunpack.c.l.b16 %v107
  %v921 = vunpack.c.h.b16 %v107
  %v922 = vunpack.c.l.b16 %v108
  %v923 = vunpack.c.h.b16 %v108
  %v924 = vunpack.c.l.b16 %v109
  %v925 = vunpack.c.h.b16 %v109
  %v926 = vunpack.c.l.b16 %v110
  %v927 = vunpack.c.h.b16 %v110
  %v928 = vunpack.c.l.b16 %v111
  %v929 = vunpack.c.h.b16 %v111
  %v930 = vunpack.c.l.b16 %v112
  %v931 = vunpack.c.h.b16 %v112
  %v932 = vunpack.c.l.b16 %v113
  %v933 = vunpack.c.h.b16 %v113
  %v934 = vunpack.c.l.b16 %v114
  %v935 = vunpack.c.h.b16 %v114
  %v936 = vunpack.c.l.b16 %v115
  %v937 = vunpack.c.h.b16 %v115
  %v938 = vunpack.c.l.b16 %v116
  %v939 = vunpack.c.h.b16 %v116
  %v940 = vunpack.c.l.b16 %v117
  %v941 = vunpack.c.h.b16 %v117
  %v942 = vunpack.c.l.b16 %v118
  %v943 = vunpack.c.h.b16 %v118
  %v944 = vunpack.c.l.b16 %v119
  %v945 = vunpack.c.h.b16 %v119
  %v946 = vunpack.c.l.b16 %v120
  %v947 = vunpack.c.h.b16 %v120
  %v948 = vunpack.c.l.b16 %v121
  %v949 = vunpack.c.h.b16 %v121
  %v950 = vunpack.c.l.b16 %v122
  %v951 = vunpack.c.h.b16 %v122
  %v952 = vunpack.c.l.b16 %v123
  %v953 = vunpack.c.h.b16 %v123
  %v954 = vunpack.c.l.b16 %v124
  %v955 = vunpack.c.h.b16 %v124
  %v956 = vunpack.c.l.b16 %v125
  %v957 = vunpack.c.h.b16 %v125
  %v958 = vunpack.c.l.b16 %v126
  %v959 = vunpack.c.h.b16 %v126
  %v960 = vunpack.c.l.b16 %v127
  %v961 = vunpack.c.h.b16 %v127
  %v962 = vunpack.c.l.b16 %v128
  %v963 = vunpack.c.h.b16 %v128
  %v964 = vunpack.c.l.b16 %v129
  %v965 = vunpack.c.h.b16 %v129
  %v966 = vunpack.c.l.b16 %v130
  %v967 = vunpack.c.h.b16 %v130
  %v968 = vunpack.c.l.b16 %v131
  %v969 = vunpack.c.h.b16 %v131
  %v970 = vunpack.c.l.b16 %v132
  %v971 = vunpack.c.h.b16 %v132
  %v972 = vunpack.c.l.b16 %v133
  %v973 = vunpack.c.h.b16 %v133
  %v974 = vunpack.c.l.b16 %v134
  %v975 = vunpack.c.h.b16 %v134
  %v976 = vunpack.c.l.b16 %v135
  %v977 = vunpack.c.h.b16 %v135
  %v978 = vunpack.c.l.b16 %v136
  %v979 = vunpack.c.h.b16 %v136
  %v980 = vunpack.c.l.b16 %v137
  %v981 = vunpack.c.h.b16 %v137
  %v982 = vunpack.c.l.b16 %v138
  %v983 = vunpack.c.h.b16 %v138
  %v984 = vunpack.c.l.b16 %v139
  %v985 = vunpack.c.h.b16 %v139
  %v986 = vunpack.c.l.b16 %v140
  %v987 = vunpack.c.h.b16 %v140
  %v988 = vunpack.c.l.b16 %v141
  %v989 = vunpack.c.h.b16 %v141
  %v990 = vunpack.c.l.b16 %v142
  %v991 = vunpack.c.h.b16 %v142
  %v992 = vunpack.c.l.b16 %v143
  %v993 = vunpack.c.h.b16 %v143
  %v994 = vunpack.c.l.b16 %v144
  %v995 = vunpack.c.h.b16 %v144
  %v996 = vunpack.c.l.b16 %v145
  %v997 = vunpack.c.h.b16 %v145
  %v998 = vunpack.c.l.b16 %v146
  %v999 = vunpack.c.h.b16 %v146
  %v1000 = vunpack.c.l.b16 %v147
  %v1001 = vunpack.c.h.b16 %v147
  %v1002 = vunpack.c.l.b16 %v148
  %v1003 = vunpack.c.h.b16 %v148
  %v1004 = vunpack.c.l.b16 %v149
  %v1005 = vunpack.c.h.b16 %v149
  %v1006 = vunpack.c.l.b16 %v150
  %v1007 = vunpack.c.h.b16 %v150
  %v1008 = vunpack.c.l.b16 %v151
  %v1009 = vunpack.c.h.b16 %v151
  %v1010 = vunpack.c.l.b16 %v152
  %v1011 = vunpack.c.h.b16 %v152
  %v1012 = vunpack.c.l.b16 %v153
  %v1013 = vunpack.c.h.b16 %v153
  %v1014 = vunpack.c.l.b16 %v154
  %v1015 = vunpack.c.h.b16 %v154
  %v1016 = vunpack.c.l.b16 %v155
  %v1017 = vunpack.c.h.b16 %v155
  %v1018 = vunpack.c.l.b16 %v156
  %v1019 = vunpack.c.h.b16 %v156
  %v1020 = vunpack.c.l.b16 %v157
  %v1021 = vunpack.c.h.b16 %v157
  %v1022 = vunpack.c.l.b16 %v158
  %v1023 = vunpack.c.h.b16 %v158
  %v1024 = vunpack.c.l.b16 %v159
  %v1025 = vunpack.c.h.b16 %v159
  %v1026 = vunpack.c.l.b16 %v160
  %v1027 = vunpack.c.h.b16 %v160
  %v1028 = vunpack.c.l.b16 %v161
  %v1029 = vunpack.c.h.b16 %v161
  %v1030 = vunpack.c.l.b16 %v162
  %v1031 = vunpack.c.h.b16 %v162
  %v1032 = vunpack.c.l.b16 %v163
  %v1033 = vunpack.c.h.b16 %v163
  %v1034 = vunpack.c.l.b16 %v164
  %v1035 = vunpack.c.h.b16 %v164
  %v1036 = vunpack.c.l.b16 %v165
  %v1037 = vunpack.c.h.b16 %v165
  %v1038 = vunpack.c.l.b16 %v166
  %v1039 = vunpack.c.h.b16 %v166
  %v1040 = vunpack.c.l.b16 %v167
  %v1041 = vunpack.c.h.b16 %v167
  %v1042 = vunpack.c.l.b16 %v168
  %v1043 = vunpack.c.h.b16 %v168
  %v1044 = vunpack.c.l.b16 %v169
  %v1045 = vunpack.c.h.b16 %v169
  %v1046 = vunpack.c.l.b16 %v170
  %v1047 = vunpack.c.h.b16 %v170
  %v1048 = vunpack.c.l.b16 %v171
  %v1049 = vunpack.c.h.b16 %v171
  %v1050 = vunpack.c.l.b16 %v172
  %v1051 = vunpack.c.h.b16 %v172
  %v1052 = vunpack.c.l.b16 %v173
  %v1053 = vunpack.c.h.b16 %v173
  %v1054 = vunpack.c.l.b16 %v174
  %v1055 = vunpack.c.h.b16 %v174
  %v1056 = vunpack.c.l.b16 %v175
  %v1057 = vunpack.c.h.b16 %v175
  %v1058 = vunpack.c.l.b16 %v176
  %v1059 = vunpack.c.h.b16 %v176
  %v1060 = vunpack.c.l.b16 %v177
  %v1061 = vunpack.c.h.b16 %v177
  %v1062 = vunpack.c.l.b16 %v178
  %v1063 = vunpack.c.h.b16 %v178
  %v1064 = vunpack.c.l.b16 %v179
  %v1065 = vunpack.c.h.b16 %v179
  %v1066 = vunpack.c.l.b16 %v180
  %v1067 = vunpack.c.h.b16 %v180
  %v1068 = vunpack.c.l.b16 %v181
  %v1069 = vunpack.c.h.b16 %v181
  %v1070 = vunpack.c.l.b16 %v182
  %v1071 = vunpack.c.h.b16 %v182
  %v1072 = vunpack.c.l.b16 %v183
  %v1073 = vunpack.c.h.b16 %v183
  %v1074 = vunpack.c.l.b16 %v184
  %v1075 = vunpack.c.h.b16 %v184
  %v1076 = vunpack.c.l.b16 %v185
  %v1077 = vunpack.c.h.b16 %v185
  %v1078 = vunpack.c.l.b16 %v186
  %v1079 = vunpack.c.h.b16 %v186
  %v1080 = vunpack.c.l.b16 %v187
  %v1081 = vunpack.c.h.b16 %v187
  %v1082 = vunpack.c.l.b16 %v188
  %v1083 = vunpack.c.h.b16 %v188
  %v1084 = vunpack.c.l.b16 %v189
  %v1085 = vunpack.c.h.b16 %v189
  %v1086 = vunpack.c.l.b16 %v190
  %v1087 = vunpack.c.h.b16 %v190
  %v1088 = vunpack.c.l.b16 %v191
  %v1089 = vunpack.c.h.b16 %v191
  %v1090 = vunpack.c.l.b16 %v192
  %v1091 = vunpack.c.h.b16 %v192
  %v1092 = vunpack.c.l.b16 %v193
  %v1093 = vunpack.c.h.b16 %v193
  %v1094 = vunpack.c.l.b16 %v194
  %v1095 = vunpack.c.h.b16 %v194
  %v1096 = vunpack.c.l.b16 %v195
  %v1097 = vunpack.c.h.b16 %v195
  %v1098 = vunpack.c.l.b16 %v196
  %v1099 = vunpack.c.h.b16 %v196
  %v1100 = vunpack.c.l.b16 %v197
  %v1101 = vunpack.c.h.b16 %v197
  %v1102 = vunpack.c.l.b16 %v198
  %v1103 = vunpack.c.h.b16 %v198
  %v1104 = vunpack.c.l.b16 %v199
  %v1105 = vunpack.c.h.b16 %v199
  %v1106 = vunpack.c.l.b16 %v200
  %v1107 = vunpack.c.h.b16 %v200
  %v1108 = vunpack.c.l.b16 %v201
  %v1109 = vunpack.c.h.b16 %v201
  %v1110 = vunpack.c.l.b16 %v202
  %v1111 = vunpack.c.h.b16 %v202
  %v1112 = vunpack.c.l.b16 %v203
  %v1113 = vunpack.c.h.b16 %v203
  %v1114 = vunpack.c.l.b16 %v204
  %v1115 = vunpack.c.h.b16 %v204
  %v1116 = vunpack.c.l.b16 %v205
  %v1117 = vunpack.c.h.b16 %v205
  %v1118 = vunpack.c.l.b16 %v206
  %v1119 = vunpack.c.h.b16 %v206
  %v1120 = vunpack.c.l.b16 %v207
  %v1121 = vunpack.c.h.b16 %v207
  %v1122 = vunpack.c.l.b16 %v208
  %v1123 = vunpack.c.h.b16 %v208
  %v1124 = vunpack.c.l.b16 %v209
  %v1125 = vunpack.c.h.b16 %v209
  %v1126 = vunpack.c.l.b16 %v210
  %v1127 = vunpack.c.h.b16 %v210
  %v1128 = vunpack.c.l.b16 %v211
  %v1129 = vunpack.c.h.b16 %v211
  %v1130 = vunpack.c.l.b16 %v212
  %v1131 = vunpack.c.h.b16 %v212
  %v1132 = vunpack.c.l.b16 %v213
  %v1133 = vunpack.c.h.b16 %v213
  %v1134 = vunpack.c.l.b16 %v214
  %v1135 = vunpack.c.h.b16 %v214
  %v1136 = vunpack.c.l.b16 %v215
  %v1137 = vunpack.c.h.b16 %v215
  %v1138 = vunpack.c.l.b16 %v216
  %v1139 = vunpack.c.h.b16 %v216
  %v1140 = vunpack.c.l.b16 %v217
  %v1141 = vunpack.c.h.b16 %v217
  %v1142 = vunpack.c.l.b16 %v218
  %v1143 = vunpack.c.h.b16 %v218
  %v1144 = vunpack.c.l.b16 %v219
  %v1145 = vunpack.c.h.b16 %v219
  %v1146 = vunpack.c.l.b16 %v220
  %v1147 = vunpack.c.h.b16 %v220
  %v1148 = vunpack.c.l.b16 %v221
  %v1149 = vunpack.c.h.b16 %v221
  %v1150 = vunpack.c.l.b16 %v222
  %v1151 = vunpack.c.h.b16 %v222
  %v1152 = vunpack.c.l.b16 %v223
  %v1153 = vunpack.c.h.b16 %v223
  %v1154 = vunpack.c.l.b16 %v224
  %v1155 = vunpack.c.h.b16 %v224
  %v1156 = vunpack.c.l.b16 %v225
  %v1157 = vunpack.c.h.b16 %v225
  %v1158 = vunpack.c.l.b16 %v226
  %v1159 = vunpack.c.h.b16 %v226
  %v1160 = vunpack.c.l.b16 %v227
  %v1161 = vunpack.c.h.b16 %v227
  %v1162 = vunpack.c.l.b16 %v228
  %v1163 = vunpack.c.h.b16 %v228
  %v1164 = vunpack.c.l.b16 %v229
  %v1165 = vunpack.c.h.b16 %v229
  %v1166 = vunpack.c.l.b16 %v230
  %v1167 = vunpack.c.h.b16 %v230
  %v1168 = vunpack.c.l.b16 %v231
  %v1169 = vunpack.c.h.b16 %v231
  %v1170 = vunpack.c.l.b16 %v232
  %v1171 = vunpack.c.h.b16 %v232
  %v1172 = vunpack.c.l.b16 %v233
  %v1173 = vunpack.c.h.b16 %v233
  %v1174 = vunpack.c.l.b16 %v234
  %v1175 = vunpack.c.h.b16 %v234
  %v1176 = vunpack.c.l.b16 %v235
  %v1177 = vunpack.c.h.b16 %v235
  %v1178 = vunpack.c.l.b16 %v236
  %v1179 = vunpack.c.h.b16 %v236
  %v1180 = vunpack.c.l.b16 %v237
  %v1181 = vunpack.c.h.b16 %v237
  %v1182 = vunpack.c.l.b16 %v238
  %v1183 = vunpack.c.h.b16 %v238
  %v1184 = vunpack.c.l.b16 %v239
  %v1185 = vunpack.c.h.b16 %v239
  %v1186 = vunpack.c.l.b16 %v240
  %v1187 = vunpack.c.h.b16 %v240
  %v1188 = vunpack.c.l.b16 %v241
  %v1189 = vunpack.c.h.b16 %v241
  %v1190 = vunpack.c.l.b16 %v242
  %v1191 = vunpack.c.h.b16 %v242
  %v1192 = vunpack.c.l.b16 %v243
  %v1193 = vunpack.c.h.b16 %v243
  %v1194 = vunpack.c.l.b16 %v244
  %v1195 = vunpack.c.h.b16 %v244
  %v1196 = vunpack.c.l.b16 %v245
  %v1197 = vunpack.c.h.b16 %v245
  %v1198 = vunpack.c.l.b16 %v246
  %v1199 = vunpack.c.h.b16 %v246
  %v1200 = vunpack.c.l.b16 %v247
  %v1201 = vunpack.c.h.b16 %v247
  %v1202 = vunpack.c.l.b16 %v248
  %v1203 = vunpack.c.h.b16 %v248
  %v1204 = vunpack.c.l.b16 %v249
  %v1205 = vunpack.c.h.b16 %v249
  %v1206 = vunpack.c.l.b16 %v250
  %v1207 = vunpack.c.h.b16 %v250
  %v1208 = vunpack.c.l.b16 %v251
  %v1209 = vunpack.c.h.b16 %v251
  %v1210 = vunpack.c.l.b16 %v252
  %v1211 = vunpack.c.h.b16 %v252
  %v1212 = vunpack.c.l.b16 %v253
  %v1213 = vunpack.c.h.b16 %v253
  %v1214 = vunpack.c.l.b16 %v254
  %v1215 = vunpack.c.h.b16 %v254
  %v1216 = vunpack.c.l.b16 %v255
  %v1217 = vunpack.c.h.b16 %v255
  %v1218 = vunpack.c.l.b16 %v256
  %v1219 = vunpack.c.h.b16 %v256
  %v1220 = vunpack.c.l.b16 %v257
  %v1221 = vunpack.c.h.b16 %v257
  %v1222 = vunpack.c.l.b16 %v258
  %v1223 = vunpack.c.h.b16 %v258
  %v1224 = vunpack.c.l.b16 %v259
  %v1225 = vunpack.c.h.b16 %v259
  %v1226 = vunpack.c.l.b16 %v260
  %v1227 = vunpack.c.h.b16 %v260
  %v1228 = vunpack.c.l.b16 %v261
  %v1229 = vunpack.c.h.b16 %v261
  %v1230 = vunpack.c.l.b16 %v262
  %v1231 = vunpack.c.h.b16 %v262
  %v1232 = vunpack.c.l.b16 %v263
  %v1233 = vunpack.c.h.b16 %v263
  %v1234 = vunpack.c.l.b16 %v264
  %v1235 = vunpack.c.h.b16 %v264
  %v1236 = vunpack.c.l.b16 %v265
  %v1237 = vunpack.c.h.b16 %v265
  %v1238 = vunpack.c.l.b16 %v266
  %v1239 = vunpack.c.h.b16 %v266
  %v1240 = vunpack.c.l.b16 %v267
  %v1241 = vunpack.c.h.b16 %v267
  %v1242 = vunpack.c.l.b16 %v268
  %v1243 = vunpack.c.h.b16 %v268
  %v1244 = vunpack.c.l.b16 %v269
  %v1245 = vunpack.c.h.b16 %v269
  %v1246 = vunpack.c.l.b16 %v270
  %v1247 = vunpack.c.h.b16 %v270
  %v1248 = vunpack.c.l.b16 %v271
  %v1249 = vunpack.c.h.b16 %v271
  %v1250 = vunpack.c.l.b16 %v272
  %v1251 = vunpack.c.h.b16 %v272
  %v1252 = vunpack.c.l.b16 %v273
  %v1253 = vunpack.c.h.b16 %v273
  %v1254 = vunpack.c.l.b16 %v274
  %v1255 = vunpack.c.h.b16 %v274
  %v1256 = vunpack.c.l.b16 %v275
  %v1257 = vunpack.c.h.b16 %v275
  %v1258 = vunpack.c.l.b16 %v276
  %v1259 = vunpack.c.h.b16 %v276
  %v1260 = vunpack.c.l.b16 %v277
  %v1261 = vunpack.c.h.b16 %v277
  %v1262 = vunpack.c.l.b16 %v278
  %v1263 = vunpack.c.h.b16 %v278
  %v1264 = vunpack.c.l.b16 %v279
  %v1265 = vunpack.c.h.b16 %v279
  %v1266 = vunpack.c.l.b16 %v280
  %v1267 = vunpack.c.h.b16 %v280
  %v1268 = vunpack.c.l.b16 %v281
  %v1269 = vunpack.c.h.b16 %v281
  %v1270 = vunpack.c.l.b16 %v282
  %v1271 = vunpack.c.h.b16 %v282
  %v1272 = vunpack.c.l.b16 %v283
  %v1273 = vunpack.c.h.b16 %v283
  %v1274 = vunpack.c.l.b16 %v284
  %v1275 = vunpack.c.h.b16 %v284
  %v1276 = vunpack.c.l.b16 %v285
  %v1277 = vunpack.c.h.b16 %v285
  %v1278 = vunpack.c.l.b16 %v286
  %v1279 = vunpack.c.h.b16 %v286
  %v1280 = vunpack.c.l.b16 %v287
  %v1281 = vunpack.c.h.b16 %v287
  %v1282 = vunpack.c.l.b16 %v288
  %v1283 = vunpack.c.h.b16 %v288
  %v1284 = vunpack.c.l.b16 %v289
  %v1285 = vunpack.c.h.b16 %v289
  %v1286 = vunpack.c.l.b16 %v290
  %v1287 = vunpack.c.h.b16 %v290
  %v1288 = vunpack.c.l.b16 %v291
  %v1289 = vunpack.c.h.b16 %v291
  %v1290 = vunpack.c.l.b16 %v292
  %v1291 = vunpack.c.h.b16 %v292
  %v1292 = vunpack.c.l.b16 %v293
  %v1293 = vunpack.c.h.b16 %v293
  %v1294 = vunpack.c.l.b16 %v294
  %v1295 = vunpack.c.h.b16 %v294
  %v1296 = vunpack.c.l.b16 %v295
  %v1297 = vunpack.c.h.b16 %v295
  %v1298 = vunpack.c.l.b16 %v296
  %v1299 = vunpack.c.h.b16 %v296
  %v1300 = vunpack.c.l.b16 %v297
  %v1301 = vunpack.c.h.b16 %v297
  %v1302 = vunpack.c.l.b16 %v298
  %v1303 = vunpack.c.h.b16 %v298
  %v1304 = vunpack.c.l.b16 %v299
  %v1305 = vunpack.c.h.b16 %v299
  %v1306 = vunpack.c.l.b16 %v300
  %v1307 = vunpack.c.h.b16 %v300
  %v1308 = vunpack.c.l.b16 %v301
  %v1309 = vunpack.c.h.b16 %v301
  %v1310 = vunpack.c.l.b16 %v302
  %v1311 = vunpack.c.h.b16 %v302
  %v1312 = vunpack.c.l.b16 %v303
  %v1313 = vunpack.c.h.b16 %v303
  %v1314 = vunpack.c.l.b16 %v304
  %v1315 = vunpack.c.h.b16 %v304
  %v1316 = vunpack.c.l.b16 %v305
  %v1317 = vunpack.c.h.b16 %v305
  %v1318 = vunpack.c.l.b16 %v306
  %v1319 = vunpack.c.h.b16 %v306
  %v1320 = vunpack.c.l.b16 %v307
  %v1321 = vunpack.c.h.b16 %v307
  %v1322 = vunpack.c.l.b16 %v308
  %v1323 = vunpack.c.h.b16 %v308
  %v1324 = vunpack.c.l.b16 %v309
  %v1325 = vunpack.c.h.b16 %v309
  %v1326 = vunpack.c.l.b16 %v310
  %v1327 = vunpack.c.h.b16 %v310
  %v1328 = vunpack.c.l.b16 %v311
  %v1329 = vunpack.c.h.b16 %v311
  %v1330 = vunpack.c.l.b16 %v312
  %v1331 = vunpack.c.h.b16 %v312
  %v1332 = vunpack.c.l.b16 %v313
  %v1333 = vunpack.c.h.b16 %v313
  %v1334 = vunpack.c.l.b16 %v314
  %v1335 = vunpack.c.h.b16 %v314
  %v1336 = vunpack.c.l.b16 %v315
  %v1337 = vunpack.c.h.b16 %v315
  %v1338 = vunpack.c.l.b16 %v316
  %v1339 = vunpack.c.h.b16 %v316
  %v1340 = vunpack.c.l.b16 %v317
  %v1341 = vunpack.c.h.b16 %v317
  %v1342 = vunpack.c.l.b16 %v318
  %v1343 = vunpack.c.h.b16 %v318
  %v1344 = vunpack.c.l.b16 %v319
  %v1345 = vunpack.c.h.b16 %v319
  %v1346 = vunpack.c.l.b16 %v320
  %v1347 = vunpack.c.h.b16 %v320
  %v1348 = vunpack.c.l.b16 %v321
  %v1349 = vunpack.c.h.b16 %v321
  %v1350 = vunpack.c.l.b16 %v322
  %v1351 = vunpack.c.h.b16 %v322
  %v1352 = vunpack.c.l.b16 %v323
  %v1353 = vunpack.c.h.b16 %v323
  %v1354 = vunpack.c.l.b16 %v324
  %v1355 = vunpack.c.h.b16 %v324
  %v1356 = vunpack.c.l.b16 %v325
  %v1357 = vunpack.c.h.b16 %v325
  %v1358 = vunpack.c.l.b16 %v326
  %v1359 = vunpack.c.h.b16 %v326
  %v1360 = vunpack.c.l.b16 %v327
  %v1361 = vunpack.c.h.b16 %v327
  %v1362 = vunpack.c.l.b16 %v328
  %v1363 = vunpack.c.h.b16 %v328
  %v1364 = vunpack.c.l.b16 %v329
  %v1365 = vunpack.c.h.b16 %v329
  %v1366 = vunpack.c.l.b16 %v330
  %v1367 = vunpack.c.h.b16 %v330
  %v1368 = vunpack.c.l.b16 %v331
  %v1369 = vunpack.c.h.b16 %v331
  %v1370 = vunpack.c.l.b16 %v332
  %v1371 = vunpack.c.h.b16 %v332
  %v1372 = vunpack.c.l.b16 %v333
  %v1373 = vunpack.c.h.b16 %v333
  %v1374 = vunpack.c.l.b16 %v334
  %v1375 = vunpack.c.h.b16 %v334
  %v1376 = vunpack.c.l.b16 %v335
  %v1377 = vunpack.c.h.b16 %v335
  %v1378 = vunpack.c.l.b16 %v336
  %v1379 = vunpack.c.h.b16 %v336
  %v1380 = vunpack.c.l.b16 %v337
  %v1381 = vunpack.c.h.b16 %v337
  %v1382 = vunpack.c.l.b16 %v338
  %v1383 = vunpack.c.h.b16 %v338
  %v1384 = vunpack.c.l.b16 %v339
  %v1385 = vunpack.c.h.b16 %v339
  %v1386 = vunpack.c.l.b16 %v340
  %v1387 = vunpack.c.h.b16 %v340
  %v1388 = vunpack.c.l.b16 %v341
  %v1389 = vunpack.c.h.b16 %v341
  %v1390 = vunpack.c.l.b16 %v342
  %v1391 = vunpack.c.h.b16 %v342
  %v1392 = vunpack.c.l.b16 %v343
  %v1393 = vunpack.c.h.b16 %v343
  %v1394 = vpack.c.b16 %v820, %v818
  %v1395 = vpack.c.b16 %v821, %v819
  %v1396 = vpack.c.b16 %v824, %v822
  %v1397 = vpack.c.b16 %v825, %v823
  %v1398 = vpack.c.b16 %v828, %v826
  %v1399 = vpack.c.b16 %v829, %v827
  %v1400 = vpack.c.b16 %v832, %v830
  %v1401 = vpack.c.b16 %v833, %v831
  %v1402 = vpack.c.b16 %v836, %v834
  %v1403 = vpack.c.b16 %v837, %v835
  %v1404 = vpack.c.b16 %v840, %v838
  %v1405 = vpack.c.b16 %v841, %v839
  %v1406 = vpack.c.b16 %v844, %v842
  %v1407 = vpack.c.b16 %v845, %v843
  %v1408 = vpack.c.b16 %v848, %v846
  %v1409 = vpack.c.b16 %v849, %v847
  %v1410 = vpack.c.b16 %v852, %v850
  %v1411 = vpack.c.b16 %v853, %v851
  %v1412 = vpack.c.b16 %v856, %v854
  %v1413 = vpack.c.b16 %v857, %v855
  %v1414 = vpack.c.b16 %v860, %v858
  %v1415 = vpack.c.b16 %v861, %v859
  %v1416 = vpack.c.b16 %v864, %v862
  %v1417 = vpack.c.b16 %v865, %v863
  %v1418 = vpack.c.b16 %v868, %v866
  %v1419 = vpack.c.b16 %v869, %v867
  %v1420 = vpack.c.b16 %v872, %v870
  %v1421 = vpack.c.b16 %v873, %v871
  %v1422 = vpack.c.b16 %v876, %v874
  %v1423 = vpack.c.b16 %v877, %v875
  %v1424 = vpack.c.b16 %v880, %v878
  %v1425 = vpack.c.b16 %v881, %v879
  %v1426 = vpack.c.b16 %v884, %v882
  %v1427 = vpack.c.b16 %v885, %v883
  %v1428 = vpack.c.b16 %v888, %v886
  %v1429 = vpack.c.b16 %v889, %v887
  %v1430 = vpack.c.b16 %v892, %v890
  %v1431 = vpack.c.b16 %v893, %v891
  %v1432 = vpack.c.b16 %v896, %v894
  %v1433 = vpack.c.b16 %v897, %v895
  %v1434 = vpack.c.b16 %v900, %v898
  %v1435 = vpack.c.b16 %v901, %v899
  %v1436 = vpack.c.b16 %v904, %v902
  %v1437 = vpack.c.b16 %v905, %v903
  %v1438 = vpack.c.b16 %v908, %v906
  %v1439 = vpack.c.b16 %v909, %v907
  %v1440 = vpack.c.b16 %v912, %v910
  %v1441 = vpack.c.b16 %v913, %v911
  %v1442 = vpack.c.b16 %v916, %v914
  %v1443 = vpack.c.b16 %v917, %v915
  %v1444 = vpack.c.b16 %v920, %v918
  %v1445 = vpack.c.b16 %v921, %v919
  %v1446 = vpack.c.b16 %v924, %v922
  %v1447 = vpack.c.b16 %v925, %v923
  %v1448 = vpack.c.b16 %v928, %v926
  %v1449 = vpack.c.b16 %v929, %v927
  %v1450 = vpack.c.b16 %v932, %v930
  %v1451 = vpack.c.b16 %v933, %v931
  %v1452 = vpack.c.b16 %v936, %v934
  %v1453 = vpack.c.b16 %v937, %v935
  %v1454 = vpack.c.b16 %v940, %v938
  %v1455 = vpack.c.b16 %v941, %v939
  %v1456 = vpack.c.b16 %v944, %v942
  %v1457 = vpack.c.b16 %v945, %v943
  %v1458 = vpack.c.b16 %v948, %v946
  %v1459 = vpack.c.b16 %v949, %v947
  %v1460 = vpack.c.b16 %v952, %v950
  %v1461 = vpack.c.b16 %v953, %v951
  %v1462 = vpack.c.b16 %v956, %v954
  %v1463 = vpack.c.b16 %v957, %v955
  %v1464 = vpack.c.b16 %v960, %v958
  %v1465 = vpack.c.b16 %v961, %v959
  %v1466 = vpack.c.b16 %v964, %v962
  %v1467 = vpack.c.b16 %v965, %v963
  %v1468 = vpack.c.b16 %v968, %v966
  %v1469 = vpack.c.b16 %v969, %v967
  %v1470 = vpack.c.b16 %v972, %v970
  %v1471 = vpack.c.b16 %v973, %v971
  %v1472 = vpack.c.b16 %v976, %v974
  %v1473 = vpack.c.b16 %v977, %v975
  %v1474 = vpack.c.b16 %v980, %v978
  %v1475 = vpack.c.b16 %v981, %v979
  %v1476 = vpack.c.b16 %v984, %v982
  %v1477 = vpack.c.b16 %v985, %v983
  %v1478 = vpack.c.b16 %v988, %v986
  %v1479 = vpack.c.b16 %v989, %v987
  %v1480 = vpack.c.b16 %v992, %v990
  %v1481 = vpack.c.b16 %v993, %v991
  %v1482 = vpack.c.b16 %v996, %v994
  %v1483 = vpack.c.b16 %v997, %v995
  %v1484 = vpack.c.b16 %v1000, %v998
  %v1485 = vpack.c.b16 %v1001, %v999
  %v1486 = vpack.c.b16 %v1004, %v1002
  %v1487 = vpack.c.b16 %v1005, %v1003
  %v1488 = vpack.c.b16 %v1008, %v1006
  %v1489 = vpack.c.b16 %v1009, %v1007
  %v1490 = vpack.c.b16 %v1012, %v1010
  %v1491 = vpack.c.b16 %v1013, %v1011
  %v1492 = vpack.c.b16 %v1016, %v1014
  %v1493 = vpack.c.b16 %v1017, %v1015
  %v1494 = vpack.c.b16 %v1020, %v1018
  %v1495 = vpack.c.b16 %v1021, %v1019
  %v1496 = vpack.c.b16 %v1024, %v1022
  %v1497 = vpack.c.b16 %v1025, %v1023
  %v1498 = vpack.c.b16 %v1028, %v1026
  %v1499 = vpack.c.b16 %v1029, %v1027
  %v1500 = vpack.c.b16 %v1032, %v1030
  %v1501 = vpack.c.b16 %v1033, %v1031
  %v1502 = vpack.c.b16 %v1036, %v1034
  %v1503 = vpack.c.b16 %v1037, %v1035
  %v1504 = vpack.c.b16 %v1040, %v1038
  %v1505 = vpack.c.b16 %v1041, %v1039
  %v1506 = vpack.c.b16 %v1044, %v1042
  %v1507 = vpack.c.b16 %v1045, %v1043
  %v1508 = vpack.c.b16 %v1048, %v1046
  %v1509 = vpack.c.b16 %v1049, %v1047
  %v1510 = vpack.c.b16 %v1052, %v1050
  %v1511 = vpack.c.b16 %v1053, %v1051
  %v1512 = vpack.c.b16 %v1056, %v1054
  %v1513 = vpack.c.b16 %v1057, %v1055
  %v1514 = vpack.c.b16 %v1060, %v1058
  %v1515 = vpack.c.b16 %v1061, %v1059
  %v1516 = vpack.c.b16 %v1064, %v1062
  %v1517 = vpack.c.b16 %v1065, %v1063
  %v1518 = vpack.c.b16 %v1068, %v1066
  %v1519 = vpack.c.b16 %v1069, %v1067
  %v1520 = vpack.c.b16 %v1072, %v1070
  %v1521 = vpack.c.b16 %v1073, %v1071
  %v1522 = vpack.c.b16 %v1076, %v1074
  %v1523 = vpack.c.b16 %v1077, %v1075
  %v1524 = vpack.c.b16 %v1080, %v1078
  %v1525 = vpack.c.b16 %v1081, %v1079
  %v1526 = vpack.c.b16 %v1084, %v1082
  %v1527 = vpack.c.b16 %v1085, %v1083
  %v1528 = vpack.c.b16 %v1088, %v1086
  %v1529 = vpack.c.b16 %v1089, %v1087
  %v1530 = vpack.c.b16 %v1092, %v1090
  %v1531 = vpack.c.b16 %v1093, %v1091
  %v1532 = vpack.c.b16 %v1096, %v1094
  %v1533 = vpack.c.b16 %v1097, %v1095
  %v1534 = vpack.c.b16 %v1100, %v1098
  %v1535 = vpack.c.b16 %v1101, %v1099
  %v1536 = vpack.c.b16 %v1104, %v1102
  %v1537 = vpack.c.b16 %v1105, %v1103
  %v1538 = vpack.c.b16 %v1108, %v1106
  %v1539 = vpack.c.b16 %v1109, %v1107
  %v1540 = vpack.c.b16 %v1112, %v1110
  %v1541 = vpack.c.b16 %v1113, %v1111
  %v1542 = vpack.c.b16 %v1116, %v1114
  %v1543 = vpack.c.b16 %v1117, %v1115
  %v1544 = vpack.c.b16 %v1120, %v1118
  %v1545 = vpack.c.b16 %v1121, %v1119
  %v1546 = vpack.c.b16 %v1124, %v1122
  %v1547 = vpack.c.b16 %v1125, %v1123
  %v1548 = vpack.c.b16 %v1128, %v1126
  %v1549 = vpack.c.b16 %v1129, %v1127
  %v1550 = vpack.c.b16 %v1132, %v1130
  %v1551 = vpack.c.b16 %v1133, %v1131
  %v1552 = vpack.c.b16 %v1136, %v1134
  %v1553 = vpack.c.b16 %v1137, %v1135
  %v1554 = vpack.c.b16 %v1140, %v1138
  %v1555 = vpack.c.b16 %v1141, %v1139
  %v1556 = vpack.c.b16 %v1144, %v1142
  %v1557 = vpack.c.b16 %v1145, %v1143
  %v1558 = vpack.c.b16 %v1148, %v1146
  %v1559 = vpack.c.b16 %v1149, %v1147
  %v1560 = vpack.c.b16 %v1152, %v1150
  %v1561 = vpack.c.b16 %v1153, %v1151
  %v1562 = vpack.c.b16 %v1156, %v1154
  %v1563 = vpack.c.b16 %v1157, %v1155
  %v1564 = vpack.c.b16 %v1160, %v1158
  %v1565 = vpack.c.b16 %v1161, %v1159
  %v1566 = vpack.c.b16 %v1164, %v1162
  %v1567 = vpack.c.b16 %v1165, %v1163
  %v1568 = vpack.c.b16 %v1168, %v1166
  %v1569 = vpack.c.b16 %v1169, %v1167
  %v1570 = vpack.c.b16 %v1172, %v1170
  %v1571 = vpack.c.b16 %v1173, %v1171
  %v1572 = vpack.c.b16 %v1176, %v1174
  %v1573 = vpack.c.b16 %v1177, %v1175
  %v1574 = vpack.c.b16 %v1180, %v1178
  %v1575 = vpack.c.b16 %v1181, %v1179
  %v1576 = vpack.c.b16 %v1184, %v1182
  %v1577 = vpack.c.b16 %v1185, %v1183
  %v1578 = vpack.c.b16 %v1188, %v1186
  %v1579 = vpack.c.b16 %v1189, %v1187
  %v1580 = vpack.c.b16 %v1192, %v1190
  %v1581 = vpack.c.b16 %v1193, %v1191
  %v1582 = vpack.c.b16 %v1196, %v1194
  %v1583 = vpack.c.b16 %v1197, %v1195
  %v1584 = vpack.c.b16 %v1200, %v1198
  %v1585 = vpack.c.b16 %v1201, %v1199
  %v1586 = vpack.c.b16 %v1204, %v1202
  %v1587 = vpack.c.b16 %v1205, %v1203
  %v1588 = vpack.c.b16 %v1208, %v1206
  %v1589 = vpack.c.b16 %v1209, %v1207
  %v1590 = vpack.c.b16 %v1212, %v1210
  %v1591 = vpack.c.b16 %v1213, %v1211
  %v1592 = vpack.c.b16 %v1216, %v1214
  %v1593 = vpack.c.b16 %v1217, %v1215
  %v1594 = vpack.c.b16 %v1220, %v1218
  %v1595 = vpack.c.b16 %v1221, %v1219
  %v1596 = vpack.c.b16 %v1224, %v1222
  %v1597 = vpack.c.b16 %v1225, %v1223
  %v1598 = vpack.c.b16 %v1228, %v1226
  %v1599 = vpack.c.b16 %v1229, %v1227
  %v1600 = vpack.c.b16 %v1232, %v1230
  %v1601 = vpack.c.b16 %v1233, %v1231
  %v1602 = vpack.c.b16 %v1236, %v1234
  %v1603 = vpack.c.b16 %v1237, %v1235
  %v1604 = vpack.c.b16 %v1240, %v1238
  %v1605 = vpack.c.b16 %v1241, %v1239
  %v1606 = vpack.c.b16 %v1244, %v1242
  %v1607 = vpack.c.b16 %v1245, %v1243
  %v1608 = vpack.c.b16 %v1248, %v1246
  %v1609 = vpack.c.b16 %v1249, %v1247
  %v1610 = vpack.c.b16 %v1252, %v1250
  %v1611 = vpack.c.b16 %v1253, %v1251
  %v1612 = vpack.c.b16 %v1256, %v1254
  %v1613 = vpack.c.b16 %v1257, %v1255
  %v1614 = vpack.c.b16 %v1260, %v1258
  %v1615 = vpack.c.b16 %v1261, %v1259
  %v1616 = vpack.c.b16 %v1264, %v1262
  %v1617 = vpack.c.b16 %v1265, %v1263
  %v1618 = vpack.c.b16 %v1268, %v1266
  %v1619 = vpack.c.b16 %v1269, %v1267
  %v1620 = vpack.c.b16 %v1272, %v1270
  %v1621 = vpack.c.b16 %v1273, %v1271
  %v1622 = vpack.c.b16 %v1276, %v1274
  %v1623 = vpack.c.b16 %v1277, %v1275
  %v1624 = vpack.c.b16 %v1280, %v1278
  %v1625 = vpack.c.b16 %v1281, %v1279
  %v1626 = vpack.c.b16 %v1284, %v1282
  %v1627 = vpack.c.b16 %v1285, %v1283
  %v1628 = vpack.c.b16 %v1288, %v1286
  %v1629 = vpack.c.b16 %v1289, %v1287
  %v1630 = vpack.c.b16 %v1292, %v1290
  %v1631 = vpack.c.b16 %v1293, %v1291
  %v1632 = vpack.c.b16 %v1296, %v1294
  %v1633 = vpack.c.b16 %v1297, %v1295
  %v1634 = vpack.c.b16 %v1300, %v1298
  %v1635 = vpack.c.b16 %v1301, %v1299
  %v1636 = vpack.c.b16 %v1304, %v1302
  %v1637 = vpack.c.b16 %v1305, %v1303
  %v1638 = vpack.c.b16 %v1308, %v1306
  %v1639 = vpack.c.b16 %v1309, %v1307
  %v1640 = vpack.c.b16 %v1312, %v1310
  %v1641 = vpack.c.b16 %v1313, %v1311
  %v1642 = vpack.c.b16 %v1316, %v1314
  %v1643 = vpack.c.b16 %v1317, %v1315
  %v1644 = vpack.c.b16 %v1320, %v1318
  %v1645 = vpack.c.b16 %v1321, %v1319
  %v1646 = vpack.c.b16 %v1324, %v1322
  %v1647 = vpack.c.b16 %v1325, %v1323
  %v1648 = vpack.c.b16 %v1328, %v1326
  %v1649 = vpack.c.b16 %v1329, %v1327
  %v1650 = vpack.c.b16 %v1332, %v1330
  %v1651 = vpack.c.b16 %v1333, %v1331
  %v1652 = vpack.c.b16 %v1336, %v1334
  %v1653 = vpack.c.b16 %v1337, %v1335
  %v1654 = vpack.c.b16 %v1340, %v1338
  %v1655 = vpack.c.b16 %v1341, %v1339
  %v1656 = vpack.c.b16 %v1344, %v1342
  %v1657 = vpack.c.b16 %v1345, %v1343
  %v1658 = vpack.c.b16 %v1348, %v1346
  %v1659 = vpack.c.b16 %v1349, %v1347
  %v1660 = vpack.c.b16 %v1352, %v1350
  %v1661 = vpack.c.b16 %v1353, %v1351
  %v1662 = vpack.c.b16 %v1356, %v1354
  %v1663 = vpack.c.b16 %v1357, %v1355
  %v1664 = vpack.c.b16 %v1360, %v1358
  %v1665 = vpack.c.b16 %v1361, %v1359
  %v1666 = vpack.c.b16 %v1364, %v1362
  %v1667 = vpack.c.b16 %v1365, %v1363
  %v1668 = vpack.c.b16 %v1368, %v1366
  %v1669 = vpack.c.b16 %v1369, %v1367
  %v1670 = vpack.c.b16 %v1372, %v1370
  %v1671 = vpack.c.b16 %v1373, %v1371
  %v1672 = vpack.c.b16 %v1376, %v1374
  %v1673 = vpack.c.b16 %v1377, %v1375
  %v1674 = vpack.c.b16 %v1380, %v1378
  %v1675 = vpack.c.b16 %v1381, %v1379
  %v1676 = vpack.c.b16 %v1384, %v1382
  %v1677 = vpack.c.b16 %v1385, %v1383
  %v1678 = vpack.c.b16 %v1388, %v1386
  %v1679 = vpack.c.b16 %v1389, %v1387
  %v1680 = vpack.c.b16 %v1392, %v1390
  %v1681 = vpack.c.b16 %v1393, %v1391
  %1970 = vmatpush.bf16.msra.mxu0 %v1408
  %1971 = vmatpush.bf16.msra.mxu0 %v1406
  %1972 = vmatpush.bf16.msra.mxu0 %v1404
  %1973 = vmatpush.bf16.msra.mxu0 %v1402
  %1974 = vmatpush.bf16.msra.mxu0 %v1400
  %1975 = vmatpush.bf16.msra.mxu0 %v1398
  %1976 = vmatpush.bf16.msra.mxu0 %v1396
  %1977 = vmatpush.bf16.msra.mxu0 %v1394
  %1978 = vmatmul.bf16.gmra.mxu0 %v458
  %v1979 = vpop.f32.mrf.mxu0
  %v1980 = vadd.f32 %v346, %v1979
  %v1981 = vpop.f32.mrf.mxu0
  %v1982 = vadd.f32 %v346, %v1981
  %1983 = vmatmul.bf16.gmra.mxu0 %v476
  %v1984 = vpop.f32.mrf.mxu0
  %v1985 = vadd.f32 %v346, %v1984
  %v1986 = vpop.f32.mrf.mxu0
  %v1987 = vadd.f32 %v346, %v1986
  %1988 = vdwg.mxu0
  %1989 = vmatpush.bf16.msra.mxu0 %v1424
  %1990 = vmatpush.bf16.msra.mxu0 %v1422
  %1991 = vmatpush.bf16.msra.mxu0 %v1420
  %1992 = vmatpush.bf16.msra.mxu0 %v1418
  %1993 = vmatpush.bf16.msra.mxu0 %v1416
  %1994 = vmatpush.bf16.msra.mxu0 %v1414
  %1995 = vmatpush.bf16.msra.mxu0 %v1412
  %1996 = vmatpush.bf16.msra.mxu0 %v1410
  %1997 = vmatmul.bf16.gmra.mxu0 %v459
  %v1998 = vpop.f32.mrf.mxu0
  %v1999 = vadd.f32 %v1980, %v1998
  %v2000 = vpop.f32.mrf.mxu0
  %v2001 = vadd.f32 %v1982, %v2000
  %2002 = vmatmul.bf16.gmra.mxu0 %v477
  %v2003 = vpop.f32.mrf.mxu0
  %v2004 = vadd.f32 %v1985, %v2003
  %v2005 = vpop.f32.mrf.mxu0
  %v2006 = vadd.f32 %v1987, %v2005
  %2007 = vdwg.mxu0
  %2008 = vmatpush.bf16.msra.mxu0 %v1440
  %2009 = vmatpush.bf16.msra.mxu0 %v1438
  %2010 = vmatpush.bf16.msra.mxu0 %v1436
  %2011 = vmatpush.bf16.msra.mxu0 %v1434
  %2012 = vmatpush.bf16.msra.mxu0 %v1432
  %2013 = vmatpush.bf16.msra.mxu0 %v1430
  %2014 = vmatpush.bf16.msra.mxu0 %v1428
  %2015 = vmatpush.bf16.msra.mxu0 %v1426
  %2016 = vmatmul.bf16.gmra.mxu0 %v460
  %v2017 = vpop.f32.mrf.mxu0
  %v2018 = vadd.f32 %v1999, %v2017
  %v2019 = vpop.f32.mrf.mxu0
  %v2020 = vadd.f32 %v2001, %v2019
  %2021 = vmatmul.bf16.gmra.mxu0 %v478
  %v2022 = vpop.f32.mrf.mxu0
  %v2023 = vadd.f32 %v2004, %v2022
  %v2024 = vpop.f32.mrf.mxu0
  %v2025 = vadd.f32 %v2006, %v2024
  %2026 = vdwg.mxu0
  %2027 = vmatpush.bf16.msra.mxu0 %v1456
  %2028 = vmatpush.bf16.msra.mxu0 %v1454
  %2029 = vmatpush.bf16.msra.mxu0 %v1452
  %2030 = vmatpush.bf16.msra.mxu0 %v1450
  %2031 = vmatpush.bf16.msra.mxu0 %v1448
  %2032 = vmatpush.bf16.msra.mxu0 %v1446
  %2033 = vmatpush.bf16.msra.mxu0 %v1444
  %2034 = vmatpush.bf16.msra.mxu0 %v1442
  %2035 = vmatmul.bf16.gmra.mxu0 %v461
  %v2036 = vpop.f32.mrf.mxu0
  %v2037 = vadd.f32 %v2018, %v2036
  %v2038 = vpop.f32.mrf.mxu0
  %v2039 = vadd.f32 %v2020, %v2038
  %2040 = vmatmul.bf16.gmra.mxu0 %v479
  %v2041 = vpop.f32.mrf.mxu0
  %v2042 = vadd.f32 %v2023, %v2041
  %v2043 = vpop.f32.mrf.mxu0
  %v2044 = vadd.f32 %v2025, %v2043
  %2045 = vdwg.mxu0
  %2046 = vmatpush.bf16.msra.mxu0 %v1472
  %2047 = vmatpush.bf16.msra.mxu0 %v1470
  %2048 = vmatpush.bf16.msra.mxu0 %v1468
  %2049 = vmatpush.bf16.msra.mxu0 %v1466
  %2050 = vmatpush.bf16.msra.mxu0 %v1464
  %2051 = vmatpush.bf16.msra.mxu0 %v1462
  %2052 = vmatpush.bf16.msra.mxu0 %v1460
  %2053 = vmatpush.bf16.msra.mxu0 %v1458
  %2054 = vmatmul.bf16.gmra.mxu0 %v462
  %v2055 = vpop.f32.mrf.mxu0
  %v2056 = vadd.f32 %v2037, %v2055
  %v2057 = vpop.f32.mrf.mxu0
  %v2058 = vadd.f32 %v2039, %v2057
  %2059 = vmatmul.bf16.gmra.mxu0 %v480
  %v2060 = vpop.f32.mrf.mxu0
  %v2061 = vadd.f32 %v2042, %v2060
  %v2062 = vpop.f32.mrf.mxu0
  %v2063 = vadd.f32 %v2044, %v2062
  %2064 = vdwg.mxu0
  %2065 = vmatpush.bf16.msra.mxu0 %v1488
  %2066 = vmatpush.bf16.msra.mxu0 %v1486
  %2067 = vmatpush.bf16.msra.mxu0 %v1484
  %2068 = vmatpush.bf16.msra.mxu0 %v1482
  %2069 = vmatpush.bf16.msra.mxu0 %v1480
  %2070 = vmatpush.bf16.msra.mxu0 %v1478
  %2071 = vmatpush.bf16.msra.mxu0 %v1476
  %2072 = vmatpush.bf16.msra.mxu0 %v1474
  %2073 = vmatmul.bf16.gmra.mxu0 %v463
  %v2074 = vpop.f32.mrf.mxu0
  %v2075 = vadd.f32 %v2056, %v2074
  %v2076 = vpop.f32.mrf.mxu0
  %v2077 = vadd.f32 %v2058, %v2076
  %2078 = vmatmul.bf16.gmra.mxu0 %v481
  %v2079 = vpop.f32.mrf.mxu0
  %v2080 = vadd.f32 %v2061, %v2079
  %v2081 = vpop.f32.mrf.mxu0
  %v2082 = vadd.f32 %v2063, %v2081
  %2083 = vdwg.mxu0
  %2084 = vmatpush.bf16.msra.mxu0 %v1504
  %2085 = vmatpush.bf16.msra.mxu0 %v1502
  %2086 = vmatpush.bf16.msra.mxu0 %v1500
  %2087 = vmatpush.bf16.msra.mxu0 %v1498
  %2088 = vmatpush.bf16.msra.mxu0 %v1496
  %2089 = vmatpush.bf16.msra.mxu0 %v1494
  %2090 = vmatpush.bf16.msra.mxu0 %v1492
  %2091 = vmatpush.bf16.msra.mxu0 %v1490
  %2092 = vmatmul.bf16.gmra.mxu0 %v464
  %v2093 = vpop.f32.mrf.mxu0
  %v2094 = vadd.f32 %v2075, %v2093
  %v2095 = vpop.f32.mrf.mxu0
  %v2096 = vadd.f32 %v2077, %v2095
  %2097 = vmatmul.bf16.gmra.mxu0 %v482
  %v2098 = vpop.f32.mrf.mxu0
  %v2099 = vadd.f32 %v2080, %v2098
  %v2100 = vpop.f32.mrf.mxu0
  %v2101 = vadd.f32 %v2082, %v2100
  %2102 = vdwg.mxu0
  %2103 = vmatpush.bf16.msra.mxu0 %v1520
  %2104 = vmatpush.bf16.msra.mxu0 %v1518
  %2105 = vmatpush.bf16.msra.mxu0 %v1516
  %2106 = vmatpush.bf16.msra.mxu0 %v1514
  %2107 = vmatpush.bf16.msra.mxu0 %v1512
  %2108 = vmatpush.bf16.msra.mxu0 %v1510
  %2109 = vmatpush.bf16.msra.mxu0 %v1508
  %2110 = vmatpush.bf16.msra.mxu0 %v1506
  %2111 = vmatmul.bf16.gmra.mxu0 %v465
  %v2112 = vpop.f32.mrf.mxu0
  %v2113 = vadd.f32 %v2094, %v2112
  %v2114 = vpop.f32.mrf.mxu0
  %v2115 = vadd.f32 %v2096, %v2114
  %2116 = vmatmul.bf16.gmra.mxu0 %v483
  %v2117 = vpop.f32.mrf.mxu0
  %v2118 = vadd.f32 %v2099, %v2117
  %v2119 = vpop.f32.mrf.mxu0
  %v2120 = vadd.f32 %v2101, %v2119
  %2121 = vdwg.mxu0
  %2122 = vmatpush.bf16.msra.mxu0 %v1536
  %2123 = vmatpush.bf16.msra.mxu0 %v1534
  %2124 = vmatpush.bf16.msra.mxu0 %v1532
  %2125 = vmatpush.bf16.msra.mxu0 %v1530
  %2126 = vmatpush.bf16.msra.mxu0 %v1528
  %2127 = vmatpush.bf16.msra.mxu0 %v1526
  %2128 = vmatpush.bf16.msra.mxu0 %v1524
  %2129 = vmatpush.bf16.msra.mxu0 %v1522
  %2130 = vmatmul.bf16.gmra.mxu0 %v466
  %v2131 = vpop.f32.mrf.mxu0
  %v2132 = vadd.f32 %v2113, %v2131
  %v2133 = vpop.f32.mrf.mxu0
  %v2134 = vadd.f32 %v2115, %v2133
  %2135 = vmatmul.bf16.gmra.mxu0 %v484
  %v2136 = vpop.f32.mrf.mxu0
  %v2137 = vadd.f32 %v2118, %v2136
  %v2138 = vpop.f32.mrf.mxu0
  %v2139 = vadd.f32 %v2120, %v2138
  %2140 = vdwg.mxu0
  %2141 = vmatpush.bf16.msra.mxu0 %v1552
  %2142 = vmatpush.bf16.msra.mxu0 %v1550
  %2143 = vmatpush.bf16.msra.mxu0 %v1548
  %2144 = vmatpush.bf16.msra.mxu0 %v1546
  %2145 = vmatpush.bf16.msra.mxu0 %v1544
  %2146 = vmatpush.bf16.msra.mxu0 %v1542
  %2147 = vmatpush.bf16.msra.mxu0 %v1540
  %2148 = vmatpush.bf16.msra.mxu0 %v1538
  %2149 = vmatmul.bf16.gmra.mxu0 %v467
  %v2150 = vpop.f32.mrf.mxu0
  %v2151 = vadd.f32 %v2132, %v2150
  %v2152 = vpop.f32.mrf.mxu0
  %v2153 = vadd.f32 %v2134, %v2152
  %2154 = vmatmul.bf16.gmra.mxu0 %v485
  %v2155 = vpop.f32.mrf.mxu0
  %v2156 = vadd.f32 %v2137, %v2155
  %v2157 = vpop.f32.mrf.mxu0
  %v2158 = vadd.f32 %v2139, %v2157
  %2159 = vdwg.mxu0
  %2160 = vmatpush.bf16.msra.mxu0 %v1568
  %2161 = vmatpush.bf16.msra.mxu0 %v1566
  %2162 = vmatpush.bf16.msra.mxu0 %v1564
  %2163 = vmatpush.bf16.msra.mxu0 %v1562
  %2164 = vmatpush.bf16.msra.mxu0 %v1560
  %2165 = vmatpush.bf16.msra.mxu0 %v1558
  %2166 = vmatpush.bf16.msra.mxu0 %v1556
  %2167 = vmatpush.bf16.msra.mxu0 %v1554
  %2168 = vmatmul.bf16.gmra.mxu0 %v468
  %v2169 = vpop.f32.mrf.mxu0
  %v2170 = vadd.f32 %v2151, %v2169
  %v2171 = vpop.f32.mrf.mxu0
  %v2172 = vadd.f32 %v2153, %v2171
  %2173 = vmatmul.bf16.gmra.mxu0 %v486
  %v2174 = vpop.f32.mrf.mxu0
  %v2175 = vadd.f32 %v2156, %v2174
  %v2176 = vpop.f32.mrf.mxu0
  %v2177 = vadd.f32 %v2158, %v2176
  %2178 = vdwg.mxu0
  %2179 = vmatpush.bf16.msra.mxu0 %v1584
  %2180 = vmatpush.bf16.msra.mxu0 %v1582
  %2181 = vmatpush.bf16.msra.mxu0 %v1580
  %2182 = vmatpush.bf16.msra.mxu0 %v1578
  %2183 = vmatpush.bf16.msra.mxu0 %v1576
  %2184 = vmatpush.bf16.msra.mxu0 %v1574
  %2185 = vmatpush.bf16.msra.mxu0 %v1572
  %2186 = vmatpush.bf16.msra.mxu0 %v1570
  %2187 = vmatmul.bf16.gmra.mxu0 %v469
  %v2188 = vpop.f32.mrf.mxu0
  %v2189 = vadd.f32 %v2170, %v2188
  %v2190 = vpop.f32.mrf.mxu0
  %v2191 = vadd.f32 %v2172, %v2190
  %2192 = vmatmul.bf16.gmra.mxu0 %v487
  %v2193 = vpop.f32.mrf.mxu0
  %v2194 = vadd.f32 %v2175, %v2193
  %v2195 = vpop.f32.mrf.mxu0
  %v2196 = vadd.f32 %v2177, %v2195
  %2197 = vdwg.mxu0
  %2198 = vmatpush.bf16.msra.mxu0 %v1600
  %2199 = vmatpush.bf16.msra.mxu0 %v1598
  %2200 = vmatpush.bf16.msra.mxu0 %v1596
  %2201 = vmatpush.bf16.msra.mxu0 %v1594
  %2202 = vmatpush.bf16.msra.mxu0 %v1592
  %2203 = vmatpush.bf16.msra.mxu0 %v1590
  %2204 = vmatpush.bf16.msra.mxu0 %v1588
  %2205 = vmatpush.bf16.msra.mxu0 %v1586
  %2206 = vmatmul.bf16.gmra.mxu0 %v470
  %v2207 = vpop.f32.mrf.mxu0
  %v2208 = vadd.f32 %v2189, %v2207
  %v2209 = vpop.f32.mrf.mxu0
  %v2210 = vadd.f32 %v2191, %v2209
  %2211 = vmatmul.bf16.gmra.mxu0 %v488
  %v2212 = vpop.f32.mrf.mxu0
  %v2213 = vadd.f32 %v2194, %v2212
  %v2214 = vpop.f32.mrf.mxu0
  %v2215 = vadd.f32 %v2196, %v2214
  %2216 = vdwg.mxu0
  %2217 = vmatpush.bf16.msra.mxu0 %v1616
  %2218 = vmatpush.bf16.msra.mxu0 %v1614
  %2219 = vmatpush.bf16.msra.mxu0 %v1612
  %2220 = vmatpush.bf16.msra.mxu0 %v1610
  %2221 = vmatpush.bf16.msra.mxu0 %v1608
  %2222 = vmatpush.bf16.msra.mxu0 %v1606
  %2223 = vmatpush.bf16.msra.mxu0 %v1604
  %2224 = vmatpush.bf16.msra.mxu0 %v1602
  %2225 = vmatmul.bf16.gmra.mxu0 %v471
  %v2226 = vpop.f32.mrf.mxu0
  %v2227 = vadd.f32 %v2208, %v2226
  %v2228 = vpop.f32.mrf.mxu0
  %v2229 = vadd.f32 %v2210, %v2228
  %2230 = vmatmul.bf16.gmra.mxu0 %v489
  %v2231 = vpop.f32.mrf.mxu0
  %v2232 = vadd.f32 %v2213, %v2231
  %v2233 = vpop.f32.mrf.mxu0
  %v2234 = vadd.f32 %v2215, %v2233
  %2235 = vdwg.mxu0
  %2236 = vmatpush.bf16.msra.mxu0 %v1632
  %2237 = vmatpush.bf16.msra.mxu0 %v1630
  %2238 = vmatpush.bf16.msra.mxu0 %v1628
  %2239 = vmatpush.bf16.msra.mxu0 %v1626
  %2240 = vmatpush.bf16.msra.mxu0 %v1624
  %2241 = vmatpush.bf16.msra.mxu0 %v1622
  %2242 = vmatpush.bf16.msra.mxu0 %v1620
  %2243 = vmatpush.bf16.msra.mxu0 %v1618
  %2244 = vmatmul.bf16.gmra.mxu0 %v472
  %v2245 = vpop.f32.mrf.mxu0
  %v2246 = vadd.f32 %v2227, %v2245
  %v2247 = vpop.f32.mrf.mxu0
  %v2248 = vadd.f32 %v2229, %v2247
  %2249 = vmatmul.bf16.gmra.mxu0 %v490
  %v2250 = vpop.f32.mrf.mxu0
  %v2251 = vadd.f32 %v2232, %v2250
  %v2252 = vpop.f32.mrf.mxu0
  %v2253 = vadd.f32 %v2234, %v2252
  %2254 = vdwg.mxu0
  %2255 = vmatpush.bf16.msra.mxu0 %v1648
  %2256 = vmatpush.bf16.msra.mxu0 %v1646
  %2257 = vmatpush.bf16.msra.mxu0 %v1644
  %2258 = vmatpush.bf16.msra.mxu0 %v1642
  %2259 = vmatpush.bf16.msra.mxu0 %v1640
  %2260 = vmatpush.bf16.msra.mxu0 %v1638
  %2261 = vmatpush.bf16.msra.mxu0 %v1636
  %2262 = vmatpush.bf16.msra.mxu0 %v1634
  %2263 = vmatmul.bf16.gmra.mxu0 %v473
  %v2264 = vpop.f32.mrf.mxu0
  %v2265 = vadd.f32 %v2246, %v2264
  %v2266 = vpop.f32.mrf.mxu0
  %v2267 = vadd.f32 %v2248, %v2266
  %2268 = vmatmul.bf16.gmra.mxu0 %v491
  %v2269 = vpop.f32.mrf.mxu0
  %v2270 = vadd.f32 %v2251, %v2269
  %v2271 = vpop.f32.mrf.mxu0
  %v2272 = vadd.f32 %v2253, %v2271
  %2273 = vdwg.mxu0
  %2274 = vmatpush.bf16.msra.mxu0 %v1664
  %2275 = vmatpush.bf16.msra.mxu0 %v1662
  %2276 = vmatpush.bf16.msra.mxu0 %v1660
  %2277 = vmatpush.bf16.msra.mxu0 %v1658
  %2278 = vmatpush.bf16.msra.mxu0 %v1656
  %2279 = vmatpush.bf16.msra.mxu0 %v1654
  %2280 = vmatpush.bf16.msra.mxu0 %v1652
  %2281 = vmatpush.bf16.msra.mxu0 %v1650
  %2282 = vmatmul.bf16.gmra.mxu0 %v474
  %v2283 = vpop.f32.mrf.mxu0
  %v2284 = vadd.f32 %v2265, %v2283
  %v2285 = vpop.f32.mrf.mxu0
  %v2286 = vadd.f32 %v2267, %v2285
  %2287 = vmatmul.bf16.gmra.mxu0 %v492
  %v2288 = vpop.f32.mrf.mxu0
  %v2289 = vadd.f32 %v2270, %v2288
  %v2290 = vpop.f32.mrf.mxu0
  %v2291 = vadd.f32 %v2272, %v2290
  %2292 = vdwg.mxu0
  %2293 = vmatpush.bf16.msra.mxu0 %v1680
  %2294 = vmatpush.bf16.msra.mxu0 %v1678
  %2295 = vmatpush.bf16.msra.mxu0 %v1676
  %2296 = vmatpush.bf16.msra.mxu0 %v1674
  %2297 = vmatpush.bf16.msra.mxu0 %v1672
  %2298 = vmatpush.bf16.msra.mxu0 %v1670
  %2299 = vmatpush.bf16.msra.mxu0 %v1668
  %2300 = vmatpush.bf16.msra.mxu0 %v1666
  %2301 = vmatmul.bf16.gmra.mxu0 %v475
  %v2302 = vpop.f32.mrf.mxu0
  %v2303 = vadd.f32 %v2284, %v2302
  %v2304 = vpop.f32.mrf.mxu0
  %v2305 = vadd.f32 %v2286, %v2304
  %2306 = vmatmul.bf16.gmra.mxu0 %v493
  %v2307 = vpop.f32.mrf.mxu0
  %v2308 = vadd.f32 %v2289, %v2307
  %v2309 = vpop.f32.mrf.mxu0
  %v2310 = vadd.f32 %v2291, %v2309
  %2311 = vdwg.mxu0
  %2312 = vmatpush.bf16.msra.mxu0 %v1409
  %2313 = vmatpush.bf16.msra.mxu0 %v1407
  %2314 = vmatpush.bf16.msra.mxu0 %v1405
  %2315 = vmatpush.bf16.msra.mxu0 %v1403
  %2316 = vmatpush.bf16.msra.mxu0 %v1401
  %2317 = vmatpush.bf16.msra.mxu0 %v1399
  %2318 = vmatpush.bf16.msra.mxu0 %v1397
  %2319 = vmatpush.bf16.msra.mxu0 %v1395
  %2320 = vmatmul.bf16.gmra.mxu0 %v458
  %v2321 = vpop.f32.mrf.mxu0
  %v2322 = vadd.f32 %v347, %v2321
  %v2323 = vpop.f32.mrf.mxu0
  %v2324 = vadd.f32 %v347, %v2323
  %2325 = vmatmul.bf16.gmra.mxu0 %v476
  %v2326 = vpop.f32.mrf.mxu0
  %v2327 = vadd.f32 %v347, %v2326
  %v2328 = vpop.f32.mrf.mxu0
  %v2329 = vadd.f32 %v347, %v2328
  %2330 = vdwg.mxu0
  %2331 = vmatpush.bf16.msra.mxu0 %v1425
  %2332 = vmatpush.bf16.msra.mxu0 %v1423
  %2333 = vmatpush.bf16.msra.mxu0 %v1421
  %2334 = vmatpush.bf16.msra.mxu0 %v1419
  %2335 = vmatpush.bf16.msra.mxu0 %v1417
  %2336 = vmatpush.bf16.msra.mxu0 %v1415
  %2337 = vmatpush.bf16.msra.mxu0 %v1413
  %2338 = vmatpush.bf16.msra.mxu0 %v1411
  %2339 = vmatmul.bf16.gmra.mxu0 %v459
  %v2340 = vpop.f32.mrf.mxu0
  %v2341 = vadd.f32 %v2322, %v2340
  %v2342 = vpop.f32.mrf.mxu0
  %v2343 = vadd.f32 %v2324, %v2342
  %2344 = vmatmul.bf16.gmra.mxu0 %v477
  %v2345 = vpop.f32.mrf.mxu0
  %v2346 = vadd.f32 %v2327, %v2345
  %v2347 = vpop.f32.mrf.mxu0
  %v2348 = vadd.f32 %v2329, %v2347
  %2349 = vdwg.mxu0
  %2350 = vmatpush.bf16.msra.mxu0 %v1441
  %2351 = vmatpush.bf16.msra.mxu0 %v1439
  %2352 = vmatpush.bf16.msra.mxu0 %v1437
  %2353 = vmatpush.bf16.msra.mxu0 %v1435
  %2354 = vmatpush.bf16.msra.mxu0 %v1433
  %2355 = vmatpush.bf16.msra.mxu0 %v1431
  %2356 = vmatpush.bf16.msra.mxu0 %v1429
  %2357 = vmatpush.bf16.msra.mxu0 %v1427
  %2358 = vmatmul.bf16.gmra.mxu0 %v460
  %v2359 = vpop.f32.mrf.mxu0
  %v2360 = vadd.f32 %v2341, %v2359
  %v2361 = vpop.f32.mrf.mxu0
  %v2362 = vadd.f32 %v2343, %v2361
  %2363 = vmatmul.bf16.gmra.mxu0 %v478
  %v2364 = vpop.f32.mrf.mxu0
  %v2365 = vadd.f32 %v2346, %v2364
  %v2366 = vpop.f32.mrf.mxu0
  %v2367 = vadd.f32 %v2348, %v2366
  %2368 = vdwg.mxu0
  %2369 = vmatpush.bf16.msra.mxu0 %v1457
  %2370 = vmatpush.bf16.msra.mxu0 %v1455
  %2371 = vmatpush.bf16.msra.mxu0 %v1453
  %2372 = vmatpush.bf16.msra.mxu0 %v1451
  %2373 = vmatpush.bf16.msra.mxu0 %v1449
  %2374 = vmatpush.bf16.msra.mxu0 %v1447
  %2375 = vmatpush.bf16.msra.mxu0 %v1445
  %2376 = vmatpush.bf16.msra.mxu0 %v1443
  %2377 = vmatmul.bf16.gmra.mxu0 %v461
  %v2378 = vpop.f32.mrf.mxu0
  %v2379 = vadd.f32 %v2360, %v2378
  %v2380 = vpop.f32.mrf.mxu0
  %v2381 = vadd.f32 %v2362, %v2380
  %2382 = vmatmul.bf16.gmra.mxu0 %v479
  %v2383 = vpop.f32.mrf.mxu0
  %v2384 = vadd.f32 %v2365, %v2383
  %v2385 = vpop.f32.mrf.mxu0
  %v2386 = vadd.f32 %v2367, %v2385
  %2387 = vdwg.mxu0
  %2388 = vmatpush.bf16.msra.mxu0 %v1473
  %2389 = vmatpush.bf16.msra.mxu0 %v1471
  %2390 = vmatpush.bf16.msra.mxu0 %v1469
  %2391 = vmatpush.bf16.msra.mxu0 %v1467
  %2392 = vmatpush.bf16.msra.mxu0 %v1465
  %2393 = vmatpush.bf16.msra.mxu0 %v1463
  %2394 = vmatpush.bf16.msra.mxu0 %v1461
  %2395 = vmatpush.bf16.msra.mxu0 %v1459
  %2396 = vmatmul.bf16.gmra.mxu0 %v462
  %v2397 = vpop.f32.mrf.mxu0
  %v2398 = vadd.f32 %v2379, %v2397
  %v2399 = vpop.f32.mrf.mxu0
  %v2400 = vadd.f32 %v2381, %v2399
  %2401 = vmatmul.bf16.gmra.mxu0 %v480
  %v2402 = vpop.f32.mrf.mxu0
  %v2403 = vadd.f32 %v2384, %v2402
  %v2404 = vpop.f32.mrf.mxu0
  %v2405 = vadd.f32 %v2386, %v2404
  %2406 = vdwg.mxu0
  %2407 = vmatpush.bf16.msra.mxu0 %v1489
  %2408 = vmatpush.bf16.msra.mxu0 %v1487
  %2409 = vmatpush.bf16.msra.mxu0 %v1485
  %2410 = vmatpush.bf16.msra.mxu0 %v1483
  %2411 = vmatpush.bf16.msra.mxu0 %v1481
  %2412 = vmatpush.bf16.msra.mxu0 %v1479
  %2413 = vmatpush.bf16.msra.mxu0 %v1477
  %2414 = vmatpush.bf16.msra.mxu0 %v1475
  %2415 = vmatmul.bf16.gmra.mxu0 %v463
  %v2416 = vpop.f32.mrf.mxu0
  %v2417 = vadd.f32 %v2398, %v2416
  %v2418 = vpop.f32.mrf.mxu0
  %v2419 = vadd.f32 %v2400, %v2418
  %2420 = vmatmul.bf16.gmra.mxu0 %v481
  %v2421 = vpop.f32.mrf.mxu0
  %v2422 = vadd.f32 %v2403, %v2421
  %v2423 = vpop.f32.mrf.mxu0
  %v2424 = vadd.f32 %v2405, %v2423
  %2425 = vdwg.mxu0
  %2426 = vmatpush.bf16.msra.mxu0 %v1505
  %2427 = vmatpush.bf16.msra.mxu0 %v1503
  %2428 = vmatpush.bf16.msra.mxu0 %v1501
  %2429 = vmatpush.bf16.msra.mxu0 %v1499
  %2430 = vmatpush.bf16.msra.mxu0 %v1497
  %2431 = vmatpush.bf16.msra.mxu0 %v1495
  %2432 = vmatpush.bf16.msra.mxu0 %v1493
  %2433 = vmatpush.bf16.msra.mxu0 %v1491
  %2434 = vmatmul.bf16.gmra.mxu0 %v464
  %v2435 = vpop.f32.mrf.mxu0
  %v2436 = vadd.f32 %v2417, %v2435
  %v2437 = vpop.f32.mrf.mxu0
  %v2438 = vadd.f32 %v2419, %v2437
  %2439 = vmatmul.bf16.gmra.mxu0 %v482
  %v2440 = vpop.f32.mrf.mxu0
  %v2441 = vadd.f32 %v2422, %v2440
  %v2442 = vpop.f32.mrf.mxu0
  %v2443 = vadd.f32 %v2424, %v2442
  %2444 = vdwg.mxu0
  %2445 = vmatpush.bf16.msra.mxu0 %v1521
  %2446 = vmatpush.bf16.msra.mxu0 %v1519
  %2447 = vmatpush.bf16.msra.mxu0 %v1517
  %2448 = vmatpush.bf16.msra.mxu0 %v1515
  %2449 = vmatpush.bf16.msra.mxu0 %v1513
  %2450 = vmatpush.bf16.msra.mxu0 %v1511
  %2451 = vmatpush.bf16.msra.mxu0 %v1509
  %2452 = vmatpush.bf16.msra.mxu0 %v1507
  %2453 = vmatmul.bf16.gmra.mxu0 %v465
  %v2454 = vpop.f32.mrf.mxu0
  %v2455 = vadd.f32 %v2436, %v2454
  %v2456 = vpop.f32.mrf.mxu0
  %v2457 = vadd.f32 %v2438, %v2456
  %2458 = vmatmul.bf16.gmra.mxu0 %v483
  %v2459 = vpop.f32.mrf.mxu0
  %v2460 = vadd.f32 %v2441, %v2459
  %v2461 = vpop.f32.mrf.mxu0
  %v2462 = vadd.f32 %v2443, %v2461
  %2463 = vdwg.mxu0
  %2464 = vmatpush.bf16.msra.mxu0 %v1537
  %2465 = vmatpush.bf16.msra.mxu0 %v1535
  %2466 = vmatpush.bf16.msra.mxu0 %v1533
  %2467 = vmatpush.bf16.msra.mxu0 %v1531
  %2468 = vmatpush.bf16.msra.mxu0 %v1529
  %2469 = vmatpush.bf16.msra.mxu0 %v1527
  %2470 = vmatpush.bf16.msra.mxu0 %v1525
  %2471 = vmatpush.bf16.msra.mxu0 %v1523
  %2472 = vmatmul.bf16.gmra.mxu0 %v466
  %v2473 = vpop.f32.mrf.mxu0
  %v2474 = vadd.f32 %v2455, %v2473
  %v2475 = vpop.f32.mrf.mxu0
  %v2476 = vadd.f32 %v2457, %v2475
  %2477 = vmatmul.bf16.gmra.mxu0 %v484
  %v2478 = vpop.f32.mrf.mxu0
  %v2479 = vadd.f32 %v2460, %v2478
  %v2480 = vpop.f32.mrf.mxu0
  %v2481 = vadd.f32 %v2462, %v2480
  %2482 = vdwg.mxu0
  %2483 = vmatpush.bf16.msra.mxu0 %v1553
  %2484 = vmatpush.bf16.msra.mxu0 %v1551
  %2485 = vmatpush.bf16.msra.mxu0 %v1549
  %2486 = vmatpush.bf16.msra.mxu0 %v1547
  %2487 = vmatpush.bf16.msra.mxu0 %v1545
  %2488 = vmatpush.bf16.msra.mxu0 %v1543
  %2489 = vmatpush.bf16.msra.mxu0 %v1541
  %2490 = vmatpush.bf16.msra.mxu0 %v1539
  %2491 = vmatmul.bf16.gmra.mxu0 %v467
  %v2492 = vpop.f32.mrf.mxu0
  %v2493 = vadd.f32 %v2474, %v2492
  %v2494 = vpop.f32.mrf.mxu0
  %v2495 = vadd.f32 %v2476, %v2494
  %2496 = vmatmul.bf16.gmra.mxu0 %v485
  %v2497 = vpop.f32.mrf.mxu0
  %v2498 = vadd.f32 %v2479, %v2497
  %v2499 = vpop.f32.mrf.mxu0
  %v2500 = vadd.f32 %v2481, %v2499
  %2501 = vdwg.mxu0
  %2502 = vmatpush.bf16.msra.mxu0 %v1569
  %2503 = vmatpush.bf16.msra.mxu0 %v1567
  %2504 = vmatpush.bf16.msra.mxu0 %v1565
  %2505 = vmatpush.bf16.msra.mxu0 %v1563
  %2506 = vmatpush.bf16.msra.mxu0 %v1561
  %2507 = vmatpush.bf16.msra.mxu0 %v1559
  %2508 = vmatpush.bf16.msra.mxu0 %v1557
  %2509 = vmatpush.bf16.msra.mxu0 %v1555
  %2510 = vmatmul.bf16.gmra.mxu0 %v468
  %v2511 = vpop.f32.mrf.mxu0
  %v2512 = vadd.f32 %v2493, %v2511
  %v2513 = vpop.f32.mrf.mxu0
  %v2514 = vadd.f32 %v2495, %v2513
  %2515 = vmatmul.bf16.gmra.mxu0 %v486
  %v2516 = vpop.f32.mrf.mxu0
  %v2517 = vadd.f32 %v2498, %v2516
  %v2518 = vpop.f32.mrf.mxu0
  %v2519 = vadd.f32 %v2500, %v2518
  %2520 = vdwg.mxu0
  %2521 = vmatpush.bf16.msra.mxu0 %v1585
  %2522 = vmatpush.bf16.msra.mxu0 %v1583
  %2523 = vmatpush.bf16.msra.mxu0 %v1581
  %2524 = vmatpush.bf16.msra.mxu0 %v1579
  %2525 = vmatpush.bf16.msra.mxu0 %v1577
  %2526 = vmatpush.bf16.msra.mxu0 %v1575
  %2527 = vmatpush.bf16.msra.mxu0 %v1573
  %2528 = vmatpush.bf16.msra.mxu0 %v1571
  %2529 = vmatmul.bf16.gmra.mxu0 %v469
  %v2530 = vpop.f32.mrf.mxu0
  %v2531 = vadd.f32 %v2512, %v2530
  %v2532 = vpop.f32.mrf.mxu0
  %v2533 = vadd.f32 %v2514, %v2532
  %2534 = vmatmul.bf16.gmra.mxu0 %v487
  %v2535 = vpop.f32.mrf.mxu0
  %v2536 = vadd.f32 %v2517, %v2535
  %v2537 = vpop.f32.mrf.mxu0
  %v2538 = vadd.f32 %v2519, %v2537
  %2539 = vdwg.mxu0
  %2540 = vmatpush.bf16.msra.mxu0 %v1601
  %2541 = vmatpush.bf16.msra.mxu0 %v1599
  %2542 = vmatpush.bf16.msra.mxu0 %v1597
  %2543 = vmatpush.bf16.msra.mxu0 %v1595
  %2544 = vmatpush.bf16.msra.mxu0 %v1593
  %2545 = vmatpush.bf16.msra.mxu0 %v1591
  %2546 = vmatpush.bf16.msra.mxu0 %v1589
  %2547 = vmatpush.bf16.msra.mxu0 %v1587
  %2548 = vmatmul.bf16.gmra.mxu0 %v470
  %v2549 = vpop.f32.mrf.mxu0
  %v2550 = vadd.f32 %v2531, %v2549
  %v2551 = vpop.f32.mrf.mxu0
  %v2552 = vadd.f32 %v2533, %v2551
  %2553 = vmatmul.bf16.gmra.mxu0 %v488
  %v2554 = vpop.f32.mrf.mxu0
  %v2555 = vadd.f32 %v2536, %v2554
  %v2556 = vpop.f32.mrf.mxu0
  %v2557 = vadd.f32 %v2538, %v2556
  %2558 = vdwg.mxu0
  %2559 = vmatpush.bf16.msra.mxu0 %v1617
  %2560 = vmatpush.bf16.msra.mxu0 %v1615
  %2561 = vmatpush.bf16.msra.mxu0 %v1613
  %2562 = vmatpush.bf16.msra.mxu0 %v1611
  %2563 = vmatpush.bf16.msra.mxu0 %v1609
  %2564 = vmatpush.bf16.msra.mxu0 %v1607
  %2565 = vmatpush.bf16.msra.mxu0 %v1605
  %2566 = vmatpush.bf16.msra.mxu0 %v1603
  %2567 = vmatmul.bf16.gmra.mxu0 %v471
  %v2568 = vpop.f32.mrf.mxu0
  %v2569 = vadd.f32 %v2550, %v2568
  %v2570 = vpop.f32.mrf.mxu0
  %v2571 = vadd.f32 %v2552, %v2570
  %2572 = vmatmul.bf16.gmra.mxu0 %v489
  %v2573 = vpop.f32.mrf.mxu0
  %v2574 = vadd.f32 %v2555, %v2573
  %v2575 = vpop.f32.mrf.mxu0
  %v2576 = vadd.f32 %v2557, %v2575
  %2577 = vdwg.mxu0
  %2578 = vmatpush.bf16.msra.mxu0 %v1633
  %2579 = vmatpush.bf16.msra.mxu0 %v1631
  %2580 = vmatpush.bf16.msra.mxu0 %v1629
  %2581 = vmatpush.bf16.msra.mxu0 %v1627
  %2582 = vmatpush.bf16.msra.mxu0 %v1625
  %2583 = vmatpush.bf16.msra.mxu0 %v1623
  %2584 = vmatpush.bf16.msra.mxu0 %v1621
  %2585 = vmatpush.bf16.msra.mxu0 %v1619
  %2586 = vmatmul.bf16.gmra.mxu0 %v472
  %v2587 = vpop.f32.mrf.mxu0
  %v2588 = vadd.f32 %v2569, %v2587
  %v2589 = vpop.f32.mrf.mxu0
  %v2590 = vadd.f32 %v2571, %v2589
  %2591 = vmatmul.bf16.gmra.mxu0 %v490
  %v2592 = vpop.f32.mrf.mxu0
  %v2593 = vadd.f32 %v2574, %v2592
  %v2594 = vpop.f32.mrf.mxu0
  %v2595 = vadd.f32 %v2576, %v2594
  %2596 = vdwg.mxu0
  %2597 = vmatpush.bf16.msra.mxu0 %v1649
  %2598 = vmatpush.bf16.msra.mxu0 %v1647
  %2599 = vmatpush.bf16.msra.mxu0 %v1645
  %2600 = vmatpush.bf16.msra.mxu0 %v1643
  %2601 = vmatpush.bf16.msra.mxu0 %v1641
  %2602 = vmatpush.bf16.msra.mxu0 %v1639
  %2603 = vmatpush.bf16.msra.mxu0 %v1637
  %2604 = vmatpush.bf16.msra.mxu0 %v1635
  %2605 = vmatmul.bf16.gmra.mxu0 %v473
  %v2606 = vpop.f32.mrf.mxu0
  %v2607 = vadd.f32 %v2588, %v2606
  %v2608 = vpop.f32.mrf.mxu0
  %v2609 = vadd.f32 %v2590, %v2608
  %2610 = vmatmul.bf16.gmra.mxu0 %v491
  %v2611 = vpop.f32.mrf.mxu0
  %v2612 = vadd.f32 %v2593, %v2611
  %v2613 = vpop.f32.mrf.mxu0
  %v2614 = vadd.f32 %v2595, %v2613
  %2615 = vdwg.mxu0
  %2616 = vmatpush.bf16.msra.mxu0 %v1665
  %2617 = vmatpush.bf16.msra.mxu0 %v1663
  %2618 = vmatpush.bf16.msra.mxu0 %v1661
  %2619 = vmatpush.bf16.msra.mxu0 %v1659
  %2620 = vmatpush.bf16.msra.mxu0 %v1657
  %2621 = vmatpush.bf16.msra.mxu0 %v1655
  %2622 = vmatpush.bf16.msra.mxu0 %v1653
  %2623 = vmatpush.bf16.msra.mxu0 %v1651
  %2624 = vmatmul.bf16.gmra.mxu0 %v474
  %v2625 = vpop.f32.mrf.mxu0
  %v2626 = vadd.f32 %v2607, %v2625
  %v2627 = vpop.f32.mrf.mxu0
  %v2628 = vadd.f32 %v2609, %v2627
  %2629 = vmatmul.bf16.gmra.mxu0 %v492
  %v2630 = vpop.f32.mrf.mxu0
  %v2631 = vadd.f32 %v2612, %v2630
  %v2632 = vpop.f32.mrf.mxu0
  %v2633 = vadd.f32 %v2614, %v2632
  %2634 = vdwg.mxu0
  %2635 = vmatpush.bf16.msra.mxu0 %v1681
  %2636 = vmatpush.bf16.msra.mxu0 %v1679
  %2637 = vmatpush.bf16.msra.mxu0 %v1677
  %2638 = vmatpush.bf16.msra.mxu0 %v1675
  %2639 = vmatpush.bf16.msra.mxu0 %v1673
  %2640 = vmatpush.bf16.msra.mxu0 %v1671
  %2641 = vmatpush.bf16.msra.mxu0 %v1669
  %2642 = vmatpush.bf16.msra.mxu0 %v1667
  %2643 = vmatmul.bf16.gmra.mxu0 %v475
  %v2644 = vpop.f32.mrf.mxu0
  %v2645 = vadd.f32 %v2626, %v2644
  %v2646 = vpop.f32.mrf.mxu0
  %v2647 = vadd.f32 %v2628, %v2646
  %2648 = vmatmul.bf16.gmra.mxu0 %v493
  %v2649 = vpop.f32.mrf.mxu0
  %v2650 = vadd.f32 %v2631, %v2649
  %v2651 = vpop.f32.mrf.mxu0
  %v2652 = vadd.f32 %v2633, %v2651
  %2653 = vdwg.mxu0
  %vm2654 = vcmp.ge.f32.partialorder %v2303, 0.0
  %vm2655 = vcmp.ge.f32.partialorder %v2645, 0.0
  %vm2656 = vcmp.ge.f32.partialorder %v2305, 0.0
  %vm2657 = vcmp.ge.f32.partialorder %v2647, 0.0
  %vm2658 = vcmp.ge.f32.partialorder %v2308, 0.0
  %vm2659 = vcmp.ge.f32.partialorder %v2650, 0.0
  %vm2660 = vcmp.ge.f32.partialorder %v2310, 0.0
  %vm2661 = vcmp.ge.f32.partialorder %v2652, 0.0
  %v2662 = vmul.f32 %v2303, 0.01
  %v2663 = vmul.f32 %v2645, 0.01
  %v2664 = vmul.f32 %v2305, 0.01
  %v2665 = vmul.f32 %v2647, 0.01
  %v2666 = vmul.f32 %v2308, 0.01
  %v2667 = vmul.f32 %v2650, 0.01
  %v2668 = vmul.f32 %v2310, 0.01
  %v2669 = vmul.f32 %v2652, 0.01
  %v2670 = vsel %vm2654, %v2303, %v2662
  %v2671 = vsel %vm2655, %v2645, %v2663
  %v2672 = vsel %vm2656, %v2305, %v2664
  %v2673 = vsel %vm2657, %v2647, %v2665
  %v2674 = vsel %vm2658, %v2308, %v2666
  %v2675 = vsel %vm2659, %v2650, %v2667
  %v2676 = vsel %vm2660, %v2310, %v2668
  %v2677 = vsel %vm2661, %v2652, %v2669
  %v2678 = vld [vmem:[%s3] sm:$0x3]
  %v2680 = vperm.slane %v2678, 0
  %v2681 = vperm.slane %v2678, 1
  %v2684 = vmul.f32 %v2670, %v2680
  %v2685 = vmul.f32 %v2671, %v2681
  %v2686 = vmul.f32 %v2672, %v2680
  %v2687 = vmul.f32 %v2673, %v2681
  %v2688 = vmul.f32 %v2674, %v2680
  %v2689 = vmul.f32 %v2675, %v2681
  %v2690 = vmul.f32 %v2676, %v2680
  %v2691 = vmul.f32 %v2677, %v2681
  %v2692 = vld [vmem:[%s4] sm:$0x3]
  %v2694 = vperm.slane %v2692, 0
  %v2695 = vperm.slane %v2692, 1
  %v2698 = vadd.f32 %v2684, %v2694
  %v2699 = vadd.f32 %v2685, %v2695
  %v2700 = vadd.f32 %v2686, %v2694
  %v2701 = vadd.f32 %v2687, %v2695
  %v2702 = vadd.f32 %v2688, %v2694
  %v2703 = vadd.f32 %v2689, %v2695
  %v2704 = vadd.f32 %v2690, %v2694
  %v2705 = vadd.f32 %v2691, %v2695
  %v2706 = vpack.c.bf16 %v2699, %v2698
  %v2707 = vpack.c.bf16 %v2701, %v2700
  %v2708 = vpack.c.bf16 %v2703, %v2702
  %v2709 = vpack.c.bf16 %v2705, %v2704
  %2710 = vst [vmem:[%s5] sm:$0xff] %v2706
  %2711 = vst [vmem:[%s5 + $0x8] sm:$0xff] %v2707
  %2712 = vst [vmem:[%s5 + $0x10] sm:$0xff] %v2708
  %2713 = vst [vmem:[%s5 + $0x18] sm:$0xff] %v2709
  // Predicated region
  $region22: #{net_forward.6} parent=0 // pred_check
    _
  $region23: #{net_forward.6} parent=0 // pred_check_branch
    %2715 = sbr.rel (0) target = $region25
  $region24: #{net_forward.6} parent=0 // pred_region
    _
  $region25: #{net_forward.6} parent=0 // pred_fallthru
    _
  // Predicated region
  $region26: #{net_forward.6} parent=0 // pred_check
    _
  $region27: #{net_forward.6} parent=0 // pred_check_branch
    %2717 = sbr.rel (0) target = $region29
  $region28: #{net_forward.6} parent=0 // pred_region
    _
  $region29: #{net_forward.6} parent=0 // pred_fallthru
    _

// kernel: net_forward.7
$region0: #{net_forward.7}
  #allocation0 [shape = 'u32[]', space=smem, size = 0x4, offset = 0x4, fixed_abs, tag = 'smem constant byte address 0x4 - core index']
  #allocation1 [shape = 'u32[72,128]{1,0:T(1,128)}', space=vmem, size = 0x9000, scoped, tag = 'internal scratch']
  %s0 = inlined_call_operand.vmem [shape: bf16[16,4096], index: 0, kind: input, shape index: {}]
  %s1 = inlined_call_operand.vmem [shape: bf16[4096,256], index: 1, kind: input, shape index: {}]
  %s2 = inlined_call_operand.vmem [shape: f32[1,256], index: 2, kind: input, shape index: {}]
  %s3 = inlined_call_operand.vmem [shape: bf16[256,128], index: 3, kind: input, shape index: {}]
  %s4 = inlined_call_operand.vmem [shape: f32[1,128], index: 4, kind: input, shape index: {}]
  %s5 = inlined_call_operand.vmem [shape: f32[16,128], index: 5, kind: output, shape index: {}]
  %s6 = sld [smem:[#allocation0]]
  $region30: #{net_forward.7} parent=0
    _
  %s8 = ssub.s32 1, %s6
  %s9 = scalar_select 0, %s8, %s6
  // Predicated region
  $region2: #{net_forward.7} parent=0 // pred_check
    _
  $region3: #{net_forward.7} parent=0 // pred_check_branch
    %11 = sbr.rel (0) target = $region5
  $region4: #{net_forward.7} parent=0 // pred_region
    _
  $region5: #{net_forward.7} parent=0 // pred_fallthru
    _
  // Predicated region
  $region6: #{net_forward.7} parent=0 // pred_check
    _
  $region7: #{net_forward.7} parent=0 // pred_check_branch
    %13 = sbr.rel (0) target = $region9
  $region8: #{net_forward.7} parent=0 // pred_region
    _
  $region9: #{net_forward.7} parent=0 // pred_fallthru
    _
  // Predicated region
  $region10: #{net_forward.7} parent=0 // pred_check
    _
  $region11: #{net_forward.7} parent=0 // pred_check_branch
    %15 = sbr.rel (0) target = $region13
  $region12: #{net_forward.7} parent=0 // pred_region
    _
  $region13: #{net_forward.7} parent=0 // pred_fallthru
    _
  // Predicated region
  $region14: #{net_forward.7} parent=0 // pred_check
    _
  $region15: #{net_forward.7} parent=0 // pred_check_branch
    %17 = sbr.rel (0) target = $region17
  $region16: #{net_forward.7} parent=0 // pred_region
    _
  $region17: #{net_forward.7} parent=0 // pred_fallthru
    _
  // Predicated region
  $region18: #{net_forward.7} parent=0 // pred_check
    _
  $region19: #{net_forward.7} parent=0 // pred_check_branch
    %19 = sbr.rel (0) target = $region21
  $region20: #{net_forward.7} parent=0 // pred_region
    _
  $region21: #{net_forward.7} parent=0 // pred_fallthru
    _
  %v20 = vld [vmem:[%s0] sm:$0xff]
  %v21 = vld [vmem:[%s0 + $0x8] sm:$0xff]
  %v22 = vld [vmem:[%s0 + $0x10] sm:$0xff]
  %v23 = vld [vmem:[%s0 + $0x18] sm:$0xff]
  %v24 = vld [vmem:[%s0 + $0x20] sm:$0xff]
  %v25 = vld [vmem:[%s0 + $0x28] sm:$0xff]
  %v26 = vld [vmem:[%s0 + $0x30] sm:$0xff]
  %v27 = vld [vmem:[%s0 + $0x38] sm:$0xff]
  %v28 = vld [vmem:[%s0 + $0x40] sm:$0xff]
  %v29 = vld [vmem:[%s0 + $0x48] sm:$0xff]
  %v30 = vld [vmem:[%s0 + $0x50] sm:$0xff]
  %v31 = vld [vmem:[%s0 + $0x58] sm:$0xff]
  %v32 = vld [vmem:[%s0 + $0x60] sm:$0xff]
  %v33 = vld [vmem:[%s0 + $0x68] sm:$0xff]
  %v34 = vld [vmem:[%s0 + $0x70] sm:$0xff]
  %v35 = vld [vmem:[%s0 + $0x78] sm:$0xff]
  %v36 = vld [vmem:[%s0 + $0x80] sm:$0xff]
  %v37 = vld [vmem:[%s0 + $0x88] sm:$0xff]
  %v38 = vld [vmem:[%s0 + $0x90] sm:$0xff]
  %v39 = vld [vmem:[%s0 + $0x98] sm:$0xff]
  %v40 = vld [vmem:[%s0 + $0xa0] sm:$0xff]
  %v41 = vld [vmem:[%s0 + $0xa8] sm:$0xff]
  %v42 = vld [vmem:[%s0 + $0xb0] sm:$0xff]
  %v43 = vld [vmem:[%s0 + $0xb8] sm:$0xff]
  %v44 = vld [vmem:[%s0 + $0xc0] sm:$0xff]
  %v45 = vld [vmem:[%s0 + $0xc8] sm:$0xff]
  %v46 = vld [vmem:[%s0 + $0xd0] sm:$0xff]
  %v47 = vld [vmem:[%s0 + $0xd8] sm:$0xff]
  %v48 = vld [vmem:[%s0 + $0xe0] sm:$0xff]
  %v49 = vld [vmem:[%s0 + $0xe8] sm:$0xff]
  %v50 = vld [vmem:[%s0 + $0xf0] sm:$0xff]
  %v51 = vld [vmem:[%s0 + $0xf8] sm:$0xff]
  %v52 = vld [vmem:[%s1] sm:$0xff]
  %v53 = vld [vmem:[%s1 + $0x8] sm:$0xff]
  %v54 = vld [vmem:[%s1 + $0x10] sm:$0xff]
  %v55 = vld [vmem:[%s1 + $0x18] sm:$0xff]
  %v56 = vld [vmem:[%s1 + $0x20] sm:$0xff]
  %v57 = vld [vmem:[%s1 + $0x28] sm:$0xff]
  %v58 = vld [vmem:[%s1 + $0x30] sm:$0xff]
  %v59 = vld [vmem:[%s1 + $0x38] sm:$0xff]
  %v60 = vld [vmem:[%s1 + $0x40] sm:$0xff]
  %v61 = vld [vmem:[%s1 + $0x48] sm:$0xff]
  %v62 = vld [vmem:[%s1 + $0x50] sm:$0xff]
  %v63 = vld [vmem:[%s1 + $0x58] sm:$0xff]
  %v64 = vld [vmem:[%s1 + $0x60] sm:$0xff]
  %v65 = vld [vmem:[%s1 + $0x68] sm:$0xff]
  %v66 = vld [vmem:[%s1 + $0x70] sm:$0xff]
  %v67 = vld [vmem:[%s1 + $0x78] sm:$0xff]
  %v68 = vld [vmem:[%s1 + $0x80] sm:$0xff]
  %v69 = vld [vmem:[%s1 + $0x88] sm:$0xff]
  %v70 = vld [vmem:[%s1 + $0x90] sm:$0xff]
  %v71 = vld [vmem:[%s1 + $0x98] sm:$0xff]
  %v72 = vld [vmem:[%s1 + $0xa0] sm:$0xff]
  %v73 = vld [vmem:[%s1 + $0xa8] sm:$0xff]
  %v74 = vld [vmem:[%s1 + $0xb0] sm:$0xff]
  %v75 = vld [vmem:[%s1 + $0xb8] sm:$0xff]
  %v76 = vld [vmem:[%s1 + $0xc0] sm:$0xff]
  %v77 = vld [vmem:[%s1 + $0xc8] sm:$0xff]
  %v78 = vld [vmem:[%s1 + $0xd0] sm:$0xff]
  %v79 = vld [vmem:[%s1 + $0xd8] sm:$0xff]
  %v80 = vld [vmem:[%s1 + $0xe0] sm:$0xff]
  %v81 = vld [vmem:[%s1 + $0xe8] sm:$0xff]
  %v82 = vld [vmem:[%s1 + $0xf0] sm:$0xff]
  %v83 = vld [vmem:[%s1 + $0xf8] sm:$0xff]
  %v84 = vld [vmem:[%s1 + $0x100] sm:$0xff]
  %v85 = vld [vmem:[%s1 + $0x108] sm:$0xff]
  %v86 = vld [vmem:[%s1 + $0x110] sm:$0xff]
  %v87 = vld [vmem:[%s1 + $0x118] sm:$0xff]
  %v88 = vld [vmem:[%s1 + $0x120] sm:$0xff]
  %v89 = vld [vmem:[%s1 + $0x128] sm:$0xff]
  %v90 = vld [vmem:[%s1 + $0x130] sm:$0xff]
  %v91 = vld [vmem:[%s1 + $0x138] sm:$0xff]
  %v92 = vld [vmem:[%s1 + $0x140] sm:$0xff]
  %v93 = vld [vmem:[%s1 + $0x148] sm:$0xff]
  %v94 = vld [vmem:[%s1 + $0x150] sm:$0xff]
  %v95 = vld [vmem:[%s1 + $0x158] sm:$0xff]
  %v96 = vld [vmem:[%s1 + $0x160] sm:$0xff]
  %v97 = vld [vmem:[%s1 + $0x168] sm:$0xff]
  %v98 = vld [vmem:[%s1 + $0x170] sm:$0xff]
  %v99 = vld [vmem:[%s1 + $0x178] sm:$0xff]
  %v100 = vld [vmem:[%s1 + $0x180] sm:$0xff]
  %v101 = vld [vmem:[%s1 + $0x188] sm:$0xff]
  %v102 = vld [vmem:[%s1 + $0x190] sm:$0xff]
  %v103 = vld [vmem:[%s1 + $0x198] sm:$0xff]
  %v104 = vld [vmem:[%s1 + $0x1a0] sm:$0xff]
  %v105 = vld [vmem:[%s1 + $0x1a8] sm:$0xff]
  %v106 = vld [vmem:[%s1 + $0x1b0] sm:$0xff]
  %v107 = vld [vmem:[%s1 + $0x1b8] sm:$0xff]
  %v108 = vld [vmem:[%s1 + $0x1c0] sm:$0xff]
  %v109 = vld [vmem:[%s1 + $0x1c8] sm:$0xff]
  %v110 = vld [vmem:[%s1 + $0x1d0] sm:$0xff]
  %v111 = vld [vmem:[%s1 + $0x1d8] sm:$0xff]
  %v112 = vld [vmem:[%s1 + $0x1e0] sm:$0xff]
  %v113 = vld [vmem:[%s1 + $0x1e8] sm:$0xff]
  %v114 = vld [vmem:[%s1 + $0x1f0] sm:$0xff]
  %v115 = vld [vmem:[%s1 + $0x1f8] sm:$0xff]
  %v116 = vld [vmem:[%s1 + $0x200] sm:$0xff]
  %v117 = vld [vmem:[%s1 + $0x208] sm:$0xff]
  %v118 = vld [vmem:[%s1 + $0x210] sm:$0xff]
  %v119 = vld [vmem:[%s1 + $0x218] sm:$0xff]
  %v120 = vld [vmem:[%s1 + $0x220] sm:$0xff]
  %v121 = vld [vmem:[%s1 + $0x228] sm:$0xff]
  %v122 = vld [vmem:[%s1 + $0x230] sm:$0xff]
  %v123 = vld [vmem:[%s1 + $0x238] sm:$0xff]
  %v124 = vld [vmem:[%s1 + $0x240] sm:$0xff]
  %v125 = vld [vmem:[%s1 + $0x248] sm:$0xff]
  %v126 = vld [vmem:[%s1 + $0x250] sm:$0xff]
  %v127 = vld [vmem:[%s1 + $0x258] sm:$0xff]
  %v128 = vld [vmem:[%s1 + $0x260] sm:$0xff]
  %v129 = vld [vmem:[%s1 + $0x268] sm:$0xff]
  %v130 = vld [vmem:[%s1 + $0x270] sm:$0xff]
  %v131 = vld [vmem:[%s1 + $0x278] sm:$0xff]
  %v132 = vld [vmem:[%s1 + $0x280] sm:$0xff]
  %v133 = vld [vmem:[%s1 + $0x288] sm:$0xff]
  %v134 = vld [vmem:[%s1 + $0x290] sm:$0xff]
  %v135 = vld [vmem:[%s1 + $0x298] sm:$0xff]
  %v136 = vld [vmem:[%s1 + $0x2a0] sm:$0xff]
  %v137 = vld [vmem:[%s1 + $0x2a8] sm:$0xff]
  %v138 = vld [vmem:[%s1 + $0x2b0] sm:$0xff]
  %v139 = vld [vmem:[%s1 + $0x2b8] sm:$0xff]
  %v140 = vld [vmem:[%s1 + $0x2c0] sm:$0xff]
  %v141 = vld [vmem:[%s1 + $0x2c8] sm:$0xff]
  %v142 = vld [vmem:[%s1 + $0x2d0] sm:$0xff]
  %v143 = vld [vmem:[%s1 + $0x2d8] sm:$0xff]
  %v144 = vld [vmem:[%s1 + $0x2e0] sm:$0xff]
  %v145 = vld [vmem:[%s1 + $0x2e8] sm:$0xff]
  %v146 = vld [vmem:[%s1 + $0x2f0] sm:$0xff]
  %v147 = vld [vmem:[%s1 + $0x2f8] sm:$0xff]
  %v148 = vld [vmem:[%s1 + $0x300] sm:$0xff]
  %v149 = vld [vmem:[%s1 + $0x308] sm:$0xff]
  %v150 = vld [vmem:[%s1 + $0x310] sm:$0xff]
  %v151 = vld [vmem:[%s1 + $0x318] sm:$0xff]
  %v152 = vld [vmem:[%s1 + $0x320] sm:$0xff]
  %v153 = vld [vmem:[%s1 + $0x328] sm:$0xff]
  %v154 = vld [vmem:[%s1 + $0x330] sm:$0xff]
  %v155 = vld [vmem:[%s1 + $0x338] sm:$0xff]
  %v156 = vld [vmem:[%s1 + $0x340] sm:$0xff]
  %v157 = vld [vmem:[%s1 + $0x348] sm:$0xff]
  %v158 = vld [vmem:[%s1 + $0x350] sm:$0xff]
  %v159 = vld [vmem:[%s1 + $0x358] sm:$0xff]
  %v160 = vld [vmem:[%s1 + $0x360] sm:$0xff]
  %v161 = vld [vmem:[%s1 + $0x368] sm:$0xff]
  %v162 = vld [vmem:[%s1 + $0x370] sm:$0xff]
  %v163 = vld [vmem:[%s1 + $0x378] sm:$0xff]
  %v164 = vld [vmem:[%s1 + $0x380] sm:$0xff]
  %v165 = vld [vmem:[%s1 + $0x388] sm:$0xff]
  %v166 = vld [vmem:[%s1 + $0x390] sm:$0xff]
  %v167 = vld [vmem:[%s1 + $0x398] sm:$0xff]
  %v168 = vld [vmem:[%s1 + $0x3a0] sm:$0xff]
  %v169 = vld [vmem:[%s1 + $0x3a8] sm:$0xff]
  %v170 = vld [vmem:[%s1 + $0x3b0] sm:$0xff]
  %v171 = vld [vmem:[%s1 + $0x3b8] sm:$0xff]
  %v172 = vld [vmem:[%s1 + $0x3c0] sm:$0xff]
  %v173 = vld [vmem:[%s1 + $0x3c8] sm:$0xff]
  %v174 = vld [vmem:[%s1 + $0x3d0] sm:$0xff]
  %v175 = vld [vmem:[%s1 + $0x3d8] sm:$0xff]
  %v176 = vld [vmem:[%s1 + $0x3e0] sm:$0xff]
  %v177 = vld [vmem:[%s1 + $0x3e8] sm:$0xff]
  %v178 = vld [vmem:[%s1 + $0x3f0] sm:$0xff]
  %v179 = vld [vmem:[%s1 + $0x3f8] sm:$0xff]
  %v180 = vld [vmem:[%s1 + $0x400] sm:$0xff]
  %v181 = vld [vmem:[%s1 + $0x408] sm:$0xff]
  %v182 = vld [vmem:[%s1 + $0x410] sm:$0xff]
  %v183 = vld [vmem:[%s1 + $0x418] sm:$0xff]
  %v184 = vld [vmem:[%s1 + $0x420] sm:$0xff]
  %v185 = vld [vmem:[%s1 + $0x428] sm:$0xff]
  %v186 = vld [vmem:[%s1 + $0x430] sm:$0xff]
  %v187 = vld [vmem:[%s1 + $0x438] sm:$0xff]
  %v188 = vld [vmem:[%s1 + $0x440] sm:$0xff]
  %v189 = vld [vmem:[%s1 + $0x448] sm:$0xff]
  %v190 = vld [vmem:[%s1 + $0x450] sm:$0xff]
  %v191 = vld [vmem:[%s1 + $0x458] sm:$0xff]
  %v192 = vld [vmem:[%s1 + $0x460] sm:$0xff]
  %v193 = vld [vmem:[%s1 + $0x468] sm:$0xff]
  %v194 = vld [vmem:[%s1 + $0x470] sm:$0xff]
  %v195 = vld [vmem:[%s1 + $0x478] sm:$0xff]
  %v196 = vld [vmem:[%s1 + $0x480] sm:$0xff]
  %v197 = vld [vmem:[%s1 + $0x488] sm:$0xff]
  %v198 = vld [vmem:[%s1 + $0x490] sm:$0xff]
  %v199 = vld [vmem:[%s1 + $0x498] sm:$0xff]
  %v200 = vld [vmem:[%s1 + $0x4a0] sm:$0xff]
  %v201 = vld [vmem:[%s1 + $0x4a8] sm:$0xff]
  %v202 = vld [vmem:[%s1 + $0x4b0] sm:$0xff]
  %v203 = vld [vmem:[%s1 + $0x4b8] sm:$0xff]
  %v204 = vld [vmem:[%s1 + $0x4c0] sm:$0xff]
  %v205 = vld [vmem:[%s1 + $0x4c8] sm:$0xff]
  %v206 = vld [vmem:[%s1 + $0x4d0] sm:$0xff]
  %v207 = vld [vmem:[%s1 + $0x4d8] sm:$0xff]
  %v208 = vld [vmem:[%s1 + $0x4e0] sm:$0xff]
  %v209 = vld [vmem:[%s1 + $0x4e8] sm:$0xff]
  %v210 = vld [vmem:[%s1 + $0x4f0] sm:$0xff]
  %v211 = vld [vmem:[%s1 + $0x4f8] sm:$0xff]
  %v212 = vld [vmem:[%s1 + $0x500] sm:$0xff]
  %v213 = vld [vmem:[%s1 + $0x508] sm:$0xff]
  %v214 = vld [vmem:[%s1 + $0x510] sm:$0xff]
  %v215 = vld [vmem:[%s1 + $0x518] sm:$0xff]
  %v216 = vld [vmem:[%s1 + $0x520] sm:$0xff]
  %v217 = vld [vmem:[%s1 + $0x528] sm:$0xff]
  %v218 = vld [vmem:[%s1 + $0x530] sm:$0xff]
  %v219 = vld [vmem:[%s1 + $0x538] sm:$0xff]
  %v220 = vld [vmem:[%s1 + $0x540] sm:$0xff]
  %v221 = vld [vmem:[%s1 + $0x548] sm:$0xff]
  %v222 = vld [vmem:[%s1 + $0x550] sm:$0xff]
  %v223 = vld [vmem:[%s1 + $0x558] sm:$0xff]
  %v224 = vld [vmem:[%s1 + $0x560] sm:$0xff]
  %v225 = vld [vmem:[%s1 + $0x568] sm:$0xff]
  %v226 = vld [vmem:[%s1 + $0x570] sm:$0xff]
  %v227 = vld [vmem:[%s1 + $0x578] sm:$0xff]
  %v228 = vld [vmem:[%s1 + $0x580] sm:$0xff]
  %v229 = vld [vmem:[%s1 + $0x588] sm:$0xff]
  %v230 = vld [vmem:[%s1 + $0x590] sm:$0xff]
  %v231 = vld [vmem:[%s1 + $0x598] sm:$0xff]
  %v232 = vld [vmem:[%s1 + $0x5a0] sm:$0xff]
  %v233 = vld [vmem:[%s1 + $0x5a8] sm:$0xff]
  %v234 = vld [vmem:[%s1 + $0x5b0] sm:$0xff]
  %v235 = vld [vmem:[%s1 + $0x5b8] sm:$0xff]
  %v236 = vld [vmem:[%s1 + $0x5c0] sm:$0xff]
  %v237 = vld [vmem:[%s1 + $0x5c8] sm:$0xff]
  %v238 = vld [vmem:[%s1 + $0x5d0] sm:$0xff]
  %v239 = vld [vmem:[%s1 + $0x5d8] sm:$0xff]
  %v240 = vld [vmem:[%s1 + $0x5e0] sm:$0xff]
  %v241 = vld [vmem:[%s1 + $0x5e8] sm:$0xff]
  %v242 = vld [vmem:[%s1 + $0x5f0] sm:$0xff]
  %v243 = vld [vmem:[%s1 + $0x5f8] sm:$0xff]
  %v244 = vld [vmem:[%s1 + $0x600] sm:$0xff]
  %v245 = vld [vmem:[%s1 + $0x608] sm:$0xff]
  %v246 = vld [vmem:[%s1 + $0x610] sm:$0xff]
  %v247 = vld [vmem:[%s1 + $0x618] sm:$0xff]
  %v248 = vld [vmem:[%s1 + $0x620] sm:$0xff]
  %v249 = vld [vmem:[%s1 + $0x628] sm:$0xff]
  %v250 = vld [vmem:[%s1 + $0x630] sm:$0xff]
  %v251 = vld [vmem:[%s1 + $0x638] sm:$0xff]
  %v252 = vld [vmem:[%s1 + $0x640] sm:$0xff]
  %v253 = vld [vmem:[%s1 + $0x648] sm:$0xff]
  %v254 = vld [vmem:[%s1 + $0x650] sm:$0xff]
  %v255 = vld [vmem:[%s1 + $0x658] sm:$0xff]
  %v256 = vld [vmem:[%s1 + $0x660] sm:$0xff]
  %v257 = vld [vmem:[%s1 + $0x668] sm:$0xff]
  %v258 = vld [vmem:[%s1 + $0x670] sm:$0xff]
  %v259 = vld [vmem:[%s1 + $0x678] sm:$0xff]
  %v260 = vld [vmem:[%s1 + $0x680] sm:$0xff]
  %v261 = vld [vmem:[%s1 + $0x688] sm:$0xff]
  %v262 = vld [vmem:[%s1 + $0x690] sm:$0xff]
  %v263 = vld [vmem:[%s1 + $0x698] sm:$0xff]
  %v264 = vld [vmem:[%s1 + $0x6a0] sm:$0xff]
  %v265 = vld [vmem:[%s1 + $0x6a8] sm:$0xff]
  %v266 = vld [vmem:[%s1 + $0x6b0] sm:$0xff]
  %v267 = vld [vmem:[%s1 + $0x6b8] sm:$0xff]
  %v268 = vld [vmem:[%s1 + $0x6c0] sm:$0xff]
  %v269 = vld [vmem:[%s1 + $0x6c8] sm:$0xff]
  %v270 = vld [vmem:[%s1 + $0x6d0] sm:$0xff]
  %v271 = vld [vmem:[%s1 + $0x6d8] sm:$0xff]
  %v272 = vld [vmem:[%s1 + $0x6e0] sm:$0xff]
  %v273 = vld [vmem:[%s1 + $0x6e8] sm:$0xff]
  %v274 = vld [vmem:[%s1 + $0x6f0] sm:$0xff]
  %v275 = vld [vmem:[%s1 + $0x6f8] sm:$0xff]
  %v276 = vld [vmem:[%s1 + $0x700] sm:$0xff]
  %v277 = vld [vmem:[%s1 + $0x708] sm:$0xff]
  %v278 = vld [vmem:[%s1 + $0x710] sm:$0xff]
  %v279 = vld [vmem:[%s1 + $0x718] sm:$0xff]
  %v280 = vld [vmem:[%s1 + $0x720] sm:$0xff]
  %v281 = vld [vmem:[%s1 + $0x728] sm:$0xff]
  %v282 = vld [vmem:[%s1 + $0x730] sm:$0xff]
  %v283 = vld [vmem:[%s1 + $0x738] sm:$0xff]
  %v284 = vld [vmem:[%s1 + $0x740] sm:$0xff]
  %v285 = vld [vmem:[%s1 + $0x748] sm:$0xff]
  %v286 = vld [vmem:[%s1 + $0x750] sm:$0xff]
  %v287 = vld [vmem:[%s1 + $0x758] sm:$0xff]
  %v288 = vld [vmem:[%s1 + $0x760] sm:$0xff]
  %v289 = vld [vmem:[%s1 + $0x768] sm:$0xff]
  %v290 = vld [vmem:[%s1 + $0x770] sm:$0xff]
  %v291 = vld [vmem:[%s1 + $0x778] sm:$0xff]
  %v292 = vld [vmem:[%s1 + $0x780] sm:$0xff]
  %v293 = vld [vmem:[%s1 + $0x788] sm:$0xff]
  %v294 = vld [vmem:[%s1 + $0x790] sm:$0xff]
  %v295 = vld [vmem:[%s1 + $0x798] sm:$0xff]
  %v296 = vld [vmem:[%s1 + $0x7a0] sm:$0xff]
  %v297 = vld [vmem:[%s1 + $0x7a8] sm:$0xff]
  %v298 = vld [vmem:[%s1 + $0x7b0] sm:$0xff]
  %v299 = vld [vmem:[%s1 + $0x7b8] sm:$0xff]
  %v300 = vld [vmem:[%s1 + $0x7c0] sm:$0xff]
  %v301 = vld [vmem:[%s1 + $0x7c8] sm:$0xff]
  %v302 = vld [vmem:[%s1 + $0x7d0] sm:$0xff]
  %v303 = vld [vmem:[%s1 + $0x7d8] sm:$0xff]
  %v304 = vld [vmem:[%s1 + $0x7e0] sm:$0xff]
  %v305 = vld [vmem:[%s1 + $0x7e8] sm:$0xff]
  %v306 = vld [vmem:[%s1 + $0x7f0] sm:$0xff]
  %v307 = vld [vmem:[%s1 + $0x7f8] sm:$0xff]
  %v308 = vld [vmem:[%s1 + $0x800] sm:$0xff]
  %v309 = vld [vmem:[%s1 + $0x808] sm:$0xff]
  %v310 = vld [vmem:[%s1 + $0x810] sm:$0xff]
  %v311 = vld [vmem:[%s1 + $0x818] sm:$0xff]
  %v312 = vld [vmem:[%s1 + $0x820] sm:$0xff]
  %v313 = vld [vmem:[%s1 + $0x828] sm:$0xff]
  %v314 = vld [vmem:[%s1 + $0x830] sm:$0xff]
  %v315 = vld [vmem:[%s1 + $0x838] sm:$0xff]
  %v316 = vld [vmem:[%s1 + $0x840] sm:$0xff]
  %v317 = vld [vmem:[%s1 + $0x848] sm:$0xff]
  %v318 = vld [vmem:[%s1 + $0x850] sm:$0xff]
  %v319 = vld [vmem:[%s1 + $0x858] sm:$0xff]
  %v320 = vld [vmem:[%s1 + $0x860] sm:$0xff]
  %v321 = vld [vmem:[%s1 + $0x868] sm:$0xff]
  %v322 = vld [vmem:[%s1 + $0x870] sm:$0xff]
  %v323 = vld [vmem:[%s1 + $0x878] sm:$0xff]
  %v324 = vld [vmem:[%s1 + $0x880] sm:$0xff]
  %v325 = vld [vmem:[%s1 + $0x888] sm:$0xff]
  %v326 = vld [vmem:[%s1 + $0x890] sm:$0xff]
  %v327 = vld [vmem:[%s1 + $0x898] sm:$0xff]
  %v328 = vld [vmem:[%s1 + $0x8a0] sm:$0xff]
  %v329 = vld [vmem:[%s1 + $0x8a8] sm:$0xff]
  %v330 = vld [vmem:[%s1 + $0x8b0] sm:$0xff]
  %v331 = vld [vmem:[%s1 + $0x8b8] sm:$0xff]
  %v332 = vld [vmem:[%s1 + $0x8c0] sm:$0xff]
  %v333 = vld [vmem:[%s1 + $0x8c8] sm:$0xff]
  %v334 = vld [vmem:[%s1 + $0x8d0] sm:$0xff]
  %v335 = vld [vmem:[%s1 + $0x8d8] sm:$0xff]
  %v336 = vld [vmem:[%s1 + $0x8e0] sm:$0xff]
  %v337 = vld [vmem:[%s1 + $0x8e8] sm:$0xff]
  %v338 = vld [vmem:[%s1 + $0x8f0] sm:$0xff]
  %v339 = vld [vmem:[%s1 + $0x8f8] sm:$0xff]
  %v340 = vld [vmem:[%s1 + $0x900] sm:$0xff]
  %v341 = vld [vmem:[%s1 + $0x908] sm:$0xff]
  %v342 = vld [vmem:[%s1 + $0x910] sm:$0xff]
  %v343 = vld [vmem:[%s1 + $0x918] sm:$0xff]
  %v344 = vld [vmem:[%s1 + $0x920] sm:$0xff]
  %v345 = vld [vmem:[%s1 + $0x928] sm:$0xff]
  %v346 = vld [vmem:[%s1 + $0x930] sm:$0xff]
  %v347 = vld [vmem:[%s1 + $0x938] sm:$0xff]
  %v348 = vld [vmem:[%s1 + $0x940] sm:$0xff]
  %v349 = vld [vmem:[%s1 + $0x948] sm:$0xff]
  %v350 = vld [vmem:[%s1 + $0x950] sm:$0xff]
  %v351 = vld [vmem:[%s1 + $0x958] sm:$0xff]
  %v352 = vld [vmem:[%s1 + $0x960] sm:$0xff]
  %v353 = vld [vmem:[%s1 + $0x968] sm:$0xff]
  %v354 = vld [vmem:[%s1 + $0x970] sm:$0xff]
  %v355 = vld [vmem:[%s1 + $0x978] sm:$0xff]
  %v356 = vld [vmem:[%s1 + $0x980] sm:$0xff]
  %v357 = vld [vmem:[%s1 + $0x988] sm:$0xff]
  %v358 = vld [vmem:[%s1 + $0x990] sm:$0xff]
  %v359 = vld [vmem:[%s1 + $0x998] sm:$0xff]
  %v360 = vld [vmem:[%s1 + $0x9a0] sm:$0xff]
  %v361 = vld [vmem:[%s1 + $0x9a8] sm:$0xff]
  %v362 = vld [vmem:[%s1 + $0x9b0] sm:$0xff]
  %v363 = vld [vmem:[%s1 + $0x9b8] sm:$0xff]
  %v364 = vld [vmem:[%s1 + $0x9c0] sm:$0xff]
  %v365 = vld [vmem:[%s1 + $0x9c8] sm:$0xff]
  %v366 = vld [vmem:[%s1 + $0x9d0] sm:$0xff]
  %v367 = vld [vmem:[%s1 + $0x9d8] sm:$0xff]
  %v368 = vld [vmem:[%s1 + $0x9e0] sm:$0xff]
  %v369 = vld [vmem:[%s1 + $0x9e8] sm:$0xff]
  %v370 = vld [vmem:[%s1 + $0x9f0] sm:$0xff]
  %v371 = vld [vmem:[%s1 + $0x9f8] sm:$0xff]
  %v372 = vld [vmem:[%s1 + $0xa00] sm:$0xff]
  %v373 = vld [vmem:[%s1 + $0xa08] sm:$0xff]
  %v374 = vld [vmem:[%s1 + $0xa10] sm:$0xff]
  %v375 = vld [vmem:[%s1 + $0xa18] sm:$0xff]
  %v376 = vld [vmem:[%s1 + $0xa20] sm:$0xff]
  %v377 = vld [vmem:[%s1 + $0xa28] sm:$0xff]
  %v378 = vld [vmem:[%s1 + $0xa30] sm:$0xff]
  %v379 = vld [vmem:[%s1 + $0xa38] sm:$0xff]
  %v380 = vld [vmem:[%s1 + $0xa40] sm:$0xff]
  %v381 = vld [vmem:[%s1 + $0xa48] sm:$0xff]
  %v382 = vld [vmem:[%s1 + $0xa50] sm:$0xff]
  %v383 = vld [vmem:[%s1 + $0xa58] sm:$0xff]
  %v384 = vld [vmem:[%s1 + $0xa60] sm:$0xff]
  %v385 = vld [vmem:[%s1 + $0xa68] sm:$0xff]
  %v386 = vld [vmem:[%s1 + $0xa70] sm:$0xff]
  %v387 = vld [vmem:[%s1 + $0xa78] sm:$0xff]
  %v388 = vld [vmem:[%s1 + $0xa80] sm:$0xff]
  %v389 = vld [vmem:[%s1 + $0xa88] sm:$0xff]
  %v390 = vld [vmem:[%s1 + $0xa90] sm:$0xff]
  %v391 = vld [vmem:[%s1 + $0xa98] sm:$0xff]
  %v392 = vld [vmem:[%s1 + $0xaa0] sm:$0xff]
  %v393 = vld [vmem:[%s1 + $0xaa8] sm:$0xff]
  %v394 = vld [vmem:[%s1 + $0xab0] sm:$0xff]
  %v395 = vld [vmem:[%s1 + $0xab8] sm:$0xff]
  %v396 = vld [vmem:[%s1 + $0xac0] sm:$0xff]
  %v397 = vld [vmem:[%s1 + $0xac8] sm:$0xff]
  %v398 = vld [vmem:[%s1 + $0xad0] sm:$0xff]
  %v399 = vld [vmem:[%s1 + $0xad8] sm:$0xff]
  %v400 = vld [vmem:[%s1 + $0xae0] sm:$0xff]
  %v401 = vld [vmem:[%s1 + $0xae8] sm:$0xff]
  %v402 = vld [vmem:[%s1 + $0xaf0] sm:$0xff]
  %v403 = vld [vmem:[%s1 + $0xaf8] sm:$0xff]
  %v404 = vld [vmem:[%s1 + $0xb00] sm:$0xff]
  %v405 = vld [vmem:[%s1 + $0xb08] sm:$0xff]
  %v406 = vld [vmem:[%s1 + $0xb10] sm:$0xff]
  %v407 = vld [vmem:[%s1 + $0xb18] sm:$0xff]
  %v408 = vld [vmem:[%s1 + $0xb20] sm:$0xff]
  %v409 = vld [vmem:[%s1 + $0xb28] sm:$0xff]
  %v410 = vld [vmem:[%s1 + $0xb30] sm:$0xff]
  %v411 = vld [vmem:[%s1 + $0xb38] sm:$0xff]
  %v412 = vld [vmem:[%s1 + $0xb40] sm:$0xff]
  %v413 = vld [vmem:[%s1 + $0xb48] sm:$0xff]
  %v414 = vld [vmem:[%s1 + $0xb50] sm:$0xff]
  %v415 = vld [vmem:[%s1 + $0xb58] sm:$0xff]
  %v416 = vld [vmem:[%s1 + $0xb60] sm:$0xff]
  %v417 = vld [vmem:[%s1 + $0xb68] sm:$0xff]
  %v418 = vld [vmem:[%s1 + $0xb70] sm:$0xff]
  %v419 = vld [vmem:[%s1 + $0xb78] sm:$0xff]
  %v420 = vld [vmem:[%s1 + $0xb80] sm:$0xff]
  %v421 = vld [vmem:[%s1 + $0xb88] sm:$0xff]
  %v422 = vld [vmem:[%s1 + $0xb90] sm:$0xff]
  %v423 = vld [vmem:[%s1 + $0xb98] sm:$0xff]
  %v424 = vld [vmem:[%s1 + $0xba0] sm:$0xff]
  %v425 = vld [vmem:[%s1 + $0xba8] sm:$0xff]
  %v426 = vld [vmem:[%s1 + $0xbb0] sm:$0xff]
  %v427 = vld [vmem:[%s1 + $0xbb8] sm:$0xff]
  %v428 = vld [vmem:[%s1 + $0xbc0] sm:$0xff]
  %v429 = vld [vmem:[%s1 + $0xbc8] sm:$0xff]
  %v430 = vld [vmem:[%s1 + $0xbd0] sm:$0xff]
  %v431 = vld [vmem:[%s1 + $0xbd8] sm:$0xff]
  %v432 = vld [vmem:[%s1 + $0xbe0] sm:$0xff]
  %v433 = vld [vmem:[%s1 + $0xbe8] sm:$0xff]
  %v434 = vld [vmem:[%s1 + $0xbf0] sm:$0xff]
  %v435 = vld [vmem:[%s1 + $0xbf8] sm:$0xff]
  %v436 = vld [vmem:[%s1 + $0xc00] sm:$0xff]
  %v437 = vld [vmem:[%s1 + $0xc08] sm:$0xff]
  %v438 = vld [vmem:[%s1 + $0xc10] sm:$0xff]
  %v439 = vld [vmem:[%s1 + $0xc18] sm:$0xff]
  %v440 = vld [vmem:[%s1 + $0xc20] sm:$0xff]
  %v441 = vld [vmem:[%s1 + $0xc28] sm:$0xff]
  %v442 = vld [vmem:[%s1 + $0xc30] sm:$0xff]
  %v443 = vld [vmem:[%s1 + $0xc38] sm:$0xff]
  %v444 = vld [vmem:[%s1 + $0xc40] sm:$0xff]
  %v445 = vld [vmem:[%s1 + $0xc48] sm:$0xff]
  %v446 = vld [vmem:[%s1 + $0xc50] sm:$0xff]
  %v447 = vld [vmem:[%s1 + $0xc58] sm:$0xff]
  %v448 = vld [vmem:[%s1 + $0xc60] sm:$0xff]
  %v449 = vld [vmem:[%s1 + $0xc68] sm:$0xff]
  %v450 = vld [vmem:[%s1 + $0xc70] sm:$0xff]
  %v451 = vld [vmem:[%s1 + $0xc78] sm:$0xff]
  %v452 = vld [vmem:[%s1 + $0xc80] sm:$0xff]
  %v453 = vld [vmem:[%s1 + $0xc88] sm:$0xff]
  %v454 = vld [vmem:[%s1 + $0xc90] sm:$0xff]
  %v455 = vld [vmem:[%s1 + $0xc98] sm:$0xff]
  %v456 = vld [vmem:[%s1 + $0xca0] sm:$0xff]
  %v457 = vld [vmem:[%s1 + $0xca8] sm:$0xff]
  %v458 = vld [vmem:[%s1 + $0xcb0] sm:$0xff]
  %v459 = vld [vmem:[%s1 + $0xcb8] sm:$0xff]
  %v460 = vld [vmem:[%s1 + $0xcc0] sm:$0xff]
  %v461 = vld [vmem:[%s1 + $0xcc8] sm:$0xff]
  %v462 = vld [vmem:[%s1 + $0xcd0] sm:$0xff]
  %v463 = vld [vmem:[%s1 + $0xcd8] sm:$0xff]
  %v464 = vld [vmem:[%s1 + $0xce0] sm:$0xff]
  %v465 = vld [vmem:[%s1 + $0xce8] sm:$0xff]
  %v466 = vld [vmem:[%s1 + $0xcf0] sm:$0xff]
  %v467 = vld [vmem:[%s1 + $0xcf8] sm:$0xff]
  %v468 = vld [vmem:[%s1 + $0xd00] sm:$0xff]
  %v469 = vld [vmem:[%s1 + $0xd08] sm:$0xff]
  %v470 = vld [vmem:[%s1 + $0xd10] sm:$0xff]
  %v471 = vld [vmem:[%s1 + $0xd18] sm:$0xff]
  %v472 = vld [vmem:[%s1 + $0xd20] sm:$0xff]
  %v473 = vld [vmem:[%s1 + $0xd28] sm:$0xff]
  %v474 = vld [vmem:[%s1 + $0xd30] sm:$0xff]
  %v475 = vld [vmem:[%s1 + $0xd38] sm:$0xff]
  %v476 = vld [vmem:[%s1 + $0xd40] sm:$0xff]
  %v477 = vld [vmem:[%s1 + $0xd48] sm:$0xff]
  %v478 = vld [vmem:[%s1 + $0xd50] sm:$0xff]
  %v479 = vld [vmem:[%s1 + $0xd58] sm:$0xff]
  %v480 = vld [vmem:[%s1 + $0xd60] sm:$0xff]
  %v481 = vld [vmem:[%s1 + $0xd68] sm:$0xff]
  %v482 = vld [vmem:[%s1 + $0xd70] sm:$0xff]
  %v483 = vld [vmem:[%s1 + $0xd78] sm:$0xff]
  %v484 = vld [vmem:[%s1 + $0xd80] sm:$0xff]
  %v485 = vld [vmem:[%s1 + $0xd88] sm:$0xff]
  %v486 = vld [vmem:[%s1 + $0xd90] sm:$0xff]
  %v487 = vld [vmem:[%s1 + $0xd98] sm:$0xff]
  %v488 = vld [vmem:[%s1 + $0xda0] sm:$0xff]
  %v489 = vld [vmem:[%s1 + $0xda8] sm:$0xff]
  %v490 = vld [vmem:[%s1 + $0xdb0] sm:$0xff]
  %v491 = vld [vmem:[%s1 + $0xdb8] sm:$0xff]
  %v492 = vld [vmem:[%s1 + $0xdc0] sm:$0xff]
  %v493 = vld [vmem:[%s1 + $0xdc8] sm:$0xff]
  %v494 = vld [vmem:[%s1 + $0xdd0] sm:$0xff]
  %v495 = vld [vmem:[%s1 + $0xdd8] sm:$0xff]
  %v496 = vld [vmem:[%s1 + $0xde0] sm:$0xff]
  %v497 = vld [vmem:[%s1 + $0xde8] sm:$0xff]
  %v498 = vld [vmem:[%s1 + $0xdf0] sm:$0xff]
  %v499 = vld [vmem:[%s1 + $0xdf8] sm:$0xff]
  %v500 = vld [vmem:[%s1 + $0xe00] sm:$0xff]
  %v501 = vld [vmem:[%s1 + $0xe08] sm:$0xff]
  %v502 = vld [vmem:[%s1 + $0xe10] sm:$0xff]
  %v503 = vld [vmem:[%s1 + $0xe18] sm:$0xff]
  %v504 = vld [vmem:[%s1 + $0xe20] sm:$0xff]
  %v505 = vld [vmem:[%s1 + $0xe28] sm:$0xff]
  %v506 = vld [vmem:[%s1 + $0xe30] sm:$0xff]
  %v507 = vld [vmem:[%s1 + $0xe38] sm:$0xff]
  %v508 = vld [vmem:[%s1 + $0xe40] sm:$0xff]
  %v509 = vld [vmem:[%s1 + $0xe48] sm:$0xff]
  %v510 = vld [vmem:[%s1 + $0xe50] sm:$0xff]
  %v511 = vld [vmem:[%s1 + $0xe58] sm:$0xff]
  %v512 = vld [vmem:[%s1 + $0xe60] sm:$0xff]
  %v513 = vld [vmem:[%s1 + $0xe68] sm:$0xff]
  %v514 = vld [vmem:[%s1 + $0xe70] sm:$0xff]
  %v515 = vld [vmem:[%s1 + $0xe78] sm:$0xff]
  %v516 = vld [vmem:[%s1 + $0xe80] sm:$0xff]
  %v517 = vld [vmem:[%s1 + $0xe88] sm:$0xff]
  %v518 = vld [vmem:[%s1 + $0xe90] sm:$0xff]
  %v519 = vld [vmem:[%s1 + $0xe98] sm:$0xff]
  %v520 = vld [vmem:[%s1 + $0xea0] sm:$0xff]
  %v521 = vld [vmem:[%s1 + $0xea8] sm:$0xff]
  %v522 = vld [vmem:[%s1 + $0xeb0] sm:$0xff]
  %v523 = vld [vmem:[%s1 + $0xeb8] sm:$0xff]
  %v524 = vld [vmem:[%s1 + $0xec0] sm:$0xff]
  %v525 = vld [vmem:[%s1 + $0xec8] sm:$0xff]
  %v526 = vld [vmem:[%s1 + $0xed0] sm:$0xff]
  %v527 = vld [vmem:[%s1 + $0xed8] sm:$0xff]
  %v528 = vld [vmem:[%s1 + $0xee0] sm:$0xff]
  %v529 = vld [vmem:[%s1 + $0xee8] sm:$0xff]
  %v530 = vld [vmem:[%s1 + $0xef0] sm:$0xff]
  %v531 = vld [vmem:[%s1 + $0xef8] sm:$0xff]
  %v532 = vld [vmem:[%s1 + $0xf00] sm:$0xff]
  %v533 = vld [vmem:[%s1 + $0xf08] sm:$0xff]
  %v534 = vld [vmem:[%s1 + $0xf10] sm:$0xff]
  %v535 = vld [vmem:[%s1 + $0xf18] sm:$0xff]
  %v536 = vld [vmem:[%s1 + $0xf20] sm:$0xff]
  %v537 = vld [vmem:[%s1 + $0xf28] sm:$0xff]
  %v538 = vld [vmem:[%s1 + $0xf30] sm:$0xff]
  %v539 = vld [vmem:[%s1 + $0xf38] sm:$0xff]
  %v540 = vld [vmem:[%s1 + $0xf40] sm:$0xff]
  %v541 = vld [vmem:[%s1 + $0xf48] sm:$0xff]
  %v542 = vld [vmem:[%s1 + $0xf50] sm:$0xff]
  %v543 = vld [vmem:[%s1 + $0xf58] sm:$0xff]
  %v544 = vld [vmem:[%s1 + $0xf60] sm:$0xff]
  %v545 = vld [vmem:[%s1 + $0xf68] sm:$0xff]
  %v546 = vld [vmem:[%s1 + $0xf70] sm:$0xff]
  %v547 = vld [vmem:[%s1 + $0xf78] sm:$0xff]
  %v548 = vld [vmem:[%s1 + $0xf80] sm:$0xff]
  %v549 = vld [vmem:[%s1 + $0xf88] sm:$0xff]
  %v550 = vld [vmem:[%s1 + $0xf90] sm:$0xff]
  %v551 = vld [vmem:[%s1 + $0xf98] sm:$0xff]
  %v552 = vld [vmem:[%s1 + $0xfa0] sm:$0xff]
  %v553 = vld [vmem:[%s1 + $0xfa8] sm:$0xff]
  %v554 = vld [vmem:[%s1 + $0xfb0] sm:$0xff]
  %v555 = vld [vmem:[%s1 + $0xfb8] sm:$0xff]
  %v556 = vld [vmem:[%s1 + $0xfc0] sm:$0xff]
  %v557 = vld [vmem:[%s1 + $0xfc8] sm:$0xff]
  %v558 = vld [vmem:[%s1 + $0xfd0] sm:$0xff]
  %v559 = vld [vmem:[%s1 + $0xfd8] sm:$0xff]
  %v560 = vld [vmem:[%s1 + $0xfe0] sm:$0xff]
  %v561 = vld [vmem:[%s1 + $0xfe8] sm:$0xff]
  %v562 = vld [vmem:[%s1 + $0xff0] sm:$0xff]
  %v563 = vld [vmem:[%s1 + $0xff8] sm:$0xff]
  %v564 = vld [vmem:[%s2] sm:$0x3]
  %v566 = vperm.slane %v564, 0
  %v567 = vperm.slane %v564, 1
  %v602 = vunpack.c.l.b16 %v20
  %v603 = vunpack.c.h.b16 %v20
  %v604 = vunpack.c.l.b16 %v21
  %v605 = vunpack.c.h.b16 %v21
  %v606 = vunpack.c.l.b16 %v22
  %v607 = vunpack.c.h.b16 %v22
  %v608 = vunpack.c.l.b16 %v23
  %v609 = vunpack.c.h.b16 %v23
  %v610 = vunpack.c.l.b16 %v24
  %v611 = vunpack.c.h.b16 %v24
  %v612 = vunpack.c.l.b16 %v25
  %v613 = vunpack.c.h.b16 %v25
  %v614 = vunpack.c.l.b16 %v26
  %v615 = vunpack.c.h.b16 %v26
  %v616 = vunpack.c.l.b16 %v27
  %v617 = vunpack.c.h.b16 %v27
  %v618 = vunpack.c.l.b16 %v28
  %v619 = vunpack.c.h.b16 %v28
  %v620 = vunpack.c.l.b16 %v29
  %v621 = vunpack.c.h.b16 %v29
  %v622 = vunpack.c.l.b16 %v30
  %v623 = vunpack.c.h.b16 %v30
  %v624 = vunpack.c.l.b16 %v31
  %v625 = vunpack.c.h.b16 %v31
  %v626 = vunpack.c.l.b16 %v32
  %v627 = vunpack.c.h.b16 %v32
  %v628 = vunpack.c.l.b16 %v33
  %v629 = vunpack.c.h.b16 %v33
  %v630 = vunpack.c.l.b16 %v34
  %v631 = vunpack.c.h.b16 %v34
  %v632 = vunpack.c.l.b16 %v35
  %v633 = vunpack.c.h.b16 %v35
  %v634 = vunpack.c.l.b16 %v36
  %v635 = vunpack.c.h.b16 %v36
  %v636 = vunpack.c.l.b16 %v37
  %v637 = vunpack.c.h.b16 %v37
  %v638 = vunpack.c.l.b16 %v38
  %v639 = vunpack.c.h.b16 %v38
  %v640 = vunpack.c.l.b16 %v39
  %v641 = vunpack.c.h.b16 %v39
  %v642 = vunpack.c.l.b16 %v40
  %v643 = vunpack.c.h.b16 %v40
  %v644 = vunpack.c.l.b16 %v41
  %v645 = vunpack.c.h.b16 %v41
  %v646 = vunpack.c.l.b16 %v42
  %v647 = vunpack.c.h.b16 %v42
  %v648 = vunpack.c.l.b16 %v43
  %v649 = vunpack.c.h.b16 %v43
  %v650 = vunpack.c.l.b16 %v44
  %v651 = vunpack.c.h.b16 %v44
  %v652 = vunpack.c.l.b16 %v45
  %v653 = vunpack.c.h.b16 %v45
  %v654 = vunpack.c.l.b16 %v46
  %v655 = vunpack.c.h.b16 %v46
  %v656 = vunpack.c.l.b16 %v47
  %v657 = vunpack.c.h.b16 %v47
  %v658 = vunpack.c.l.b16 %v48
  %v659 = vunpack.c.h.b16 %v48
  %v660 = vunpack.c.l.b16 %v49
  %v661 = vunpack.c.h.b16 %v49
  %v662 = vunpack.c.l.b16 %v50
  %v663 = vunpack.c.h.b16 %v50
  %v664 = vunpack.c.l.b16 %v51
  %v665 = vunpack.c.h.b16 %v51
  %v666 = vpack.c.b16 %v634, %v602
  %v667 = vpack.c.b16 %v635, %v603
  %v668 = vpack.c.b16 %v636, %v604
  %v669 = vpack.c.b16 %v637, %v605
  %v670 = vpack.c.b16 %v638, %v606
  %v671 = vpack.c.b16 %v639, %v607
  %v672 = vpack.c.b16 %v640, %v608
  %v673 = vpack.c.b16 %v641, %v609
  %v674 = vpack.c.b16 %v642, %v610
  %v675 = vpack.c.b16 %v643, %v611
  %v676 = vpack.c.b16 %v644, %v612
  %v677 = vpack.c.b16 %v645, %v613
  %v678 = vpack.c.b16 %v646, %v614
  %v679 = vpack.c.b16 %v647, %v615
  %v680 = vpack.c.b16 %v648, %v616
  %v681 = vpack.c.b16 %v649, %v617
  %v682 = vpack.c.b16 %v650, %v618
  %v683 = vpack.c.b16 %v651, %v619
  %v684 = vpack.c.b16 %v652, %v620
  %v685 = vpack.c.b16 %v653, %v621
  %v686 = vpack.c.b16 %v654, %v622
  %v687 = vpack.c.b16 %v655, %v623
  %v688 = vpack.c.b16 %v656, %v624
  %v689 = vpack.c.b16 %v657, %v625
  %v690 = vpack.c.b16 %v658, %v626
  %v691 = vpack.c.b16 %v659, %v627
  %v692 = vpack.c.b16 %v660, %v628
  %v693 = vpack.c.b16 %v661, %v629
  %v694 = vpack.c.b16 %v662, %v630
  %v695 = vpack.c.b16 %v663, %v631
  %v696 = vpack.c.b16 %v664, %v632
  %v697 = vpack.c.b16 %v665, %v633
  %v1242 = vunpack.c.l.b16 %v52
  %v1243 = vunpack.c.h.b16 %v52
  %v1244 = vunpack.c.l.b16 %v53
  %v1245 = vunpack.c.h.b16 %v53
  %v1246 = vunpack.c.l.b16 %v54
  %v1247 = vunpack.c.h.b16 %v54
  %v1248 = vunpack.c.l.b16 %v55
  %v1249 = vunpack.c.h.b16 %v55
  %v1250 = vunpack.c.l.b16 %v56
  %v1251 = vunpack.c.h.b16 %v56
  %v1252 = vunpack.c.l.b16 %v57
  %v1253 = vunpack.c.h.b16 %v57
  %v1254 = vunpack.c.l.b16 %v58
  %v1255 = vunpack.c.h.b16 %v58
  %v1256 = vunpack.c.l.b16 %v59
  %v1257 = vunpack.c.h.b16 %v59
  %v1258 = vunpack.c.l.b16 %v60
  %v1259 = vunpack.c.h.b16 %v60
  %v1260 = vunpack.c.l.b16 %v61
  %v1261 = vunpack.c.h.b16 %v61
  %v1262 = vunpack.c.l.b16 %v62
  %v1263 = vunpack.c.h.b16 %v62
  %v1264 = vunpack.c.l.b16 %v63
  %v1265 = vunpack.c.h.b16 %v63
  %v1266 = vunpack.c.l.b16 %v64
  %v1267 = vunpack.c.h.b16 %v64
  %v1268 = vunpack.c.l.b16 %v65
  %v1269 = vunpack.c.h.b16 %v65
  %v1270 = vunpack.c.l.b16 %v66
  %v1271 = vunpack.c.h.b16 %v66
  %v1272 = vunpack.c.l.b16 %v67
  %v1273 = vunpack.c.h.b16 %v67
  %v1274 = vunpack.c.l.b16 %v68
  %v1275 = vunpack.c.h.b16 %v68
  %v1276 = vunpack.c.l.b16 %v69
  %v1277 = vunpack.c.h.b16 %v69
  %v1278 = vunpack.c.l.b16 %v70
  %v1279 = vunpack.c.h.b16 %v70
  %v1280 = vunpack.c.l.b16 %v71
  %v1281 = vunpack.c.h.b16 %v71
  %v1282 = vunpack.c.l.b16 %v72
  %v1283 = vunpack.c.h.b16 %v72
  %v1284 = vunpack.c.l.b16 %v73
  %v1285 = vunpack.c.h.b16 %v73
  %v1286 = vunpack.c.l.b16 %v74
  %v1287 = vunpack.c.h.b16 %v74
  %v1288 = vunpack.c.l.b16 %v75
  %v1289 = vunpack.c.h.b16 %v75
  %v1290 = vunpack.c.l.b16 %v76
  %v1291 = vunpack.c.h.b16 %v76
  %v1292 = vunpack.c.l.b16 %v77
  %v1293 = vunpack.c.h.b16 %v77
  %v1294 = vunpack.c.l.b16 %v78
  %v1295 = vunpack.c.h.b16 %v78
  %v1296 = vunpack.c.l.b16 %v79
  %v1297 = vunpack.c.h.b16 %v79
  %v1298 = vunpack.c.l.b16 %v80
  %v1299 = vunpack.c.h.b16 %v80
  %v1300 = vunpack.c.l.b16 %v81
  %v1301 = vunpack.c.h.b16 %v81
  %v1302 = vunpack.c.l.b16 %v82
  %v1303 = vunpack.c.h.b16 %v82
  %v1304 = vunpack.c.l.b16 %v83
  %v1305 = vunpack.c.h.b16 %v83
  %v1306 = vunpack.c.l.b16 %v84
  %v1307 = vunpack.c.h.b16 %v84
  %v1308 = vunpack.c.l.b16 %v85
  %v1309 = vunpack.c.h.b16 %v85
  %v1310 = vunpack.c.l.b16 %v86
  %v1311 = vunpack.c.h.b16 %v86
  %v1312 = vunpack.c.l.b16 %v87
  %v1313 = vunpack.c.h.b16 %v87
  %v1314 = vunpack.c.l.b16 %v88
  %v1315 = vunpack.c.h.b16 %v88
  %v1316 = vunpack.c.l.b16 %v89
  %v1317 = vunpack.c.h.b16 %v89
  %v1318 = vunpack.c.l.b16 %v90
  %v1319 = vunpack.c.h.b16 %v90
  %v1320 = vunpack.c.l.b16 %v91
  %v1321 = vunpack.c.h.b16 %v91
  %v1322 = vunpack.c.l.b16 %v92
  %v1323 = vunpack.c.h.b16 %v92
  %v1324 = vunpack.c.l.b16 %v93
  %v1325 = vunpack.c.h.b16 %v93
  %v1326 = vunpack.c.l.b16 %v94
  %v1327 = vunpack.c.h.b16 %v94
  %v1328 = vunpack.c.l.b16 %v95
  %v1329 = vunpack.c.h.b16 %v95
  %v1330 = vunpack.c.l.b16 %v96
  %v1331 = vunpack.c.h.b16 %v96
  %v1332 = vunpack.c.l.b16 %v97
  %v1333 = vunpack.c.h.b16 %v97
  %v1334 = vunpack.c.l.b16 %v98
  %v1335 = vunpack.c.h.b16 %v98
  %v1336 = vunpack.c.l.b16 %v99
  %v1337 = vunpack.c.h.b16 %v99
  %v1338 = vunpack.c.l.b16 %v100
  %v1339 = vunpack.c.h.b16 %v100
  %v1340 = vunpack.c.l.b16 %v101
  %v1341 = vunpack.c.h.b16 %v101
  %v1342 = vunpack.c.l.b16 %v102
  %v1343 = vunpack.c.h.b16 %v102
  %v1344 = vunpack.c.l.b16 %v103
  %v1345 = vunpack.c.h.b16 %v103
  %v1346 = vunpack.c.l.b16 %v104
  %v1347 = vunpack.c.h.b16 %v104
  %v1348 = vunpack.c.l.b16 %v105
  %v1349 = vunpack.c.h.b16 %v105
  %v1350 = vunpack.c.l.b16 %v106
  %v1351 = vunpack.c.h.b16 %v106
  %v1352 = vunpack.c.l.b16 %v107
  %v1353 = vunpack.c.h.b16 %v107
  %v1354 = vunpack.c.l.b16 %v108
  %v1355 = vunpack.c.h.b16 %v108
  %v1356 = vunpack.c.l.b16 %v109
  %v1357 = vunpack.c.h.b16 %v109
  %v1358 = vunpack.c.l.b16 %v110
  %v1359 = vunpack.c.h.b16 %v110
  %v1360 = vunpack.c.l.b16 %v111
  %v1361 = vunpack.c.h.b16 %v111
  %v1362 = vunpack.c.l.b16 %v112
  %v1363 = vunpack.c.h.b16 %v112
  %v1364 = vunpack.c.l.b16 %v113
  %v1365 = vunpack.c.h.b16 %v113
  %v1366 = vunpack.c.l.b16 %v114
  %v1367 = vunpack.c.h.b16 %v114
  %v1368 = vunpack.c.l.b16 %v115
  %v1369 = vunpack.c.h.b16 %v115
  %v1370 = vunpack.c.l.b16 %v116
  %v1371 = vunpack.c.h.b16 %v116
  %v1372 = vunpack.c.l.b16 %v117
  %v1373 = vunpack.c.h.b16 %v117
  %v1374 = vunpack.c.l.b16 %v118
  %v1375 = vunpack.c.h.b16 %v118
  %v1376 = vunpack.c.l.b16 %v119
  %v1377 = vunpack.c.h.b16 %v119
  %v1378 = vunpack.c.l.b16 %v120
  %v1379 = vunpack.c.h.b16 %v120
  %v1380 = vunpack.c.l.b16 %v121
  %v1381 = vunpack.c.h.b16 %v121
  %v1382 = vunpack.c.l.b16 %v122
  %v1383 = vunpack.c.h.b16 %v122
  %v1384 = vunpack.c.l.b16 %v123
  %v1385 = vunpack.c.h.b16 %v123
  %v1386 = vunpack.c.l.b16 %v124
  %v1387 = vunpack.c.h.b16 %v124
  %v1388 = vunpack.c.l.b16 %v125
  %v1389 = vunpack.c.h.b16 %v125
  %v1390 = vunpack.c.l.b16 %v126
  %v1391 = vunpack.c.h.b16 %v126
  %v1392 = vunpack.c.l.b16 %v127
  %v1393 = vunpack.c.h.b16 %v127
  %v1394 = vunpack.c.l.b16 %v128
  %v1395 = vunpack.c.h.b16 %v128
  %v1396 = vunpack.c.l.b16 %v129
  %v1397 = vunpack.c.h.b16 %v129
  %v1398 = vunpack.c.l.b16 %v130
  %v1399 = vunpack.c.h.b16 %v130
  %v1400 = vunpack.c.l.b16 %v131
  %v1401 = vunpack.c.h.b16 %v131
  %v1402 = vunpack.c.l.b16 %v132
  %v1403 = vunpack.c.h.b16 %v132
  %v1404 = vunpack.c.l.b16 %v133
  %v1405 = vunpack.c.h.b16 %v133
  %v1406 = vunpack.c.l.b16 %v134
  %v1407 = vunpack.c.h.b16 %v134
  %v1408 = vunpack.c.l.b16 %v135
  %v1409 = vunpack.c.h.b16 %v135
  %v1410 = vunpack.c.l.b16 %v136
  %v1411 = vunpack.c.h.b16 %v136
  %v1412 = vunpack.c.l.b16 %v137
  %v1413 = vunpack.c.h.b16 %v137
  %v1414 = vunpack.c.l.b16 %v138
  %v1415 = vunpack.c.h.b16 %v138
  %v1416 = vunpack.c.l.b16 %v139
  %v1417 = vunpack.c.h.b16 %v139
  %v1418 = vunpack.c.l.b16 %v140
  %v1419 = vunpack.c.h.b16 %v140
  %v1420 = vunpack.c.l.b16 %v141
  %v1421 = vunpack.c.h.b16 %v141
  %v1422 = vunpack.c.l.b16 %v142
  %v1423 = vunpack.c.h.b16 %v142
  %v1424 = vunpack.c.l.b16 %v143
  %v1425 = vunpack.c.h.b16 %v143
  %v1426 = vunpack.c.l.b16 %v144
  %v1427 = vunpack.c.h.b16 %v144
  %v1428 = vunpack.c.l.b16 %v145
  %v1429 = vunpack.c.h.b16 %v145
  %v1430 = vunpack.c.l.b16 %v146
  %v1431 = vunpack.c.h.b16 %v146
  %v1432 = vunpack.c.l.b16 %v147
  %v1433 = vunpack.c.h.b16 %v147
  %v1434 = vunpack.c.l.b16 %v148
  %v1435 = vunpack.c.h.b16 %v148
  %v1436 = vunpack.c.l.b16 %v149
  %v1437 = vunpack.c.h.b16 %v149
  %v1438 = vunpack.c.l.b16 %v150
  %v1439 = vunpack.c.h.b16 %v150
  %v1440 = vunpack.c.l.b16 %v151
  %v1441 = vunpack.c.h.b16 %v151
  %v1442 = vunpack.c.l.b16 %v152
  %v1443 = vunpack.c.h.b16 %v152
  %v1444 = vunpack.c.l.b16 %v153
  %v1445 = vunpack.c.h.b16 %v153
  %v1446 = vunpack.c.l.b16 %v154
  %v1447 = vunpack.c.h.b16 %v154
  %v1448 = vunpack.c.l.b16 %v155
  %v1449 = vunpack.c.h.b16 %v155
  %v1450 = vunpack.c.l.b16 %v156
  %v1451 = vunpack.c.h.b16 %v156
  %v1452 = vunpack.c.l.b16 %v157
  %v1453 = vunpack.c.h.b16 %v157
  %v1454 = vunpack.c.l.b16 %v158
  %v1455 = vunpack.c.h.b16 %v158
  %v1456 = vunpack.c.l.b16 %v159
  %v1457 = vunpack.c.h.b16 %v159
  %v1458 = vunpack.c.l.b16 %v160
  %v1459 = vunpack.c.h.b16 %v160
  %v1460 = vunpack.c.l.b16 %v161
  %v1461 = vunpack.c.h.b16 %v161
  %v1462 = vunpack.c.l.b16 %v162
  %v1463 = vunpack.c.h.b16 %v162
  %v1464 = vunpack.c.l.b16 %v163
  %v1465 = vunpack.c.h.b16 %v163
  %v1466 = vunpack.c.l.b16 %v164
  %v1467 = vunpack.c.h.b16 %v164
  %v1468 = vunpack.c.l.b16 %v165
  %v1469 = vunpack.c.h.b16 %v165
  %v1470 = vunpack.c.l.b16 %v166
  %v1471 = vunpack.c.h.b16 %v166
  %v1472 = vunpack.c.l.b16 %v167
  %v1473 = vunpack.c.h.b16 %v167
  %v1474 = vunpack.c.l.b16 %v168
  %v1475 = vunpack.c.h.b16 %v168
  %v1476 = vunpack.c.l.b16 %v169
  %v1477 = vunpack.c.h.b16 %v169
  %v1478 = vunpack.c.l.b16 %v170
  %v1479 = vunpack.c.h.b16 %v170
  %v1480 = vunpack.c.l.b16 %v171
  %v1481 = vunpack.c.h.b16 %v171
  %v1482 = vunpack.c.l.b16 %v172
  %v1483 = vunpack.c.h.b16 %v172
  %v1484 = vunpack.c.l.b16 %v173
  %v1485 = vunpack.c.h.b16 %v173
  %v1486 = vunpack.c.l.b16 %v174
  %v1487 = vunpack.c.h.b16 %v174
  %v1488 = vunpack.c.l.b16 %v175
  %v1489 = vunpack.c.h.b16 %v175
  %v1490 = vunpack.c.l.b16 %v176
  %v1491 = vunpack.c.h.b16 %v176
  %v1492 = vunpack.c.l.b16 %v177
  %v1493 = vunpack.c.h.b16 %v177
  %v1494 = vunpack.c.l.b16 %v178
  %v1495 = vunpack.c.h.b16 %v178
  %v1496 = vunpack.c.l.b16 %v179
  %v1497 = vunpack.c.h.b16 %v179
  %v1498 = vunpack.c.l.b16 %v180
  %v1499 = vunpack.c.h.b16 %v180
  %v1500 = vunpack.c.l.b16 %v181
  %v1501 = vunpack.c.h.b16 %v181
  %v1502 = vunpack.c.l.b16 %v182
  %v1503 = vunpack.c.h.b16 %v182
  %v1504 = vunpack.c.l.b16 %v183
  %v1505 = vunpack.c.h.b16 %v183
  %v1506 = vunpack.c.l.b16 %v184
  %v1507 = vunpack.c.h.b16 %v184
  %v1508 = vunpack.c.l.b16 %v185
  %v1509 = vunpack.c.h.b16 %v185
  %v1510 = vunpack.c.l.b16 %v186
  %v1511 = vunpack.c.h.b16 %v186
  %v1512 = vunpack.c.l.b16 %v187
  %v1513 = vunpack.c.h.b16 %v187
  %v1514 = vunpack.c.l.b16 %v188
  %v1515 = vunpack.c.h.b16 %v188
  %v1516 = vunpack.c.l.b16 %v189
  %v1517 = vunpack.c.h.b16 %v189
  %v1518 = vunpack.c.l.b16 %v190
  %v1519 = vunpack.c.h.b16 %v190
  %v1520 = vunpack.c.l.b16 %v191
  %v1521 = vunpack.c.h.b16 %v191
  %v1522 = vunpack.c.l.b16 %v192
  %v1523 = vunpack.c.h.b16 %v192
  %v1524 = vunpack.c.l.b16 %v193
  %v1525 = vunpack.c.h.b16 %v193
  %v1526 = vunpack.c.l.b16 %v194
  %v1527 = vunpack.c.h.b16 %v194
  %v1528 = vunpack.c.l.b16 %v195
  %v1529 = vunpack.c.h.b16 %v195
  %v1530 = vunpack.c.l.b16 %v196
  %v1531 = vunpack.c.h.b16 %v196
  %v1532 = vunpack.c.l.b16 %v197
  %v1533 = vunpack.c.h.b16 %v197
  %v1534 = vunpack.c.l.b16 %v198
  %v1535 = vunpack.c.h.b16 %v198
  %v1536 = vunpack.c.l.b16 %v199
  %v1537 = vunpack.c.h.b16 %v199
  %v1538 = vunpack.c.l.b16 %v200
  %v1539 = vunpack.c.h.b16 %v200
  %v1540 = vunpack.c.l.b16 %v201
  %v1541 = vunpack.c.h.b16 %v201
  %v1542 = vunpack.c.l.b16 %v202
  %v1543 = vunpack.c.h.b16 %v202
  %v1544 = vunpack.c.l.b16 %v203
  %v1545 = vunpack.c.h.b16 %v203
  %v1546 = vunpack.c.l.b16 %v204
  %v1547 = vunpack.c.h.b16 %v204
  %v1548 = vunpack.c.l.b16 %v205
  %v1549 = vunpack.c.h.b16 %v205
  %v1550 = vunpack.c.l.b16 %v206
  %v1551 = vunpack.c.h.b16 %v206
  %v1552 = vunpack.c.l.b16 %v207
  %v1553 = vunpack.c.h.b16 %v207
  %v1554 = vunpack.c.l.b16 %v208
  %v1555 = vunpack.c.h.b16 %v208
  %v1556 = vunpack.c.l.b16 %v209
  %v1557 = vunpack.c.h.b16 %v209
  %v1558 = vunpack.c.l.b16 %v210
  %v1559 = vunpack.c.h.b16 %v210
  %v1560 = vunpack.c.l.b16 %v211
  %v1561 = vunpack.c.h.b16 %v211
  %v1562 = vunpack.c.l.b16 %v212
  %v1563 = vunpack.c.h.b16 %v212
  %v1564 = vunpack.c.l.b16 %v213
  %v1565 = vunpack.c.h.b16 %v213
  %v1566 = vunpack.c.l.b16 %v214
  %v1567 = vunpack.c.h.b16 %v214
  %v1568 = vunpack.c.l.b16 %v215
  %v1569 = vunpack.c.h.b16 %v215
  %v1570 = vunpack.c.l.b16 %v216
  %v1571 = vunpack.c.h.b16 %v216
  %v1572 = vunpack.c.l.b16 %v217
  %v1573 = vunpack.c.h.b16 %v217
  %v1574 = vunpack.c.l.b16 %v218
  %v1575 = vunpack.c.h.b16 %v218
  %v1576 = vunpack.c.l.b16 %v219
  %v1577 = vunpack.c.h.b16 %v219
  %v1578 = vunpack.c.l.b16 %v220
  %v1579 = vunpack.c.h.b16 %v220
  %v1580 = vunpack.c.l.b16 %v221
  %v1581 = vunpack.c.h.b16 %v221
  %v1582 = vunpack.c.l.b16 %v222
  %v1583 = vunpack.c.h.b16 %v222
  %v1584 = vunpack.c.l.b16 %v223
  %v1585 = vunpack.c.h.b16 %v223
  %v1586 = vunpack.c.l.b16 %v224
  %v1587 = vunpack.c.h.b16 %v224
  %v1588 = vunpack.c.l.b16 %v225
  %v1589 = vunpack.c.h.b16 %v225
  %v1590 = vunpack.c.l.b16 %v226
  %v1591 = vunpack.c.h.b16 %v226
  %v1592 = vunpack.c.l.b16 %v227
  %v1593 = vunpack.c.h.b16 %v227
  %v1594 = vunpack.c.l.b16 %v228
  %v1595 = vunpack.c.h.b16 %v228
  %v1596 = vunpack.c.l.b16 %v229
  %v1597 = vunpack.c.h.b16 %v229
  %v1598 = vunpack.c.l.b16 %v230
  %v1599 = vunpack.c.h.b16 %v230
  %v1600 = vunpack.c.l.b16 %v231
  %v1601 = vunpack.c.h.b16 %v231
  %v1602 = vunpack.c.l.b16 %v232
  %v1603 = vunpack.c.h.b16 %v232
  %v1604 = vunpack.c.l.b16 %v233
  %v1605 = vunpack.c.h.b16 %v233
  %v1606 = vunpack.c.l.b16 %v234
  %v1607 = vunpack.c.h.b16 %v234
  %v1608 = vunpack.c.l.b16 %v235
  %v1609 = vunpack.c.h.b16 %v235
  %v1610 = vunpack.c.l.b16 %v236
  %v1611 = vunpack.c.h.b16 %v236
  %v1612 = vunpack.c.l.b16 %v237
  %v1613 = vunpack.c.h.b16 %v237
  %v1614 = vunpack.c.l.b16 %v238
  %v1615 = vunpack.c.h.b16 %v238
  %v1616 = vunpack.c.l.b16 %v239
  %v1617 = vunpack.c.h.b16 %v239
  %v1618 = vunpack.c.l.b16 %v240
  %v1619 = vunpack.c.h.b16 %v240
  %v1620 = vunpack.c.l.b16 %v241
  %v1621 = vunpack.c.h.b16 %v241
  %v1622 = vunpack.c.l.b16 %v242
  %v1623 = vunpack.c.h.b16 %v242
  %v1624 = vunpack.c.l.b16 %v243
  %v1625 = vunpack.c.h.b16 %v243
  %v1626 = vunpack.c.l.b16 %v244
  %v1627 = vunpack.c.h.b16 %v244
  %v1628 = vunpack.c.l.b16 %v245
  %v1629 = vunpack.c.h.b16 %v245
  %v1630 = vunpack.c.l.b16 %v246
  %v1631 = vunpack.c.h.b16 %v246
  %v1632 = vunpack.c.l.b16 %v247
  %v1633 = vunpack.c.h.b16 %v247
  %v1634 = vunpack.c.l.b16 %v248
  %v1635 = vunpack.c.h.b16 %v248
  %v1636 = vunpack.c.l.b16 %v249
  %v1637 = vunpack.c.h.b16 %v249
  %v1638 = vunpack.c.l.b16 %v250
  %v1639 = vunpack.c.h.b16 %v250
  %v1640 = vunpack.c.l.b16 %v251
  %v1641 = vunpack.c.h.b16 %v251
  %v1642 = vunpack.c.l.b16 %v252
  %v1643 = vunpack.c.h.b16 %v252
  %v1644 = vunpack.c.l.b16 %v253
  %v1645 = vunpack.c.h.b16 %v253
  %v1646 = vunpack.c.l.b16 %v254
  %v1647 = vunpack.c.h.b16 %v254
  %v1648 = vunpack.c.l.b16 %v255
  %v1649 = vunpack.c.h.b16 %v255
  %v1650 = vunpack.c.l.b16 %v256
  %v1651 = vunpack.c.h.b16 %v256
  %v1652 = vunpack.c.l.b16 %v257
  %v1653 = vunpack.c.h.b16 %v257
  %v1654 = vunpack.c.l.b16 %v258
  %v1655 = vunpack.c.h.b16 %v258
  %v1656 = vunpack.c.l.b16 %v259
  %v1657 = vunpack.c.h.b16 %v259
  %v1658 = vunpack.c.l.b16 %v260
  %v1659 = vunpack.c.h.b16 %v260
  %v1660 = vunpack.c.l.b16 %v261
  %v1661 = vunpack.c.h.b16 %v261
  %v1662 = vunpack.c.l.b16 %v262
  %v1663 = vunpack.c.h.b16 %v262
  %v1664 = vunpack.c.l.b16 %v263
  %v1665 = vunpack.c.h.b16 %v263
  %v1666 = vunpack.c.l.b16 %v264
  %v1667 = vunpack.c.h.b16 %v264
  %v1668 = vunpack.c.l.b16 %v265
  %v1669 = vunpack.c.h.b16 %v265
  %v1670 = vunpack.c.l.b16 %v266
  %v1671 = vunpack.c.h.b16 %v266
  %v1672 = vunpack.c.l.b16 %v267
  %v1673 = vunpack.c.h.b16 %v267
  %v1674 = vunpack.c.l.b16 %v268
  %v1675 = vunpack.c.h.b16 %v268
  %v1676 = vunpack.c.l.b16 %v269
  %v1677 = vunpack.c.h.b16 %v269
  %v1678 = vunpack.c.l.b16 %v270
  %v1679 = vunpack.c.h.b16 %v270
  %v1680 = vunpack.c.l.b16 %v271
  %v1681 = vunpack.c.h.b16 %v271
  %v1682 = vunpack.c.l.b16 %v272
  %v1683 = vunpack.c.h.b16 %v272
  %v1684 = vunpack.c.l.b16 %v273
  %v1685 = vunpack.c.h.b16 %v273
  %v1686 = vunpack.c.l.b16 %v274
  %v1687 = vunpack.c.h.b16 %v274
  %v1688 = vunpack.c.l.b16 %v275
  %v1689 = vunpack.c.h.b16 %v275
  %v1690 = vunpack.c.l.b16 %v276
  %v1691 = vunpack.c.h.b16 %v276
  %v1692 = vunpack.c.l.b16 %v277
  %v1693 = vunpack.c.h.b16 %v277
  %v1694 = vunpack.c.l.b16 %v278
  %v1695 = vunpack.c.h.b16 %v278
  %v1696 = vunpack.c.l.b16 %v279
  %v1697 = vunpack.c.h.b16 %v279
  %v1698 = vunpack.c.l.b16 %v280
  %v1699 = vunpack.c.h.b16 %v280
  %v1700 = vunpack.c.l.b16 %v281
  %v1701 = vunpack.c.h.b16 %v281
  %v1702 = vunpack.c.l.b16 %v282
  %v1703 = vunpack.c.h.b16 %v282
  %v1704 = vunpack.c.l.b16 %v283
  %v1705 = vunpack.c.h.b16 %v283
  %v1706 = vunpack.c.l.b16 %v284
  %v1707 = vunpack.c.h.b16 %v284
  %v1708 = vunpack.c.l.b16 %v285
  %v1709 = vunpack.c.h.b16 %v285
  %v1710 = vunpack.c.l.b16 %v286
  %v1711 = vunpack.c.h.b16 %v286
  %v1712 = vunpack.c.l.b16 %v287
  %v1713 = vunpack.c.h.b16 %v287
  %v1714 = vunpack.c.l.b16 %v288
  %v1715 = vunpack.c.h.b16 %v288
  %v1716 = vunpack.c.l.b16 %v289
  %v1717 = vunpack.c.h.b16 %v289
  %v1718 = vunpack.c.l.b16 %v290
  %v1719 = vunpack.c.h.b16 %v290
  %v1720 = vunpack.c.l.b16 %v291
  %v1721 = vunpack.c.h.b16 %v291
  %v1722 = vunpack.c.l.b16 %v292
  %v1723 = vunpack.c.h.b16 %v292
  %v1724 = vunpack.c.l.b16 %v293
  %v1725 = vunpack.c.h.b16 %v293
  %v1726 = vunpack.c.l.b16 %v294
  %v1727 = vunpack.c.h.b16 %v294
  %v1728 = vunpack.c.l.b16 %v295
  %v1729 = vunpack.c.h.b16 %v295
  %v1730 = vunpack.c.l.b16 %v296
  %v1731 = vunpack.c.h.b16 %v296
  %v1732 = vunpack.c.l.b16 %v297
  %v1733 = vunpack.c.h.b16 %v297
  %v1734 = vunpack.c.l.b16 %v298
  %v1735 = vunpack.c.h.b16 %v298
  %v1736 = vunpack.c.l.b16 %v299
  %v1737 = vunpack.c.h.b16 %v299
  %v1738 = vunpack.c.l.b16 %v300
  %v1739 = vunpack.c.h.b16 %v300
  %v1740 = vunpack.c.l.b16 %v301
  %v1741 = vunpack.c.h.b16 %v301
  %v1742 = vunpack.c.l.b16 %v302
  %v1743 = vunpack.c.h.b16 %v302
  %v1744 = vunpack.c.l.b16 %v303
  %v1745 = vunpack.c.h.b16 %v303
  %v1746 = vunpack.c.l.b16 %v304
  %v1747 = vunpack.c.h.b16 %v304
  %v1748 = vunpack.c.l.b16 %v305
  %v1749 = vunpack.c.h.b16 %v305
  %v1750 = vunpack.c.l.b16 %v306
  %v1751 = vunpack.c.h.b16 %v306
  %v1752 = vunpack.c.l.b16 %v307
  %v1753 = vunpack.c.h.b16 %v307
  %v1754 = vunpack.c.l.b16 %v308
  %v1755 = vunpack.c.h.b16 %v308
  %v1756 = vunpack.c.l.b16 %v309
  %v1757 = vunpack.c.h.b16 %v309
  %v1758 = vunpack.c.l.b16 %v310
  %v1759 = vunpack.c.h.b16 %v310
  %v1760 = vunpack.c.l.b16 %v311
  %v1761 = vunpack.c.h.b16 %v311
  %v1762 = vunpack.c.l.b16 %v312
  %v1763 = vunpack.c.h.b16 %v312
  %v1764 = vunpack.c.l.b16 %v313
  %v1765 = vunpack.c.h.b16 %v313
  %v1766 = vunpack.c.l.b16 %v314
  %v1767 = vunpack.c.h.b16 %v314
  %v1768 = vunpack.c.l.b16 %v315
  %v1769 = vunpack.c.h.b16 %v315
  %v1770 = vunpack.c.l.b16 %v316
  %v1771 = vunpack.c.h.b16 %v316
  %v1772 = vunpack.c.l.b16 %v317
  %v1773 = vunpack.c.h.b16 %v317
  %v1774 = vunpack.c.l.b16 %v318
  %v1775 = vunpack.c.h.b16 %v318
  %v1776 = vunpack.c.l.b16 %v319
  %v1777 = vunpack.c.h.b16 %v319
  %v1778 = vunpack.c.l.b16 %v320
  %v1779 = vunpack.c.h.b16 %v320
  %v1780 = vunpack.c.l.b16 %v321
  %v1781 = vunpack.c.h.b16 %v321
  %v1782 = vunpack.c.l.b16 %v322
  %v1783 = vunpack.c.h.b16 %v322
  %v1784 = vunpack.c.l.b16 %v323
  %v1785 = vunpack.c.h.b16 %v323
  %v1786 = vunpack.c.l.b16 %v324
  %v1787 = vunpack.c.h.b16 %v324
  %v1788 = vunpack.c.l.b16 %v325
  %v1789 = vunpack.c.h.b16 %v325
  %v1790 = vunpack.c.l.b16 %v326
  %v1791 = vunpack.c.h.b16 %v326
  %v1792 = vunpack.c.l.b16 %v327
  %v1793 = vunpack.c.h.b16 %v327
  %v1794 = vunpack.c.l.b16 %v328
  %v1795 = vunpack.c.h.b16 %v328
  %v1796 = vunpack.c.l.b16 %v329
  %v1797 = vunpack.c.h.b16 %v329
  %v1798 = vunpack.c.l.b16 %v330
  %v1799 = vunpack.c.h.b16 %v330
  %v1800 = vunpack.c.l.b16 %v331
  %v1801 = vunpack.c.h.b16 %v331
  %v1802 = vunpack.c.l.b16 %v332
  %v1803 = vunpack.c.h.b16 %v332
  %v1804 = vunpack.c.l.b16 %v333
  %v1805 = vunpack.c.h.b16 %v333
  %v1806 = vunpack.c.l.b16 %v334
  %v1807 = vunpack.c.h.b16 %v334
  %v1808 = vunpack.c.l.b16 %v335
  %v1809 = vunpack.c.h.b16 %v335
  %v1810 = vunpack.c.l.b16 %v336
  %v1811 = vunpack.c.h.b16 %v336
  %v1812 = vunpack.c.l.b16 %v337
  %v1813 = vunpack.c.h.b16 %v337
  %v1814 = vunpack.c.l.b16 %v338
  %v1815 = vunpack.c.h.b16 %v338
  %v1816 = vunpack.c.l.b16 %v339
  %v1817 = vunpack.c.h.b16 %v339
  %v1818 = vunpack.c.l.b16 %v340
  %v1819 = vunpack.c.h.b16 %v340
  %v1820 = vunpack.c.l.b16 %v341
  %v1821 = vunpack.c.h.b16 %v341
  %v1822 = vunpack.c.l.b16 %v342
  %v1823 = vunpack.c.h.b16 %v342
  %v1824 = vunpack.c.l.b16 %v343
  %v1825 = vunpack.c.h.b16 %v343
  %v1826 = vunpack.c.l.b16 %v344
  %v1827 = vunpack.c.h.b16 %v344
  %v1828 = vunpack.c.l.b16 %v345
  %v1829 = vunpack.c.h.b16 %v345
  %v1830 = vunpack.c.l.b16 %v346
  %v1831 = vunpack.c.h.b16 %v346
  %v1832 = vunpack.c.l.b16 %v347
  %v1833 = vunpack.c.h.b16 %v347
  %v1834 = vunpack.c.l.b16 %v348
  %v1835 = vunpack.c.h.b16 %v348
  %v1836 = vunpack.c.l.b16 %v349
  %v1837 = vunpack.c.h.b16 %v349
  %v1838 = vunpack.c.l.b16 %v350
  %v1839 = vunpack.c.h.b16 %v350
  %v1840 = vunpack.c.l.b16 %v351
  %v1841 = vunpack.c.h.b16 %v351
  %v1842 = vunpack.c.l.b16 %v352
  %v1843 = vunpack.c.h.b16 %v352
  %v1844 = vunpack.c.l.b16 %v353
  %v1845 = vunpack.c.h.b16 %v353
  %v1846 = vunpack.c.l.b16 %v354
  %v1847 = vunpack.c.h.b16 %v354
  %v1848 = vunpack.c.l.b16 %v355
  %v1849 = vunpack.c.h.b16 %v355
  %v1850 = vunpack.c.l.b16 %v356
  %v1851 = vunpack.c.h.b16 %v356
  %v1852 = vunpack.c.l.b16 %v357
  %v1853 = vunpack.c.h.b16 %v357
  %v1854 = vunpack.c.l.b16 %v358
  %v1855 = vunpack.c.h.b16 %v358
  %v1856 = vunpack.c.l.b16 %v359
  %v1857 = vunpack.c.h.b16 %v359
  %v1858 = vunpack.c.l.b16 %v360
  %v1859 = vunpack.c.h.b16 %v360
  %v1860 = vunpack.c.l.b16 %v361
  %v1861 = vunpack.c.h.b16 %v361
  %v1862 = vunpack.c.l.b16 %v362
  %v1863 = vunpack.c.h.b16 %v362
  %v1864 = vunpack.c.l.b16 %v363
  %v1865 = vunpack.c.h.b16 %v363
  %v1866 = vunpack.c.l.b16 %v364
  %v1867 = vunpack.c.h.b16 %v364
  %v1868 = vunpack.c.l.b16 %v365
  %v1869 = vunpack.c.h.b16 %v365
  %v1870 = vunpack.c.l.b16 %v366
  %v1871 = vunpack.c.h.b16 %v366
  %v1872 = vunpack.c.l.b16 %v367
  %v1873 = vunpack.c.h.b16 %v367
  %v1874 = vunpack.c.l.b16 %v368
  %v1875 = vunpack.c.h.b16 %v368
  %v1876 = vunpack.c.l.b16 %v369
  %v1877 = vunpack.c.h.b16 %v369
  %v1878 = vunpack.c.l.b16 %v370
  %v1879 = vunpack.c.h.b16 %v370
  %v1880 = vunpack.c.l.b16 %v371
  %v1881 = vunpack.c.h.b16 %v371
  %v1882 = vunpack.c.l.b16 %v372
  %v1883 = vunpack.c.h.b16 %v372
  %v1884 = vunpack.c.l.b16 %v373
  %v1885 = vunpack.c.h.b16 %v373
  %v1886 = vunpack.c.l.b16 %v374
  %v1887 = vunpack.c.h.b16 %v374
  %v1888 = vunpack.c.l.b16 %v375
  %v1889 = vunpack.c.h.b16 %v375
  %v1890 = vunpack.c.l.b16 %v376
  %v1891 = vunpack.c.h.b16 %v376
  %v1892 = vunpack.c.l.b16 %v377
  %v1893 = vunpack.c.h.b16 %v377
  %v1894 = vunpack.c.l.b16 %v378
  %v1895 = vunpack.c.h.b16 %v378
  %v1896 = vunpack.c.l.b16 %v379
  %v1897 = vunpack.c.h.b16 %v379
  %v1898 = vunpack.c.l.b16 %v380
  %v1899 = vunpack.c.h.b16 %v380
  %v1900 = vunpack.c.l.b16 %v381
  %v1901 = vunpack.c.h.b16 %v381
  %v1902 = vunpack.c.l.b16 %v382
  %v1903 = vunpack.c.h.b16 %v382
  %v1904 = vunpack.c.l.b16 %v383
  %v1905 = vunpack.c.h.b16 %v383
  %v1906 = vunpack.c.l.b16 %v384
  %v1907 = vunpack.c.h.b16 %v384
  %v1908 = vunpack.c.l.b16 %v385
  %v1909 = vunpack.c.h.b16 %v385
  %v1910 = vunpack.c.l.b16 %v386
  %v1911 = vunpack.c.h.b16 %v386
  %v1912 = vunpack.c.l.b16 %v387
  %v1913 = vunpack.c.h.b16 %v387
  %v1914 = vunpack.c.l.b16 %v388
  %v1915 = vunpack.c.h.b16 %v388
  %v1916 = vunpack.c.l.b16 %v389
  %v1917 = vunpack.c.h.b16 %v389
  %v1918 = vunpack.c.l.b16 %v390
  %v1919 = vunpack.c.h.b16 %v390
  %v1920 = vunpack.c.l.b16 %v391
  %v1921 = vunpack.c.h.b16 %v391
  %v1922 = vunpack.c.l.b16 %v392
  %v1923 = vunpack.c.h.b16 %v392
  %v1924 = vunpack.c.l.b16 %v393
  %v1925 = vunpack.c.h.b16 %v393
  %v1926 = vunpack.c.l.b16 %v394
  %v1927 = vunpack.c.h.b16 %v394
  %v1928 = vunpack.c.l.b16 %v395
  %v1929 = vunpack.c.h.b16 %v395
  %v1930 = vunpack.c.l.b16 %v396
  %v1931 = vunpack.c.h.b16 %v396
  %v1932 = vunpack.c.l.b16 %v397
  %v1933 = vunpack.c.h.b16 %v397
  %v1934 = vunpack.c.l.b16 %v398
  %v1935 = vunpack.c.h.b16 %v398
  %v1936 = vunpack.c.l.b16 %v399
  %v1937 = vunpack.c.h.b16 %v399
  %v1938 = vunpack.c.l.b16 %v400
  %v1939 = vunpack.c.h.b16 %v400
  %v1940 = vunpack.c.l.b16 %v401
  %v1941 = vunpack.c.h.b16 %v401
  %v1942 = vunpack.c.l.b16 %v402
  %v1943 = vunpack.c.h.b16 %v402
  %v1944 = vunpack.c.l.b16 %v403
  %v1945 = vunpack.c.h.b16 %v403
  %v1946 = vunpack.c.l.b16 %v404
  %v1947 = vunpack.c.h.b16 %v404
  %v1948 = vunpack.c.l.b16 %v405
  %v1949 = vunpack.c.h.b16 %v405
  %v1950 = vunpack.c.l.b16 %v406
  %v1951 = vunpack.c.h.b16 %v406
  %v1952 = vunpack.c.l.b16 %v407
  %v1953 = vunpack.c.h.b16 %v407
  %v1954 = vunpack.c.l.b16 %v408
  %v1955 = vunpack.c.h.b16 %v408
  %v1956 = vunpack.c.l.b16 %v409
  %v1957 = vunpack.c.h.b16 %v409
  %v1958 = vunpack.c.l.b16 %v410
  %v1959 = vunpack.c.h.b16 %v410
  %v1960 = vunpack.c.l.b16 %v411
  %v1961 = vunpack.c.h.b16 %v411
  %v1962 = vunpack.c.l.b16 %v412
  %v1963 = vunpack.c.h.b16 %v412
  %v1964 = vunpack.c.l.b16 %v413
  %v1965 = vunpack.c.h.b16 %v413
  %v1966 = vunpack.c.l.b16 %v414
  %v1967 = vunpack.c.h.b16 %v414
  %v1968 = vunpack.c.l.b16 %v415
  %v1969 = vunpack.c.h.b16 %v415
  %v1970 = vunpack.c.l.b16 %v416
  %v1971 = vunpack.c.h.b16 %v416
  %v1972 = vunpack.c.l.b16 %v417
  %v1973 = vunpack.c.h.b16 %v417
  %v1974 = vunpack.c.l.b16 %v418
  %v1975 = vunpack.c.h.b16 %v418
  %v1976 = vunpack.c.l.b16 %v419
  %v1977 = vunpack.c.h.b16 %v419
  %v1978 = vunpack.c.l.b16 %v420
  %v1979 = vunpack.c.h.b16 %v420
  %v1980 = vunpack.c.l.b16 %v421
  %v1981 = vunpack.c.h.b16 %v421
  %v1982 = vunpack.c.l.b16 %v422
  %v1983 = vunpack.c.h.b16 %v422
  %v1984 = vunpack.c.l.b16 %v423
  %v1985 = vunpack.c.h.b16 %v423
  %v1986 = vunpack.c.l.b16 %v424
  %v1987 = vunpack.c.h.b16 %v424
  %v1988 = vunpack.c.l.b16 %v425
  %v1989 = vunpack.c.h.b16 %v425
  %v1990 = vunpack.c.l.b16 %v426
  %v1991 = vunpack.c.h.b16 %v426
  %v1992 = vunpack.c.l.b16 %v427
  %v1993 = vunpack.c.h.b16 %v427
  %v1994 = vunpack.c.l.b16 %v428
  %v1995 = vunpack.c.h.b16 %v428
  %v1996 = vunpack.c.l.b16 %v429
  %v1997 = vunpack.c.h.b16 %v429
  %v1998 = vunpack.c.l.b16 %v430
  %v1999 = vunpack.c.h.b16 %v430
  %v2000 = vunpack.c.l.b16 %v431
  %v2001 = vunpack.c.h.b16 %v431
  %v2002 = vunpack.c.l.b16 %v432
  %v2003 = vunpack.c.h.b16 %v432
  %v2004 = vunpack.c.l.b16 %v433
  %v2005 = vunpack.c.h.b16 %v433
  %v2006 = vunpack.c.l.b16 %v434
  %v2007 = vunpack.c.h.b16 %v434
  %v2008 = vunpack.c.l.b16 %v435
  %v2009 = vunpack.c.h.b16 %v435
  %v2010 = vunpack.c.l.b16 %v436
  %v2011 = vunpack.c.h.b16 %v436
  %v2012 = vunpack.c.l.b16 %v437
  %v2013 = vunpack.c.h.b16 %v437
  %v2014 = vunpack.c.l.b16 %v438
  %v2015 = vunpack.c.h.b16 %v438
  %v2016 = vunpack.c.l.b16 %v439
  %v2017 = vunpack.c.h.b16 %v439
  %v2018 = vunpack.c.l.b16 %v440
  %v2019 = vunpack.c.h.b16 %v440
  %v2020 = vunpack.c.l.b16 %v441
  %v2021 = vunpack.c.h.b16 %v441
  %v2022 = vunpack.c.l.b16 %v442
  %v2023 = vunpack.c.h.b16 %v442
  %v2024 = vunpack.c.l.b16 %v443
  %v2025 = vunpack.c.h.b16 %v443
  %v2026 = vunpack.c.l.b16 %v444
  %v2027 = vunpack.c.h.b16 %v444
  %v2028 = vunpack.c.l.b16 %v445
  %v2029 = vunpack.c.h.b16 %v445
  %v2030 = vunpack.c.l.b16 %v446
  %v2031 = vunpack.c.h.b16 %v446
  %v2032 = vunpack.c.l.b16 %v447
  %v2033 = vunpack.c.h.b16 %v447
  %v2034 = vunpack.c.l.b16 %v448
  %v2035 = vunpack.c.h.b16 %v448
  %v2036 = vunpack.c.l.b16 %v449
  %v2037 = vunpack.c.h.b16 %v449
  %v2038 = vunpack.c.l.b16 %v450
  %v2039 = vunpack.c.h.b16 %v450
  %v2040 = vunpack.c.l.b16 %v451
  %v2041 = vunpack.c.h.b16 %v451
  %v2042 = vunpack.c.l.b16 %v452
  %v2043 = vunpack.c.h.b16 %v452
  %v2044 = vunpack.c.l.b16 %v453
  %v2045 = vunpack.c.h.b16 %v453
  %v2046 = vunpack.c.l.b16 %v454
  %v2047 = vunpack.c.h.b16 %v454
  %v2048 = vunpack.c.l.b16 %v455
  %v2049 = vunpack.c.h.b16 %v455
  %v2050 = vunpack.c.l.b16 %v456
  %v2051 = vunpack.c.h.b16 %v456
  %v2052 = vunpack.c.l.b16 %v457
  %v2053 = vunpack.c.h.b16 %v457
  %v2054 = vunpack.c.l.b16 %v458
  %v2055 = vunpack.c.h.b16 %v458
  %v2056 = vunpack.c.l.b16 %v459
  %v2057 = vunpack.c.h.b16 %v459
  %v2058 = vunpack.c.l.b16 %v460
  %v2059 = vunpack.c.h.b16 %v460
  %v2060 = vunpack.c.l.b16 %v461
  %v2061 = vunpack.c.h.b16 %v461
  %v2062 = vunpack.c.l.b16 %v462
  %v2063 = vunpack.c.h.b16 %v462
  %v2064 = vunpack.c.l.b16 %v463
  %v2065 = vunpack.c.h.b16 %v463
  %v2066 = vunpack.c.l.b16 %v464
  %v2067 = vunpack.c.h.b16 %v464
  %v2068 = vunpack.c.l.b16 %v465
  %v2069 = vunpack.c.h.b16 %v465
  %v2070 = vunpack.c.l.b16 %v466
  %v2071 = vunpack.c.h.b16 %v466
  %v2072 = vunpack.c.l.b16 %v467
  %v2073 = vunpack.c.h.b16 %v467
  %v2074 = vunpack.c.l.b16 %v468
  %v2075 = vunpack.c.h.b16 %v468
  %v2076 = vunpack.c.l.b16 %v469
  %v2077 = vunpack.c.h.b16 %v469
  %v2078 = vunpack.c.l.b16 %v470
  %v2079 = vunpack.c.h.b16 %v470
  %v2080 = vunpack.c.l.b16 %v471
  %v2081 = vunpack.c.h.b16 %v471
  %v2082 = vunpack.c.l.b16 %v472
  %v2083 = vunpack.c.h.b16 %v472
  %v2084 = vunpack.c.l.b16 %v473
  %v2085 = vunpack.c.h.b16 %v473
  %v2086 = vunpack.c.l.b16 %v474
  %v2087 = vunpack.c.h.b16 %v474
  %v2088 = vunpack.c.l.b16 %v475
  %v2089 = vunpack.c.h.b16 %v475
  %v2090 = vunpack.c.l.b16 %v476
  %v2091 = vunpack.c.h.b16 %v476
  %v2092 = vunpack.c.l.b16 %v477
  %v2093 = vunpack.c.h.b16 %v477
  %v2094 = vunpack.c.l.b16 %v478
  %v2095 = vunpack.c.h.b16 %v478
  %v2096 = vunpack.c.l.b16 %v479
  %v2097 = vunpack.c.h.b16 %v479
  %v2098 = vunpack.c.l.b16 %v480
  %v2099 = vunpack.c.h.b16 %v480
  %v2100 = vunpack.c.l.b16 %v481
  %v2101 = vunpack.c.h.b16 %v481
  %v2102 = vunpack.c.l.b16 %v482
  %v2103 = vunpack.c.h.b16 %v482
  %v2104 = vunpack.c.l.b16 %v483
  %v2105 = vunpack.c.h.b16 %v483
  %v2106 = vunpack.c.l.b16 %v484
  %v2107 = vunpack.c.h.b16 %v484
  %v2108 = vunpack.c.l.b16 %v485
  %v2109 = vunpack.c.h.b16 %v485
  %v2110 = vunpack.c.l.b16 %v486
  %v2111 = vunpack.c.h.b16 %v486
  %v2112 = vunpack.c.l.b16 %v487
  %v2113 = vunpack.c.h.b16 %v487
  %v2114 = vunpack.c.l.b16 %v488
  %v2115 = vunpack.c.h.b16 %v488
  %v2116 = vunpack.c.l.b16 %v489
  %v2117 = vunpack.c.h.b16 %v489
  %v2118 = vunpack.c.l.b16 %v490
  %v2119 = vunpack.c.h.b16 %v490
  %v2120 = vunpack.c.l.b16 %v491
  %v2121 = vunpack.c.h.b16 %v491
  %v2122 = vunpack.c.l.b16 %v492
  %v2123 = vunpack.c.h.b16 %v492
  %v2124 = vunpack.c.l.b16 %v493
  %v2125 = vunpack.c.h.b16 %v493
  %v2126 = vunpack.c.l.b16 %v494
  %v2127 = vunpack.c.h.b16 %v494
  %v2128 = vunpack.c.l.b16 %v495
  %v2129 = vunpack.c.h.b16 %v495
  %v2130 = vunpack.c.l.b16 %v496
  %v2131 = vunpack.c.h.b16 %v496
  %v2132 = vunpack.c.l.b16 %v497
  %v2133 = vunpack.c.h.b16 %v497
  %v2134 = vunpack.c.l.b16 %v498
  %v2135 = vunpack.c.h.b16 %v498
  %v2136 = vunpack.c.l.b16 %v499
  %v2137 = vunpack.c.h.b16 %v499
  %v2138 = vunpack.c.l.b16 %v500
  %v2139 = vunpack.c.h.b16 %v500
  %v2140 = vunpack.c.l.b16 %v501
  %v2141 = vunpack.c.h.b16 %v501
  %v2142 = vunpack.c.l.b16 %v502
  %v2143 = vunpack.c.h.b16 %v502
  %v2144 = vunpack.c.l.b16 %v503
  %v2145 = vunpack.c.h.b16 %v503
  %v2146 = vunpack.c.l.b16 %v504
  %v2147 = vunpack.c.h.b16 %v504
  %v2148 = vunpack.c.l.b16 %v505
  %v2149 = vunpack.c.h.b16 %v505
  %v2150 = vunpack.c.l.b16 %v506
  %v2151 = vunpack.c.h.b16 %v506
  %v2152 = vunpack.c.l.b16 %v507
  %v2153 = vunpack.c.h.b16 %v507
  %v2154 = vunpack.c.l.b16 %v508
  %v2155 = vunpack.c.h.b16 %v508
  %v2156 = vunpack.c.l.b16 %v509
  %v2157 = vunpack.c.h.b16 %v509
  %v2158 = vunpack.c.l.b16 %v510
  %v2159 = vunpack.c.h.b16 %v510
  %v2160 = vunpack.c.l.b16 %v511
  %v2161 = vunpack.c.h.b16 %v511
  %v2162 = vunpack.c.l.b16 %v512
  %v2163 = vunpack.c.h.b16 %v512
  %v2164 = vunpack.c.l.b16 %v513
  %v2165 = vunpack.c.h.b16 %v513
  %v2166 = vunpack.c.l.b16 %v514
  %v2167 = vunpack.c.h.b16 %v514
  %v2168 = vunpack.c.l.b16 %v515
  %v2169 = vunpack.c.h.b16 %v515
  %v2170 = vunpack.c.l.b16 %v516
  %v2171 = vunpack.c.h.b16 %v516
  %v2172 = vunpack.c.l.b16 %v517
  %v2173 = vunpack.c.h.b16 %v517
  %v2174 = vunpack.c.l.b16 %v518
  %v2175 = vunpack.c.h.b16 %v518
  %v2176 = vunpack.c.l.b16 %v519
  %v2177 = vunpack.c.h.b16 %v519
  %v2178 = vunpack.c.l.b16 %v520
  %v2179 = vunpack.c.h.b16 %v520
  %v2180 = vunpack.c.l.b16 %v521
  %v2181 = vunpack.c.h.b16 %v521
  %v2182 = vunpack.c.l.b16 %v522
  %v2183 = vunpack.c.h.b16 %v522
  %v2184 = vunpack.c.l.b16 %v523
  %v2185 = vunpack.c.h.b16 %v523
  %v2186 = vunpack.c.l.b16 %v524
  %v2187 = vunpack.c.h.b16 %v524
  %v2188 = vunpack.c.l.b16 %v525
  %v2189 = vunpack.c.h.b16 %v525
  %v2190 = vunpack.c.l.b16 %v526
  %v2191 = vunpack.c.h.b16 %v526
  %v2192 = vunpack.c.l.b16 %v527
  %v2193 = vunpack.c.h.b16 %v527
  %v2194 = vunpack.c.l.b16 %v528
  %v2195 = vunpack.c.h.b16 %v528
  %v2196 = vunpack.c.l.b16 %v529
  %v2197 = vunpack.c.h.b16 %v529
  %v2198 = vunpack.c.l.b16 %v530
  %v2199 = vunpack.c.h.b16 %v530
  %v2200 = vunpack.c.l.b16 %v531
  %v2201 = vunpack.c.h.b16 %v531
  %v2202 = vunpack.c.l.b16 %v532
  %v2203 = vunpack.c.h.b16 %v532
  %v2204 = vunpack.c.l.b16 %v533
  %v2205 = vunpack.c.h.b16 %v533
  %v2206 = vunpack.c.l.b16 %v534
  %v2207 = vunpack.c.h.b16 %v534
  %v2208 = vunpack.c.l.b16 %v535
  %v2209 = vunpack.c.h.b16 %v535
  %v2210 = vunpack.c.l.b16 %v536
  %v2211 = vunpack.c.h.b16 %v536
  %v2212 = vunpack.c.l.b16 %v537
  %v2213 = vunpack.c.h.b16 %v537
  %v2214 = vunpack.c.l.b16 %v538
  %v2215 = vunpack.c.h.b16 %v538
  %v2216 = vunpack.c.l.b16 %v539
  %v2217 = vunpack.c.h.b16 %v539
  %v2218 = vunpack.c.l.b16 %v540
  %v2219 = vunpack.c.h.b16 %v540
  %v2220 = vunpack.c.l.b16 %v541
  %v2221 = vunpack.c.h.b16 %v541
  %v2222 = vunpack.c.l.b16 %v542
  %v2223 = vunpack.c.h.b16 %v542
  %v2224 = vunpack.c.l.b16 %v543
  %v2225 = vunpack.c.h.b16 %v543
  %v2226 = vunpack.c.l.b16 %v544
  %v2227 = vunpack.c.h.b16 %v544
  %v2228 = vunpack.c.l.b16 %v545
  %v2229 = vunpack.c.h.b16 %v545
  %v2230 = vunpack.c.l.b16 %v546
  %v2231 = vunpack.c.h.b16 %v546
  %v2232 = vunpack.c.l.b16 %v547
  %v2233 = vunpack.c.h.b16 %v547
  %v2234 = vunpack.c.l.b16 %v548
  %v2235 = vunpack.c.h.b16 %v548
  %v2236 = vunpack.c.l.b16 %v549
  %v2237 = vunpack.c.h.b16 %v549
  %v2238 = vunpack.c.l.b16 %v550
  %v2239 = vunpack.c.h.b16 %v550
  %v2240 = vunpack.c.l.b16 %v551
  %v2241 = vunpack.c.h.b16 %v551
  %v2242 = vunpack.c.l.b16 %v552
  %v2243 = vunpack.c.h.b16 %v552
  %v2244 = vunpack.c.l.b16 %v553
  %v2245 = vunpack.c.h.b16 %v553
  %v2246 = vunpack.c.l.b16 %v554
  %v2247 = vunpack.c.h.b16 %v554
  %v2248 = vunpack.c.l.b16 %v555
  %v2249 = vunpack.c.h.b16 %v555
  %v2250 = vunpack.c.l.b16 %v556
  %v2251 = vunpack.c.h.b16 %v556
  %v2252 = vunpack.c.l.b16 %v557
  %v2253 = vunpack.c.h.b16 %v557
  %v2254 = vunpack.c.l.b16 %v558
  %v2255 = vunpack.c.h.b16 %v558
  %v2256 = vunpack.c.l.b16 %v559
  %v2257 = vunpack.c.h.b16 %v559
  %v2258 = vunpack.c.l.b16 %v560
  %v2259 = vunpack.c.h.b16 %v560
  %v2260 = vunpack.c.l.b16 %v561
  %v2261 = vunpack.c.h.b16 %v561
  %v2262 = vunpack.c.l.b16 %v562
  %v2263 = vunpack.c.h.b16 %v562
  %v2264 = vunpack.c.l.b16 %v563
  %v2265 = vunpack.c.h.b16 %v563
  %v2266 = vpack.c.b16 %v1244, %v1242
  %v2267 = vpack.c.b16 %v1245, %v1243
  %v2268 = vpack.c.b16 %v1248, %v1246
  %v2269 = vpack.c.b16 %v1249, %v1247
  %v2270 = vpack.c.b16 %v1252, %v1250
  %v2271 = vpack.c.b16 %v1253, %v1251
  %v2272 = vpack.c.b16 %v1256, %v1254
  %v2273 = vpack.c.b16 %v1257, %v1255
  %v2274 = vpack.c.b16 %v1260, %v1258
  %v2275 = vpack.c.b16 %v1261, %v1259
  %v2276 = vpack.c.b16 %v1264, %v1262
  %v2277 = vpack.c.b16 %v1265, %v1263
  %v2278 = vpack.c.b16 %v1268, %v1266
  %v2279 = vpack.c.b16 %v1269, %v1267
  %v2280 = vpack.c.b16 %v1272, %v1270
  %v2281 = vpack.c.b16 %v1273, %v1271
  %v2282 = vpack.c.b16 %v1276, %v1274
  %v2283 = vpack.c.b16 %v1277, %v1275
  %v2284 = vpack.c.b16 %v1280, %v1278
  %v2285 = vpack.c.b16 %v1281, %v1279
  %v2286 = vpack.c.b16 %v1284, %v1282
  %v2287 = vpack.c.b16 %v1285, %v1283
  %v2288 = vpack.c.b16 %v1288, %v1286
  %v2289 = vpack.c.b16 %v1289, %v1287
  %v2290 = vpack.c.b16 %v1292, %v1290
  %v2291 = vpack.c.b16 %v1293, %v1291
  %v2292 = vpack.c.b16 %v1296, %v1294
  %v2293 = vpack.c.b16 %v1297, %v1295
  %v2294 = vpack.c.b16 %v1300, %v1298
  %v2295 = vpack.c.b16 %v1301, %v1299
  %v2296 = vpack.c.b16 %v1304, %v1302
  %v2297 = vpack.c.b16 %v1305, %v1303
  %v2298 = vpack.c.b16 %v1308, %v1306
  %v2299 = vpack.c.b16 %v1309, %v1307
  %v2300 = vpack.c.b16 %v1312, %v1310
  %v2301 = vpack.c.b16 %v1313, %v1311
  %v2302 = vpack.c.b16 %v1316, %v1314
  %v2303 = vpack.c.b16 %v1317, %v1315
  %v2304 = vpack.c.b16 %v1320, %v1318
  %v2305 = vpack.c.b16 %v1321, %v1319
  %v2306 = vpack.c.b16 %v1324, %v1322
  %v2307 = vpack.c.b16 %v1325, %v1323
  %v2308 = vpack.c.b16 %v1328, %v1326
  %v2309 = vpack.c.b16 %v1329, %v1327
  %v2310 = vpack.c.b16 %v1332, %v1330
  %v2311 = vpack.c.b16 %v1333, %v1331
  %v2312 = vpack.c.b16 %v1336, %v1334
  %v2313 = vpack.c.b16 %v1337, %v1335
  %v2314 = vpack.c.b16 %v1340, %v1338
  %v2315 = vpack.c.b16 %v1341, %v1339
  %v2316 = vpack.c.b16 %v1344, %v1342
  %v2317 = vpack.c.b16 %v1345, %v1343
  %v2318 = vpack.c.b16 %v1348, %v1346
  %v2319 = vpack.c.b16 %v1349, %v1347
  %v2320 = vpack.c.b16 %v1352, %v1350
  %v2321 = vpack.c.b16 %v1353, %v1351
  %v2322 = vpack.c.b16 %v1356, %v1354
  %v2323 = vpack.c.b16 %v1357, %v1355
  %v2324 = vpack.c.b16 %v1360, %v1358
  %v2325 = vpack.c.b16 %v1361, %v1359
  %v2326 = vpack.c.b16 %v1364, %v1362
  %v2327 = vpack.c.b16 %v1365, %v1363
  %v2328 = vpack.c.b16 %v1368, %v1366
  %v2329 = vpack.c.b16 %v1369, %v1367
  %v2330 = vpack.c.b16 %v1372, %v1370
  %v2331 = vpack.c.b16 %v1373, %v1371
  %v2332 = vpack.c.b16 %v1376, %v1374
  %v2333 = vpack.c.b16 %v1377, %v1375
  %v2334 = vpack.c.b16 %v1380, %v1378
  %v2335 = vpack.c.b16 %v1381, %v1379
  %v2336 = vpack.c.b16 %v1384, %v1382
  %v2337 = vpack.c.b16 %v1385, %v1383
  %v2338 = vpack.c.b16 %v1388, %v1386
  %v2339 = vpack.c.b16 %v1389, %v1387
  %v2340 = vpack.c.b16 %v1392, %v1390
  %v2341 = vpack.c.b16 %v1393, %v1391
  %v2342 = vpack.c.b16 %v1396, %v1394
  %v2343 = vpack.c.b16 %v1397, %v1395
  %v2344 = vpack.c.b16 %v1400, %v1398
  %v2345 = vpack.c.b16 %v1401, %v1399
  %v2346 = vpack.c.b16 %v1404, %v1402
  %v2347 = vpack.c.b16 %v1405, %v1403
  %v2348 = vpack.c.b16 %v1408, %v1406
  %v2349 = vpack.c.b16 %v1409, %v1407
  %v2350 = vpack.c.b16 %v1412, %v1410
  %v2351 = vpack.c.b16 %v1413, %v1411
  %v2352 = vpack.c.b16 %v1416, %v1414
  %v2353 = vpack.c.b16 %v1417, %v1415
  %v2354 = vpack.c.b16 %v1420, %v1418
  %v2355 = vpack.c.b16 %v1421, %v1419
  %v2356 = vpack.c.b16 %v1424, %v1422
  %v2357 = vpack.c.b16 %v1425, %v1423
  %v2358 = vpack.c.b16 %v1428, %v1426
  %v2359 = vpack.c.b16 %v1429, %v1427
  %v2360 = vpack.c.b16 %v1432, %v1430
  %v2361 = vpack.c.b16 %v1433, %v1431
  %v2362 = vpack.c.b16 %v1436, %v1434
  %v2363 = vpack.c.b16 %v1437, %v1435
  %v2364 = vpack.c.b16 %v1440, %v1438
  %v2365 = vpack.c.b16 %v1441, %v1439
  %v2366 = vpack.c.b16 %v1444, %v1442
  %v2367 = vpack.c.b16 %v1445, %v1443
  %v2368 = vpack.c.b16 %v1448, %v1446
  %v2369 = vpack.c.b16 %v1449, %v1447
  %v2370 = vpack.c.b16 %v1452, %v1450
  %v2371 = vpack.c.b16 %v1453, %v1451
  %v2372 = vpack.c.b16 %v1456, %v1454
  %v2373 = vpack.c.b16 %v1457, %v1455
  %v2374 = vpack.c.b16 %v1460, %v1458
  %v2375 = vpack.c.b16 %v1461, %v1459
  %v2376 = vpack.c.b16 %v1464, %v1462
  %v2377 = vpack.c.b16 %v1465, %v1463
  %v2378 = vpack.c.b16 %v1468, %v1466
  %v2379 = vpack.c.b16 %v1469, %v1467
  %v2380 = vpack.c.b16 %v1472, %v1470
  %v2381 = vpack.c.b16 %v1473, %v1471
  %v2382 = vpack.c.b16 %v1476, %v1474
  %v2383 = vpack.c.b16 %v1477, %v1475
  %v2384 = vpack.c.b16 %v1480, %v1478
  %v2385 = vpack.c.b16 %v1481, %v1479
  %v2386 = vpack.c.b16 %v1484, %v1482
  %v2387 = vpack.c.b16 %v1485, %v1483
  %v2388 = vpack.c.b16 %v1488, %v1486
  %v2389 = vpack.c.b16 %v1489, %v1487
  %v2390 = vpack.c.b16 %v1492, %v1490
  %v2391 = vpack.c.b16 %v1493, %v1491
  %v2392 = vpack.c.b16 %v1496, %v1494
  %v2393 = vpack.c.b16 %v1497, %v1495
  %v2394 = vpack.c.b16 %v1500, %v1498
  %v2395 = vpack.c.b16 %v1501, %v1499
  %v2396 = vpack.c.b16 %v1504, %v1502
  %v2397 = vpack.c.b16 %v1505, %v1503
  %v2398 = vpack.c.b16 %v1508, %v1506
  %v2399 = vpack.c.b16 %v1509, %v1507
  %v2400 = vpack.c.b16 %v1512, %v1510
  %v2401 = vpack.c.b16 %v1513, %v1511
  %v2402 = vpack.c.b16 %v1516, %v1514
  %v2403 = vpack.c.b16 %v1517, %v1515
  %v2404 = vpack.c.b16 %v1520, %v1518
  %v2405 = vpack.c.b16 %v1521, %v1519
  %v2406 = vpack.c.b16 %v1524, %v1522
  %v2407 = vpack.c.b16 %v1525, %v1523
  %v2408 = vpack.c.b16 %v1528, %v1526
  %v2409 = vpack.c.b16 %v1529, %v1527
  %v2410 = vpack.c.b16 %v1532, %v1530
  %v2411 = vpack.c.b16 %v1533, %v1531
  %v2412 = vpack.c.b16 %v1536, %v1534
  %v2413 = vpack.c.b16 %v1537, %v1535
  %v2414 = vpack.c.b16 %v1540, %v1538
  %v2415 = vpack.c.b16 %v1541, %v1539
  %v2416 = vpack.c.b16 %v1544, %v1542
  %v2417 = vpack.c.b16 %v1545, %v1543
  %v2418 = vpack.c.b16 %v1548, %v1546
  %v2419 = vpack.c.b16 %v1549, %v1547
  %v2420 = vpack.c.b16 %v1552, %v1550
  %v2421 = vpack.c.b16 %v1553, %v1551
  %v2422 = vpack.c.b16 %v1556, %v1554
  %v2423 = vpack.c.b16 %v1557, %v1555
  %v2424 = vpack.c.b16 %v1560, %v1558
  %v2425 = vpack.c.b16 %v1561, %v1559
  %v2426 = vpack.c.b16 %v1564, %v1562
  %v2427 = vpack.c.b16 %v1565, %v1563
  %v2428 = vpack.c.b16 %v1568, %v1566
  %v2429 = vpack.c.b16 %v1569, %v1567
  %v2430 = vpack.c.b16 %v1572, %v1570
  %v2431 = vpack.c.b16 %v1573, %v1571
  %v2432 = vpack.c.b16 %v1576, %v1574
  %v2433 = vpack.c.b16 %v1577, %v1575
  %v2434 = vpack.c.b16 %v1580, %v1578
  %v2435 = vpack.c.b16 %v1581, %v1579
  %v2436 = vpack.c.b16 %v1584, %v1582
  %v2437 = vpack.c.b16 %v1585, %v1583
  %v2438 = vpack.c.b16 %v1588, %v1586
  %v2439 = vpack.c.b16 %v1589, %v1587
  %v2440 = vpack.c.b16 %v1592, %v1590
  %v2441 = vpack.c.b16 %v1593, %v1591
  %v2442 = vpack.c.b16 %v1596, %v1594
  %v2443 = vpack.c.b16 %v1597, %v1595
  %v2444 = vpack.c.b16 %v1600, %v1598
  %v2445 = vpack.c.b16 %v1601, %v1599
  %v2446 = vpack.c.b16 %v1604, %v1602
  %v2447 = vpack.c.b16 %v1605, %v1603
  %v2448 = vpack.c.b16 %v1608, %v1606
  %v2449 = vpack.c.b16 %v1609, %v1607
  %v2450 = vpack.c.b16 %v1612, %v1610
  %v2451 = vpack.c.b16 %v1613, %v1611
  %v2452 = vpack.c.b16 %v1616, %v1614
  %v2453 = vpack.c.b16 %v1617, %v1615
  %v2454 = vpack.c.b16 %v1620, %v1618
  %v2455 = vpack.c.b16 %v1621, %v1619
  %v2456 = vpack.c.b16 %v1624, %v1622
  %v2457 = vpack.c.b16 %v1625, %v1623
  %v2458 = vpack.c.b16 %v1628, %v1626
  %v2459 = vpack.c.b16 %v1629, %v1627
  %v2460 = vpack.c.b16 %v1632, %v1630
  %v2461 = vpack.c.b16 %v1633, %v1631
  %v2462 = vpack.c.b16 %v1636, %v1634
  %v2463 = vpack.c.b16 %v1637, %v1635
  %v2464 = vpack.c.b16 %v1640, %v1638
  %v2465 = vpack.c.b16 %v1641, %v1639
  %v2466 = vpack.c.b16 %v1644, %v1642
  %v2467 = vpack.c.b16 %v1645, %v1643
  %v2468 = vpack.c.b16 %v1648, %v1646
  %v2469 = vpack.c.b16 %v1649, %v1647
  %v2470 = vpack.c.b16 %v1652, %v1650
  %v2471 = vpack.c.b16 %v1653, %v1651
  %v2472 = vpack.c.b16 %v1656, %v1654
  %v2473 = vpack.c.b16 %v1657, %v1655
  %v2474 = vpack.c.b16 %v1660, %v1658
  %v2475 = vpack.c.b16 %v1661, %v1659
  %v2476 = vpack.c.b16 %v1664, %v1662
  %v2477 = vpack.c.b16 %v1665, %v1663
  %v2478 = vpack.c.b16 %v1668, %v1666
  %v2479 = vpack.c.b16 %v1669, %v1667
  %v2480 = vpack.c.b16 %v1672, %v1670
  %v2481 = vpack.c.b16 %v1673, %v1671
  %v2482 = vpack.c.b16 %v1676, %v1674
  %v2483 = vpack.c.b16 %v1677, %v1675
  %v2484 = vpack.c.b16 %v1680, %v1678
  %v2485 = vpack.c.b16 %v1681, %v1679
  %v2486 = vpack.c.b16 %v1684, %v1682
  %v2487 = vpack.c.b16 %v1685, %v1683
  %v2488 = vpack.c.b16 %v1688, %v1686
  %v2489 = vpack.c.b16 %v1689, %v1687
  %v2490 = vpack.c.b16 %v1692, %v1690
  %v2491 = vpack.c.b16 %v1693, %v1691
  %v2492 = vpack.c.b16 %v1696, %v1694
  %v2493 = vpack.c.b16 %v1697, %v1695
  %v2494 = vpack.c.b16 %v1700, %v1698
  %v2495 = vpack.c.b16 %v1701, %v1699
  %v2496 = vpack.c.b16 %v1704, %v1702
  %v2497 = vpack.c.b16 %v1705, %v1703
  %v2498 = vpack.c.b16 %v1708, %v1706
  %v2499 = vpack.c.b16 %v1709, %v1707
  %v2500 = vpack.c.b16 %v1712, %v1710
  %v2501 = vpack.c.b16 %v1713, %v1711
  %v2502 = vpack.c.b16 %v1716, %v1714
  %v2503 = vpack.c.b16 %v1717, %v1715
  %v2504 = vpack.c.b16 %v1720, %v1718
  %v2505 = vpack.c.b16 %v1721, %v1719
  %v2506 = vpack.c.b16 %v1724, %v1722
  %v2507 = vpack.c.b16 %v1725, %v1723
  %v2508 = vpack.c.b16 %v1728, %v1726
  %v2509 = vpack.c.b16 %v1729, %v1727
  %v2510 = vpack.c.b16 %v1732, %v1730
  %v2511 = vpack.c.b16 %v1733, %v1731
  %v2512 = vpack.c.b16 %v1736, %v1734
  %v2513 = vpack.c.b16 %v1737, %v1735
  %v2514 = vpack.c.b16 %v1740, %v1738
  %v2515 = vpack.c.b16 %v1741, %v1739
  %v2516 = vpack.c.b16 %v1744, %v1742
  %v2517 = vpack.c.b16 %v1745, %v1743
  %v2518 = vpack.c.b16 %v1748, %v1746
  %v2519 = vpack.c.b16 %v1749, %v1747
  %v2520 = vpack.c.b16 %v1752, %v1750
  %v2521 = vpack.c.b16 %v1753, %v1751
  %v2522 = vpack.c.b16 %v1756, %v1754
  %v2523 = vpack.c.b16 %v1757, %v1755
  %v2524 = vpack.c.b16 %v1760, %v1758
  %v2525 = vpack.c.b16 %v1761, %v1759
  %v2526 = vpack.c.b16 %v1764, %v1762
  %v2527 = vpack.c.b16 %v1765, %v1763
  %v2528 = vpack.c.b16 %v1768, %v1766
  %v2529 = vpack.c.b16 %v1769, %v1767
  %v2530 = vpack.c.b16 %v1772, %v1770
  %v2531 = vpack.c.b16 %v1773, %v1771
  %v2532 = vpack.c.b16 %v1776, %v1774
  %v2533 = vpack.c.b16 %v1777, %v1775
  %v2534 = vpack.c.b16 %v1780, %v1778
  %v2535 = vpack.c.b16 %v1781, %v1779
  %v2536 = vpack.c.b16 %v1784, %v1782
  %v2537 = vpack.c.b16 %v1785, %v1783
  %v2538 = vpack.c.b16 %v1788, %v1786
  %v2539 = vpack.c.b16 %v1789, %v1787
  %v2540 = vpack.c.b16 %v1792, %v1790
  %v2541 = vpack.c.b16 %v1793, %v1791
  %v2542 = vpack.c.b16 %v1796, %v1794
  %v2543 = vpack.c.b16 %v1797, %v1795
  %v2544 = vpack.c.b16 %v1800, %v1798
  %v2545 = vpack.c.b16 %v1801, %v1799
  %v2546 = vpack.c.b16 %v1804, %v1802
  %v2547 = vpack.c.b16 %v1805, %v1803
  %v2548 = vpack.c.b16 %v1808, %v1806
  %v2549 = vpack.c.b16 %v1809, %v1807
  %v2550 = vpack.c.b16 %v1812, %v1810
  %v2551 = vpack.c.b16 %v1813, %v1811
  %v2552 = vpack.c.b16 %v1816, %v1814
  %v2553 = vpack.c.b16 %v1817, %v1815
  %v2554 = vpack.c.b16 %v1820, %v1818
  %v2555 = vpack.c.b16 %v1821, %v1819
  %v2556 = vpack.c.b16 %v1824, %v1822
  %v2557 = vpack.c.b16 %v1825, %v1823
  %v2558 = vpack.c.b16 %v1828, %v1826
  %v2559 = vpack.c.b16 %v1829, %v1827
  %v2560 = vpack.c.b16 %v1832, %v1830
  %v2561 = vpack.c.b16 %v1833, %v1831
  %v2562 = vpack.c.b16 %v1836, %v1834
  %v2563 = vpack.c.b16 %v1837, %v1835
  %v2564 = vpack.c.b16 %v1840, %v1838
  %v2565 = vpack.c.b16 %v1841, %v1839
  %v2566 = vpack.c.b16 %v1844, %v1842
  %v2567 = vpack.c.b16 %v1845, %v1843
  %v2568 = vpack.c.b16 %v1848, %v1846
  %v2569 = vpack.c.b16 %v1849, %v1847
  %v2570 = vpack.c.b16 %v1852, %v1850
  %v2571 = vpack.c.b16 %v1853, %v1851
  %v2572 = vpack.c.b16 %v1856, %v1854
  %v2573 = vpack.c.b16 %v1857, %v1855
  %v2574 = vpack.c.b16 %v1860, %v1858
  %v2575 = vpack.c.b16 %v1861, %v1859
  %v2576 = vpack.c.b16 %v1864, %v1862
  %v2577 = vpack.c.b16 %v1865, %v1863
  %v2578 = vpack.c.b16 %v1868, %v1866
  %v2579 = vpack.c.b16 %v1869, %v1867
  %v2580 = vpack.c.b16 %v1872, %v1870
  %v2581 = vpack.c.b16 %v1873, %v1871
  %v2582 = vpack.c.b16 %v1876, %v1874
  %v2583 = vpack.c.b16 %v1877, %v1875
  %v2584 = vpack.c.b16 %v1880, %v1878
  %v2585 = vpack.c.b16 %v1881, %v1879
  %v2586 = vpack.c.b16 %v1884, %v1882
  %v2587 = vpack.c.b16 %v1885, %v1883
  %v2588 = vpack.c.b16 %v1888, %v1886
  %v2589 = vpack.c.b16 %v1889, %v1887
  %v2590 = vpack.c.b16 %v1892, %v1890
  %v2591 = vpack.c.b16 %v1893, %v1891
  %v2592 = vpack.c.b16 %v1896, %v1894
  %v2593 = vpack.c.b16 %v1897, %v1895
  %v2594 = vpack.c.b16 %v1900, %v1898
  %v2595 = vpack.c.b16 %v1901, %v1899
  %v2596 = vpack.c.b16 %v1904, %v1902
  %v2597 = vpack.c.b16 %v1905, %v1903
  %v2598 = vpack.c.b16 %v1908, %v1906
  %v2599 = vpack.c.b16 %v1909, %v1907
  %v2600 = vpack.c.b16 %v1912, %v1910
  %v2601 = vpack.c.b16 %v1913, %v1911
  %v2602 = vpack.c.b16 %v1916, %v1914
  %v2603 = vpack.c.b16 %v1917, %v1915
  %v2604 = vpack.c.b16 %v1920, %v1918
  %v2605 = vpack.c.b16 %v1921, %v1919
  %v2606 = vpack.c.b16 %v1924, %v1922
  %v2607 = vpack.c.b16 %v1925, %v1923
  %v2608 = vpack.c.b16 %v1928, %v1926
  %v2609 = vpack.c.b16 %v1929, %v1927
  %v2610 = vpack.c.b16 %v1932, %v1930
  %v2611 = vpack.c.b16 %v1933, %v1931
  %v2612 = vpack.c.b16 %v1936, %v1934
  %v2613 = vpack.c.b16 %v1937, %v1935
  %v2614 = vpack.c.b16 %v1940, %v1938
  %v2615 = vpack.c.b16 %v1941, %v1939
  %v2616 = vpack.c.b16 %v1944, %v1942
  %v2617 = vpack.c.b16 %v1945, %v1943
  %v2618 = vpack.c.b16 %v1948, %v1946
  %v2619 = vpack.c.b16 %v1949, %v1947
  %v2620 = vpack.c.b16 %v1952, %v1950
  %v2621 = vpack.c.b16 %v1953, %v1951
  %v2622 = vpack.c.b16 %v1956, %v1954
  %v2623 = vpack.c.b16 %v1957, %v1955
  %v2624 = vpack.c.b16 %v1960, %v1958
  %v2625 = vpack.c.b16 %v1961, %v1959
  %v2626 = vpack.c.b16 %v1964, %v1962
  %v2627 = vpack.c.b16 %v1965, %v1963
  %v2628 = vpack.c.b16 %v1968, %v1966
  %v2629 = vpack.c.b16 %v1969, %v1967
  %v2630 = vpack.c.b16 %v1972, %v1970
  %v2631 = vpack.c.b16 %v1973, %v1971
  %v2632 = vpack.c.b16 %v1976, %v1974
  %v2633 = vpack.c.b16 %v1977, %v1975
  %v2634 = vpack.c.b16 %v1980, %v1978
  %v2635 = vpack.c.b16 %v1981, %v1979
  %v2636 = vpack.c.b16 %v1984, %v1982
  %v2637 = vpack.c.b16 %v1985, %v1983
  %v2638 = vpack.c.b16 %v1988, %v1986
  %v2639 = vpack.c.b16 %v1989, %v1987
  %v2640 = vpack.c.b16 %v1992, %v1990
  %v2641 = vpack.c.b16 %v1993, %v1991
  %v2642 = vpack.c.b16 %v1996, %v1994
  %v2643 = vpack.c.b16 %v1997, %v1995
  %v2644 = vpack.c.b16 %v2000, %v1998
  %v2645 = vpack.c.b16 %v2001, %v1999
  %v2646 = vpack.c.b16 %v2004, %v2002
  %v2647 = vpack.c.b16 %v2005, %v2003
  %v2648 = vpack.c.b16 %v2008, %v2006
  %v2649 = vpack.c.b16 %v2009, %v2007
  %v2650 = vpack.c.b16 %v2012, %v2010
  %v2651 = vpack.c.b16 %v2013, %v2011
  %v2652 = vpack.c.b16 %v2016, %v2014
  %v2653 = vpack.c.b16 %v2017, %v2015
  %v2654 = vpack.c.b16 %v2020, %v2018
  %v2655 = vpack.c.b16 %v2021, %v2019
  %v2656 = vpack.c.b16 %v2024, %v2022
  %v2657 = vpack.c.b16 %v2025, %v2023
  %v2658 = vpack.c.b16 %v2028, %v2026
  %v2659 = vpack.c.b16 %v2029, %v2027
  %v2660 = vpack.c.b16 %v2032, %v2030
  %v2661 = vpack.c.b16 %v2033, %v2031
  %v2662 = vpack.c.b16 %v2036, %v2034
  %v2663 = vpack.c.b16 %v2037, %v2035
  %v2664 = vpack.c.b16 %v2040, %v2038
  %v2665 = vpack.c.b16 %v2041, %v2039
  %v2666 = vpack.c.b16 %v2044, %v2042
  %v2667 = vpack.c.b16 %v2045, %v2043
  %v2668 = vpack.c.b16 %v2048, %v2046
  %v2669 = vpack.c.b16 %v2049, %v2047
  %v2670 = vpack.c.b16 %v2052, %v2050
  %v2671 = vpack.c.b16 %v2053, %v2051
  %v2672 = vpack.c.b16 %v2056, %v2054
  %v2673 = vpack.c.b16 %v2057, %v2055
  %v2674 = vpack.c.b16 %v2060, %v2058
  %v2675 = vpack.c.b16 %v2061, %v2059
  %v2676 = vpack.c.b16 %v2064, %v2062
  %v2677 = vpack.c.b16 %v2065, %v2063
  %v2678 = vpack.c.b16 %v2068, %v2066
  %v2679 = vpack.c.b16 %v2069, %v2067
  %v2680 = vpack.c.b16 %v2072, %v2070
  %v2681 = vpack.c.b16 %v2073, %v2071
  %v2682 = vpack.c.b16 %v2076, %v2074
  %v2683 = vpack.c.b16 %v2077, %v2075
  %v2684 = vpack.c.b16 %v2080, %v2078
  %v2685 = vpack.c.b16 %v2081, %v2079
  %v2686 = vpack.c.b16 %v2084, %v2082
  %v2687 = vpack.c.b16 %v2085, %v2083
  %v2688 = vpack.c.b16 %v2088, %v2086
  %v2689 = vpack.c.b16 %v2089, %v2087
  %v2690 = vpack.c.b16 %v2092, %v2090
  %v2691 = vpack.c.b16 %v2093, %v2091
  %v2692 = vpack.c.b16 %v2096, %v2094
  %v2693 = vpack.c.b16 %v2097, %v2095
  %v2694 = vpack.c.b16 %v2100, %v2098
  %v2695 = vpack.c.b16 %v2101, %v2099
  %v2696 = vpack.c.b16 %v2104, %v2102
  %v2697 = vpack.c.b16 %v2105, %v2103
  %v2698 = vpack.c.b16 %v2108, %v2106
  %v2699 = vpack.c.b16 %v2109, %v2107
  %v2700 = vpack.c.b16 %v2112, %v2110
  %v2701 = vpack.c.b16 %v2113, %v2111
  %v2702 = vpack.c.b16 %v2116, %v2114
  %v2703 = vpack.c.b16 %v2117, %v2115
  %v2704 = vpack.c.b16 %v2120, %v2118
  %v2705 = vpack.c.b16 %v2121, %v2119
  %v2706 = vpack.c.b16 %v2124, %v2122
  %v2707 = vpack.c.b16 %v2125, %v2123
  %v2708 = vpack.c.b16 %v2128, %v2126
  %v2709 = vpack.c.b16 %v2129, %v2127
  %v2710 = vpack.c.b16 %v2132, %v2130
  %v2711 = vpack.c.b16 %v2133, %v2131
  %v2712 = vpack.c.b16 %v2136, %v2134
  %v2713 = vpack.c.b16 %v2137, %v2135
  %v2714 = vpack.c.b16 %v2140, %v2138
  %v2715 = vpack.c.b16 %v2141, %v2139
  %v2716 = vpack.c.b16 %v2144, %v2142
  %v2717 = vpack.c.b16 %v2145, %v2143
  %v2718 = vpack.c.b16 %v2148, %v2146
  %v2719 = vpack.c.b16 %v2149, %v2147
  %v2720 = vpack.c.b16 %v2152, %v2150
  %v2721 = vpack.c.b16 %v2153, %v2151
  %v2722 = vpack.c.b16 %v2156, %v2154
  %v2723 = vpack.c.b16 %v2157, %v2155
  %v2724 = vpack.c.b16 %v2160, %v2158
  %v2725 = vpack.c.b16 %v2161, %v2159
  %v2726 = vpack.c.b16 %v2164, %v2162
  %v2727 = vpack.c.b16 %v2165, %v2163
  %v2728 = vpack.c.b16 %v2168, %v2166
  %v2729 = vpack.c.b16 %v2169, %v2167
  %v2730 = vpack.c.b16 %v2172, %v2170
  %v2731 = vpack.c.b16 %v2173, %v2171
  %v2732 = vpack.c.b16 %v2176, %v2174
  %v2733 = vpack.c.b16 %v2177, %v2175
  %v2734 = vpack.c.b16 %v2180, %v2178
  %v2735 = vpack.c.b16 %v2181, %v2179
  %v2736 = vpack.c.b16 %v2184, %v2182
  %v2737 = vpack.c.b16 %v2185, %v2183
  %v2738 = vpack.c.b16 %v2188, %v2186
  %v2739 = vpack.c.b16 %v2189, %v2187
  %v2740 = vpack.c.b16 %v2192, %v2190
  %v2741 = vpack.c.b16 %v2193, %v2191
  %v2742 = vpack.c.b16 %v2196, %v2194
  %v2743 = vpack.c.b16 %v2197, %v2195
  %v2744 = vpack.c.b16 %v2200, %v2198
  %v2745 = vpack.c.b16 %v2201, %v2199
  %v2746 = vpack.c.b16 %v2204, %v2202
  %v2747 = vpack.c.b16 %v2205, %v2203
  %v2748 = vpack.c.b16 %v2208, %v2206
  %v2749 = vpack.c.b16 %v2209, %v2207
  %v2750 = vpack.c.b16 %v2212, %v2210
  %v2751 = vpack.c.b16 %v2213, %v2211
  %v2752 = vpack.c.b16 %v2216, %v2214
  %v2753 = vpack.c.b16 %v2217, %v2215
  %v2754 = vpack.c.b16 %v2220, %v2218
  %v2755 = vpack.c.b16 %v2221, %v2219
  %v2756 = vpack.c.b16 %v2224, %v2222
  %v2757 = vpack.c.b16 %v2225, %v2223
  %v2758 = vpack.c.b16 %v2228, %v2226
  %v2759 = vpack.c.b16 %v2229, %v2227
  %v2760 = vpack.c.b16 %v2232, %v2230
  %v2761 = vpack.c.b16 %v2233, %v2231
  %v2762 = vpack.c.b16 %v2236, %v2234
  %v2763 = vpack.c.b16 %v2237, %v2235
  %v2764 = vpack.c.b16 %v2240, %v2238
  %v2765 = vpack.c.b16 %v2241, %v2239
  %v2766 = vpack.c.b16 %v2244, %v2242
  %v2767 = vpack.c.b16 %v2245, %v2243
  %v2768 = vpack.c.b16 %v2248, %v2246
  %v2769 = vpack.c.b16 %v2249, %v2247
  %v2770 = vpack.c.b16 %v2252, %v2250
  %v2771 = vpack.c.b16 %v2253, %v2251
  %v2772 = vpack.c.b16 %v2256, %v2254
  %v2773 = vpack.c.b16 %v2257, %v2255
  %v2774 = vpack.c.b16 %v2260, %v2258
  %v2775 = vpack.c.b16 %v2261, %v2259
  %v2776 = vpack.c.b16 %v2264, %v2262
  %v2777 = vpack.c.b16 %v2265, %v2263
  %3290 = vmatpush.bf16.msra.mxu0 %v2280
  %3291 = vmatpush.bf16.msra.mxu0 %v2278
  %3292 = vmatpush.bf16.msra.mxu0 %v2276
  %3293 = vmatpush.bf16.msra.mxu0 %v2274
  %3294 = vmatpush.bf16.msra.mxu0 %v2272
  %3295 = vmatpush.bf16.msra.mxu0 %v2270
  %3296 = vmatpush.bf16.msra.mxu0 %v2268
  %3297 = vmatpush.bf16.msra.mxu0 %v2266
  %3298 = vmatmul.bf16.gmra.mxu0 %v666
  %v3299 = vpop.f32.mrf.mxu0
  %v3300 = vadd.f32 %v566, %v3299
  %v3301 = vpop.f32.mrf.mxu0
  %v3302 = vadd.f32 %v566, %v3301
  %3303 = vdwg.mxu0
  %3304 = vmatpush.bf16.msra.mxu0 %v2296
  %3305 = vmatpush.bf16.msra.mxu0 %v2294
  %3306 = vmatpush.bf16.msra.mxu0 %v2292
  %3307 = vmatpush.bf16.msra.mxu0 %v2290
  %3308 = vmatpush.bf16.msra.mxu0 %v2288
  %3309 = vmatpush.bf16.msra.mxu0 %v2286
  %3310 = vmatpush.bf16.msra.mxu0 %v2284
  %3311 = vmatpush.bf16.msra.mxu0 %v2282
  %3312 = vmatmul.bf16.gmra.mxu0 %v667
  %v3313 = vpop.f32.mrf.mxu0
  %v3314 = vadd.f32 %v3300, %v3313
  %v3315 = vpop.f32.mrf.mxu0
  %v3316 = vadd.f32 %v3302, %v3315
  %3317 = vdwg.mxu0
  %3318 = vmatpush.bf16.msra.mxu0 %v2312
  %3319 = vmatpush.bf16.msra.mxu0 %v2310
  %3320 = vmatpush.bf16.msra.mxu0 %v2308
  %3321 = vmatpush.bf16.msra.mxu0 %v2306
  %3322 = vmatpush.bf16.msra.mxu0 %v2304
  %3323 = vmatpush.bf16.msra.mxu0 %v2302
  %3324 = vmatpush.bf16.msra.mxu0 %v2300
  %3325 = vmatpush.bf16.msra.mxu0 %v2298
  %3326 = vmatmul.bf16.gmra.mxu0 %v668
  %v3327 = vpop.f32.mrf.mxu0
  %v3328 = vadd.f32 %v3314, %v3327
  %v3329 = vpop.f32.mrf.mxu0
  %v3330 = vadd.f32 %v3316, %v3329
  %3331 = vdwg.mxu0
  %3332 = vmatpush.bf16.msra.mxu0 %v2328
  %3333 = vmatpush.bf16.msra.mxu0 %v2326
  %3334 = vmatpush.bf16.msra.mxu0 %v2324
  %3335 = vmatpush.bf16.msra.mxu0 %v2322
  %3336 = vmatpush.bf16.msra.mxu0 %v2320
  %3337 = vmatpush.bf16.msra.mxu0 %v2318
  %3338 = vmatpush.bf16.msra.mxu0 %v2316
  %3339 = vmatpush.bf16.msra.mxu0 %v2314
  %3340 = vmatmul.bf16.gmra.mxu0 %v669
  %v3341 = vpop.f32.mrf.mxu0
  %v3342 = vadd.f32 %v3328, %v3341
  %v3343 = vpop.f32.mrf.mxu0
  %v3344 = vadd.f32 %v3330, %v3343
  %3345 = vdwg.mxu0
  %3346 = vmatpush.bf16.msra.mxu0 %v2344
  %3347 = vmatpush.bf16.msra.mxu0 %v2342
  %3348 = vmatpush.bf16.msra.mxu0 %v2340
  %3349 = vmatpush.bf16.msra.mxu0 %v2338
  %3350 = vmatpush.bf16.msra.mxu0 %v2336
  %3351 = vmatpush.bf16.msra.mxu0 %v2334
  %3352 = vmatpush.bf16.msra.mxu0 %v2332
  %3353 = vmatpush.bf16.msra.mxu0 %v2330
  %3354 = vmatmul.bf16.gmra.mxu0 %v670
  %v3355 = vpop.f32.mrf.mxu0
  %v3356 = vadd.f32 %v3342, %v3355
  %v3357 = vpop.f32.mrf.mxu0
  %v3358 = vadd.f32 %v3344, %v3357
  %3359 = vdwg.mxu0
  %3360 = vmatpush.bf16.msra.mxu0 %v2360
  %3361 = vmatpush.bf16.msra.mxu0 %v2358
  %3362 = vmatpush.bf16.msra.mxu0 %v2356
  %3363 = vmatpush.bf16.msra.mxu0 %v2354
  %3364 = vmatpush.bf16.msra.mxu0 %v2352
  %3365 = vmatpush.bf16.msra.mxu0 %v2350
  %3366 = vmatpush.bf16.msra.mxu0 %v2348
  %3367 = vmatpush.bf16.msra.mxu0 %v2346
  %3368 = vmatmul.bf16.gmra.mxu0 %v671
  %v3369 = vpop.f32.mrf.mxu0
  %v3370 = vadd.f32 %v3356, %v3369
  %v3371 = vpop.f32.mrf.mxu0
  %v3372 = vadd.f32 %v3358, %v3371
  %3373 = vdwg.mxu0
  %3374 = vmatpush.bf16.msra.mxu0 %v2376
  %3375 = vmatpush.bf16.msra.mxu0 %v2374
  %3376 = vmatpush.bf16.msra.mxu0 %v2372
  %3377 = vmatpush.bf16.msra.mxu0 %v2370
  %3378 = vmatpush.bf16.msra.mxu0 %v2368
  %3379 = vmatpush.bf16.msra.mxu0 %v2366
  %3380 = vmatpush.bf16.msra.mxu0 %v2364
  %3381 = vmatpush.bf16.msra.mxu0 %v2362
  %3382 = vmatmul.bf16.gmra.mxu0 %v672
  %v3383 = vpop.f32.mrf.mxu0
  %v3384 = vadd.f32 %v3370, %v3383
  %v3385 = vpop.f32.mrf.mxu0
  %v3386 = vadd.f32 %v3372, %v3385
  %3387 = vdwg.mxu0
  %3388 = vmatpush.bf16.msra.mxu0 %v2392
  %3389 = vmatpush.bf16.msra.mxu0 %v2390
  %3390 = vmatpush.bf16.msra.mxu0 %v2388
  %3391 = vmatpush.bf16.msra.mxu0 %v2386
  %3392 = vmatpush.bf16.msra.mxu0 %v2384
  %3393 = vmatpush.bf16.msra.mxu0 %v2382
  %3394 = vmatpush.bf16.msra.mxu0 %v2380
  %3395 = vmatpush.bf16.msra.mxu0 %v2378
  %3396 = vmatmul.bf16.gmra.mxu0 %v673
  %v3397 = vpop.f32.mrf.mxu0
  %v3398 = vadd.f32 %v3384, %v3397
  %v3399 = vpop.f32.mrf.mxu0
  %v3400 = vadd.f32 %v3386, %v3399
  %3401 = vdwg.mxu0
  %3402 = vmatpush.bf16.msra.mxu0 %v2408
  %3403 = vmatpush.bf16.msra.mxu0 %v2406
  %3404 = vmatpush.bf16.msra.mxu0 %v2404
  %3405 = vmatpush.bf16.msra.mxu0 %v2402
  %3406 = vmatpush.bf16.msra.mxu0 %v2400
  %3407 = vmatpush.bf16.msra.mxu0 %v2398
  %3408 = vmatpush.bf16.msra.mxu0 %v2396
  %3409 = vmatpush.bf16.msra.mxu0 %v2394
  %3410 = vmatmul.bf16.gmra.mxu0 %v674
  %v3411 = vpop.f32.mrf.mxu0
  %v3412 = vadd.f32 %v3398, %v3411
  %v3413 = vpop.f32.mrf.mxu0
  %v3414 = vadd.f32 %v3400, %v3413
  %3415 = vdwg.mxu0
  %3416 = vmatpush.bf16.msra.mxu0 %v2424
  %3417 = vmatpush.bf16.msra.mxu0 %v2422
  %3418 = vmatpush.bf16.msra.mxu0 %v2420
  %3419 = vmatpush.bf16.msra.mxu0 %v2418
  %3420 = vmatpush.bf16.msra.mxu0 %v2416
  %3421 = vmatpush.bf16.msra.mxu0 %v2414
  %3422 = vmatpush.bf16.msra.mxu0 %v2412
  %3423 = vmatpush.bf16.msra.mxu0 %v2410
  %3424 = vmatmul.bf16.gmra.mxu0 %v675
  %v3425 = vpop.f32.mrf.mxu0
  %v3426 = vadd.f32 %v3412, %v3425
  %v3427 = vpop.f32.mrf.mxu0
  %v3428 = vadd.f32 %v3414, %v3427
  %3429 = vdwg.mxu0
  %3430 = vmatpush.bf16.msra.mxu0 %v2440
  %3431 = vmatpush.bf16.msra.mxu0 %v2438
  %3432 = vmatpush.bf16.msra.mxu0 %v2436
  %3433 = vmatpush.bf16.msra.mxu0 %v2434
  %3434 = vmatpush.bf16.msra.mxu0 %v2432
  %3435 = vmatpush.bf16.msra.mxu0 %v2430
  %3436 = vmatpush.bf16.msra.mxu0 %v2428
  %3437 = vmatpush.bf16.msra.mxu0 %v2426
  %3438 = vmatmul.bf16.gmra.mxu0 %v676
  %v3439 = vpop.f32.mrf.mxu0
  %v3440 = vadd.f32 %v3426, %v3439
  %v3441 = vpop.f32.mrf.mxu0
  %v3442 = vadd.f32 %v3428, %v3441
  %3443 = vdwg.mxu0
  %3444 = vmatpush.bf16.msra.mxu0 %v2456
  %3445 = vmatpush.bf16.msra.mxu0 %v2454
  %3446 = vmatpush.bf16.msra.mxu0 %v2452
  %3447 = vmatpush.bf16.msra.mxu0 %v2450
  %3448 = vmatpush.bf16.msra.mxu0 %v2448
  %3449 = vmatpush.bf16.msra.mxu0 %v2446
  %3450 = vmatpush.bf16.msra.mxu0 %v2444
  %3451 = vmatpush.bf16.msra.mxu0 %v2442
  %3452 = vmatmul.bf16.gmra.mxu0 %v677
  %v3453 = vpop.f32.mrf.mxu0
  %v3454 = vadd.f32 %v3440, %v3453
  %v3455 = vpop.f32.mrf.mxu0
  %v3456 = vadd.f32 %v3442, %v3455
  %3457 = vdwg.mxu0
  %3458 = vmatpush.bf16.msra.mxu0 %v2472
  %3459 = vmatpush.bf16.msra.mxu0 %v2470
  %3460 = vmatpush.bf16.msra.mxu0 %v2468
  %3461 = vmatpush.bf16.msra.mxu0 %v2466
  %3462 = vmatpush.bf16.msra.mxu0 %v2464
  %3463 = vmatpush.bf16.msra.mxu0 %v2462
  %3464 = vmatpush.bf16.msra.mxu0 %v2460
  %3465 = vmatpush.bf16.msra.mxu0 %v2458
  %3466 = vmatmul.bf16.gmra.mxu0 %v678
  %v3467 = vpop.f32.mrf.mxu0
  %v3468 = vadd.f32 %v3454, %v3467
  %v3469 = vpop.f32.mrf.mxu0
  %v3470 = vadd.f32 %v3456, %v3469
  %3471 = vdwg.mxu0
  %3472 = vmatpush.bf16.msra.mxu0 %v2488
  %3473 = vmatpush.bf16.msra.mxu0 %v2486
  %3474 = vmatpush.bf16.msra.mxu0 %v2484
  %3475 = vmatpush.bf16.msra.mxu0 %v2482
  %3476 = vmatpush.bf16.msra.mxu0 %v2480
  %3477 = vmatpush.bf16.msra.mxu0 %v2478
  %3478 = vmatpush.bf16.msra.mxu0 %v2476
  %3479 = vmatpush.bf16.msra.mxu0 %v2474
  %3480 = vmatmul.bf16.gmra.mxu0 %v679
  %v3481 = vpop.f32.mrf.mxu0
  %v3482 = vadd.f32 %v3468, %v3481
  %v3483 = vpop.f32.mrf.mxu0
  %v3484 = vadd.f32 %v3470, %v3483
  %3485 = vdwg.mxu0
  %3486 = vmatpush.bf16.msra.mxu0 %v2504
  %3487 = vmatpush.bf16.msra.mxu0 %v2502
  %3488 = vmatpush.bf16.msra.mxu0 %v2500
  %3489 = vmatpush.bf16.msra.mxu0 %v2498
  %3490 = vmatpush.bf16.msra.mxu0 %v2496
  %3491 = vmatpush.bf16.msra.mxu0 %v2494
  %3492 = vmatpush.bf16.msra.mxu0 %v2492
  %3493 = vmatpush.bf16.msra.mxu0 %v2490
  %3494 = vmatmul.bf16.gmra.mxu0 %v680
  %v3495 = vpop.f32.mrf.mxu0
  %v3496 = vadd.f32 %v3482, %v3495
  %v3497 = vpop.f32.mrf.mxu0
  %v3498 = vadd.f32 %v3484, %v3497
  %3499 = vdwg.mxu0
  %3500 = vmatpush.bf16.msra.mxu0 %v2520
  %3501 = vmatpush.bf16.msra.mxu0 %v2518
  %3502 = vmatpush.bf16.msra.mxu0 %v2516
  %3503 = vmatpush.bf16.msra.mxu0 %v2514
  %3504 = vmatpush.bf16.msra.mxu0 %v2512
  %3505 = vmatpush.bf16.msra.mxu0 %v2510
  %3506 = vmatpush.bf16.msra.mxu0 %v2508
  %3507 = vmatpush.bf16.msra.mxu0 %v2506
  %3508 = vmatmul.bf16.gmra.mxu0 %v681
  %v3509 = vpop.f32.mrf.mxu0
  %v3510 = vadd.f32 %v3496, %v3509
  %v3511 = vpop.f32.mrf.mxu0
  %v3512 = vadd.f32 %v3498, %v3511
  %3513 = vdwg.mxu0
  %3514 = vmatpush.bf16.msra.mxu0 %v2536
  %3515 = vmatpush.bf16.msra.mxu0 %v2534
  %3516 = vmatpush.bf16.msra.mxu0 %v2532
  %3517 = vmatpush.bf16.msra.mxu0 %v2530
  %3518 = vmatpush.bf16.msra.mxu0 %v2528
  %3519 = vmatpush.bf16.msra.mxu0 %v2526
  %3520 = vmatpush.bf16.msra.mxu0 %v2524
  %3521 = vmatpush.bf16.msra.mxu0 %v2522
  %3522 = vmatmul.bf16.gmra.mxu0 %v682
  %v3523 = vpop.f32.mrf.mxu0
  %v3524 = vadd.f32 %v3510, %v3523
  %v3525 = vpop.f32.mrf.mxu0
  %v3526 = vadd.f32 %v3512, %v3525
  %3527 = vdwg.mxu0
  %3528 = vmatpush.bf16.msra.mxu0 %v2552
  %3529 = vmatpush.bf16.msra.mxu0 %v2550
  %3530 = vmatpush.bf16.msra.mxu0 %v2548
  %3531 = vmatpush.bf16.msra.mxu0 %v2546
  %3532 = vmatpush.bf16.msra.mxu0 %v2544
  %3533 = vmatpush.bf16.msra.mxu0 %v2542
  %3534 = vmatpush.bf16.msra.mxu0 %v2540
  %3535 = vmatpush.bf16.msra.mxu0 %v2538
  %3536 = vmatmul.bf16.gmra.mxu0 %v683
  %v3537 = vpop.f32.mrf.mxu0
  %v3538 = vadd.f32 %v3524, %v3537
  %v3539 = vpop.f32.mrf.mxu0
  %v3540 = vadd.f32 %v3526, %v3539
  %3541 = vdwg.mxu0
  %3542 = vmatpush.bf16.msra.mxu0 %v2568
  %3543 = vmatpush.bf16.msra.mxu0 %v2566
  %3544 = vmatpush.bf16.msra.mxu0 %v2564
  %3545 = vmatpush.bf16.msra.mxu0 %v2562
  %3546 = vmatpush.bf16.msra.mxu0 %v2560
  %3547 = vmatpush.bf16.msra.mxu0 %v2558
  %3548 = vmatpush.bf16.msra.mxu0 %v2556
  %3549 = vmatpush.bf16.msra.mxu0 %v2554
  %3550 = vmatmul.bf16.gmra.mxu0 %v684
  %v3551 = vpop.f32.mrf.mxu0
  %v3552 = vadd.f32 %v3538, %v3551
  %v3553 = vpop.f32.mrf.mxu0
  %v3554 = vadd.f32 %v3540, %v3553
  %3555 = vdwg.mxu0
  %3556 = vmatpush.bf16.msra.mxu0 %v2584
  %3557 = vmatpush.bf16.msra.mxu0 %v2582
  %3558 = vmatpush.bf16.msra.mxu0 %v2580
  %3559 = vmatpush.bf16.msra.mxu0 %v2578
  %3560 = vmatpush.bf16.msra.mxu0 %v2576
  %3561 = vmatpush.bf16.msra.mxu0 %v2574
  %3562 = vmatpush.bf16.msra.mxu0 %v2572
  %3563 = vmatpush.bf16.msra.mxu0 %v2570
  %3564 = vmatmul.bf16.gmra.mxu0 %v685
  %v3565 = vpop.f32.mrf.mxu0
  %v3566 = vadd.f32 %v3552, %v3565
  %v3567 = vpop.f32.mrf.mxu0
  %v3568 = vadd.f32 %v3554, %v3567
  %3569 = vdwg.mxu0
  %3570 = vmatpush.bf16.msra.mxu0 %v2600
  %3571 = vmatpush.bf16.msra.mxu0 %v2598
  %3572 = vmatpush.bf16.msra.mxu0 %v2596
  %3573 = vmatpush.bf16.msra.mxu0 %v2594
  %3574 = vmatpush.bf16.msra.mxu0 %v2592
  %3575 = vmatpush.bf16.msra.mxu0 %v2590
  %3576 = vmatpush.bf16.msra.mxu0 %v2588
  %3577 = vmatpush.bf16.msra.mxu0 %v2586
  %3578 = vmatmul.bf16.gmra.mxu0 %v686
  %v3579 = vpop.f32.mrf.mxu0
  %v3580 = vadd.f32 %v3566, %v3579
  %v3581 = vpop.f32.mrf.mxu0
  %v3582 = vadd.f32 %v3568, %v3581
  %3583 = vdwg.mxu0
  %3584 = vmatpush.bf16.msra.mxu0 %v2616
  %3585 = vmatpush.bf16.msra.mxu0 %v2614
  %3586 = vmatpush.bf16.msra.mxu0 %v2612
  %3587 = vmatpush.bf16.msra.mxu0 %v2610
  %3588 = vmatpush.bf16.msra.mxu0 %v2608
  %3589 = vmatpush.bf16.msra.mxu0 %v2606
  %3590 = vmatpush.bf16.msra.mxu0 %v2604
  %3591 = vmatpush.bf16.msra.mxu0 %v2602
  %3592 = vmatmul.bf16.gmra.mxu0 %v687
  %v3593 = vpop.f32.mrf.mxu0
  %v3594 = vadd.f32 %v3580, %v3593
  %v3595 = vpop.f32.mrf.mxu0
  %v3596 = vadd.f32 %v3582, %v3595
  %3597 = vdwg.mxu0
  %3598 = vmatpush.bf16.msra.mxu0 %v2632
  %3599 = vmatpush.bf16.msra.mxu0 %v2630
  %3600 = vmatpush.bf16.msra.mxu0 %v2628
  %3601 = vmatpush.bf16.msra.mxu0 %v2626
  %3602 = vmatpush.bf16.msra.mxu0 %v2624
  %3603 = vmatpush.bf16.msra.mxu0 %v2622
  %3604 = vmatpush.bf16.msra.mxu0 %v2620
  %3605 = vmatpush.bf16.msra.mxu0 %v2618
  %3606 = vmatmul.bf16.gmra.mxu0 %v688
  %v3607 = vpop.f32.mrf.mxu0
  %v3608 = vadd.f32 %v3594, %v3607
  %v3609 = vpop.f32.mrf.mxu0
  %v3610 = vadd.f32 %v3596, %v3609
  %3611 = vdwg.mxu0
  %3612 = vmatpush.bf16.msra.mxu0 %v2648
  %3613 = vmatpush.bf16.msra.mxu0 %v2646
  %3614 = vmatpush.bf16.msra.mxu0 %v2644
  %3615 = vmatpush.bf16.msra.mxu0 %v2642
  %3616 = vmatpush.bf16.msra.mxu0 %v2640
  %3617 = vmatpush.bf16.msra.mxu0 %v2638
  %3618 = vmatpush.bf16.msra.mxu0 %v2636
  %3619 = vmatpush.bf16.msra.mxu0 %v2634
  %3620 = vmatmul.bf16.gmra.mxu0 %v689
  %v3621 = vpop.f32.mrf.mxu0
  %v3622 = vadd.f32 %v3608, %v3621
  %v3623 = vpop.f32.mrf.mxu0
  %v3624 = vadd.f32 %v3610, %v3623
  %3625 = vdwg.mxu0
  %3626 = vmatpush.bf16.msra.mxu0 %v2664
  %3627 = vmatpush.bf16.msra.mxu0 %v2662
  %3628 = vmatpush.bf16.msra.mxu0 %v2660
  %3629 = vmatpush.bf16.msra.mxu0 %v2658
  %3630 = vmatpush.bf16.msra.mxu0 %v2656
  %3631 = vmatpush.bf16.msra.mxu0 %v2654
  %3632 = vmatpush.bf16.msra.mxu0 %v2652
  %3633 = vmatpush.bf16.msra.mxu0 %v2650
  %3634 = vmatmul.bf16.gmra.mxu0 %v690
  %v3635 = vpop.f32.mrf.mxu0
  %v3636 = vadd.f32 %v3622, %v3635
  %v3637 = vpop.f32.mrf.mxu0
  %v3638 = vadd.f32 %v3624, %v3637
  %3639 = vdwg.mxu0
  %3640 = vmatpush.bf16.msra.mxu0 %v2680
  %3641 = vmatpush.bf16.msra.mxu0 %v2678
  %3642 = vmatpush.bf16.msra.mxu0 %v2676
  %3643 = vmatpush.bf16.msra.mxu0 %v2674
  %3644 = vmatpush.bf16.msra.mxu0 %v2672
  %3645 = vmatpush.bf16.msra.mxu0 %v2670
  %3646 = vmatpush.bf16.msra.mxu0 %v2668
  %3647 = vmatpush.bf16.msra.mxu0 %v2666
  %3648 = vmatmul.bf16.gmra.mxu0 %v691
  %v3649 = vpop.f32.mrf.mxu0
  %v3650 = vadd.f32 %v3636, %v3649
  %v3651 = vpop.f32.mrf.mxu0
  %v3652 = vadd.f32 %v3638, %v3651
  %3653 = vdwg.mxu0
  %3654 = vmatpush.bf16.msra.mxu0 %v2696
  %3655 = vmatpush.bf16.msra.mxu0 %v2694
  %3656 = vmatpush.bf16.msra.mxu0 %v2692
  %3657 = vmatpush.bf16.msra.mxu0 %v2690
  %3658 = vmatpush.bf16.msra.mxu0 %v2688
  %3659 = vmatpush.bf16.msra.mxu0 %v2686
  %3660 = vmatpush.bf16.msra.mxu0 %v2684
  %3661 = vmatpush.bf16.msra.mxu0 %v2682
  %3662 = vmatmul.bf16.gmra.mxu0 %v692
  %v3663 = vpop.f32.mrf.mxu0
  %v3664 = vadd.f32 %v3650, %v3663
  %v3665 = vpop.f32.mrf.mxu0
  %v3666 = vadd.f32 %v3652, %v3665
  %3667 = vdwg.mxu0
  %3668 = vmatpush.bf16.msra.mxu0 %v2712
  %3669 = vmatpush.bf16.msra.mxu0 %v2710
  %3670 = vmatpush.bf16.msra.mxu0 %v2708
  %3671 = vmatpush.bf16.msra.mxu0 %v2706
  %3672 = vmatpush.bf16.msra.mxu0 %v2704
  %3673 = vmatpush.bf16.msra.mxu0 %v2702
  %3674 = vmatpush.bf16.msra.mxu0 %v2700
  %3675 = vmatpush.bf16.msra.mxu0 %v2698
  %3676 = vmatmul.bf16.gmra.mxu0 %v693
  %v3677 = vpop.f32.mrf.mxu0
  %v3678 = vadd.f32 %v3664, %v3677
  %v3679 = vpop.f32.mrf.mxu0
  %v3680 = vadd.f32 %v3666, %v3679
  %3681 = vdwg.mxu0
  %3682 = vmatpush.bf16.msra.mxu0 %v2728
  %3683 = vmatpush.bf16.msra.mxu0 %v2726
  %3684 = vmatpush.bf16.msra.mxu0 %v2724
  %3685 = vmatpush.bf16.msra.mxu0 %v2722
  %3686 = vmatpush.bf16.msra.mxu0 %v2720
  %3687 = vmatpush.bf16.msra.mxu0 %v2718
  %3688 = vmatpush.bf16.msra.mxu0 %v2716
  %3689 = vmatpush.bf16.msra.mxu0 %v2714
  %3690 = vmatmul.bf16.gmra.mxu0 %v694
  %v3691 = vpop.f32.mrf.mxu0
  %v3692 = vadd.f32 %v3678, %v3691
  %v3693 = vpop.f32.mrf.mxu0
  %v3694 = vadd.f32 %v3680, %v3693
  %3695 = vdwg.mxu0
  %3696 = vmatpush.bf16.msra.mxu0 %v2744
  %3697 = vmatpush.bf16.msra.mxu0 %v2742
  %3698 = vmatpush.bf16.msra.mxu0 %v2740
  %3699 = vmatpush.bf16.msra.mxu0 %v2738
  %3700 = vmatpush.bf16.msra.mxu0 %v2736
  %3701 = vmatpush.bf16.msra.mxu0 %v2734
  %3702 = vmatpush.bf16.msra.mxu0 %v2732
  %3703 = vmatpush.bf16.msra.mxu0 %v2730
  %3704 = vmatmul.bf16.gmra.mxu0 %v695
  %v3705 = vpop.f32.mrf.mxu0
  %v3706 = vadd.f32 %v3692, %v3705
  %v3707 = vpop.f32.mrf.mxu0
  %v3708 = vadd.f32 %v3694, %v3707
  %3709 = vdwg.mxu0
  %3710 = vmatpush.bf16.msra.mxu0 %v2760
  %3711 = vmatpush.bf16.msra.mxu0 %v2758
  %3712 = vmatpush.bf16.msra.mxu0 %v2756
  %3713 = vmatpush.bf16.msra.mxu0 %v2754
  %3714 = vmatpush.bf16.msra.mxu0 %v2752
  %3715 = vmatpush.bf16.msra.mxu0 %v2750
  %3716 = vmatpush.bf16.msra.mxu0 %v2748
  %3717 = vmatpush.bf16.msra.mxu0 %v2746
  %3718 = vmatmul.bf16.gmra.mxu0 %v696
  %v3719 = vpop.f32.mrf.mxu0
  %v3720 = vadd.f32 %v3706, %v3719
  %v3721 = vpop.f32.mrf.mxu0
  %v3722 = vadd.f32 %v3708, %v3721
  %3723 = vdwg.mxu0
  %3724 = vmatpush.bf16.msra.mxu0 %v2776
  %3725 = vmatpush.bf16.msra.mxu0 %v2774
  %3726 = vmatpush.bf16.msra.mxu0 %v2772
  %3727 = vmatpush.bf16.msra.mxu0 %v2770
  %3728 = vmatpush.bf16.msra.mxu0 %v2768
  %3729 = vmatpush.bf16.msra.mxu0 %v2766
  %3730 = vmatpush.bf16.msra.mxu0 %v2764
  %3731 = vmatpush.bf16.msra.mxu0 %v2762
  %3732 = vmatmul.bf16.gmra.mxu0 %v697
  %v3733 = vpop.f32.mrf.mxu0
  %v3734 = vadd.f32 %v3720, %v3733
  %v3735 = vpop.f32.mrf.mxu0
  %v3736 = vadd.f32 %v3722, %v3735
  %3737 = vdwg.mxu0
  %3738 = vmatpush.bf16.msra.mxu0 %v2281
  %3739 = vmatpush.bf16.msra.mxu0 %v2279
  %3740 = vmatpush.bf16.msra.mxu0 %v2277
  %3741 = vmatpush.bf16.msra.mxu0 %v2275
  %3742 = vmatpush.bf16.msra.mxu0 %v2273
  %3743 = vmatpush.bf16.msra.mxu0 %v2271
  %3744 = vmatpush.bf16.msra.mxu0 %v2269
  %3745 = vmatpush.bf16.msra.mxu0 %v2267
  %3746 = vmatmul.bf16.gmra.mxu0 %v666
  %v3747 = vpop.f32.mrf.mxu0
  %v3748 = vadd.f32 %v567, %v3747
  %v3749 = vpop.f32.mrf.mxu0
  %v3750 = vadd.f32 %v567, %v3749
  %3751 = vdwg.mxu0
  %3752 = vmatpush.bf16.msra.mxu0 %v2297
  %3753 = vmatpush.bf16.msra.mxu0 %v2295
  %3754 = vmatpush.bf16.msra.mxu0 %v2293
  %3755 = vmatpush.bf16.msra.mxu0 %v2291
  %3756 = vmatpush.bf16.msra.mxu0 %v2289
  %3757 = vmatpush.bf16.msra.mxu0 %v2287
  %3758 = vmatpush.bf16.msra.mxu0 %v2285
  %3759 = vmatpush.bf16.msra.mxu0 %v2283
  %3760 = vmatmul.bf16.gmra.mxu0 %v667
  %v3761 = vpop.f32.mrf.mxu0
  %v3762 = vadd.f32 %v3748, %v3761
  %v3763 = vpop.f32.mrf.mxu0
  %v3764 = vadd.f32 %v3750, %v3763
  %3765 = vdwg.mxu0
  %3766 = vmatpush.bf16.msra.mxu0 %v2313
  %3767 = vmatpush.bf16.msra.mxu0 %v2311
  %3768 = vmatpush.bf16.msra.mxu0 %v2309
  %3769 = vmatpush.bf16.msra.mxu0 %v2307
  %3770 = vmatpush.bf16.msra.mxu0 %v2305
  %3771 = vmatpush.bf16.msra.mxu0 %v2303
  %3772 = vmatpush.bf16.msra.mxu0 %v2301
  %3773 = vmatpush.bf16.msra.mxu0 %v2299
  %3774 = vmatmul.bf16.gmra.mxu0 %v668
  %v3775 = vpop.f32.mrf.mxu0
  %v3776 = vadd.f32 %v3762, %v3775
  %v3777 = vpop.f32.mrf.mxu0
  %v3778 = vadd.f32 %v3764, %v3777
  %3779 = vdwg.mxu0
  %3780 = vmatpush.bf16.msra.mxu0 %v2329
  %3781 = vmatpush.bf16.msra.mxu0 %v2327
  %3782 = vmatpush.bf16.msra.mxu0 %v2325
  %3783 = vmatpush.bf16.msra.mxu0 %v2323
  %3784 = vmatpush.bf16.msra.mxu0 %v2321
  %3785 = vmatpush.bf16.msra.mxu0 %v2319
  %3786 = vmatpush.bf16.msra.mxu0 %v2317
  %3787 = vmatpush.bf16.msra.mxu0 %v2315
  %3788 = vmatmul.bf16.gmra.mxu0 %v669
  %v3789 = vpop.f32.mrf.mxu0
  %v3790 = vadd.f32 %v3776, %v3789
  %v3791 = vpop.f32.mrf.mxu0
  %v3792 = vadd.f32 %v3778, %v3791
  %3793 = vdwg.mxu0
  %3794 = vmatpush.bf16.msra.mxu0 %v2345
  %3795 = vmatpush.bf16.msra.mxu0 %v2343
  %3796 = vmatpush.bf16.msra.mxu0 %v2341
  %3797 = vmatpush.bf16.msra.mxu0 %v2339
  %3798 = vmatpush.bf16.msra.mxu0 %v2337
  %3799 = vmatpush.bf16.msra.mxu0 %v2335
  %3800 = vmatpush.bf16.msra.mxu0 %v2333
  %3801 = vmatpush.bf16.msra.mxu0 %v2331
  %3802 = vmatmul.bf16.gmra.mxu0 %v670
  %v3803 = vpop.f32.mrf.mxu0
  %v3804 = vadd.f32 %v3790, %v3803
  %v3805 = vpop.f32.mrf.mxu0
  %v3806 = vadd.f32 %v3792, %v3805
  %3807 = vdwg.mxu0
  %3808 = vmatpush.bf16.msra.mxu0 %v2361
  %3809 = vmatpush.bf16.msra.mxu0 %v2359
  %3810 = vmatpush.bf16.msra.mxu0 %v2357
  %3811 = vmatpush.bf16.msra.mxu0 %v2355
  %3812 = vmatpush.bf16.msra.mxu0 %v2353
  %3813 = vmatpush.bf16.msra.mxu0 %v2351
  %3814 = vmatpush.bf16.msra.mxu0 %v2349
  %3815 = vmatpush.bf16.msra.mxu0 %v2347
  %3816 = vmatmul.bf16.gmra.mxu0 %v671
  %v3817 = vpop.f32.mrf.mxu0
  %v3818 = vadd.f32 %v3804, %v3817
  %v3819 = vpop.f32.mrf.mxu0
  %v3820 = vadd.f32 %v3806, %v3819
  %3821 = vdwg.mxu0
  %3822 = vmatpush.bf16.msra.mxu0 %v2377
  %3823 = vmatpush.bf16.msra.mxu0 %v2375
  %3824 = vmatpush.bf16.msra.mxu0 %v2373
  %3825 = vmatpush.bf16.msra.mxu0 %v2371
  %3826 = vmatpush.bf16.msra.mxu0 %v2369
  %3827 = vmatpush.bf16.msra.mxu0 %v2367
  %3828 = vmatpush.bf16.msra.mxu0 %v2365
  %3829 = vmatpush.bf16.msra.mxu0 %v2363
  %3830 = vmatmul.bf16.gmra.mxu0 %v672
  %v3831 = vpop.f32.mrf.mxu0
  %v3832 = vadd.f32 %v3818, %v3831
  %v3833 = vpop.f32.mrf.mxu0
  %v3834 = vadd.f32 %v3820, %v3833
  %3835 = vdwg.mxu0
  %3836 = vmatpush.bf16.msra.mxu0 %v2393
  %3837 = vmatpush.bf16.msra.mxu0 %v2391
  %3838 = vmatpush.bf16.msra.mxu0 %v2389
  %3839 = vmatpush.bf16.msra.mxu0 %v2387
  %3840 = vmatpush.bf16.msra.mxu0 %v2385
  %3841 = vmatpush.bf16.msra.mxu0 %v2383
  %3842 = vmatpush.bf16.msra.mxu0 %v2381
  %3843 = vmatpush.bf16.msra.mxu0 %v2379
  %3844 = vmatmul.bf16.gmra.mxu0 %v673
  %v3845 = vpop.f32.mrf.mxu0
  %v3846 = vadd.f32 %v3832, %v3845
  %v3847 = vpop.f32.mrf.mxu0
  %v3848 = vadd.f32 %v3834, %v3847
  %3849 = vdwg.mxu0
  %3850 = vmatpush.bf16.msra.mxu0 %v2409
  %3851 = vmatpush.bf16.msra.mxu0 %v2407
  %3852 = vmatpush.bf16.msra.mxu0 %v2405
  %3853 = vmatpush.bf16.msra.mxu0 %v2403
  %3854 = vmatpush.bf16.msra.mxu0 %v2401
  %3855 = vmatpush.bf16.msra.mxu0 %v2399
  %3856 = vmatpush.bf16.msra.mxu0 %v2397
  %3857 = vmatpush.bf16.msra.mxu0 %v2395
  %3858 = vmatmul.bf16.gmra.mxu0 %v674
  %v3859 = vpop.f32.mrf.mxu0
  %v3860 = vadd.f32 %v3846, %v3859
  %v3861 = vpop.f32.mrf.mxu0
  %v3862 = vadd.f32 %v3848, %v3861
  %3863 = vdwg.mxu0
  %3864 = vmatpush.bf16.msra.mxu0 %v2425
  %3865 = vmatpush.bf16.msra.mxu0 %v2423
  %3866 = vmatpush.bf16.msra.mxu0 %v2421
  %3867 = vmatpush.bf16.msra.mxu0 %v2419
  %3868 = vmatpush.bf16.msra.mxu0 %v2417
  %3869 = vmatpush.bf16.msra.mxu0 %v2415
  %3870 = vmatpush.bf16.msra.mxu0 %v2413
  %3871 = vmatpush.bf16.msra.mxu0 %v2411
  %3872 = vmatmul.bf16.gmra.mxu0 %v675
  %v3873 = vpop.f32.mrf.mxu0
  %v3874 = vadd.f32 %v3860, %v3873
  %v3875 = vpop.f32.mrf.mxu0
  %v3876 = vadd.f32 %v3862, %v3875
  %3877 = vdwg.mxu0
  %3878 = vmatpush.bf16.msra.mxu0 %v2441
  %3879 = vmatpush.bf16.msra.mxu0 %v2439
  %3880 = vmatpush.bf16.msra.mxu0 %v2437
  %3881 = vmatpush.bf16.msra.mxu0 %v2435
  %3882 = vmatpush.bf16.msra.mxu0 %v2433
  %3883 = vmatpush.bf16.msra.mxu0 %v2431
  %3884 = vmatpush.bf16.msra.mxu0 %v2429
  %3885 = vmatpush.bf16.msra.mxu0 %v2427
  %3886 = vmatmul.bf16.gmra.mxu0 %v676
  %v3887 = vpop.f32.mrf.mxu0
  %v3888 = vadd.f32 %v3874, %v3887
  %v3889 = vpop.f32.mrf.mxu0
  %v3890 = vadd.f32 %v3876, %v3889
  %3891 = vdwg.mxu0
  %3892 = vmatpush.bf16.msra.mxu0 %v2457
  %3893 = vmatpush.bf16.msra.mxu0 %v2455
  %3894 = vmatpush.bf16.msra.mxu0 %v2453
  %3895 = vmatpush.bf16.msra.mxu0 %v2451
  %3896 = vmatpush.bf16.msra.mxu0 %v2449
  %3897 = vmatpush.bf16.msra.mxu0 %v2447
  %3898 = vmatpush.bf16.msra.mxu0 %v2445
  %3899 = vmatpush.bf16.msra.mxu0 %v2443
  %3900 = vmatmul.bf16.gmra.mxu0 %v677
  %v3901 = vpop.f32.mrf.mxu0
  %v3902 = vadd.f32 %v3888, %v3901
  %v3903 = vpop.f32.mrf.mxu0
  %v3904 = vadd.f32 %v3890, %v3903
  %3905 = vdwg.mxu0
  %3906 = vmatpush.bf16.msra.mxu0 %v2473
  %3907 = vmatpush.bf16.msra.mxu0 %v2471
  %3908 = vmatpush.bf16.msra.mxu0 %v2469
  %3909 = vmatpush.bf16.msra.mxu0 %v2467
  %3910 = vmatpush.bf16.msra.mxu0 %v2465
  %3911 = vmatpush.bf16.msra.mxu0 %v2463
  %3912 = vmatpush.bf16.msra.mxu0 %v2461
  %3913 = vmatpush.bf16.msra.mxu0 %v2459
  %3914 = vmatmul.bf16.gmra.mxu0 %v678
  %v3915 = vpop.f32.mrf.mxu0
  %v3916 = vadd.f32 %v3902, %v3915
  %v3917 = vpop.f32.mrf.mxu0
  %v3918 = vadd.f32 %v3904, %v3917
  %3919 = vdwg.mxu0
  %3920 = vmatpush.bf16.msra.mxu0 %v2489
  %3921 = vmatpush.bf16.msra.mxu0 %v2487
  %3922 = vmatpush.bf16.msra.mxu0 %v2485
  %3923 = vmatpush.bf16.msra.mxu0 %v2483
  %3924 = vmatpush.bf16.msra.mxu0 %v2481
  %3925 = vmatpush.bf16.msra.mxu0 %v2479
  %3926 = vmatpush.bf16.msra.mxu0 %v2477
  %3927 = vmatpush.bf16.msra.mxu0 %v2475
  %3928 = vmatmul.bf16.gmra.mxu0 %v679
  %v3929 = vpop.f32.mrf.mxu0
  %v3930 = vadd.f32 %v3916, %v3929
  %v3931 = vpop.f32.mrf.mxu0
  %v3932 = vadd.f32 %v3918, %v3931
  %3933 = vdwg.mxu0
  %3934 = vmatpush.bf16.msra.mxu0 %v2505
  %3935 = vmatpush.bf16.msra.mxu0 %v2503
  %3936 = vmatpush.bf16.msra.mxu0 %v2501
  %3937 = vmatpush.bf16.msra.mxu0 %v2499
  %3938 = vmatpush.bf16.msra.mxu0 %v2497
  %3939 = vmatpush.bf16.msra.mxu0 %v2495
  %3940 = vmatpush.bf16.msra.mxu0 %v2493
  %3941 = vmatpush.bf16.msra.mxu0 %v2491
  %3942 = vmatmul.bf16.gmra.mxu0 %v680
  %v3943 = vpop.f32.mrf.mxu0
  %v3944 = vadd.f32 %v3930, %v3943
  %v3945 = vpop.f32.mrf.mxu0
  %v3946 = vadd.f32 %v3932, %v3945
  %3947 = vdwg.mxu0
  %3948 = vmatpush.bf16.msra.mxu0 %v2521
  %3949 = vmatpush.bf16.msra.mxu0 %v2519
  %3950 = vmatpush.bf16.msra.mxu0 %v2517
  %3951 = vmatpush.bf16.msra.mxu0 %v2515
  %3952 = vmatpush.bf16.msra.mxu0 %v2513
  %3953 = vmatpush.bf16.msra.mxu0 %v2511
  %3954 = vmatpush.bf16.msra.mxu0 %v2509
  %3955 = vmatpush.bf16.msra.mxu0 %v2507
  %3956 = vmatmul.bf16.gmra.mxu0 %v681
  %v3957 = vpop.f32.mrf.mxu0
  %v3958 = vadd.f32 %v3944, %v3957
  %v3959 = vpop.f32.mrf.mxu0
  %v3960 = vadd.f32 %v3946, %v3959
  %3961 = vdwg.mxu0
  %3962 = vmatpush.bf16.msra.mxu0 %v2537
  %3963 = vmatpush.bf16.msra.mxu0 %v2535
  %3964 = vmatpush.bf16.msra.mxu0 %v2533
  %3965 = vmatpush.bf16.msra.mxu0 %v2531
  %3966 = vmatpush.bf16.msra.mxu0 %v2529
  %3967 = vmatpush.bf16.msra.mxu0 %v2527
  %3968 = vmatpush.bf16.msra.mxu0 %v2525
  %3969 = vmatpush.bf16.msra.mxu0 %v2523
  %3970 = vmatmul.bf16.gmra.mxu0 %v682
  %v3971 = vpop.f32.mrf.mxu0
  %v3972 = vadd.f32 %v3958, %v3971
  %v3973 = vpop.f32.mrf.mxu0
  %v3974 = vadd.f32 %v3960, %v3973
  %3975 = vdwg.mxu0
  %3976 = vmatpush.bf16.msra.mxu0 %v2553
  %3977 = vmatpush.bf16.msra.mxu0 %v2551
  %3978 = vmatpush.bf16.msra.mxu0 %v2549
  %3979 = vmatpush.bf16.msra.mxu0 %v2547
  %3980 = vmatpush.bf16.msra.mxu0 %v2545
  %3981 = vmatpush.bf16.msra.mxu0 %v2543
  %3982 = vmatpush.bf16.msra.mxu0 %v2541
  %3983 = vmatpush.bf16.msra.mxu0 %v2539
  %3984 = vmatmul.bf16.gmra.mxu0 %v683
  %v3985 = vpop.f32.mrf.mxu0
  %v3986 = vadd.f32 %v3972, %v3985
  %v3987 = vpop.f32.mrf.mxu0
  %v3988 = vadd.f32 %v3974, %v3987
  %3989 = vdwg.mxu0
  %3990 = vmatpush.bf16.msra.mxu0 %v2569
  %3991 = vmatpush.bf16.msra.mxu0 %v2567
  %3992 = vmatpush.bf16.msra.mxu0 %v2565
  %3993 = vmatpush.bf16.msra.mxu0 %v2563
  %3994 = vmatpush.bf16.msra.mxu0 %v2561
  %3995 = vmatpush.bf16.msra.mxu0 %v2559
  %3996 = vmatpush.bf16.msra.mxu0 %v2557
  %3997 = vmatpush.bf16.msra.mxu0 %v2555
  %3998 = vmatmul.bf16.gmra.mxu0 %v684
  %v3999 = vpop.f32.mrf.mxu0
  %v4000 = vadd.f32 %v3986, %v3999
  %v4001 = vpop.f32.mrf.mxu0
  %v4002 = vadd.f32 %v3988, %v4001
  %4003 = vdwg.mxu0
  %4004 = vmatpush.bf16.msra.mxu0 %v2585
  %4005 = vmatpush.bf16.msra.mxu0 %v2583
  %4006 = vmatpush.bf16.msra.mxu0 %v2581
  %4007 = vmatpush.bf16.msra.mxu0 %v2579
  %4008 = vmatpush.bf16.msra.mxu0 %v2577
  %4009 = vmatpush.bf16.msra.mxu0 %v2575
  %4010 = vmatpush.bf16.msra.mxu0 %v2573
  %4011 = vmatpush.bf16.msra.mxu0 %v2571
  %4012 = vmatmul.bf16.gmra.mxu0 %v685
  %v4013 = vpop.f32.mrf.mxu0
  %v4014 = vadd.f32 %v4000, %v4013
  %v4015 = vpop.f32.mrf.mxu0
  %v4016 = vadd.f32 %v4002, %v4015
  %4017 = vdwg.mxu0
  %4018 = vmatpush.bf16.msra.mxu0 %v2601
  %4019 = vmatpush.bf16.msra.mxu0 %v2599
  %4020 = vmatpush.bf16.msra.mxu0 %v2597
  %4021 = vmatpush.bf16.msra.mxu0 %v2595
  %4022 = vmatpush.bf16.msra.mxu0 %v2593
  %4023 = vmatpush.bf16.msra.mxu0 %v2591
  %4024 = vmatpush.bf16.msra.mxu0 %v2589
  %4025 = vmatpush.bf16.msra.mxu0 %v2587
  %4026 = vmatmul.bf16.gmra.mxu0 %v686
  %v4027 = vpop.f32.mrf.mxu0
  %v4028 = vadd.f32 %v4014, %v4027
  %v4029 = vpop.f32.mrf.mxu0
  %v4030 = vadd.f32 %v4016, %v4029
  %4031 = vdwg.mxu0
  %4032 = vmatpush.bf16.msra.mxu0 %v2617
  %4033 = vmatpush.bf16.msra.mxu0 %v2615
  %4034 = vmatpush.bf16.msra.mxu0 %v2613
  %4035 = vmatpush.bf16.msra.mxu0 %v2611
  %4036 = vmatpush.bf16.msra.mxu0 %v2609
  %4037 = vmatpush.bf16.msra.mxu0 %v2607
  %4038 = vmatpush.bf16.msra.mxu0 %v2605
  %4039 = vmatpush.bf16.msra.mxu0 %v2603
  %4040 = vmatmul.bf16.gmra.mxu0 %v687
  %v4041 = vpop.f32.mrf.mxu0
  %v4042 = vadd.f32 %v4028, %v4041
  %v4043 = vpop.f32.mrf.mxu0
  %v4044 = vadd.f32 %v4030, %v4043
  %4045 = vdwg.mxu0
  %4046 = vmatpush.bf16.msra.mxu0 %v2633
  %4047 = vmatpush.bf16.msra.mxu0 %v2631
  %4048 = vmatpush.bf16.msra.mxu0 %v2629
  %4049 = vmatpush.bf16.msra.mxu0 %v2627
  %4050 = vmatpush.bf16.msra.mxu0 %v2625
  %4051 = vmatpush.bf16.msra.mxu0 %v2623
  %4052 = vmatpush.bf16.msra.mxu0 %v2621
  %4053 = vmatpush.bf16.msra.mxu0 %v2619
  %4054 = vmatmul.bf16.gmra.mxu0 %v688
  %v4055 = vpop.f32.mrf.mxu0
  %v4056 = vadd.f32 %v4042, %v4055
  %v4057 = vpop.f32.mrf.mxu0
  %v4058 = vadd.f32 %v4044, %v4057
  %4059 = vdwg.mxu0
  %4060 = vmatpush.bf16.msra.mxu0 %v2649
  %4061 = vmatpush.bf16.msra.mxu0 %v2647
  %4062 = vmatpush.bf16.msra.mxu0 %v2645
  %4063 = vmatpush.bf16.msra.mxu0 %v2643
  %4064 = vmatpush.bf16.msra.mxu0 %v2641
  %4065 = vmatpush.bf16.msra.mxu0 %v2639
  %4066 = vmatpush.bf16.msra.mxu0 %v2637
  %4067 = vmatpush.bf16.msra.mxu0 %v2635
  %4068 = vmatmul.bf16.gmra.mxu0 %v689
  %v4069 = vpop.f32.mrf.mxu0
  %v4070 = vadd.f32 %v4056, %v4069
  %v4071 = vpop.f32.mrf.mxu0
  %v4072 = vadd.f32 %v4058, %v4071
  %4073 = vdwg.mxu0
  %4074 = vmatpush.bf16.msra.mxu0 %v2665
  %4075 = vmatpush.bf16.msra.mxu0 %v2663
  %4076 = vmatpush.bf16.msra.mxu0 %v2661
  %4077 = vmatpush.bf16.msra.mxu0 %v2659
  %4078 = vmatpush.bf16.msra.mxu0 %v2657
  %4079 = vmatpush.bf16.msra.mxu0 %v2655
  %4080 = vmatpush.bf16.msra.mxu0 %v2653
  %4081 = vmatpush.bf16.msra.mxu0 %v2651
  %4082 = vmatmul.bf16.gmra.mxu0 %v690
  %v4083 = vpop.f32.mrf.mxu0
  %v4084 = vadd.f32 %v4070, %v4083
  %v4085 = vpop.f32.mrf.mxu0
  %v4086 = vadd.f32 %v4072, %v4085
  %4087 = vdwg.mxu0
  %4088 = vmatpush.bf16.msra.mxu0 %v2681
  %4089 = vmatpush.bf16.msra.mxu0 %v2679
  %4090 = vmatpush.bf16.msra.mxu0 %v2677
  %4091 = vmatpush.bf16.msra.mxu0 %v2675
  %4092 = vmatpush.bf16.msra.mxu0 %v2673
  %4093 = vmatpush.bf16.msra.mxu0 %v2671
  %4094 = vmatpush.bf16.msra.mxu0 %v2669
  %4095 = vmatpush.bf16.msra.mxu0 %v2667
  %4096 = vmatmul.bf16.gmra.mxu0 %v691
  %v4097 = vpop.f32.mrf.mxu0
  %v4098 = vadd.f32 %v4084, %v4097
  %v4099 = vpop.f32.mrf.mxu0
  %v4100 = vadd.f32 %v4086, %v4099
  %4101 = vdwg.mxu0
  %4102 = vmatpush.bf16.msra.mxu0 %v2697
  %4103 = vmatpush.bf16.msra.mxu0 %v2695
  %4104 = vmatpush.bf16.msra.mxu0 %v2693
  %4105 = vmatpush.bf16.msra.mxu0 %v2691
  %4106 = vmatpush.bf16.msra.mxu0 %v2689
  %4107 = vmatpush.bf16.msra.mxu0 %v2687
  %4108 = vmatpush.bf16.msra.mxu0 %v2685
  %4109 = vmatpush.bf16.msra.mxu0 %v2683
  %4110 = vmatmul.bf16.gmra.mxu0 %v692
  %v4111 = vpop.f32.mrf.mxu0
  %v4112 = vadd.f32 %v4098, %v4111
  %v4113 = vpop.f32.mrf.mxu0
  %v4114 = vadd.f32 %v4100, %v4113
  %4115 = vdwg.mxu0
  %4116 = vmatpush.bf16.msra.mxu0 %v2713
  %4117 = vmatpush.bf16.msra.mxu0 %v2711
  %4118 = vmatpush.bf16.msra.mxu0 %v2709
  %4119 = vmatpush.bf16.msra.mxu0 %v2707
  %4120 = vmatpush.bf16.msra.mxu0 %v2705
  %4121 = vmatpush.bf16.msra.mxu0 %v2703
  %4122 = vmatpush.bf16.msra.mxu0 %v2701
  %4123 = vmatpush.bf16.msra.mxu0 %v2699
  %4124 = vmatmul.bf16.gmra.mxu0 %v693
  %v4125 = vpop.f32.mrf.mxu0
  %v4126 = vadd.f32 %v4112, %v4125
  %v4127 = vpop.f32.mrf.mxu0
  %v4128 = vadd.f32 %v4114, %v4127
  %4129 = vdwg.mxu0
  %4130 = vmatpush.bf16.msra.mxu0 %v2729
  %4131 = vmatpush.bf16.msra.mxu0 %v2727
  %4132 = vmatpush.bf16.msra.mxu0 %v2725
  %4133 = vmatpush.bf16.msra.mxu0 %v2723
  %4134 = vmatpush.bf16.msra.mxu0 %v2721
  %4135 = vmatpush.bf16.msra.mxu0 %v2719
  %4136 = vmatpush.bf16.msra.mxu0 %v2717
  %4137 = vmatpush.bf16.msra.mxu0 %v2715
  %4138 = vmatmul.bf16.gmra.mxu0 %v694
  %v4139 = vpop.f32.mrf.mxu0
  %v4140 = vadd.f32 %v4126, %v4139
  %v4141 = vpop.f32.mrf.mxu0
  %v4142 = vadd.f32 %v4128, %v4141
  %4143 = vdwg.mxu0
  %4144 = vmatpush.bf16.msra.mxu0 %v2745
  %4145 = vmatpush.bf16.msra.mxu0 %v2743
  %4146 = vmatpush.bf16.msra.mxu0 %v2741
  %4147 = vmatpush.bf16.msra.mxu0 %v2739
  %4148 = vmatpush.bf16.msra.mxu0 %v2737
  %4149 = vmatpush.bf16.msra.mxu0 %v2735
  %4150 = vmatpush.bf16.msra.mxu0 %v2733
  %4151 = vmatpush.bf16.msra.mxu0 %v2731
  %4152 = vmatmul.bf16.gmra.mxu0 %v695
  %v4153 = vpop.f32.mrf.mxu0
  %v4154 = vadd.f32 %v4140, %v4153
  %v4155 = vpop.f32.mrf.mxu0
  %v4156 = vadd.f32 %v4142, %v4155
  %4157 = vdwg.mxu0
  %4158 = vmatpush.bf16.msra.mxu0 %v2761
  %4159 = vmatpush.bf16.msra.mxu0 %v2759
  %4160 = vmatpush.bf16.msra.mxu0 %v2757
  %4161 = vmatpush.bf16.msra.mxu0 %v2755
  %4162 = vmatpush.bf16.msra.mxu0 %v2753
  %4163 = vmatpush.bf16.msra.mxu0 %v2751
  %4164 = vmatpush.bf16.msra.mxu0 %v2749
  %4165 = vmatpush.bf16.msra.mxu0 %v2747
  %4166 = vmatmul.bf16.gmra.mxu0 %v696
  %v4167 = vpop.f32.mrf.mxu0
  %v4168 = vadd.f32 %v4154, %v4167
  %v4169 = vpop.f32.mrf.mxu0
  %v4170 = vadd.f32 %v4156, %v4169
  %4171 = vdwg.mxu0
  %4172 = vmatpush.bf16.msra.mxu0 %v2777
  %4173 = vmatpush.bf16.msra.mxu0 %v2775
  %4174 = vmatpush.bf16.msra.mxu0 %v2773
  %4175 = vmatpush.bf16.msra.mxu0 %v2771
  %4176 = vmatpush.bf16.msra.mxu0 %v2769
  %4177 = vmatpush.bf16.msra.mxu0 %v2767
  %4178 = vmatpush.bf16.msra.mxu0 %v2765
  %4179 = vmatpush.bf16.msra.mxu0 %v2763
  %4180 = vmatmul.bf16.gmra.mxu0 %v697
  %v4181 = vpop.f32.mrf.mxu0
  %v4182 = vadd.f32 %v4168, %v4181
  %v4183 = vpop.f32.mrf.mxu0
  %v4184 = vadd.f32 %v4170, %v4183
  %4185 = vdwg.mxu0
  %v4186 = vmax.f32 %v3734, 0.0
  %v4187 = vmax.f32 %v4182, 0.0
  %v4188 = vmax.f32 %v3736, 0.0
  %v4189 = vmax.f32 %v4184, 0.0
  %v4190 = vpack.c.bf16 %v4188, %v4186
  %v4191 = vpack.c.bf16 %v4189, %v4187
  %v4192 = vld [vmem:[%s3] sm:$0xf]
  %v4193 = vld [vmem:[%s3 + $0x4] sm:$0xf]
  %v4194 = vld [vmem:[%s3 + $0x8] sm:$0xf]
  %v4195 = vld [vmem:[%s3 + $0xc] sm:$0xf]
  %v4196 = vld [vmem:[%s3 + $0x10] sm:$0xf]
  %v4197 = vld [vmem:[%s3 + $0x14] sm:$0xf]
  %v4198 = vld [vmem:[%s3 + $0x18] sm:$0xf]
  %v4199 = vld [vmem:[%s3 + $0x1c] sm:$0xf]
  %v4200 = vld [vmem:[%s3 + $0x20] sm:$0xf]
  %v4201 = vld [vmem:[%s3 + $0x24] sm:$0xf]
  %v4202 = vld [vmem:[%s3 + $0x28] sm:$0xf]
  %v4203 = vld [vmem:[%s3 + $0x2c] sm:$0xf]
  %v4204 = vld [vmem:[%s3 + $0x30] sm:$0xf]
  %v4205 = vld [vmem:[%s3 + $0x34] sm:$0xf]
  %v4206 = vld [vmem:[%s3 + $0x38] sm:$0xf]
  %v4207 = vld [vmem:[%s3 + $0x3c] sm:$0xf]
  %v4208 = vld [vmem:[%s3 + $0x40] sm:$0xf]
  %v4209 = vld [vmem:[%s3 + $0x44] sm:$0xf]
  %v4210 = vld [vmem:[%s3 + $0x48] sm:$0xf]
  %v4211 = vld [vmem:[%s3 + $0x4c] sm:$0xf]
  %v4212 = vld [vmem:[%s3 + $0x50] sm:$0xf]
  %v4213 = vld [vmem:[%s3 + $0x54] sm:$0xf]
  %v4214 = vld [vmem:[%s3 + $0x58] sm:$0xf]
  %v4215 = vld [vmem:[%s3 + $0x5c] sm:$0xf]
  %v4216 = vld [vmem:[%s3 + $0x60] sm:$0xf]
  %v4217 = vld [vmem:[%s3 + $0x64] sm:$0xf]
  %v4218 = vld [vmem:[%s3 + $0x68] sm:$0xf]
  %v4219 = vld [vmem:[%s3 + $0x6c] sm:$0xf]
  %v4220 = vld [vmem:[%s3 + $0x70] sm:$0xf]
  %v4221 = vld [vmem:[%s3 + $0x74] sm:$0xf]
  %v4222 = vld [vmem:[%s3 + $0x78] sm:$0xf]
  %v4223 = vld [vmem:[%s3 + $0x7c] sm:$0xf]
  %v4224 = vld [vmem:[%s4] sm:$0x1]
  %v4226 = vperm.slane %v4224, 0
  %v4260 = vunpack.c.l.b16 %v4192
  %v4261 = vunpack.c.l.b16 %v4193
  %v4262 = vunpack.c.l.b16 %v4194
  %v4263 = vunpack.c.l.b16 %v4195
  %v4264 = vunpack.c.l.b16 %v4196
  %v4265 = vunpack.c.l.b16 %v4197
  %v4266 = vunpack.c.l.b16 %v4198
  %v4267 = vunpack.c.l.b16 %v4199
  %v4268 = vunpack.c.l.b16 %v4200
  %v4269 = vunpack.c.l.b16 %v4201
  %v4270 = vunpack.c.l.b16 %v4202
  %v4271 = vunpack.c.l.b16 %v4203
  %v4272 = vunpack.c.l.b16 %v4204
  %v4273 = vunpack.c.l.b16 %v4205
  %v4274 = vunpack.c.l.b16 %v4206
  %v4275 = vunpack.c.l.b16 %v4207
  %v4276 = vunpack.c.l.b16 %v4208
  %v4277 = vunpack.c.l.b16 %v4209
  %v4278 = vunpack.c.l.b16 %v4210
  %v4279 = vunpack.c.l.b16 %v4211
  %v4280 = vunpack.c.l.b16 %v4212
  %v4281 = vunpack.c.l.b16 %v4213
  %v4282 = vunpack.c.l.b16 %v4214
  %v4283 = vunpack.c.l.b16 %v4215
  %v4284 = vunpack.c.l.b16 %v4216
  %v4285 = vunpack.c.l.b16 %v4217
  %v4286 = vunpack.c.l.b16 %v4218
  %v4287 = vunpack.c.l.b16 %v4219
  %v4288 = vunpack.c.l.b16 %v4220
  %v4289 = vunpack.c.l.b16 %v4221
  %v4290 = vunpack.c.l.b16 %v4222
  %v4291 = vunpack.c.l.b16 %v4223
  %v4292 = vpack.c.b16 %v4261, %v4260
  %v4293 = vpack.c.b16 %v4263, %v4262
  %v4294 = vpack.c.b16 %v4265, %v4264
  %v4295 = vpack.c.b16 %v4267, %v4266
  %v4296 = vpack.c.b16 %v4269, %v4268
  %v4297 = vpack.c.b16 %v4271, %v4270
  %v4298 = vpack.c.b16 %v4273, %v4272
  %v4299 = vpack.c.b16 %v4275, %v4274
  %v4300 = vpack.c.b16 %v4277, %v4276
  %v4301 = vpack.c.b16 %v4279, %v4278
  %v4302 = vpack.c.b16 %v4281, %v4280
  %v4303 = vpack.c.b16 %v4283, %v4282
  %v4304 = vpack.c.b16 %v4285, %v4284
  %v4305 = vpack.c.b16 %v4287, %v4286
  %v4306 = vpack.c.b16 %v4289, %v4288
  %v4307 = vpack.c.b16 %v4291, %v4290
  %4324 = vmatpush.bf16.msra.mxu0 %v4299
  %4325 = vmatpush.bf16.msra.mxu0 %v4298
  %4326 = vmatpush.bf16.msra.mxu0 %v4297
  %4327 = vmatpush.bf16.msra.mxu0 %v4296
  %4328 = vmatpush.bf16.msra.mxu0 %v4295
  %4329 = vmatpush.bf16.msra.mxu0 %v4294
  %4330 = vmatpush.bf16.msra.mxu0 %v4293
  %4331 = vmatpush.bf16.msra.mxu0 %v4292
  %4332 = vmatmul.bf16.gmra.mxu0 %v4190
  %v4333 = vpop.f32.mrf.mxu0
  %v4334 = vadd.f32 %v4226, %v4333
  %v4335 = vpop.f32.mrf.mxu0
  %v4336 = vadd.f32 %v4226, %v4335
  %4337 = vdwg.mxu0
  %4338 = vmatpush.bf16.msra.mxu0 %v4307
  %4339 = vmatpush.bf16.msra.mxu0 %v4306
  %4340 = vmatpush.bf16.msra.mxu0 %v4305
  %4341 = vmatpush.bf16.msra.mxu0 %v4304
  %4342 = vmatpush.bf16.msra.mxu0 %v4303
  %4343 = vmatpush.bf16.msra.mxu0 %v4302
  %4344 = vmatpush.bf16.msra.mxu0 %v4301
  %4345 = vmatpush.bf16.msra.mxu0 %v4300
  %4346 = vmatmul.bf16.gmra.mxu0 %v4191
  %v4347 = vpop.f32.mrf.mxu0
  %v4348 = vadd.f32 %v4334, %v4347
  %v4349 = vpop.f32.mrf.mxu0
  %v4350 = vadd.f32 %v4336, %v4349
  %4351 = vdwg.mxu0
  %4352 = vmax.xlane.f32.xlu0 %v4348
  %v4353 = vpop.xlane.xlu0 %4352
  %4354 = vmax.xlane.f32.xlu0 %v4350
  %v4355 = vpop.xlane.xlu0 %4354
  %v4356 = vsub.f32 %v4348, %v4353
  %v4357 = vsub.f32 %v4350, %v4355
  %v4358 = vmul.f32 %v4356, 1.442695
  %v4359 = vpow.pop %v4358
  %v4360 = vmul.f32 %v4357, 1.442695
  %v4361 = vpow.pop %v4360
  %4362 = vadd.xlane.f32.xlu0 %v4359
  %v4363 = vpop.xlane.xlu0 %4362
  %4364 = vadd.xlane.f32.xlu0 %v4361
  %v4365 = vpop.xlane.xlu0 %4364
  %v4366 = vlog2.pop %v4363
  %v4367 = vmul.f32 %v4366, 0.6931472
  %v4368 = vlog2.pop %v4365
  %v4369 = vmul.f32 %v4368, 0.6931472
  %v4370 = vadd.f32 %v4367, %v4353
  %v4371 = vadd.f32 %v4369, %v4355
  %v4372 = vsub.f32 %v4348, %v4370
  %v4373 = vsub.f32 %v4350, %v4371
  %4374 = vst [vmem:[%s5] sm:$0xff] %v4372
  %4375 = vst [vmem:[%s5 + $0x8] sm:$0xff] %v4373
  // Predicated region
  $region22: #{net_forward.7} parent=0 // pred_check
    _
  $region23: #{net_forward.7} parent=0 // pred_check_branch
    %4377 = sbr.rel (0) target = $region25
  $region24: #{net_forward.7} parent=0 // pred_region
    _
  $region25: #{net_forward.7} parent=0 // pred_fallthru
    _
  // Predicated region
  $region26: #{net_forward.7} parent=0 // pred_check
    _
  $region27: #{net_forward.7} parent=0 // pred_check_branch
    %4379 = sbr.rel (0) target = $region29
  $region28: #{net_forward.7} parent=0 // pred_region
    _
  $region29: #{net_forward.7} parent=0 // pred_fallthru
    _

</llo_original>
